<compile_context>
chip_gen: v7x
topology: tpu7x:2x2x1
jax: 0.10.0
libtpu: 0.0.40
codegen_flags: <defaults>
</compile_context>

<pallas_src>
import jax
import jax.numpy as jnp
from jax import lax
from jax.experimental import pallas as pl
from jax.experimental.pallas import tpu as pltpu

EPS = 1e-5                      # PyTorch BatchNorm2d default eps
_CHANNELS = (16, 16, 32)        # conv output channels per layer (fixed arch)


# ---------------------------------------------------------------------------
# Fused kernel: layer1 -> layer2 -> layer3 (conv as dense GEMM + BN + ReLU)
# ---------------------------------------------------------------------------
def _onehot_groups(shape, S, f_axis, c_axis):
    """0/1 indicator: entry is 1 iff flat-column index // S == channel index."""
    f = lax.broadcasted_iota(jnp.int32, shape, f_axis)
    c = lax.broadcasted_iota(jnp.int32, shape, c_axis)
    lo = c * S
    return ((f >= lo) & (f < lo + S)).astype(jnp.float32)


def _context_net_kernel(x_ref, w1_ref, w2_ref, w3_ref, bn_ref, o_ref):
    def conv_bn_relu(h_bf16, w_ref, layer, C):
        # Conv as one dense GEMM on the MXU (bf16 operands, f32 accumulation).
        acc = jnp.dot(h_bf16, w_ref[...], preferred_element_type=jnp.float32)  # (B, F)
        B, F = acc.shape
        S = F // C                      # spatial positions per channel
        inv_n = 1.0 / (B * S)           # BN counts N*H*W elements per channel

        # Per-column sums / sums-of-squares, stacked into ONE (2, F) LHS so the
        # channel reduction is a single MXU launch.
        colsum = jnp.sum(acc, axis=0, keepdims=True)            # (1, F)
        colsumsq = jnp.sum(acc * acc, axis=0, keepdims=True)    # (1, F)
        row = lax.broadcasted_iota(jnp.int32, (2, F), 0)
        stats = jnp.where(row == 0,
                          jnp.broadcast_to(colsum, (2, F)),
                          jnp.broadcast_to(colsumsq, (2, F)))   # (2, F)

        # Channel indicator built in-kernel (iota + compare): no HBM traffic.
        G = _onehot_groups((F, C), S, 0, 1)                     # (F, C)
        # TODO(synk): set precision=HIGHEST on this dot if strict parity with
        # PyTorch's f32 BN statistics is ever required.
        ch = jnp.dot(stats, G, preferred_element_type=jnp.float32) * inv_n  # (2, C)
        mean_c = ch[0:1, :]
        var_c = ch[1:2, :] - mean_c * mean_c                    # biased variance

        gm = bn_ref[2 * layer: 2 * layer + 1, 0:C]              # (1, C) gamma
        bt = bn_ref[2 * layer + 1: 2 * layer + 2, 0:C]          # (1, C) beta
        scale_c = gm * lax.rsqrt(var_c + EPS)                   # rsqrt -> EUP
        shift_c = bt - mean_c * scale_c

        # Expand per-channel -> per-column with a single (2, C) @ (C, F) launch.
        rowc = lax.broadcasted_iota(jnp.int32, (2, C), 0)
        ss = jnp.where(rowc == 0,
                       jnp.broadcast_to(scale_c, (2, C)),
                       jnp.broadcast_to(shift_c, (2, C)))       # (2, C)
        GT = _onehot_groups((C, F), S, 1, 0)                    # (C, F)
        sf = jnp.dot(ss, GT, preferred_element_type=jnp.float32)  # (2, F)

        return jnp.maximum(acc * sf[0:1, :] + sf[1:2, :], 0.0)

    h1 = conv_bn_relu(x_ref[...], w1_ref, 0, _CHANNELS[0])                  # (B, 1024)
    h2 = conv_bn_relu(h1.astype(jnp.bfloat16), w2_ref, 1, _CHANNELS[1])     # (B, 576)
    h3 = conv_bn_relu(h2.astype(jnp.bfloat16), w3_ref, 2, _CHANNELS[2])     # (B, 512)
    o_ref[...] = h3  # already in NCHW-flatten order -> Flatten() is free


# ---------------------------------------------------------------------------
# One-time weight repacking (outside the forward / jit)
# ---------------------------------------------------------------------------
def _conv_as_matrix(w, H, W):
    """Dense matrix of a valid stride-1 conv: NCHW-flat in -> NCHW-flat out.

    dense[ci*H*W + yi*W + xi, co*Ho*Wo + yo*Wo + xo] =
        w[co, ci, yi - yo, xi - xo]   if the tap is in range, else 0.
    """
    C_out, C_in, KH, KW = w.shape
    Ho, Wo = H - KH + 1, W - KW + 1
    dy = jnp.arange(H)[:, None] - jnp.arange(Ho)[None, :]   # (H, Ho)
    dx = jnp.arange(W)[:, None] - jnp.arange(Wo)[None, :]   # (W, Wo)
    vy = (dy >= 0) & (dy < KH)
    vx = (dx >= 0) & (dx < KW)
    dyc = jnp.clip(dy, 0, KH - 1)
    dxc = jnp.clip(dx, 0, KW - 1)
    w_cik = jnp.transpose(w, (1, 0, 2, 3))                  # (C_in, C_out, KH, KW)
    g = w_cik[:, :, dyc[:, :, None, None], dxc[None, None, :, :]]  # (Ci,Co,H,Ho,W,Wo)
    mask = (vy[:, :, None, None] & vx[None, None, :, :]).astype(w.dtype)
    g = g * mask
    g = jnp.transpose(g, (0, 2, 4, 1, 3, 5))                # (Ci, H, W, Co, Ho, Wo)
    return g.reshape(C_in * H * W, C_out * Ho * Wo)


def prepare_params(params, size=12, in_hw=(16, 16)):
    """Repack conv weights into dense bf16 GEMM matrices; fold the resize into
    layer 1; pack all BN gamma/beta vectors into one (6, 32) f32 tile.

    Conv biases are intentionally dropped: they are zero-initialized in the
    reference module and are cancelled exactly by training-mode BN.
    """
    Hin, Win = in_hw
    # Resize matrix R: flattened (Hin*Win,) -> flattened (size*size,), obtained
    # by pushing the identity basis through the (linear) bilinear resize.
    # TODO(synk): the PyTorch path is ToPILImage (uint8 quantize) + PIL Resize;
    # this bilinear matrix is a close approximation, not bit-exact.
    eye = jnp.eye(Hin * Win, dtype=jnp.float32).reshape(Hin * Win, 1, Hin, Win)
    R = jax.image.resize(eye, (Hin * Win, 1, size, size), method="linear")
    R = R.reshape(Hin * Win, size * size)                   # (256, 144)

    max_c = max(_CHANNELS)
    ws, bn_rows = [], []
    H = size
    for i, (wk, gk, bk) in enumerate((("w1", "g1", "bt1"),
                                      ("w2", "g2", "bt2"),
                                      ("w3", "g3", "bt3"))):
        w = params[wk]
        C_out, _, KH, _ = w.shape
        wd = _conv_as_matrix(w, H, H)                       # f32 (Ci*H*H, Co*Ho*Ho)
        if i == 0:
            wd = R @ wd                                     # fold resize: (256, 1024)
        ws.append(wd.astype(jnp.bfloat16))
        bn_rows.append(jnp.pad(params[gk].astype(jnp.float32), (0, max_c - C_out)))
        bn_rows.append(jnp.pad(params[bk].astype(jnp.float32), (0, max_c - C_out)))
        H = H - KH + 1
    bn = jnp.stack(bn_rows)                                  # (6, 32) f32, one tile
    return (ws[0], ws[1], ws[2], bn)


# ---------------------------------------------------------------------------
# Forward
# ---------------------------------------------------------------------------
def context_net_forward(prep, x):
    w1, w2, w3, bn = prep
    B = x.shape[0]
    # Raw NCHW flatten; the 16x16 -> 12x12 resize is already folded into w1.
    xf = x.reshape(B, -1).astype(jnp.bfloat16)               # (B, 256), lane-dense

    vmem = pl.BlockSpec(memory_space=pltpu.MemorySpace.VMEM)
    out = pl.pallas_call(
        _context_net_kernel,
        out_shape=jax.ShapeDtypeStruct((B, 512), jnp.float32),
        in_specs=[vmem] * 5,
        out_specs=vmem,
        compiler_params=pltpu.CompilerParams(vmem_limit_bytes=8 * 1024 * 1024),
    )(xf, w1, w2, w3, bn)
    return out  # (B, 32*4*4), identical to PyTorch's Flatten of NCHW


# ---------------------------------------------------------------------------
# Params (matching the PyTorch module init)
# ---------------------------------------------------------------------------
def init_params(key):
    k1, k2, k3 = jax.random.split(key, 3)

    def u(k, shape):
        return jax.random.uniform(k, shape, jnp.float32, -0.01, 0.01)

    return {
        # layer1: Conv2d(1, 16, 5) + BN(16)
        "w1": u(k1, (16, 1, 5, 5)),
        "b1": jnp.zeros((16,), jnp.float32),   # zero, cancelled by BN -> unused
        "g1": jnp.ones((16,), jnp.float32),
        "bt1": jnp.zeros((16,), jnp.float32),
        # layer2: Conv2d(16, 16, 3) + BN(16)
        "w2": u(k2, (16, 16, 3, 3)),
        "b2": jnp.zeros((16,), jnp.float32),
        "g2": jnp.ones((16,), jnp.float32),
        "bt2": jnp.zeros((16,), jnp.float32),
        # layer3: Conv2d(16, 32, 3) + BN(32)
        "w3": u(k3, (32, 16, 3, 3)),
        "b3": jnp.zeros((32,), jnp.float32),
        "g3": jnp.ones((32,), jnp.float32),
        "bt3": jnp.zeros((32,), jnp.float32),
    }


if __name__ == "__main__":
    key = jax.random.PRNGKey(0)
    pkey, xkey = jax.random.split(key)
    params = init_params(pkey)
    prep = prepare_params(params)  # one-time repack (resize folded into w1)

    # Input matches resize_tensor's expectation: NCHW, single channel.
    x = jax.random.uniform(xkey, (2, 1, 16, 16), jnp.float32)

    out = jax.jit(context_net_forward)(prep, x)
    out = jax.block_until_ready(out)

    assert out.shape == (2, 32 * 4 * 4), out.shape
    assert jnp.all(jnp.isfinite(out))
    print("KERNEL_OK")
</pallas_src>

<mosaic_0001>
module attributes {stable_mosaic.version = 11 : i64} {
  func.func @_context_net_kernel(%arg0: memref<2x256xbf16, #tpu.memory_space<vmem>>, %arg1: memref<256x1024xbf16, #tpu.memory_space<vmem>>, %arg2: memref<1024x576xbf16, #tpu.memory_space<vmem>>, %arg3: memref<576x512xbf16, #tpu.memory_space<vmem>>, %arg4: memref<6x32xf32, #tpu.memory_space<vmem>>, %arg5: memref<2x512xf32, #tpu.memory_space<vmem>>) attributes {dimension_semantics = [], scalar_prefetch = 0 : i64, scratch_operands = 0 : i64, tpu.core_type = #tpu.core_type<tc>} {
    %c0 = arith.constant 0 : index
    %c0_0 = arith.constant 0 : index
    %0 = vector.load %arg0[%c0, %c0_0] : memref<2x256xbf16, #tpu.memory_space<vmem>>, vector<2x256xbf16>
    %c0_1 = arith.constant 0 : index
    %c0_2 = arith.constant 0 : index
    %1 = vector.load %arg1[%c0_1, %c0_2] : memref<256x1024xbf16, #tpu.memory_space<vmem>>, vector<256x1024xbf16>
    %cst = arith.constant dense<0.000000e+00> : vector<2x1024xf32>
    %2 = tpu.matmul %0, %1, %cst {dimension_numbers = #tpu.dot_dimension_numbers<[1], [0], [0], [1], [0, 0, 1, 1], [], []>} : vector<2x256xbf16>, vector<256x1024xbf16>, vector<2x1024xf32> -> vector<2x1024xf32>
    %cst_3 = arith.constant dense<0.000000e+00> : vector<1024xf32>
    %3 = vector.multi_reduction <add>, %2, %cst_3 [0] : vector<2x1024xf32> to vector<1024xf32>
    %4 = vector.shape_cast %3 : vector<1024xf32> to vector<1x1024xf32>
    %5 = arith.mulf %2, %2 : vector<2x1024xf32>
    %cst_4 = arith.constant dense<0.000000e+00> : vector<1024xf32>
    %6 = vector.multi_reduction <add>, %5, %cst_4 [0] : vector<2x1024xf32> to vector<1024xf32>
    %7 = vector.shape_cast %6 : vector<1024xf32> to vector<1x1024xf32>
    %8 = tpu.iota {dimensions = array<i32: 0>} : vector<2x1024xi32>
    %c0_i32 = arith.constant 0 : i32
    %9 = vector.broadcast %c0_i32 : i32 to vector<2x1024xi32>
    %10 = arith.cmpi eq, %8, %9 : vector<2x1024xi32>
    %11 = vector.shape_cast %4 : vector<1x1024xf32> to vector<1x1024xf32>
    %12 = vector.broadcast %11 : vector<1x1024xf32> to vector<2x1024xf32>
    %13 = vector.shape_cast %7 : vector<1x1024xf32> to vector<1x1024xf32>
    %14 = vector.broadcast %13 : vector<1x1024xf32> to vector<2x1024xf32>
    %15 = arith.select %10, %12, %14 : vector<2x1024xi1>, vector<2x1024xf32>
    %16 = tpu.iota {dimensions = array<i32: 0>} : vector<1024x16xi32>
    %17 = tpu.iota {dimensions = array<i32: 1>} : vector<1024x16xi32>
    %c64_i32 = arith.constant 64 : i32
    %18 = vector.broadcast %c64_i32 : i32 to vector<1024x16xi32>
    %19 = arith.muli %17, %18 : vector<1024x16xi32>
    %20 = arith.cmpi sge, %16, %19 : vector<1024x16xi32>
    %c64_i32_5 = arith.constant 64 : i32
    %21 = vector.broadcast %c64_i32_5 : i32 to vector<1024x16xi32>
    %22 = arith.addi %19, %21 : vector<1024x16xi32>
    %23 = arith.cmpi slt, %16, %22 : vector<1024x16xi32>
    %24 = arith.andi %20, %23 : vector<1024x16xi1>
    %25 = arith.extui %24 : vector<1024x16xi1> to vector<1024x16xi32>
    %26 = arith.sitofp %25 : vector<1024x16xi32> to vector<1024x16xf32>
    %cst_6 = arith.constant dense<0.000000e+00> : vector<2x16xf32>
    %27 = tpu.matmul %15, %26, %cst_6 {dimension_numbers = #tpu.dot_dimension_numbers<[1], [0], [0], [1], [0, 0, 1, 1], [], []>} : vector<2x1024xf32>, vector<1024x16xf32>, vector<2x16xf32> -> vector<2x16xf32>
    %cst_7 = arith.constant 7.812500e-03 : f32
    %28 = vector.broadcast %cst_7 : f32 to vector<2x16xf32>
    %29 = arith.mulf %27, %28 : vector<2x16xf32>
    %30 = vector.extract_strided_slice %29 {offsets = [0, 0], sizes = [1, 16], strides = [1, 1]} : vector<2x16xf32> to vector<1x16xf32>
    %31 = vector.extract_strided_slice %29 {offsets = [1, 0], sizes = [1, 16], strides = [1, 1]} : vector<2x16xf32> to vector<1x16xf32>
    %32 = arith.mulf %30, %30 : vector<1x16xf32>
    %33 = arith.subf %31, %32 : vector<1x16xf32>
    %c0_8 = arith.constant 0 : index
    %c0_9 = arith.constant 0 : index
    %34 = vector.load %arg4[%c0_8, %c0_9] : memref<6x32xf32, #tpu.memory_space<vmem>>, vector<1x16xf32>
    %c1 = arith.constant 1 : index
    %c0_10 = arith.constant 0 : index
    %35 = vector.load %arg4[%c1, %c0_10] : memref<6x32xf32, #tpu.memory_space<vmem>>, vector<1x16xf32>
    %cst_11 = arith.constant 9.99999974E-6 : f32
    %36 = vector.broadcast %cst_11 : f32 to vector<1x16xf32>
    %37 = arith.addf %33, %36 : vector<1x16xf32>
    %38 = math.rsqrt %37 : vector<1x16xf32>
    %39 = arith.mulf %34, %38 : vector<1x16xf32>
    %40 = arith.mulf %30, %39 : vector<1x16xf32>
    %41 = arith.subf %35, %40 : vector<1x16xf32>
    %42 = tpu.iota {dimensions = array<i32: 0>} : vector<2x16xi32>
    %c0_i32_12 = arith.constant 0 : i32
    %43 = vector.broadcast %c0_i32_12 : i32 to vector<2x16xi32>
    %44 = arith.cmpi eq, %42, %43 : vector<2x16xi32>
    %45 = vector.shape_cast %39 : vector<1x16xf32> to vector<1x16xf32>
    %46 = vector.broadcast %45 : vector<1x16xf32> to vector<2x16xf32>
    %47 = vector.shape_cast %41 : vector<1x16xf32> to vector<1x16xf32>
    %48 = vector.broadcast %47 : vector<1x16xf32> to vector<2x16xf32>
    %49 = arith.select %44, %46, %48 : vector<2x16xi1>, vector<2x16xf32>
    %50 = tpu.iota {dimensions = array<i32: 1>} : vector<16x1024xi32>
    %51 = tpu.iota {dimensions = array<i32: 0>} : vector<16x1024xi32>
    %c64_i32_13 = arith.constant 64 : i32
    %52 = vector.broadcast %c64_i32_13 : i32 to vector<16x1024xi32>
    %53 = arith.muli %51, %52 : vector<16x1024xi32>
    %54 = arith.cmpi sge, %50, %53 : vector<16x1024xi32>
    %c64_i32_14 = arith.constant 64 : i32
    %55 = vector.broadcast %c64_i32_14 : i32 to vector<16x1024xi32>
    %56 = arith.addi %53, %55 : vector<16x1024xi32>
    %57 = arith.cmpi slt, %50, %56 : vector<16x1024xi32>
    %58 = arith.andi %54, %57 : vector<16x1024xi1>
    %59 = arith.extui %58 : vector<16x1024xi1> to vector<16x1024xi32>
    %60 = arith.sitofp %59 : vector<16x1024xi32> to vector<16x1024xf32>
    %cst_15 = arith.constant dense<0.000000e+00> : vector<2x1024xf32>
    %61 = tpu.matmul %49, %60, %cst_15 {dimension_numbers = #tpu.dot_dimension_numbers<[1], [0], [0], [1], [0, 0, 1, 1], [], []>} : vector<2x16xf32>, vector<16x1024xf32>, vector<2x1024xf32> -> vector<2x1024xf32>
    %62 = vector.extract_strided_slice %61 {offsets = [0, 0], sizes = [1, 1024], strides = [1, 1]} : vector<2x1024xf32> to vector<1x1024xf32>
    %63 = vector.broadcast %62 : vector<1x1024xf32> to vector<2x1024xf32>
    %64 = arith.mulf %2, %63 : vector<2x1024xf32>
    %65 = vector.extract_strided_slice %61 {offsets = [1, 0], sizes = [1, 1024], strides = [1, 1]} : vector<2x1024xf32> to vector<1x1024xf32>
    %66 = vector.broadcast %65 : vector<1x1024xf32> to vector<2x1024xf32>
    %67 = arith.addf %64, %66 : vector<2x1024xf32>
    %cst_16 = arith.constant 0.000000e+00 : f32
    %68 = vector.broadcast %cst_16 : f32 to vector<2x1024xf32>
    %69 = arith.maximumf %67, %68 : vector<2x1024xf32>
    %70 = arith.truncf %69 : vector<2x1024xf32> to vector<2x1024xbf16>
    %c0_17 = arith.constant 0 : index
    %c0_18 = arith.constant 0 : index
    %71 = vector.load %arg2[%c0_17, %c0_18] : memref<1024x576xbf16, #tpu.memory_space<vmem>>, vector<1024x576xbf16>
    %cst_19 = arith.constant dense<0.000000e+00> : vector<2x576xf32>
    %72 = tpu.matmul %70, %71, %cst_19 {dimension_numbers = #tpu.dot_dimension_numbers<[1], [0], [0], [1], [0, 0, 1, 1], [], []>} : vector<2x1024xbf16>, vector<1024x576xbf16>, vector<2x576xf32> -> vector<2x576xf32>
    %cst_20 = arith.constant dense<0.000000e+00> : vector<576xf32>
    %73 = vector.multi_reduction <add>, %72, %cst_20 [0] : vector<2x576xf32> to vector<576xf32>
    %74 = vector.shape_cast %73 : vector<576xf32> to vector<1x576xf32>
    %75 = arith.mulf %72, %72 : vector<2x576xf32>
    %cst_21 = arith.constant dense<0.000000e+00> : vector<576xf32>
    %76 = vector.multi_reduction <add>, %75, %cst_21 [0] : vector<2x576xf32> to vector<576xf32>
    %77 = vector.shape_cast %76 : vector<576xf32> to vector<1x576xf32>
    %78 = tpu.iota {dimensions = array<i32: 0>} : vector<2x576xi32>
    %c0_i32_22 = arith.constant 0 : i32
    %79 = vector.broadcast %c0_i32_22 : i32 to vector<2x576xi32>
    %80 = arith.cmpi eq, %78, %79 : vector<2x576xi32>
    %81 = vector.shape_cast %74 : vector<1x576xf32> to vector<1x576xf32>
    %82 = vector.broadcast %81 : vector<1x576xf32> to vector<2x576xf32>
    %83 = vector.shape_cast %77 : vector<1x576xf32> to vector<1x576xf32>
    %84 = vector.broadcast %83 : vector<1x576xf32> to vector<2x576xf32>
    %85 = arith.select %80, %82, %84 : vector<2x576xi1>, vector<2x576xf32>
    %86 = tpu.iota {dimensions = array<i32: 0>} : vector<576x16xi32>
    %87 = tpu.iota {dimensions = array<i32: 1>} : vector<576x16xi32>
    %c36_i32 = arith.constant 36 : i32
    %88 = vector.broadcast %c36_i32 : i32 to vector<576x16xi32>
    %89 = arith.muli %87, %88 : vector<576x16xi32>
    %90 = arith.cmpi sge, %86, %89 : vector<576x16xi32>
    %c36_i32_23 = arith.constant 36 : i32
    %91 = vector.broadcast %c36_i32_23 : i32 to vector<576x16xi32>
    %92 = arith.addi %89, %91 : vector<576x16xi32>
    %93 = arith.cmpi slt, %86, %92 : vector<576x16xi32>
    %94 = arith.andi %90, %93 : vector<576x16xi1>
    %95 = arith.extui %94 : vector<576x16xi1> to vector<576x16xi32>
    %96 = arith.sitofp %95 : vector<576x16xi32> to vector<576x16xf32>
    %cst_24 = arith.constant dense<0.000000e+00> : vector<2x16xf32>
    %97 = tpu.matmul %85, %96, %cst_24 {dimension_numbers = #tpu.dot_dimension_numbers<[1], [0], [0], [1], [0, 0, 1, 1], [], []>} : vector<2x576xf32>, vector<576x16xf32>, vector<2x16xf32> -> vector<2x16xf32>
    %cst_25 = arith.constant 0.013888889 : f32
    %98 = vector.broadcast %cst_25 : f32 to vector<2x16xf32>
    %99 = arith.mulf %97, %98 : vector<2x16xf32>
    %100 = vector.extract_strided_slice %99 {offsets = [0, 0], sizes = [1, 16], strides = [1, 1]} : vector<2x16xf32> to vector<1x16xf32>
    %101 = vector.extract_strided_slice %99 {offsets = [1, 0], sizes = [1, 16], strides = [1, 1]} : vector<2x16xf32> to vector<1x16xf32>
    %102 = arith.mulf %100, %100 : vector<1x16xf32>
    %103 = arith.subf %101, %102 : vector<1x16xf32>
    %c2 = arith.constant 2 : index
    %c0_26 = arith.constant 0 : index
    %104 = vector.load %arg4[%c2, %c0_26] : memref<6x32xf32, #tpu.memory_space<vmem>>, vector<1x16xf32>
    %c3 = arith.constant 3 : index
    %c0_27 = arith.constant 0 : index
    %105 = vector.load %arg4[%c3, %c0_27] : memref<6x32xf32, #tpu.memory_space<vmem>>, vector<1x16xf32>
    %cst_28 = arith.constant 9.99999974E-6 : f32
    %106 = vector.broadcast %cst_28 : f32 to vector<1x16xf32>
    %107 = arith.addf %103, %106 : vector<1x16xf32>
    %108 = math.rsqrt %107 : vector<1x16xf32>
    %109 = arith.mulf %104, %108 : vector<1x16xf32>
    %110 = arith.mulf %100, %109 : vector<1x16xf32>
    %111 = arith.subf %105, %110 : vector<1x16xf32>
    %112 = tpu.iota {dimensions = array<i32: 0>} : vector<2x16xi32>
    %c0_i32_29 = arith.constant 0 : i32
    %113 = vector.broadcast %c0_i32_29 : i32 to vector<2x16xi32>
    %114 = arith.cmpi eq, %112, %113 : vector<2x16xi32>
    %115 = vector.shape_cast %109 : vector<1x16xf32> to vector<1x16xf32>
    %116 = vector.broadcast %115 : vector<1x16xf32> to vector<2x16xf32>
    %117 = vector.shape_cast %111 : vector<1x16xf32> to vector<1x16xf32>
    %118 = vector.broadcast %117 : vector<1x16xf32> to vector<2x16xf32>
    %119 = arith.select %114, %116, %118 : vector<2x16xi1>, vector<2x16xf32>
    %120 = tpu.iota {dimensions = array<i32: 1>} : vector<16x576xi32>
    %121 = tpu.iota {dimensions = array<i32: 0>} : vector<16x576xi32>
    %c36_i32_30 = arith.constant 36 : i32
    %122 = vector.broadcast %c36_i32_30 : i32 to vector<16x576xi32>
    %123 = arith.muli %121, %122 : vector<16x576xi32>
    %124 = arith.cmpi sge, %120, %123 : vector<16x576xi32>
    %c36_i32_31 = arith.constant 36 : i32
    %125 = vector.broadcast %c36_i32_31 : i32 to vector<16x576xi32>
    %126 = arith.addi %123, %125 : vector<16x576xi32>
    %127 = arith.cmpi slt, %120, %126 : vector<16x576xi32>
    %128 = arith.andi %124, %127 : vector<16x576xi1>
    %129 = arith.extui %128 : vector<16x576xi1> to vector<16x576xi32>
    %130 = arith.sitofp %129 : vector<16x576xi32> to vector<16x576xf32>
    %cst_32 = arith.constant dense<0.000000e+00> : vector<2x576xf32>
    %131 = tpu.matmul %119, %130, %cst_32 {dimension_numbers = #tpu.dot_dimension_numbers<[1], [0], [0], [1], [0, 0, 1, 1], [], []>} : vector<2x16xf32>, vector<16x576xf32>, vector<2x576xf32> -> vector<2x576xf32>
    %132 = vector.extract_strided_slice %131 {offsets = [0, 0], sizes = [1, 576], strides = [1, 1]} : vector<2x576xf32> to vector<1x576xf32>
    %133 = vector.broadcast %132 : vector<1x576xf32> to vector<2x576xf32>
    %134 = arith.mulf %72, %133 : vector<2x576xf32>
    %135 = vector.extract_strided_slice %131 {offsets = [1, 0], sizes = [1, 576], strides = [1, 1]} : vector<2x576xf32> to vector<1x576xf32>
    %136 = vector.broadcast %135 : vector<1x576xf32> to vector<2x576xf32>
    %137 = arith.addf %134, %136 : vector<2x576xf32>
    %cst_33 = arith.constant 0.000000e+00 : f32
    %138 = vector.broadcast %cst_33 : f32 to vector<2x576xf32>
    %139 = arith.maximumf %137, %138 : vector<2x576xf32>
    %140 = arith.truncf %139 : vector<2x576xf32> to vector<2x576xbf16>
    %c0_34 = arith.constant 0 : index
    %c0_35 = arith.constant 0 : index
    %141 = vector.load %arg3[%c0_34, %c0_35] : memref<576x512xbf16, #tpu.memory_space<vmem>>, vector<576x512xbf16>
    %cst_36 = arith.constant dense<0.000000e+00> : vector<2x512xf32>
    %142 = tpu.matmul %140, %141, %cst_36 {dimension_numbers = #tpu.dot_dimension_numbers<[1], [0], [0], [1], [0, 0, 1, 1], [], []>} : vector<2x576xbf16>, vector<576x512xbf16>, vector<2x512xf32> -> vector<2x512xf32>
    %cst_37 = arith.constant dense<0.000000e+00> : vector<512xf32>
    %143 = vector.multi_reduction <add>, %142, %cst_37 [0] : vector<2x512xf32> to vector<512xf32>
    %144 = vector.shape_cast %143 : vector<512xf32> to vector<1x512xf32>
    %145 = arith.mulf %142, %142 : vector<2x512xf32>
    %cst_38 = arith.constant dense<0.000000e+00> : vector<512xf32>
    %146 = vector.multi_reduction <add>, %145, %cst_38 [0] : vector<2x512xf32> to vector<512xf32>
    %147 = vector.shape_cast %146 : vector<512xf32> to vector<1x512xf32>
    %148 = tpu.iota {dimensions = array<i32: 0>} : vector<2x512xi32>
    %c0_i32_39 = arith.constant 0 : i32
    %149 = vector.broadcast %c0_i32_39 : i32 to vector<2x512xi32>
    %150 = arith.cmpi eq, %148, %149 : vector<2x512xi32>
    %151 = vector.shape_cast %144 : vector<1x512xf32> to vector<1x512xf32>
    %152 = vector.broadcast %151 : vector<1x512xf32> to vector<2x512xf32>
    %153 = vector.shape_cast %147 : vector<1x512xf32> to vector<1x512xf32>
    %154 = vector.broadcast %153 : vector<1x512xf32> to vector<2x512xf32>
    %155 = arith.select %150, %152, %154 : vector<2x512xi1>, vector<2x512xf32>
    %156 = tpu.iota {dimensions = array<i32: 0>} : vector<512x32xi32>
    %157 = tpu.iota {dimensions = array<i32: 1>} : vector<512x32xi32>
    %c16_i32 = arith.constant 16 : i32
    %158 = vector.broadcast %c16_i32 : i32 to vector<512x32xi32>
    %159 = arith.muli %157, %158 : vector<512x32xi32>
    %160 = arith.cmpi sge, %156, %159 : vector<512x32xi32>
    %c16_i32_40 = arith.constant 16 : i32
    %161 = vector.broadcast %c16_i32_40 : i32 to vector<512x32xi32>
    %162 = arith.addi %159, %161 : vector<512x32xi32>
    %163 = arith.cmpi slt, %156, %162 : vector<512x32xi32>
    %164 = arith.andi %160, %163 : vector<512x32xi1>
    %165 = arith.extui %164 : vector<512x32xi1> to vector<512x32xi32>
    %166 = arith.sitofp %165 : vector<512x32xi32> to vector<512x32xf32>
    %cst_41 = arith.constant dense<0.000000e+00> : vector<2x32xf32>
    %167 = tpu.matmul %155, %166, %cst_41 {dimension_numbers = #tpu.dot_dimension_numbers<[1], [0], [0], [1], [0, 0, 1, 1], [], []>} : vector<2x512xf32>, vector<512x32xf32>, vector<2x32xf32> -> vector<2x32xf32>
    %cst_42 = arith.constant 3.125000e-02 : f32
    %168 = vector.broadcast %cst_42 : f32 to vector<2x32xf32>
    %169 = arith.mulf %167, %168 : vector<2x32xf32>
    %170 = vector.extract_strided_slice %169 {offsets = [0, 0], sizes = [1, 32], strides = [1, 1]} : vector<2x32xf32> to vector<1x32xf32>
    %171 = vector.extract_strided_slice %169 {offsets = [1, 0], sizes = [1, 32], strides = [1, 1]} : vector<2x32xf32> to vector<1x32xf32>
    %172 = arith.mulf %170, %170 : vector<1x32xf32>
    %173 = arith.subf %171, %172 : vector<1x32xf32>
    %c4 = arith.constant 4 : index
    %c0_43 = arith.constant 0 : index
    %174 = vector.load %arg4[%c4, %c0_43] : memref<6x32xf32, #tpu.memory_space<vmem>>, vector<1x32xf32>
    %c5 = arith.constant 5 : index
    %c0_44 = arith.constant 0 : index
    %175 = vector.load %arg4[%c5, %c0_44] : memref<6x32xf32, #tpu.memory_space<vmem>>, vector<1x32xf32>
    %cst_45 = arith.constant 9.99999974E-6 : f32
    %176 = vector.broadcast %cst_45 : f32 to vector<1x32xf32>
    %177 = arith.addf %173, %176 : vector<1x32xf32>
    %178 = math.rsqrt %177 : vector<1x32xf32>
    %179 = arith.mulf %174, %178 : vector<1x32xf32>
    %180 = arith.mulf %170, %179 : vector<1x32xf32>
    %181 = arith.subf %175, %180 : vector<1x32xf32>
    %182 = tpu.iota {dimensions = array<i32: 0>} : vector<2x32xi32>
    %c0_i32_46 = arith.constant 0 : i32
    %183 = vector.broadcast %c0_i32_46 : i32 to vector<2x32xi32>
    %184 = arith.cmpi eq, %182, %183 : vector<2x32xi32>
    %185 = vector.shape_cast %179 : vector<1x32xf32> to vector<1x32xf32>
    %186 = vector.broadcast %185 : vector<1x32xf32> to vector<2x32xf32>
    %187 = vector.shape_cast %181 : vector<1x32xf32> to vector<1x32xf32>
    %188 = vector.broadcast %187 : vector<1x32xf32> to vector<2x32xf32>
    %189 = arith.select %184, %186, %188 : vector<2x32xi1>, vector<2x32xf32>
    %190 = tpu.iota {dimensions = array<i32: 1>} : vector<32x512xi32>
    %191 = tpu.iota {dimensions = array<i32: 0>} : vector<32x512xi32>
    %c16_i32_47 = arith.constant 16 : i32
    %192 = vector.broadcast %c16_i32_47 : i32 to vector<32x512xi32>
    %193 = arith.muli %191, %192 : vector<32x512xi32>
    %194 = arith.cmpi sge, %190, %193 : vector<32x512xi32>
    %c16_i32_48 = arith.constant 16 : i32
    %195 = vector.broadcast %c16_i32_48 : i32 to vector<32x512xi32>
    %196 = arith.addi %193, %195 : vector<32x512xi32>
    %197 = arith.cmpi slt, %190, %196 : vector<32x512xi32>
    %198 = arith.andi %194, %197 : vector<32x512xi1>
    %199 = arith.extui %198 : vector<32x512xi1> to vector<32x512xi32>
    %200 = arith.sitofp %199 : vector<32x512xi32> to vector<32x512xf32>
    %cst_49 = arith.constant dense<0.000000e+00> : vector<2x512xf32>
    %201 = tpu.matmul %189, %200, %cst_49 {dimension_numbers = #tpu.dot_dimension_numbers<[1], [0], [0], [1], [0, 0, 1, 1], [], []>} : vector<2x32xf32>, vector<32x512xf32>, vector<2x512xf32> -> vector<2x512xf32>
    %202 = vector.extract_strided_slice %201 {offsets = [0, 0], sizes = [1, 512], strides = [1, 1]} : vector<2x512xf32> to vector<1x512xf32>
    %203 = vector.broadcast %202 : vector<1x512xf32> to vector<2x512xf32>
    %204 = arith.mulf %142, %203 : vector<2x512xf32>
    %205 = vector.extract_strided_slice %201 {offsets = [1, 0], sizes = [1, 512], strides = [1, 1]} : vector<2x512xf32> to vector<1x512xf32>
    %206 = vector.broadcast %205 : vector<1x512xf32> to vector<2x512xf32>
    %207 = arith.addf %204, %206 : vector<2x512xf32>
    %cst_50 = arith.constant 0.000000e+00 : f32
    %208 = vector.broadcast %cst_50 : f32 to vector<2x512xf32>
    %209 = arith.maximumf %207, %208 : vector<2x512xf32>
    %c0_51 = arith.constant 0 : index
    %c0_52 = arith.constant 0 : index
    %210 = vector.load %arg5[%c0_51, %c0_52] : memref<2x512xf32, #tpu.memory_space<vmem>>, vector<2x512xf32>
    tpu.vector_store %arg5[%c0_51, %c0_52], %209 {strides = array<i32>} : memref<2x512xf32, #tpu.memory_space<vmem>>, vector<2x512xf32>,
    return
  }
}

</mosaic_0001>

<llo_original>
// kernel: context_net_forward.1
$region0: #{context_net_forward.1}
  #allocation0 [shape = 'u32[]', space=smem, size = 0x4, offset = 0x4, fixed_abs, tag = 'smem constant byte address 0x4 - core index']
  #allocation1 [shape = 'u32[144,128]{1,0:T(1,128)}', space=vmem, size = 0x12000, scoped, tag = 'internal scratch']
  %s0 = inlined_call_operand.vmem [shape: bf16[2,256], index: 0, kind: input, shape index: {}]
  %s1 = inlined_call_operand.vmem [shape: bf16[256,1024], index: 1, kind: input, shape index: {}]
  %s2 = inlined_call_operand.vmem [shape: bf16[1024,576], index: 2, kind: input, shape index: {}]
  %s3 = inlined_call_operand.vmem [shape: bf16[576,512], index: 3, kind: input, shape index: {}]
  %s4 = inlined_call_operand.vmem [shape: f32[6,32], index: 4, kind: input, shape index: {}]
  %s5 = inlined_call_operand.hbm [shape: f32[2,512], index: 5, kind: output, shape index: {}]
  %s6 = sld [smem:[#allocation0]]
  $region30: #{context_net_forward.1} parent=0
    _
  %s8 = ssub.s32 1, %s6
  %s9 = scalar_select 0, %s8, %s6
  $region1: #{context_net_forward.1} parent=0
    #allocation2 [shape = 'u8[4096]{0}', space=vmem, size = 0x1000, scoped, tag = 'output window, operand 0, single buffered']
    #allocation3 [shape = 's32[1]{0}', space=sflag, size = 0x4, scoped, tag = 'scoped memory for context_net_forward.1']
    %10 = vsyncpa [#allocation3], 0
    // Predicated region
    $region2: #{context_net_forward.1} parent=1 // pred_check
      _
    $region3: #{context_net_forward.1} parent=1 // pred_check_branch
      %12 = sbr.rel (0) target = $region5
    $region4: #{context_net_forward.1} parent=1 // pred_region
      _
    $region5: #{context_net_forward.1} parent=1 // pred_fallthru
      _
    // Predicated region
    $region6: #{context_net_forward.1} parent=1 // pred_check
      _
    $region7: #{context_net_forward.1} parent=1 // pred_check_branch
      %14 = sbr.rel (0) target = $region9
    $region8: #{context_net_forward.1} parent=1 // pred_region
      _
    $region9: #{context_net_forward.1} parent=1 // pred_fallthru
      _
    // Predicated region
    $region10: #{context_net_forward.1} parent=1 // pred_check
      _
    $region11: #{context_net_forward.1} parent=1 // pred_check_branch
      %16 = sbr.rel (0) target = $region13
    $region12: #{context_net_forward.1} parent=1 // pred_region
      _
    $region13: #{context_net_forward.1} parent=1 // pred_fallthru
      _
    // Predicated region
    $region14: #{context_net_forward.1} parent=1 // pred_check
      _
    $region15: #{context_net_forward.1} parent=1 // pred_check_branch
      %18 = sbr.rel (0) target = $region17
    $region16: #{context_net_forward.1} parent=1 // pred_region
      _
    $region17: #{context_net_forward.1} parent=1 // pred_fallthru
      _
    // Predicated region
    $region18: #{context_net_forward.1} parent=1 // pred_check
      _
    $region19: #{context_net_forward.1} parent=1 // pred_check_branch
      %20 = sbr.rel (0) target = $region21
    $region20: #{context_net_forward.1} parent=1 // pred_region
      _
    $region21: #{context_net_forward.1} parent=1 // pred_fallthru
      _
    %v22 = vld [vmem:[%s0] sm:$0x3]
    %v23 = vld [vmem:[%s1] sm:$0xff]
    %v24 = vld [vmem:[%s1 + $0x8] sm:$0xff]
    %v25 = vld [vmem:[%s1 + $0x10] sm:$0xff]
    %v26 = vld [vmem:[%s1 + $0x18] sm:$0xff]
    %v27 = vld [vmem:[%s1 + $0x20] sm:$0xff]
    %v28 = vld [vmem:[%s1 + $0x28] sm:$0xff]
    %v29 = vld [vmem:[%s1 + $0x30] sm:$0xff]
    %v30 = vld [vmem:[%s1 + $0x38] sm:$0xff]
    %v31 = vld [vmem:[%s1 + $0x40] sm:$0xff]
    %v32 = vld [vmem:[%s1 + $0x48] sm:$0xff]
    %v33 = vld [vmem:[%s1 + $0x50] sm:$0xff]
    %v34 = vld [vmem:[%s1 + $0x58] sm:$0xff]
    %v35 = vld [vmem:[%s1 + $0x60] sm:$0xff]
    %v36 = vld [vmem:[%s1 + $0x68] sm:$0xff]
    %v37 = vld [vmem:[%s1 + $0x70] sm:$0xff]
    %v38 = vld [vmem:[%s1 + $0x78] sm:$0xff]
    %v39 = vld [vmem:[%s1 + $0x80] sm:$0xff]
    %v40 = vld [vmem:[%s1 + $0x88] sm:$0xff]
    %v41 = vld [vmem:[%s1 + $0x90] sm:$0xff]
    %v42 = vld [vmem:[%s1 + $0x98] sm:$0xff]
    %v43 = vld [vmem:[%s1 + $0xa0] sm:$0xff]
    %v44 = vld [vmem:[%s1 + $0xa8] sm:$0xff]
    %v45 = vld [vmem:[%s1 + $0xb0] sm:$0xff]
    %v46 = vld [vmem:[%s1 + $0xb8] sm:$0xff]
    %v47 = vld [vmem:[%s1 + $0xc0] sm:$0xff]
    %v48 = vld [vmem:[%s1 + $0xc8] sm:$0xff]
    %v49 = vld [vmem:[%s1 + $0xd0] sm:$0xff]
    %v50 = vld [vmem:[%s1 + $0xd8] sm:$0xff]
    %v51 = vld [vmem:[%s1 + $0xe0] sm:$0xff]
    %v52 = vld [vmem:[%s1 + $0xe8] sm:$0xff]
    %v53 = vld [vmem:[%s1 + $0xf0] sm:$0xff]
    %v54 = vld [vmem:[%s1 + $0xf8] sm:$0xff]
    %v55 = vld [vmem:[%s1 + $0x100] sm:$0xff]
    %v56 = vld [vmem:[%s1 + $0x108] sm:$0xff]
    %v57 = vld [vmem:[%s1 + $0x110] sm:$0xff]
    %v58 = vld [vmem:[%s1 + $0x118] sm:$0xff]
    %v59 = vld [vmem:[%s1 + $0x120] sm:$0xff]
    %v60 = vld [vmem:[%s1 + $0x128] sm:$0xff]
    %v61 = vld [vmem:[%s1 + $0x130] sm:$0xff]
    %v62 = vld [vmem:[%s1 + $0x138] sm:$0xff]
    %v63 = vld [vmem:[%s1 + $0x140] sm:$0xff]
    %v64 = vld [vmem:[%s1 + $0x148] sm:$0xff]
    %v65 = vld [vmem:[%s1 + $0x150] sm:$0xff]
    %v66 = vld [vmem:[%s1 + $0x158] sm:$0xff]
    %v67 = vld [vmem:[%s1 + $0x160] sm:$0xff]
    %v68 = vld [vmem:[%s1 + $0x168] sm:$0xff]
    %v69 = vld [vmem:[%s1 + $0x170] sm:$0xff]
    %v70 = vld [vmem:[%s1 + $0x178] sm:$0xff]
    %v71 = vld [vmem:[%s1 + $0x180] sm:$0xff]
    %v72 = vld [vmem:[%s1 + $0x188] sm:$0xff]
    %v73 = vld [vmem:[%s1 + $0x190] sm:$0xff]
    %v74 = vld [vmem:[%s1 + $0x198] sm:$0xff]
    %v75 = vld [vmem:[%s1 + $0x1a0] sm:$0xff]
    %v76 = vld [vmem:[%s1 + $0x1a8] sm:$0xff]
    %v77 = vld [vmem:[%s1 + $0x1b0] sm:$0xff]
    %v78 = vld [vmem:[%s1 + $0x1b8] sm:$0xff]
    %v79 = vld [vmem:[%s1 + $0x1c0] sm:$0xff]
    %v80 = vld [vmem:[%s1 + $0x1c8] sm:$0xff]
    %v81 = vld [vmem:[%s1 + $0x1d0] sm:$0xff]
    %v82 = vld [vmem:[%s1 + $0x1d8] sm:$0xff]
    %v83 = vld [vmem:[%s1 + $0x1e0] sm:$0xff]
    %v84 = vld [vmem:[%s1 + $0x1e8] sm:$0xff]
    %v85 = vld [vmem:[%s1 + $0x1f0] sm:$0xff]
    %v86 = vld [vmem:[%s1 + $0x1f8] sm:$0xff]
    %v87 = vld [vmem:[%s1 + $0x200] sm:$0xff]
    %v88 = vld [vmem:[%s1 + $0x208] sm:$0xff]
    %v89 = vld [vmem:[%s1 + $0x210] sm:$0xff]
    %v90 = vld [vmem:[%s1 + $0x218] sm:$0xff]
    %v91 = vld [vmem:[%s1 + $0x220] sm:$0xff]
    %v92 = vld [vmem:[%s1 + $0x228] sm:$0xff]
    %v93 = vld [vmem:[%s1 + $0x230] sm:$0xff]
    %v94 = vld [vmem:[%s1 + $0x238] sm:$0xff]
    %v95 = vld [vmem:[%s1 + $0x240] sm:$0xff]
    %v96 = vld [vmem:[%s1 + $0x248] sm:$0xff]
    %v97 = vld [vmem:[%s1 + $0x250] sm:$0xff]
    %v98 = vld [vmem:[%s1 + $0x258] sm:$0xff]
    %v99 = vld [vmem:[%s1 + $0x260] sm:$0xff]
    %v100 = vld [vmem:[%s1 + $0x268] sm:$0xff]
    %v101 = vld [vmem:[%s1 + $0x270] sm:$0xff]
    %v102 = vld [vmem:[%s1 + $0x278] sm:$0xff]
    %v103 = vld [vmem:[%s1 + $0x280] sm:$0xff]
    %v104 = vld [vmem:[%s1 + $0x288] sm:$0xff]
    %v105 = vld [vmem:[%s1 + $0x290] sm:$0xff]
    %v106 = vld [vmem:[%s1 + $0x298] sm:$0xff]
    %v107 = vld [vmem:[%s1 + $0x2a0] sm:$0xff]
    %v108 = vld [vmem:[%s1 + $0x2a8] sm:$0xff]
    %v109 = vld [vmem:[%s1 + $0x2b0] sm:$0xff]
    %v110 = vld [vmem:[%s1 + $0x2b8] sm:$0xff]
    %v111 = vld [vmem:[%s1 + $0x2c0] sm:$0xff]
    %v112 = vld [vmem:[%s1 + $0x2c8] sm:$0xff]
    %v113 = vld [vmem:[%s1 + $0x2d0] sm:$0xff]
    %v114 = vld [vmem:[%s1 + $0x2d8] sm:$0xff]
    %v115 = vld [vmem:[%s1 + $0x2e0] sm:$0xff]
    %v116 = vld [vmem:[%s1 + $0x2e8] sm:$0xff]
    %v117 = vld [vmem:[%s1 + $0x2f0] sm:$0xff]
    %v118 = vld [vmem:[%s1 + $0x2f8] sm:$0xff]
    %v119 = vld [vmem:[%s1 + $0x300] sm:$0xff]
    %v120 = vld [vmem:[%s1 + $0x308] sm:$0xff]
    %v121 = vld [vmem:[%s1 + $0x310] sm:$0xff]
    %v122 = vld [vmem:[%s1 + $0x318] sm:$0xff]
    %v123 = vld [vmem:[%s1 + $0x320] sm:$0xff]
    %v124 = vld [vmem:[%s1 + $0x328] sm:$0xff]
    %v125 = vld [vmem:[%s1 + $0x330] sm:$0xff]
    %v126 = vld [vmem:[%s1 + $0x338] sm:$0xff]
    %v127 = vld [vmem:[%s1 + $0x340] sm:$0xff]
    %v128 = vld [vmem:[%s1 + $0x348] sm:$0xff]
    %v129 = vld [vmem:[%s1 + $0x350] sm:$0xff]
    %v130 = vld [vmem:[%s1 + $0x358] sm:$0xff]
    %v131 = vld [vmem:[%s1 + $0x360] sm:$0xff]
    %v132 = vld [vmem:[%s1 + $0x368] sm:$0xff]
    %v133 = vld [vmem:[%s1 + $0x370] sm:$0xff]
    %v134 = vld [vmem:[%s1 + $0x378] sm:$0xff]
    %v135 = vld [vmem:[%s1 + $0x380] sm:$0xff]
    %v136 = vld [vmem:[%s1 + $0x388] sm:$0xff]
    %v137 = vld [vmem:[%s1 + $0x390] sm:$0xff]
    %v138 = vld [vmem:[%s1 + $0x398] sm:$0xff]
    %v139 = vld [vmem:[%s1 + $0x3a0] sm:$0xff]
    %v140 = vld [vmem:[%s1 + $0x3a8] sm:$0xff]
    %v141 = vld [vmem:[%s1 + $0x3b0] sm:$0xff]
    %v142 = vld [vmem:[%s1 + $0x3b8] sm:$0xff]
    %v143 = vld [vmem:[%s1 + $0x3c0] sm:$0xff]
    %v144 = vld [vmem:[%s1 + $0x3c8] sm:$0xff]
    %v145 = vld [vmem:[%s1 + $0x3d0] sm:$0xff]
    %v146 = vld [vmem:[%s1 + $0x3d8] sm:$0xff]
    %v147 = vld [vmem:[%s1 + $0x3e0] sm:$0xff]
    %v148 = vld [vmem:[%s1 + $0x3e8] sm:$0xff]
    %v149 = vld [vmem:[%s1 + $0x3f0] sm:$0xff]
    %v150 = vld [vmem:[%s1 + $0x3f8] sm:$0xff]
    %v153 = vunpack.c.l.s4 1966171168
    %v154 = vunpack.c.0.s8 %v153
    %v155 = vlaneseq
    %v156 = vshrl.u32 %v155, 7
    %v157 = vsub.s32 %v154, %v156
    %v158 = vrot.slane %v22, %v157
    %v159 = vcombine.high %v158, %v158
    %v161 = vunpack.c.l.s4 1966171168
    %v162 = vunpack.c.0.s8 %v161
    %v163 = vlaneseq
    %v164 = vshrl.u32 %v163, 7
    %v165 = vsub.s32 %v162, %v164
    %v166 = vrot.slane %v158, %v165
    %v168 = vunpack.c.l.s4 1966171168
    %v169 = vunpack.c.0.s8 %v168
    %v170 = vlaneseq
    %v171 = vshrl.u32 %v170, 7
    %v172 = vsub.s32 %v169, %v171
    %v173 = vrot.slane %v159, %v172
    %v304 = vunpack.c.l.b16 %v23
    %v305 = vunpack.c.h.b16 %v23
    %v306 = vunpack.c.l.b16 %v24
    %v307 = vunpack.c.h.b16 %v24
    %v308 = vunpack.c.l.b16 %v25
    %v309 = vunpack.c.h.b16 %v25
    %v310 = vunpack.c.l.b16 %v26
    %v311 = vunpack.c.h.b16 %v26
    %v312 = vunpack.c.l.b16 %v27
    %v313 = vunpack.c.h.b16 %v27
    %v314 = vunpack.c.l.b16 %v28
    %v315 = vunpack.c.h.b16 %v28
    %v316 = vunpack.c.l.b16 %v29
    %v317 = vunpack.c.h.b16 %v29
    %v318 = vunpack.c.l.b16 %v30
    %v319 = vunpack.c.h.b16 %v30
    %v320 = vunpack.c.l.b16 %v31
    %v321 = vunpack.c.h.b16 %v31
    %v322 = vunpack.c.l.b16 %v32
    %v323 = vunpack.c.h.b16 %v32
    %v324 = vunpack.c.l.b16 %v33
    %v325 = vunpack.c.h.b16 %v33
    %v326 = vunpack.c.l.b16 %v34
    %v327 = vunpack.c.h.b16 %v34
    %v328 = vunpack.c.l.b16 %v35
    %v329 = vunpack.c.h.b16 %v35
    %v330 = vunpack.c.l.b16 %v36
    %v331 = vunpack.c.h.b16 %v36
    %v332 = vunpack.c.l.b16 %v37
    %v333 = vunpack.c.h.b16 %v37
    %v334 = vunpack.c.l.b16 %v38
    %v335 = vunpack.c.h.b16 %v38
    %v336 = vunpack.c.l.b16 %v39
    %v337 = vunpack.c.h.b16 %v39
    %v338 = vunpack.c.l.b16 %v40
    %v339 = vunpack.c.h.b16 %v40
    %v340 = vunpack.c.l.b16 %v41
    %v341 = vunpack.c.h.b16 %v41
    %v342 = vunpack.c.l.b16 %v42
    %v343 = vunpack.c.h.b16 %v42
    %v344 = vunpack.c.l.b16 %v43
    %v345 = vunpack.c.h.b16 %v43
    %v346 = vunpack.c.l.b16 %v44
    %v347 = vunpack.c.h.b16 %v44
    %v348 = vunpack.c.l.b16 %v45
    %v349 = vunpack.c.h.b16 %v45
    %v350 = vunpack.c.l.b16 %v46
    %v351 = vunpack.c.h.b16 %v46
    %v352 = vunpack.c.l.b16 %v47
    %v353 = vunpack.c.h.b16 %v47
    %v354 = vunpack.c.l.b16 %v48
    %v355 = vunpack.c.h.b16 %v48
    %v356 = vunpack.c.l.b16 %v49
    %v357 = vunpack.c.h.b16 %v49
    %v358 = vunpack.c.l.b16 %v50
    %v359 = vunpack.c.h.b16 %v50
    %v360 = vunpack.c.l.b16 %v51
    %v361 = vunpack.c.h.b16 %v51
    %v362 = vunpack.c.l.b16 %v52
    %v363 = vunpack.c.h.b16 %v52
    %v364 = vunpack.c.l.b16 %v53
    %v365 = vunpack.c.h.b16 %v53
    %v366 = vunpack.c.l.b16 %v54
    %v367 = vunpack.c.h.b16 %v54
    %v368 = vunpack.c.l.b16 %v55
    %v369 = vunpack.c.h.b16 %v55
    %v370 = vunpack.c.l.b16 %v56
    %v371 = vunpack.c.h.b16 %v56
    %v372 = vunpack.c.l.b16 %v57
    %v373 = vunpack.c.h.b16 %v57
    %v374 = vunpack.c.l.b16 %v58
    %v375 = vunpack.c.h.b16 %v58
    %v376 = vunpack.c.l.b16 %v59
    %v377 = vunpack.c.h.b16 %v59
    %v378 = vunpack.c.l.b16 %v60
    %v379 = vunpack.c.h.b16 %v60
    %v380 = vunpack.c.l.b16 %v61
    %v381 = vunpack.c.h.b16 %v61
    %v382 = vunpack.c.l.b16 %v62
    %v383 = vunpack.c.h.b16 %v62
    %v384 = vunpack.c.l.b16 %v63
    %v385 = vunpack.c.h.b16 %v63
    %v386 = vunpack.c.l.b16 %v64
    %v387 = vunpack.c.h.b16 %v64
    %v388 = vunpack.c.l.b16 %v65
    %v389 = vunpack.c.h.b16 %v65
    %v390 = vunpack.c.l.b16 %v66
    %v391 = vunpack.c.h.b16 %v66
    %v392 = vunpack.c.l.b16 %v67
    %v393 = vunpack.c.h.b16 %v67
    %v394 = vunpack.c.l.b16 %v68
    %v395 = vunpack.c.h.b16 %v68
    %v396 = vunpack.c.l.b16 %v69
    %v397 = vunpack.c.h.b16 %v69
    %v398 = vunpack.c.l.b16 %v70
    %v399 = vunpack.c.h.b16 %v70
    %v400 = vunpack.c.l.b16 %v71
    %v401 = vunpack.c.h.b16 %v71
    %v402 = vunpack.c.l.b16 %v72
    %v403 = vunpack.c.h.b16 %v72
    %v404 = vunpack.c.l.b16 %v73
    %v405 = vunpack.c.h.b16 %v73
    %v406 = vunpack.c.l.b16 %v74
    %v407 = vunpack.c.h.b16 %v74
    %v408 = vunpack.c.l.b16 %v75
    %v409 = vunpack.c.h.b16 %v75
    %v410 = vunpack.c.l.b16 %v76
    %v411 = vunpack.c.h.b16 %v76
    %v412 = vunpack.c.l.b16 %v77
    %v413 = vunpack.c.h.b16 %v77
    %v414 = vunpack.c.l.b16 %v78
    %v415 = vunpack.c.h.b16 %v78
    %v416 = vunpack.c.l.b16 %v79
    %v417 = vunpack.c.h.b16 %v79
    %v418 = vunpack.c.l.b16 %v80
    %v419 = vunpack.c.h.b16 %v80
    %v420 = vunpack.c.l.b16 %v81
    %v421 = vunpack.c.h.b16 %v81
    %v422 = vunpack.c.l.b16 %v82
    %v423 = vunpack.c.h.b16 %v82
    %v424 = vunpack.c.l.b16 %v83
    %v425 = vunpack.c.h.b16 %v83
    %v426 = vunpack.c.l.b16 %v84
    %v427 = vunpack.c.h.b16 %v84
    %v428 = vunpack.c.l.b16 %v85
    %v429 = vunpack.c.h.b16 %v85
    %v430 = vunpack.c.l.b16 %v86
    %v431 = vunpack.c.h.b16 %v86
    %v432 = vunpack.c.l.b16 %v87
    %v433 = vunpack.c.h.b16 %v87
    %v434 = vunpack.c.l.b16 %v88
    %v435 = vunpack.c.h.b16 %v88
    %v436 = vunpack.c.l.b16 %v89
    %v437 = vunpack.c.h.b16 %v89
    %v438 = vunpack.c.l.b16 %v90
    %v439 = vunpack.c.h.b16 %v90
    %v440 = vunpack.c.l.b16 %v91
    %v441 = vunpack.c.h.b16 %v91
    %v442 = vunpack.c.l.b16 %v92
    %v443 = vunpack.c.h.b16 %v92
    %v444 = vunpack.c.l.b16 %v93
    %v445 = vunpack.c.h.b16 %v93
    %v446 = vunpack.c.l.b16 %v94
    %v447 = vunpack.c.h.b16 %v94
    %v448 = vunpack.c.l.b16 %v95
    %v449 = vunpack.c.h.b16 %v95
    %v450 = vunpack.c.l.b16 %v96
    %v451 = vunpack.c.h.b16 %v96
    %v452 = vunpack.c.l.b16 %v97
    %v453 = vunpack.c.h.b16 %v97
    %v454 = vunpack.c.l.b16 %v98
    %v455 = vunpack.c.h.b16 %v98
    %v456 = vunpack.c.l.b16 %v99
    %v457 = vunpack.c.h.b16 %v99
    %v458 = vunpack.c.l.b16 %v100
    %v459 = vunpack.c.h.b16 %v100
    %v460 = vunpack.c.l.b16 %v101
    %v461 = vunpack.c.h.b16 %v101
    %v462 = vunpack.c.l.b16 %v102
    %v463 = vunpack.c.h.b16 %v102
    %v464 = vunpack.c.l.b16 %v103
    %v465 = vunpack.c.h.b16 %v103
    %v466 = vunpack.c.l.b16 %v104
    %v467 = vunpack.c.h.b16 %v104
    %v468 = vunpack.c.l.b16 %v105
    %v469 = vunpack.c.h.b16 %v105
    %v470 = vunpack.c.l.b16 %v106
    %v471 = vunpack.c.h.b16 %v106
    %v472 = vunpack.c.l.b16 %v107
    %v473 = vunpack.c.h.b16 %v107
    %v474 = vunpack.c.l.b16 %v108
    %v475 = vunpack.c.h.b16 %v108
    %v476 = vunpack.c.l.b16 %v109
    %v477 = vunpack.c.h.b16 %v109
    %v478 = vunpack.c.l.b16 %v110
    %v479 = vunpack.c.h.b16 %v110
    %v480 = vunpack.c.l.b16 %v111
    %v481 = vunpack.c.h.b16 %v111
    %v482 = vunpack.c.l.b16 %v112
    %v483 = vunpack.c.h.b16 %v112
    %v484 = vunpack.c.l.b16 %v113
    %v485 = vunpack.c.h.b16 %v113
    %v486 = vunpack.c.l.b16 %v114
    %v487 = vunpack.c.h.b16 %v114
    %v488 = vunpack.c.l.b16 %v115
    %v489 = vunpack.c.h.b16 %v115
    %v490 = vunpack.c.l.b16 %v116
    %v491 = vunpack.c.h.b16 %v116
    %v492 = vunpack.c.l.b16 %v117
    %v493 = vunpack.c.h.b16 %v117
    %v494 = vunpack.c.l.b16 %v118
    %v495 = vunpack.c.h.b16 %v118
    %v496 = vunpack.c.l.b16 %v119
    %v497 = vunpack.c.h.b16 %v119
    %v498 = vunpack.c.l.b16 %v120
    %v499 = vunpack.c.h.b16 %v120
    %v500 = vunpack.c.l.b16 %v121
    %v501 = vunpack.c.h.b16 %v121
    %v502 = vunpack.c.l.b16 %v122
    %v503 = vunpack.c.h.b16 %v122
    %v504 = vunpack.c.l.b16 %v123
    %v505 = vunpack.c.h.b16 %v123
    %v506 = vunpack.c.l.b16 %v124
    %v507 = vunpack.c.h.b16 %v124
    %v508 = vunpack.c.l.b16 %v125
    %v509 = vunpack.c.h.b16 %v125
    %v510 = vunpack.c.l.b16 %v126
    %v511 = vunpack.c.h.b16 %v126
    %v512 = vunpack.c.l.b16 %v127
    %v513 = vunpack.c.h.b16 %v127
    %v514 = vunpack.c.l.b16 %v128
    %v515 = vunpack.c.h.b16 %v128
    %v516 = vunpack.c.l.b16 %v129
    %v517 = vunpack.c.h.b16 %v129
    %v518 = vunpack.c.l.b16 %v130
    %v519 = vunpack.c.h.b16 %v130
    %v520 = vunpack.c.l.b16 %v131
    %v521 = vunpack.c.h.b16 %v131
    %v522 = vunpack.c.l.b16 %v132
    %v523 = vunpack.c.h.b16 %v132
    %v524 = vunpack.c.l.b16 %v133
    %v525 = vunpack.c.h.b16 %v133
    %v526 = vunpack.c.l.b16 %v134
    %v527 = vunpack.c.h.b16 %v134
    %v528 = vunpack.c.l.b16 %v135
    %v529 = vunpack.c.h.b16 %v135
    %v530 = vunpack.c.l.b16 %v136
    %v531 = vunpack.c.h.b16 %v136
    %v532 = vunpack.c.l.b16 %v137
    %v533 = vunpack.c.h.b16 %v137
    %v534 = vunpack.c.l.b16 %v138
    %v535 = vunpack.c.h.b16 %v138
    %v536 = vunpack.c.l.b16 %v139
    %v537 = vunpack.c.h.b16 %v139
    %v538 = vunpack.c.l.b16 %v140
    %v539 = vunpack.c.h.b16 %v140
    %v540 = vunpack.c.l.b16 %v141
    %v541 = vunpack.c.h.b16 %v141
    %v542 = vunpack.c.l.b16 %v142
    %v543 = vunpack.c.h.b16 %v142
    %v544 = vunpack.c.l.b16 %v143
    %v545 = vunpack.c.h.b16 %v143
    %v546 = vunpack.c.l.b16 %v144
    %v547 = vunpack.c.h.b16 %v144
    %v548 = vunpack.c.l.b16 %v145
    %v549 = vunpack.c.h.b16 %v145
    %v550 = vunpack.c.l.b16 %v146
    %v551 = vunpack.c.h.b16 %v146
    %v552 = vunpack.c.l.b16 %v147
    %v553 = vunpack.c.h.b16 %v147
    %v554 = vunpack.c.l.b16 %v148
    %v555 = vunpack.c.h.b16 %v148
    %v556 = vunpack.c.l.b16 %v149
    %v557 = vunpack.c.h.b16 %v149
    %v558 = vunpack.c.l.b16 %v150
    %v559 = vunpack.c.h.b16 %v150
    %v560 = vpack.c.b16 %v312, %v304
    %v561 = vpack.c.b16 %v313, %v305
    %v562 = vpack.c.b16 %v314, %v306
    %v563 = vpack.c.b16 %v315, %v307
    %v564 = vpack.c.b16 %v316, %v308
    %v565 = vpack.c.b16 %v317, %v309
    %v566 = vpack.c.b16 %v318, %v310
    %v567 = vpack.c.b16 %v319, %v311
    %v568 = vpack.c.b16 %v328, %v320
    %v569 = vpack.c.b16 %v329, %v321
    %v570 = vpack.c.b16 %v330, %v322
    %v571 = vpack.c.b16 %v331, %v323
    %v572 = vpack.c.b16 %v332, %v324
    %v573 = vpack.c.b16 %v333, %v325
    %v574 = vpack.c.b16 %v334, %v326
    %v575 = vpack.c.b16 %v335, %v327
    %v576 = vpack.c.b16 %v344, %v336
    %v577 = vpack.c.b16 %v345, %v337
    %v578 = vpack.c.b16 %v346, %v338
    %v579 = vpack.c.b16 %v347, %v339
    %v580 = vpack.c.b16 %v348, %v340
    %v581 = vpack.c.b16 %v349, %v341
    %v582 = vpack.c.b16 %v350, %v342
    %v583 = vpack.c.b16 %v351, %v343
    %v584 = vpack.c.b16 %v360, %v352
    %v585 = vpack.c.b16 %v361, %v353
    %v586 = vpack.c.b16 %v362, %v354
    %v587 = vpack.c.b16 %v363, %v355
    %v588 = vpack.c.b16 %v364, %v356
    %v589 = vpack.c.b16 %v365, %v357
    %v590 = vpack.c.b16 %v366, %v358
    %v591 = vpack.c.b16 %v367, %v359
    %v592 = vpack.c.b16 %v376, %v368
    %v593 = vpack.c.b16 %v377, %v369
    %v594 = vpack.c.b16 %v378, %v370
    %v595 = vpack.c.b16 %v379, %v371
    %v596 = vpack.c.b16 %v380, %v372
    %v597 = vpack.c.b16 %v381, %v373
    %v598 = vpack.c.b16 %v382, %v374
    %v599 = vpack.c.b16 %v383, %v375
    %v600 = vpack.c.b16 %v392, %v384
    %v601 = vpack.c.b16 %v393, %v385
    %v602 = vpack.c.b16 %v394, %v386
    %v603 = vpack.c.b16 %v395, %v387
    %v604 = vpack.c.b16 %v396, %v388
    %v605 = vpack.c.b16 %v397, %v389
    %v606 = vpack.c.b16 %v398, %v390
    %v607 = vpack.c.b16 %v399, %v391
    %v608 = vpack.c.b16 %v408, %v400
    %v609 = vpack.c.b16 %v409, %v401
    %v610 = vpack.c.b16 %v410, %v402
    %v611 = vpack.c.b16 %v411, %v403
    %v612 = vpack.c.b16 %v412, %v404
    %v613 = vpack.c.b16 %v413, %v405
    %v614 = vpack.c.b16 %v414, %v406
    %v615 = vpack.c.b16 %v415, %v407
    %v616 = vpack.c.b16 %v424, %v416
    %v617 = vpack.c.b16 %v425, %v417
    %v618 = vpack.c.b16 %v426, %v418
    %v619 = vpack.c.b16 %v427, %v419
    %v620 = vpack.c.b16 %v428, %v420
    %v621 = vpack.c.b16 %v429, %v421
    %v622 = vpack.c.b16 %v430, %v422
    %v623 = vpack.c.b16 %v431, %v423
    %v624 = vpack.c.b16 %v440, %v432
    %v625 = vpack.c.b16 %v441, %v433
    %v626 = vpack.c.b16 %v442, %v434
    %v627 = vpack.c.b16 %v443, %v435
    %v628 = vpack.c.b16 %v444, %v436
    %v629 = vpack.c.b16 %v445, %v437
    %v630 = vpack.c.b16 %v446, %v438
    %v631 = vpack.c.b16 %v447, %v439
    %v632 = vpack.c.b16 %v456, %v448
    %v633 = vpack.c.b16 %v457, %v449
    %v634 = vpack.c.b16 %v458, %v450
    %v635 = vpack.c.b16 %v459, %v451
    %v636 = vpack.c.b16 %v460, %v452
    %v637 = vpack.c.b16 %v461, %v453
    %v638 = vpack.c.b16 %v462, %v454
    %v639 = vpack.c.b16 %v463, %v455
    %v640 = vpack.c.b16 %v472, %v464
    %v641 = vpack.c.b16 %v473, %v465
    %v642 = vpack.c.b16 %v474, %v466
    %v643 = vpack.c.b16 %v475, %v467
    %v644 = vpack.c.b16 %v476, %v468
    %v645 = vpack.c.b16 %v477, %v469
    %v646 = vpack.c.b16 %v478, %v470
    %v647 = vpack.c.b16 %v479, %v471
    %v648 = vpack.c.b16 %v488, %v480
    %v649 = vpack.c.b16 %v489, %v481
    %v650 = vpack.c.b16 %v490, %v482
    %v651 = vpack.c.b16 %v491, %v483
    %v652 = vpack.c.b16 %v492, %v484
    %v653 = vpack.c.b16 %v493, %v485
    %v654 = vpack.c.b16 %v494, %v486
    %v655 = vpack.c.b16 %v495, %v487
    %v656 = vpack.c.b16 %v504, %v496
    %v657 = vpack.c.b16 %v505, %v497
    %v658 = vpack.c.b16 %v506, %v498
    %v659 = vpack.c.b16 %v507, %v499
    %v660 = vpack.c.b16 %v508, %v500
    %v661 = vpack.c.b16 %v509, %v501
    %v662 = vpack.c.b16 %v510, %v502
    %v663 = vpack.c.b16 %v511, %v503
    %v664 = vpack.c.b16 %v520, %v512
    %v665 = vpack.c.b16 %v521, %v513
    %v666 = vpack.c.b16 %v522, %v514
    %v667 = vpack.c.b16 %v523, %v515
    %v668 = vpack.c.b16 %v524, %v516
    %v669 = vpack.c.b16 %v525, %v517
    %v670 = vpack.c.b16 %v526, %v518
    %v671 = vpack.c.b16 %v527, %v519
    %v672 = vpack.c.b16 %v536, %v528
    %v673 = vpack.c.b16 %v537, %v529
    %v674 = vpack.c.b16 %v538, %v530
    %v675 = vpack.c.b16 %v539, %v531
    %v676 = vpack.c.b16 %v540, %v532
    %v677 = vpack.c.b16 %v541, %v533
    %v678 = vpack.c.b16 %v542, %v534
    %v679 = vpack.c.b16 %v543, %v535
    %v680 = vpack.c.b16 %v552, %v544
    %v681 = vpack.c.b16 %v553, %v545
    %v682 = vpack.c.b16 %v554, %v546
    %v683 = vpack.c.b16 %v555, %v547
    %v684 = vpack.c.b16 %v556, %v548
    %v685 = vpack.c.b16 %v557, %v549
    %v686 = vpack.c.b16 %v558, %v550
    %v687 = vpack.c.b16 %v559, %v551
    %816 = vmatprep.subr.bf16.mxu0 %v561
    %817 = vmatpush1.bf16.msra.mxu0 %v560
    %818 = vmatprep.subr.bf16.mxu0 %v569
    %819 = vmatpush1.bf16.msra.mxu0 %v568
    %820 = vmatprep.subr.bf16.mxu0 %v577
    %821 = vmatpush1.bf16.msra.mxu0 %v576
    %822 = vmatprep.subr.bf16.mxu0 %v585
    %823 = vmatpush1.bf16.msra.mxu0 %v584
    %824 = vmatprep.subr.bf16.mxu0 %v593
    %825 = vmatpush1.bf16.msra.mxu0 %v592
    %826 = vmatprep.subr.bf16.mxu0 %v601
    %827 = vmatpush1.bf16.msra.mxu0 %v600
    %828 = vmatprep.subr.bf16.mxu0 %v609
    %829 = vmatpush1.bf16.msra.mxu0 %v608
    %830 = vmatprep.subr.bf16.mxu0 %v617
    %831 = vmatpush1.bf16.msra.mxu0 %v616
    %832 = vmatprep.subr.bf16.mxu0 %v625
    %833 = vmatpush1.bf16.msra.mxu0 %v624
    %834 = vmatprep.subr.bf16.mxu0 %v633
    %835 = vmatpush1.bf16.msra.mxu0 %v632
    %836 = vmatprep.subr.bf16.mxu0 %v641
    %837 = vmatpush1.bf16.msra.mxu0 %v640
    %838 = vmatprep.subr.bf16.mxu0 %v649
    %839 = vmatpush1.bf16.msra.mxu0 %v648
    %840 = vmatprep.subr.bf16.mxu0 %v657
    %841 = vmatpush1.bf16.msra.mxu0 %v656
    %842 = vmatprep.subr.bf16.mxu0 %v665
    %843 = vmatpush1.bf16.msra.mxu0 %v664
    %844 = vmatprep.subr.bf16.mxu0 %v673
    %845 = vmatpush1.bf16.msra.mxu0 %v672
    %846 = vmatprep.subr.bf16.mxu0 %v681
    %847 = vmatpush1.bf16.msra.mxu0 %v680
    %848 = vmatprep.mubr.bf16.mxu0 %v173
    %849 = vmatmul.mubr.bf16.gmra.mrb[0].mxu0 %v166
    %v850 = vpop.f32.mrb[0].mxu0
    %v851 = vadd.f32 0.0, %v850
    %v852 = vpop.f32.mrb[0].mxu0
    %v853 = vadd.f32 0.0, %v852
    %v854 = vpop.f32.mrb[0].mxu0
    %v855 = vpop.f32.mrb[0].mxu0
    %856 = vdwg.mxu0
    %857 = vmatprep.subr.bf16.mxu0 %v563
    %858 = vmatpush1.bf16.msra.mxu0 %v562
    %859 = vmatprep.subr.bf16.mxu0 %v571
    %860 = vmatpush1.bf16.msra.mxu0 %v570
    %861 = vmatprep.subr.bf16.mxu0 %v579
    %862 = vmatpush1.bf16.msra.mxu0 %v578
    %863 = vmatprep.subr.bf16.mxu0 %v587
    %864 = vmatpush1.bf16.msra.mxu0 %v586
    %865 = vmatprep.subr.bf16.mxu0 %v595
    %866 = vmatpush1.bf16.msra.mxu0 %v594
    %867 = vmatprep.subr.bf16.mxu0 %v603
    %868 = vmatpush1.bf16.msra.mxu0 %v602
    %869 = vmatprep.subr.bf16.mxu0 %v611
    %870 = vmatpush1.bf16.msra.mxu0 %v610
    %871 = vmatprep.subr.bf16.mxu0 %v619
    %872 = vmatpush1.bf16.msra.mxu0 %v618
    %873 = vmatprep.subr.bf16.mxu0 %v627
    %874 = vmatpush1.bf16.msra.mxu0 %v626
    %875 = vmatprep.subr.bf16.mxu0 %v635
    %876 = vmatpush1.bf16.msra.mxu0 %v634
    %877 = vmatprep.subr.bf16.mxu0 %v643
    %878 = vmatpush1.bf16.msra.mxu0 %v642
    %879 = vmatprep.subr.bf16.mxu0 %v651
    %880 = vmatpush1.bf16.msra.mxu0 %v650
    %881 = vmatprep.subr.bf16.mxu0 %v659
    %882 = vmatpush1.bf16.msra.mxu0 %v658
    %883 = vmatprep.subr.bf16.mxu0 %v667
    %884 = vmatpush1.bf16.msra.mxu0 %v666
    %885 = vmatprep.subr.bf16.mxu0 %v675
    %886 = vmatpush1.bf16.msra.mxu0 %v674
    %887 = vmatprep.subr.bf16.mxu0 %v683
    %888 = vmatpush1.bf16.msra.mxu0 %v682
    %889 = vmatprep.mubr.bf16.mxu0 %v173
    %890 = vmatmul.mubr.bf16.gmra.mrb[0].mxu0 %v166
    %v891 = vpop.f32.mrb[0].mxu0
    %v892 = vadd.f32 0.0, %v891
    %v893 = vpop.f32.mrb[0].mxu0
    %v894 = vadd.f32 0.0, %v893
    %v895 = vpop.f32.mrb[0].mxu0
    %v896 = vpop.f32.mrb[0].mxu0
    %897 = vdwg.mxu0
    %898 = vmatprep.subr.bf16.mxu0 %v565
    %899 = vmatpush1.bf16.msra.mxu0 %v564
    %900 = vmatprep.subr.bf16.mxu0 %v573
    %901 = vmatpush1.bf16.msra.mxu0 %v572
    %902 = vmatprep.subr.bf16.mxu0 %v581
    %903 = vmatpush1.bf16.msra.mxu0 %v580
    %904 = vmatprep.subr.bf16.mxu0 %v589
    %905 = vmatpush1.bf16.msra.mxu0 %v588
    %906 = vmatprep.subr.bf16.mxu0 %v597
    %907 = vmatpush1.bf16.msra.mxu0 %v596
    %908 = vmatprep.subr.bf16.mxu0 %v605
    %909 = vmatpush1.bf16.msra.mxu0 %v604
    %910 = vmatprep.subr.bf16.mxu0 %v613
    %911 = vmatpush1.bf16.msra.mxu0 %v612
    %912 = vmatprep.subr.bf16.mxu0 %v621
    %913 = vmatpush1.bf16.msra.mxu0 %v620
    %914 = vmatprep.subr.bf16.mxu0 %v629
    %915 = vmatpush1.bf16.msra.mxu0 %v628
    %916 = vmatprep.subr.bf16.mxu0 %v637
    %917 = vmatpush1.bf16.msra.mxu0 %v636
    %918 = vmatprep.subr.bf16.mxu0 %v645
    %919 = vmatpush1.bf16.msra.mxu0 %v644
    %920 = vmatprep.subr.bf16.mxu0 %v653
    %921 = vmatpush1.bf16.msra.mxu0 %v652
    %922 = vmatprep.subr.bf16.mxu0 %v661
    %923 = vmatpush1.bf16.msra.mxu0 %v660
    %924 = vmatprep.subr.bf16.mxu0 %v669
    %925 = vmatpush1.bf16.msra.mxu0 %v668
    %926 = vmatprep.subr.bf16.mxu0 %v677
    %927 = vmatpush1.bf16.msra.mxu0 %v676
    %928 = vmatprep.subr.bf16.mxu0 %v685
    %929 = vmatpush1.bf16.msra.mxu0 %v684
    %930 = vmatprep.mubr.bf16.mxu0 %v173
    %931 = vmatmul.mubr.bf16.gmra.mrb[0].mxu0 %v166
    %v932 = vpop.f32.mrb[0].mxu0
    %v933 = vadd.f32 0.0, %v932
    %v934 = vpop.f32.mrb[0].mxu0
    %v935 = vadd.f32 0.0, %v934
    %v936 = vpop.f32.mrb[0].mxu0
    %v937 = vpop.f32.mrb[0].mxu0
    %938 = vdwg.mxu0
    %939 = vmatprep.subr.bf16.mxu0 %v567
    %940 = vmatpush1.bf16.msra.mxu0 %v566
    %941 = vmatprep.subr.bf16.mxu0 %v575
    %942 = vmatpush1.bf16.msra.mxu0 %v574
    %943 = vmatprep.subr.bf16.mxu0 %v583
    %944 = vmatpush1.bf16.msra.mxu0 %v582
    %945 = vmatprep.subr.bf16.mxu0 %v591
    %946 = vmatpush1.bf16.msra.mxu0 %v590
    %947 = vmatprep.subr.bf16.mxu0 %v599
    %948 = vmatpush1.bf16.msra.mxu0 %v598
    %949 = vmatprep.subr.bf16.mxu0 %v607
    %950 = vmatpush1.bf16.msra.mxu0 %v606
    %951 = vmatprep.subr.bf16.mxu0 %v615
    %952 = vmatpush1.bf16.msra.mxu0 %v614
    %953 = vmatprep.subr.bf16.mxu0 %v623
    %954 = vmatpush1.bf16.msra.mxu0 %v622
    %955 = vmatprep.subr.bf16.mxu0 %v631
    %956 = vmatpush1.bf16.msra.mxu0 %v630
    %957 = vmatprep.subr.bf16.mxu0 %v639
    %958 = vmatpush1.bf16.msra.mxu0 %v638
    %959 = vmatprep.subr.bf16.mxu0 %v647
    %960 = vmatpush1.bf16.msra.mxu0 %v646
    %961 = vmatprep.subr.bf16.mxu0 %v655
    %962 = vmatpush1.bf16.msra.mxu0 %v654
    %963 = vmatprep.subr.bf16.mxu0 %v663
    %964 = vmatpush1.bf16.msra.mxu0 %v662
    %965 = vmatprep.subr.bf16.mxu0 %v671
    %966 = vmatpush1.bf16.msra.mxu0 %v670
    %967 = vmatprep.subr.bf16.mxu0 %v679
    %968 = vmatpush1.bf16.msra.mxu0 %v678
    %969 = vmatprep.subr.bf16.mxu0 %v687
    %970 = vmatpush1.bf16.msra.mxu0 %v686
    %971 = vmatprep.mubr.bf16.mxu0 %v173
    %972 = vmatmul.mubr.bf16.gmra.mrb[0].mxu0 %v166
    %v973 = vpop.f32.mrb[0].mxu0
    %v974 = vadd.f32 0.0, %v973
    %v975 = vpop.f32.mrb[0].mxu0
    %v976 = vadd.f32 0.0, %v975
    %v977 = vpop.f32.mrb[0].mxu0
    %v978 = vpop.f32.mrb[0].mxu0
    %979 = vdwg.mxu0
    %vm980 = vcmask 1041408
    %v981 = vsel %vm980, %v851, 0.0
    %v982 = vrot.slane %v981, 4
    %v983 = vadd.f32 %v981, %v982
    %v984 = vrot.slane %v983, 2
    %v985 = vadd.f32 %v983, %v984
    %v986 = vrot.slane %v985, 1
    %v987 = vadd.f32 %v985, %v986
    %v988 = vsel %vm980, %v853, 0.0
    %v989 = vrot.slane %v988, 4
    %v990 = vadd.f32 %v988, %v989
    %v991 = vrot.slane %v990, 2
    %v992 = vadd.f32 %v990, %v991
    %v993 = vrot.slane %v992, 1
    %v994 = vadd.f32 %v992, %v993
    %v995 = vsel %vm980, %v892, 0.0
    %v996 = vrot.slane %v995, 4
    %v997 = vadd.f32 %v995, %v996
    %v998 = vrot.slane %v997, 2
    %v999 = vadd.f32 %v997, %v998
    %v1000 = vrot.slane %v999, 1
    %v1001 = vadd.f32 %v999, %v1000
    %v1002 = vsel %vm980, %v894, 0.0
    %v1003 = vrot.slane %v1002, 4
    %v1004 = vadd.f32 %v1002, %v1003
    %v1005 = vrot.slane %v1004, 2
    %v1006 = vadd.f32 %v1004, %v1005
    %v1007 = vrot.slane %v1006, 1
    %v1008 = vadd.f32 %v1006, %v1007
    %v1009 = vsel %vm980, %v933, 0.0
    %v1010 = vrot.slane %v1009, 4
    %v1011 = vadd.f32 %v1009, %v1010
    %v1012 = vrot.slane %v1011, 2
    %v1013 = vadd.f32 %v1011, %v1012
    %v1014 = vrot.slane %v1013, 1
    %v1015 = vadd.f32 %v1013, %v1014
    %v1016 = vsel %vm980, %v935, 0.0
    %v1017 = vrot.slane %v1016, 4
    %v1018 = vadd.f32 %v1016, %v1017
    %v1019 = vrot.slane %v1018, 2
    %v1020 = vadd.f32 %v1018, %v1019
    %v1021 = vrot.slane %v1020, 1
    %v1022 = vadd.f32 %v1020, %v1021
    %v1023 = vsel %vm980, %v974, 0.0
    %v1024 = vrot.slane %v1023, 4
    %v1025 = vadd.f32 %v1023, %v1024
    %v1026 = vrot.slane %v1025, 2
    %v1027 = vadd.f32 %v1025, %v1026
    %v1028 = vrot.slane %v1027, 1
    %v1029 = vadd.f32 %v1027, %v1028
    %v1030 = vsel %vm980, %v976, 0.0
    %v1031 = vrot.slane %v1030, 4
    %v1032 = vadd.f32 %v1030, %v1031
    %v1033 = vrot.slane %v1032, 2
    %v1034 = vadd.f32 %v1032, %v1033
    %v1035 = vrot.slane %v1034, 1
    %v1036 = vadd.f32 %v1034, %v1035
    %v1037 = vmul.f32 %v851, %v851
    %v1038 = vmul.f32 %v853, %v853
    %v1039 = vmul.f32 %v892, %v892
    %v1040 = vmul.f32 %v894, %v894
    %v1041 = vmul.f32 %v933, %v933
    %v1042 = vmul.f32 %v935, %v935
    %v1043 = vmul.f32 %v974, %v974
    %v1044 = vmul.f32 %v976, %v976
    %v1045 = vsel %vm980, %v1037, 0.0
    %v1046 = vrot.slane %v1045, 4
    %v1047 = vadd.f32 %v1045, %v1046
    %v1048 = vrot.slane %v1047, 2
    %v1049 = vadd.f32 %v1047, %v1048
    %v1050 = vrot.slane %v1049, 1
    %v1051 = vadd.f32 %v1049, %v1050
    %v1052 = vsel %vm980, %v1038, 0.0
    %v1053 = vrot.slane %v1052, 4
    %v1054 = vadd.f32 %v1052, %v1053
    %v1055 = vrot.slane %v1054, 2
    %v1056 = vadd.f32 %v1054, %v1055
    %v1057 = vrot.slane %v1056, 1
    %v1058 = vadd.f32 %v1056, %v1057
    %v1059 = vsel %vm980, %v1039, 0.0
    %v1060 = vrot.slane %v1059, 4
    %v1061 = vadd.f32 %v1059, %v1060
    %v1062 = vrot.slane %v1061, 2
    %v1063 = vadd.f32 %v1061, %v1062
    %v1064 = vrot.slane %v1063, 1
    %v1065 = vadd.f32 %v1063, %v1064
    %v1066 = vsel %vm980, %v1040, 0.0
    %v1067 = vrot.slane %v1066, 4
    %v1068 = vadd.f32 %v1066, %v1067
    %v1069 = vrot.slane %v1068, 2
    %v1070 = vadd.f32 %v1068, %v1069
    %v1071 = vrot.slane %v1070, 1
    %v1072 = vadd.f32 %v1070, %v1071
    %v1073 = vsel %vm980, %v1041, 0.0
    %v1074 = vrot.slane %v1073, 4
    %v1075 = vadd.f32 %v1073, %v1074
    %v1076 = vrot.slane %v1075, 2
    %v1077 = vadd.f32 %v1075, %v1076
    %v1078 = vrot.slane %v1077, 1
    %v1079 = vadd.f32 %v1077, %v1078
    %v1080 = vsel %vm980, %v1042, 0.0
    %v1081 = vrot.slane %v1080, 4
    %v1082 = vadd.f32 %v1080, %v1081
    %v1083 = vrot.slane %v1082, 2
    %v1084 = vadd.f32 %v1082, %v1083
    %v1085 = vrot.slane %v1084, 1
    %v1086 = vadd.f32 %v1084, %v1085
    %v1087 = vsel %vm980, %v1043, 0.0
    %v1088 = vrot.slane %v1087, 4
    %v1089 = vadd.f32 %v1087, %v1088
    %v1090 = vrot.slane %v1089, 2
    %v1091 = vadd.f32 %v1089, %v1090
    %v1092 = vrot.slane %v1091, 1
    %v1093 = vadd.f32 %v1091, %v1092
    %v1094 = vsel %vm980, %v1044, 0.0
    %v1095 = vrot.slane %v1094, 4
    %v1096 = vadd.f32 %v1094, %v1095
    %v1097 = vrot.slane %v1096, 2
    %v1098 = vadd.f32 %v1096, %v1097
    %v1099 = vrot.slane %v1098, 1
    %v1100 = vadd.f32 %v1098, %v1099
    %v1101 = vlaneseq
    %v1102 = vshrl.u32 %v1101, 7
    %vm1103 = vcmp.eq.s32.totalorder %v1102, 0
    %v1104 = vsel %vm1103, %v987, %v1051
    %v1105 = vsel %vm1103, %v994, %v1058
    %v1106 = vsel %vm1103, %v1001, %v1065
    %v1107 = vsel %vm1103, %v1008, %v1072
    %v1108 = vsel %vm1103, %v1015, %v1079
    %v1109 = vsel %vm1103, %v1022, %v1086
    %v1110 = vsel %vm1103, %v1029, %v1093
    %v1111 = vsel %vm1103, %v1036, %v1100
    %v1112 = vadd.s32 %v1102, 8
    %v1113 = vadd.s32 %v1102, 16
    %v1114 = vadd.s32 %v1102, 24
    %v1115 = vadd.s32 %v1102, 32
    %v1116 = vadd.s32 %v1102, 40
    %v1117 = vadd.s32 %v1102, 48
    %v1118 = vadd.s32 %v1102, 56
    %v1119 = vadd.s32 %v1102, 64
    %v1120 = vadd.s32 %v1102, 72
    %v1121 = vadd.s32 %v1102, 80
    %v1122 = vadd.s32 %v1102, 88
    %v1123 = vadd.s32 %v1102, 96
    %v1124 = vadd.s32 %v1102, 104
    %v1125 = vadd.s32 %v1102, 112
    %v1126 = vadd.s32 %v1102, 120
    %v1127 = vadd.s32 %v1102, 128
    %v1128 = vadd.s32 %v1102, 136
    %v1129 = vadd.s32 %v1102, 144
    %v1130 = vadd.s32 %v1102, 152
    %v1131 = vadd.s32 %v1102, 160
    %v1132 = vadd.s32 %v1102, 168
    %v1133 = vadd.s32 %v1102, 176
    %v1134 = vadd.s32 %v1102, 184
    %v1135 = vadd.s32 %v1102, 192
    %v1136 = vadd.s32 %v1102, 200
    %v1137 = vadd.s32 %v1102, 208
    %v1138 = vadd.s32 %v1102, 216
    %v1139 = vadd.s32 %v1102, 224
    %v1140 = vadd.s32 %v1102, 232
    %v1141 = vadd.s32 %v1102, 240
    %v1142 = vadd.s32 %v1102, 248
    %v1143 = vadd.s32 %v1102, 256
    %v1144 = vadd.s32 %v1102, 264
    %v1145 = vadd.s32 %v1102, 272
    %v1146 = vadd.s32 %v1102, 280
    %v1147 = vadd.s32 %v1102, 288
    %v1148 = vadd.s32 %v1102, 296
    %v1149 = vadd.s32 %v1102, 304
    %v1150 = vadd.s32 %v1102, 312
    %v1151 = vadd.s32 %v1102, 320
    %v1152 = vadd.s32 %v1102, 328
    %v1153 = vadd.s32 %v1102, 336
    %v1154 = vadd.s32 %v1102, 344
    %v1155 = vadd.s32 %v1102, 352
    %v1156 = vadd.s32 %v1102, 360
    %v1157 = vadd.s32 %v1102, 368
    %v1158 = vadd.s32 %v1102, 376
    %v1159 = vadd.s32 %v1102, 384
    %v1160 = vadd.s32 %v1102, 392
    %v1161 = vadd.s32 %v1102, 400
    %v1162 = vadd.s32 %v1102, 408
    %v1163 = vadd.s32 %v1102, 416
    %v1164 = vadd.s32 %v1102, 424
    %v1165 = vadd.s32 %v1102, 432
    %v1166 = vadd.s32 %v1102, 440
    %v1167 = vadd.s32 %v1102, 448
    %v1168 = vadd.s32 %v1102, 456
    %v1169 = vadd.s32 %v1102, 464
    %v1170 = vadd.s32 %v1102, 472
    %v1171 = vadd.s32 %v1102, 480
    %v1172 = vadd.s32 %v1102, 488
    %v1173 = vadd.s32 %v1102, 496
    %v1174 = vadd.s32 %v1102, 504
    %v1175 = vadd.s32 %v1102, 512
    %v1176 = vadd.s32 %v1102, 520
    %v1177 = vadd.s32 %v1102, 528
    %v1178 = vadd.s32 %v1102, 536
    %v1179 = vadd.s32 %v1102, 544
    %v1180 = vadd.s32 %v1102, 552
    %v1181 = vadd.s32 %v1102, 560
    %v1182 = vadd.s32 %v1102, 568
    %v1183 = vadd.s32 %v1102, 576
    %v1184 = vadd.s32 %v1102, 584
    %v1185 = vadd.s32 %v1102, 592
    %v1186 = vadd.s32 %v1102, 600
    %v1187 = vadd.s32 %v1102, 608
    %v1188 = vadd.s32 %v1102, 616
    %v1189 = vadd.s32 %v1102, 624
    %v1190 = vadd.s32 %v1102, 632
    %v1191 = vadd.s32 %v1102, 640
    %v1192 = vadd.s32 %v1102, 648
    %v1193 = vadd.s32 %v1102, 656
    %v1194 = vadd.s32 %v1102, 664
    %v1195 = vadd.s32 %v1102, 672
    %v1196 = vadd.s32 %v1102, 680
    %v1197 = vadd.s32 %v1102, 688
    %v1198 = vadd.s32 %v1102, 696
    %v1199 = vadd.s32 %v1102, 704
    %v1200 = vadd.s32 %v1102, 712
    %v1201 = vadd.s32 %v1102, 720
    %v1202 = vadd.s32 %v1102, 728
    %v1203 = vadd.s32 %v1102, 736
    %v1204 = vadd.s32 %v1102, 744
    %v1205 = vadd.s32 %v1102, 752
    %v1206 = vadd.s32 %v1102, 760
    %v1207 = vadd.s32 %v1102, 768
    %v1208 = vadd.s32 %v1102, 776
    %v1209 = vadd.s32 %v1102, 784
    %v1210 = vadd.s32 %v1102, 792
    %v1211 = vadd.s32 %v1102, 800
    %v1212 = vadd.s32 %v1102, 808
    %v1213 = vadd.s32 %v1102, 816
    %v1214 = vadd.s32 %v1102, 824
    %v1215 = vadd.s32 %v1102, 832
    %v1216 = vadd.s32 %v1102, 840
    %v1217 = vadd.s32 %v1102, 848
    %v1218 = vadd.s32 %v1102, 856
    %v1219 = vadd.s32 %v1102, 864
    %v1220 = vadd.s32 %v1102, 872
    %v1221 = vadd.s32 %v1102, 880
    %v1222 = vadd.s32 %v1102, 888
    %v1223 = vadd.s32 %v1102, 896
    %v1224 = vadd.s32 %v1102, 904
    %v1225 = vadd.s32 %v1102, 912
    %v1226 = vadd.s32 %v1102, 920
    %v1227 = vadd.s32 %v1102, 928
    %v1228 = vadd.s32 %v1102, 936
    %v1229 = vadd.s32 %v1102, 944
    %v1230 = vadd.s32 %v1102, 952
    %v1231 = vadd.s32 %v1102, 960
    %v1232 = vadd.s32 %v1102, 968
    %v1233 = vadd.s32 %v1102, 976
    %v1234 = vadd.s32 %v1102, 984
    %v1235 = vadd.s32 %v1102, 992
    %v1236 = vadd.s32 %v1102, 1000
    %v1237 = vadd.s32 %v1102, 1008
    %v1238 = vadd.s32 %v1102, 1016
    %v1239 = vlaneseq
    %v1240 = vand.u32 %v1239, 127
    %v1241 = vmul.u32 %v1240, 64
    %vm1242 = vcmp.ge.s32.totalorder %v1102, %v1241
    %vm1243 = vcmp.ge.s32.totalorder %v1112, %v1241
    %vm1244 = vcmp.ge.s32.totalorder %v1113, %v1241
    %vm1245 = vcmp.ge.s32.totalorder %v1114, %v1241
    %vm1246 = vcmp.ge.s32.totalorder %v1115, %v1241
    %vm1247 = vcmp.ge.s32.totalorder %v1116, %v1241
    %vm1248 = vcmp.ge.s32.totalorder %v1117, %v1241
    %vm1249 = vcmp.ge.s32.totalorder %v1118, %v1241
    %vm1250 = vcmp.ge.s32.totalorder %v1119, %v1241
    %vm1251 = vcmp.ge.s32.totalorder %v1120, %v1241
    %vm1252 = vcmp.ge.s32.totalorder %v1121, %v1241
    %vm1253 = vcmp.ge.s32.totalorder %v1122, %v1241
    %vm1254 = vcmp.ge.s32.totalorder %v1123, %v1241
    %vm1255 = vcmp.ge.s32.totalorder %v1124, %v1241
    %vm1256 = vcmp.ge.s32.totalorder %v1125, %v1241
    %vm1257 = vcmp.ge.s32.totalorder %v1126, %v1241
    %vm1258 = vcmp.ge.s32.totalorder %v1127, %v1241
    %vm1259 = vcmp.ge.s32.totalorder %v1128, %v1241
    %vm1260 = vcmp.ge.s32.totalorder %v1129, %v1241
    %vm1261 = vcmp.ge.s32.totalorder %v1130, %v1241
    %vm1262 = vcmp.ge.s32.totalorder %v1131, %v1241
    %vm1263 = vcmp.ge.s32.totalorder %v1132, %v1241
    %vm1264 = vcmp.ge.s32.totalorder %v1133, %v1241
    %vm1265 = vcmp.ge.s32.totalorder %v1134, %v1241
    %vm1266 = vcmp.ge.s32.totalorder %v1135, %v1241
    %vm1267 = vcmp.ge.s32.totalorder %v1136, %v1241
    %vm1268 = vcmp.ge.s32.totalorder %v1137, %v1241
    %vm1269 = vcmp.ge.s32.totalorder %v1138, %v1241
    %vm1270 = vcmp.ge.s32.totalorder %v1139, %v1241
    %vm1271 = vcmp.ge.s32.totalorder %v1140, %v1241
    %vm1272 = vcmp.ge.s32.totalorder %v1141, %v1241
    %vm1273 = vcmp.ge.s32.totalorder %v1142, %v1241
    %vm1274 = vcmp.ge.s32.totalorder %v1143, %v1241
    %vm1275 = vcmp.ge.s32.totalorder %v1144, %v1241
    %vm1276 = vcmp.ge.s32.totalorder %v1145, %v1241
    %vm1277 = vcmp.ge.s32.totalorder %v1146, %v1241
    %vm1278 = vcmp.ge.s32.totalorder %v1147, %v1241
    %vm1279 = vcmp.ge.s32.totalorder %v1148, %v1241
    %vm1280 = vcmp.ge.s32.totalorder %v1149, %v1241
    %vm1281 = vcmp.ge.s32.totalorder %v1150, %v1241
    %vm1282 = vcmp.ge.s32.totalorder %v1151, %v1241
    %vm1283 = vcmp.ge.s32.totalorder %v1152, %v1241
    %vm1284 = vcmp.ge.s32.totalorder %v1153, %v1241
    %vm1285 = vcmp.ge.s32.totalorder %v1154, %v1241
    %vm1286 = vcmp.ge.s32.totalorder %v1155, %v1241
    %vm1287 = vcmp.ge.s32.totalorder %v1156, %v1241
    %vm1288 = vcmp.ge.s32.totalorder %v1157, %v1241
    %vm1289 = vcmp.ge.s32.totalorder %v1158, %v1241
    %vm1290 = vcmp.ge.s32.totalorder %v1159, %v1241
    %vm1291 = vcmp.ge.s32.totalorder %v1160, %v1241
    %vm1292 = vcmp.ge.s32.totalorder %v1161, %v1241
    %vm1293 = vcmp.ge.s32.totalorder %v1162, %v1241
    %vm1294 = vcmp.ge.s32.totalorder %v1163, %v1241
    %vm1295 = vcmp.ge.s32.totalorder %v1164, %v1241
    %vm1296 = vcmp.ge.s32.totalorder %v1165, %v1241
    %vm1297 = vcmp.ge.s32.totalorder %v1166, %v1241
    %vm1298 = vcmp.ge.s32.totalorder %v1167, %v1241
    %vm1299 = vcmp.ge.s32.totalorder %v1168, %v1241
    %vm1300 = vcmp.ge.s32.totalorder %v1169, %v1241
    %vm1301 = vcmp.ge.s32.totalorder %v1170, %v1241
    %vm1302 = vcmp.ge.s32.totalorder %v1171, %v1241
    %vm1303 = vcmp.ge.s32.totalorder %v1172, %v1241
    %vm1304 = vcmp.ge.s32.totalorder %v1173, %v1241
    %vm1305 = vcmp.ge.s32.totalorder %v1174, %v1241
    %vm1306 = vcmp.ge.s32.totalorder %v1175, %v1241
    %vm1307 = vcmp.ge.s32.totalorder %v1176, %v1241
    %vm1308 = vcmp.ge.s32.totalorder %v1177, %v1241
    %vm1309 = vcmp.ge.s32.totalorder %v1178, %v1241
    %vm1310 = vcmp.ge.s32.totalorder %v1179, %v1241
    %vm1311 = vcmp.ge.s32.totalorder %v1180, %v1241
    %vm1312 = vcmp.ge.s32.totalorder %v1181, %v1241
    %vm1313 = vcmp.ge.s32.totalorder %v1182, %v1241
    %vm1314 = vcmp.ge.s32.totalorder %v1183, %v1241
    %vm1315 = vcmp.ge.s32.totalorder %v1184, %v1241
    %vm1316 = vcmp.ge.s32.totalorder %v1185, %v1241
    %vm1317 = vcmp.ge.s32.totalorder %v1186, %v1241
    %vm1318 = vcmp.ge.s32.totalorder %v1187, %v1241
    %vm1319 = vcmp.ge.s32.totalorder %v1188, %v1241
    %vm1320 = vcmp.ge.s32.totalorder %v1189, %v1241
    %vm1321 = vcmp.ge.s32.totalorder %v1190, %v1241
    %vm1322 = vcmp.ge.s32.totalorder %v1191, %v1241
    %vm1323 = vcmp.ge.s32.totalorder %v1192, %v1241
    %vm1324 = vcmp.ge.s32.totalorder %v1193, %v1241
    %vm1325 = vcmp.ge.s32.totalorder %v1194, %v1241
    %vm1326 = vcmp.ge.s32.totalorder %v1195, %v1241
    %vm1327 = vcmp.ge.s32.totalorder %v1196, %v1241
    %vm1328 = vcmp.ge.s32.totalorder %v1197, %v1241
    %vm1329 = vcmp.ge.s32.totalorder %v1198, %v1241
    %vm1330 = vcmp.ge.s32.totalorder %v1199, %v1241
    %vm1331 = vcmp.ge.s32.totalorder %v1200, %v1241
    %vm1332 = vcmp.ge.s32.totalorder %v1201, %v1241
    %vm1333 = vcmp.ge.s32.totalorder %v1202, %v1241
    %vm1334 = vcmp.ge.s32.totalorder %v1203, %v1241
    %vm1335 = vcmp.ge.s32.totalorder %v1204, %v1241
    %vm1336 = vcmp.ge.s32.totalorder %v1205, %v1241
    %vm1337 = vcmp.ge.s32.totalorder %v1206, %v1241
    %vm1338 = vcmp.ge.s32.totalorder %v1207, %v1241
    %vm1339 = vcmp.ge.s32.totalorder %v1208, %v1241
    %vm1340 = vcmp.ge.s32.totalorder %v1209, %v1241
    %vm1341 = vcmp.ge.s32.totalorder %v1210, %v1241
    %vm1342 = vcmp.ge.s32.totalorder %v1211, %v1241
    %vm1343 = vcmp.ge.s32.totalorder %v1212, %v1241
    %vm1344 = vcmp.ge.s32.totalorder %v1213, %v1241
    %vm1345 = vcmp.ge.s32.totalorder %v1214, %v1241
    %vm1346 = vcmp.ge.s32.totalorder %v1215, %v1241
    %vm1347 = vcmp.ge.s32.totalorder %v1216, %v1241
    %vm1348 = vcmp.ge.s32.totalorder %v1217, %v1241
    %vm1349 = vcmp.ge.s32.totalorder %v1218, %v1241
    %vm1350 = vcmp.ge.s32.totalorder %v1219, %v1241
    %vm1351 = vcmp.ge.s32.totalorder %v1220, %v1241
    %vm1352 = vcmp.ge.s32.totalorder %v1221, %v1241
    %vm1353 = vcmp.ge.s32.totalorder %v1222, %v1241
    %vm1354 = vcmp.ge.s32.totalorder %v1223, %v1241
    %vm1355 = vcmp.ge.s32.totalorder %v1224, %v1241
    %vm1356 = vcmp.ge.s32.totalorder %v1225, %v1241
    %vm1357 = vcmp.ge.s32.totalorder %v1226, %v1241
    %vm1358 = vcmp.ge.s32.totalorder %v1227, %v1241
    %vm1359 = vcmp.ge.s32.totalorder %v1228, %v1241
    %vm1360 = vcmp.ge.s32.totalorder %v1229, %v1241
    %vm1361 = vcmp.ge.s32.totalorder %v1230, %v1241
    %vm1362 = vcmp.ge.s32.totalorder %v1231, %v1241
    %vm1363 = vcmp.ge.s32.totalorder %v1232, %v1241
    %vm1364 = vcmp.ge.s32.totalorder %v1233, %v1241
    %vm1365 = vcmp.ge.s32.totalorder %v1234, %v1241
    %vm1366 = vcmp.ge.s32.totalorder %v1235, %v1241
    %vm1367 = vcmp.ge.s32.totalorder %v1236, %v1241
    %vm1368 = vcmp.ge.s32.totalorder %v1237, %v1241
    %vm1369 = vcmp.ge.s32.totalorder %v1238, %v1241
    %v1370 = vadd.s32 %v1241, 64
    %vm1371 = vcmp.lt.s32.totalorder %v1102, %v1370
    %vm1372 = vcmp.lt.s32.totalorder %v1112, %v1370
    %vm1373 = vcmp.lt.s32.totalorder %v1113, %v1370
    %vm1374 = vcmp.lt.s32.totalorder %v1114, %v1370
    %vm1375 = vcmp.lt.s32.totalorder %v1115, %v1370
    %vm1376 = vcmp.lt.s32.totalorder %v1116, %v1370
    %vm1377 = vcmp.lt.s32.totalorder %v1117, %v1370
    %vm1378 = vcmp.lt.s32.totalorder %v1118, %v1370
    %vm1379 = vcmp.lt.s32.totalorder %v1119, %v1370
    %vm1380 = vcmp.lt.s32.totalorder %v1120, %v1370
    %vm1381 = vcmp.lt.s32.totalorder %v1121, %v1370
    %vm1382 = vcmp.lt.s32.totalorder %v1122, %v1370
    %vm1383 = vcmp.lt.s32.totalorder %v1123, %v1370
    %vm1384 = vcmp.lt.s32.totalorder %v1124, %v1370
    %vm1385 = vcmp.lt.s32.totalorder %v1125, %v1370
    %vm1386 = vcmp.lt.s32.totalorder %v1126, %v1370
    %vm1387 = vcmp.lt.s32.totalorder %v1127, %v1370
    %vm1388 = vcmp.lt.s32.totalorder %v1128, %v1370
    %vm1389 = vcmp.lt.s32.totalorder %v1129, %v1370
    %vm1390 = vcmp.lt.s32.totalorder %v1130, %v1370
    %vm1391 = vcmp.lt.s32.totalorder %v1131, %v1370
    %vm1392 = vcmp.lt.s32.totalorder %v1132, %v1370
    %vm1393 = vcmp.lt.s32.totalorder %v1133, %v1370
    %vm1394 = vcmp.lt.s32.totalorder %v1134, %v1370
    %vm1395 = vcmp.lt.s32.totalorder %v1135, %v1370
    %vm1396 = vcmp.lt.s32.totalorder %v1136, %v1370
    %vm1397 = vcmp.lt.s32.totalorder %v1137, %v1370
    %vm1398 = vcmp.lt.s32.totalorder %v1138, %v1370
    %vm1399 = vcmp.lt.s32.totalorder %v1139, %v1370
    %vm1400 = vcmp.lt.s32.totalorder %v1140, %v1370
    %vm1401 = vcmp.lt.s32.totalorder %v1141, %v1370
    %vm1402 = vcmp.lt.s32.totalorder %v1142, %v1370
    %vm1403 = vcmp.lt.s32.totalorder %v1143, %v1370
    %vm1404 = vcmp.lt.s32.totalorder %v1144, %v1370
    %vm1405 = vcmp.lt.s32.totalorder %v1145, %v1370
    %vm1406 = vcmp.lt.s32.totalorder %v1146, %v1370
    %vm1407 = vcmp.lt.s32.totalorder %v1147, %v1370
    %vm1408 = vcmp.lt.s32.totalorder %v1148, %v1370
    %vm1409 = vcmp.lt.s32.totalorder %v1149, %v1370
    %vm1410 = vcmp.lt.s32.totalorder %v1150, %v1370
    %vm1411 = vcmp.lt.s32.totalorder %v1151, %v1370
    %vm1412 = vcmp.lt.s32.totalorder %v1152, %v1370
    %vm1413 = vcmp.lt.s32.totalorder %v1153, %v1370
    %vm1414 = vcmp.lt.s32.totalorder %v1154, %v1370
    %vm1415 = vcmp.lt.s32.totalorder %v1155, %v1370
    %vm1416 = vcmp.lt.s32.totalorder %v1156, %v1370
    %vm1417 = vcmp.lt.s32.totalorder %v1157, %v1370
    %vm1418 = vcmp.lt.s32.totalorder %v1158, %v1370
    %vm1419 = vcmp.lt.s32.totalorder %v1159, %v1370
    %vm1420 = vcmp.lt.s32.totalorder %v1160, %v1370
    %vm1421 = vcmp.lt.s32.totalorder %v1161, %v1370
    %vm1422 = vcmp.lt.s32.totalorder %v1162, %v1370
    %vm1423 = vcmp.lt.s32.totalorder %v1163, %v1370
    %vm1424 = vcmp.lt.s32.totalorder %v1164, %v1370
    %vm1425 = vcmp.lt.s32.totalorder %v1165, %v1370
    %vm1426 = vcmp.lt.s32.totalorder %v1166, %v1370
    %vm1427 = vcmp.lt.s32.totalorder %v1167, %v1370
    %vm1428 = vcmp.lt.s32.totalorder %v1168, %v1370
    %vm1429 = vcmp.lt.s32.totalorder %v1169, %v1370
    %vm1430 = vcmp.lt.s32.totalorder %v1170, %v1370
    %vm1431 = vcmp.lt.s32.totalorder %v1171, %v1370
    %vm1432 = vcmp.lt.s32.totalorder %v1172, %v1370
    %vm1433 = vcmp.lt.s32.totalorder %v1173, %v1370
    %vm1434 = vcmp.lt.s32.totalorder %v1174, %v1370
    %vm1435 = vcmp.lt.s32.totalorder %v1175, %v1370
    %vm1436 = vcmp.lt.s32.totalorder %v1176, %v1370
    %vm1437 = vcmp.lt.s32.totalorder %v1177, %v1370
    %vm1438 = vcmp.lt.s32.totalorder %v1178, %v1370
    %vm1439 = vcmp.lt.s32.totalorder %v1179, %v1370
    %vm1440 = vcmp.lt.s32.totalorder %v1180, %v1370
    %vm1441 = vcmp.lt.s32.totalorder %v1181, %v1370
    %vm1442 = vcmp.lt.s32.totalorder %v1182, %v1370
    %vm1443 = vcmp.lt.s32.totalorder %v1183, %v1370
    %vm1444 = vcmp.lt.s32.totalorder %v1184, %v1370
    %vm1445 = vcmp.lt.s32.totalorder %v1185, %v1370
    %vm1446 = vcmp.lt.s32.totalorder %v1186, %v1370
    %vm1447 = vcmp.lt.s32.totalorder %v1187, %v1370
    %vm1448 = vcmp.lt.s32.totalorder %v1188, %v1370
    %vm1449 = vcmp.lt.s32.totalorder %v1189, %v1370
    %vm1450 = vcmp.lt.s32.totalorder %v1190, %v1370
    %vm1451 = vcmp.lt.s32.totalorder %v1191, %v1370
    %vm1452 = vcmp.lt.s32.totalorder %v1192, %v1370
    %vm1453 = vcmp.lt.s32.totalorder %v1193, %v1370
    %vm1454 = vcmp.lt.s32.totalorder %v1194, %v1370
    %vm1455 = vcmp.lt.s32.totalorder %v1195, %v1370
    %vm1456 = vcmp.lt.s32.totalorder %v1196, %v1370
    %vm1457 = vcmp.lt.s32.totalorder %v1197, %v1370
    %vm1458 = vcmp.lt.s32.totalorder %v1198, %v1370
    %vm1459 = vcmp.lt.s32.totalorder %v1199, %v1370
    %vm1460 = vcmp.lt.s32.totalorder %v1200, %v1370
    %vm1461 = vcmp.lt.s32.totalorder %v1201, %v1370
    %vm1462 = vcmp.lt.s32.totalorder %v1202, %v1370
    %vm1463 = vcmp.lt.s32.totalorder %v1203, %v1370
    %vm1464 = vcmp.lt.s32.totalorder %v1204, %v1370
    %vm1465 = vcmp.lt.s32.totalorder %v1205, %v1370
    %vm1466 = vcmp.lt.s32.totalorder %v1206, %v1370
    %vm1467 = vcmp.lt.s32.totalorder %v1207, %v1370
    %vm1468 = vcmp.lt.s32.totalorder %v1208, %v1370
    %vm1469 = vcmp.lt.s32.totalorder %v1209, %v1370
    %vm1470 = vcmp.lt.s32.totalorder %v1210, %v1370
    %vm1471 = vcmp.lt.s32.totalorder %v1211, %v1370
    %vm1472 = vcmp.lt.s32.totalorder %v1212, %v1370
    %vm1473 = vcmp.lt.s32.totalorder %v1213, %v1370
    %vm1474 = vcmp.lt.s32.totalorder %v1214, %v1370
    %vm1475 = vcmp.lt.s32.totalorder %v1215, %v1370
    %vm1476 = vcmp.lt.s32.totalorder %v1216, %v1370
    %vm1477 = vcmp.lt.s32.totalorder %v1217, %v1370
    %vm1478 = vcmp.lt.s32.totalorder %v1218, %v1370
    %vm1479 = vcmp.lt.s32.totalorder %v1219, %v1370
    %vm1480 = vcmp.lt.s32.totalorder %v1220, %v1370
    %vm1481 = vcmp.lt.s32.totalorder %v1221, %v1370
    %vm1482 = vcmp.lt.s32.totalorder %v1222, %v1370
    %vm1483 = vcmp.lt.s32.totalorder %v1223, %v1370
    %vm1484 = vcmp.lt.s32.totalorder %v1224, %v1370
    %vm1485 = vcmp.lt.s32.totalorder %v1225, %v1370
    %vm1486 = vcmp.lt.s32.totalorder %v1226, %v1370
    %vm1487 = vcmp.lt.s32.totalorder %v1227, %v1370
    %vm1488 = vcmp.lt.s32.totalorder %v1228, %v1370
    %vm1489 = vcmp.lt.s32.totalorder %v1229, %v1370
    %vm1490 = vcmp.lt.s32.totalorder %v1230, %v1370
    %vm1491 = vcmp.lt.s32.totalorder %v1231, %v1370
    %vm1492 = vcmp.lt.s32.totalorder %v1232, %v1370
    %vm1493 = vcmp.lt.s32.totalorder %v1233, %v1370
    %vm1494 = vcmp.lt.s32.totalorder %v1234, %v1370
    %vm1495 = vcmp.lt.s32.totalorder %v1235, %v1370
    %vm1496 = vcmp.lt.s32.totalorder %v1236, %v1370
    %vm1497 = vcmp.lt.s32.totalorder %v1237, %v1370
    %vm1498 = vcmp.lt.s32.totalorder %v1238, %v1370
    %vm1499 = vmand %vm1242, %vm1371
    %vm1500 = vmand %vm1243, %vm1372
    %vm1501 = vmand %vm1244, %vm1373
    %vm1502 = vmand %vm1245, %vm1374
    %vm1503 = vmand %vm1246, %vm1375
    %vm1504 = vmand %vm1247, %vm1376
    %vm1505 = vmand %vm1248, %vm1377
    %vm1506 = vmand %vm1249, %vm1378
    %vm1507 = vmand %vm1250, %vm1379
    %vm1508 = vmand %vm1251, %vm1380
    %vm1509 = vmand %vm1252, %vm1381
    %vm1510 = vmand %vm1253, %vm1382
    %vm1511 = vmand %vm1254, %vm1383
    %vm1512 = vmand %vm1255, %vm1384
    %vm1513 = vmand %vm1256, %vm1385
    %vm1514 = vmand %vm1257, %vm1386
    %vm1515 = vmand %vm1258, %vm1387
    %vm1516 = vmand %vm1259, %vm1388
    %vm1517 = vmand %vm1260, %vm1389
    %vm1518 = vmand %vm1261, %vm1390
    %vm1519 = vmand %vm1262, %vm1391
    %vm1520 = vmand %vm1263, %vm1392
    %vm1521 = vmand %vm1264, %vm1393
    %vm1522 = vmand %vm1265, %vm1394
    %vm1523 = vmand %vm1266, %vm1395
    %vm1524 = vmand %vm1267, %vm1396
    %vm1525 = vmand %vm1268, %vm1397
    %vm1526 = vmand %vm1269, %vm1398
    %vm1527 = vmand %vm1270, %vm1399
    %vm1528 = vmand %vm1271, %vm1400
    %vm1529 = vmand %vm1272, %vm1401
    %vm1530 = vmand %vm1273, %vm1402
    %vm1531 = vmand %vm1274, %vm1403
    %vm1532 = vmand %vm1275, %vm1404
    %vm1533 = vmand %vm1276, %vm1405
    %vm1534 = vmand %vm1277, %vm1406
    %vm1535 = vmand %vm1278, %vm1407
    %vm1536 = vmand %vm1279, %vm1408
    %vm1537 = vmand %vm1280, %vm1409
    %vm1538 = vmand %vm1281, %vm1410
    %vm1539 = vmand %vm1282, %vm1411
    %vm1540 = vmand %vm1283, %vm1412
    %vm1541 = vmand %vm1284, %vm1413
    %vm1542 = vmand %vm1285, %vm1414
    %vm1543 = vmand %vm1286, %vm1415
    %vm1544 = vmand %vm1287, %vm1416
    %vm1545 = vmand %vm1288, %vm1417
    %vm1546 = vmand %vm1289, %vm1418
    %vm1547 = vmand %vm1290, %vm1419
    %vm1548 = vmand %vm1291, %vm1420
    %vm1549 = vmand %vm1292, %vm1421
    %vm1550 = vmand %vm1293, %vm1422
    %vm1551 = vmand %vm1294, %vm1423
    %vm1552 = vmand %vm1295, %vm1424
    %vm1553 = vmand %vm1296, %vm1425
    %vm1554 = vmand %vm1297, %vm1426
    %vm1555 = vmand %vm1298, %vm1427
    %vm1556 = vmand %vm1299, %vm1428
    %vm1557 = vmand %vm1300, %vm1429
    %vm1558 = vmand %vm1301, %vm1430
    %vm1559 = vmand %vm1302, %vm1431
    %vm1560 = vmand %vm1303, %vm1432
    %vm1561 = vmand %vm1304, %vm1433
    %vm1562 = vmand %vm1305, %vm1434
    %vm1563 = vmand %vm1306, %vm1435
    %vm1564 = vmand %vm1307, %vm1436
    %vm1565 = vmand %vm1308, %vm1437
    %vm1566 = vmand %vm1309, %vm1438
    %vm1567 = vmand %vm1310, %vm1439
    %vm1568 = vmand %vm1311, %vm1440
    %vm1569 = vmand %vm1312, %vm1441
    %vm1570 = vmand %vm1313, %vm1442
    %vm1571 = vmand %vm1314, %vm1443
    %vm1572 = vmand %vm1315, %vm1444
    %vm1573 = vmand %vm1316, %vm1445
    %vm1574 = vmand %vm1317, %vm1446
    %vm1575 = vmand %vm1318, %vm1447
    %vm1576 = vmand %vm1319, %vm1448
    %vm1577 = vmand %vm1320, %vm1449
    %vm1578 = vmand %vm1321, %vm1450
    %vm1579 = vmand %vm1322, %vm1451
    %vm1580 = vmand %vm1323, %vm1452
    %vm1581 = vmand %vm1324, %vm1453
    %vm1582 = vmand %vm1325, %vm1454
    %vm1583 = vmand %vm1326, %vm1455
    %vm1584 = vmand %vm1327, %vm1456
    %vm1585 = vmand %vm1328, %vm1457
    %vm1586 = vmand %vm1329, %vm1458
    %vm1587 = vmand %vm1330, %vm1459
    %vm1588 = vmand %vm1331, %vm1460
    %vm1589 = vmand %vm1332, %vm1461
    %vm1590 = vmand %vm1333, %vm1462
    %vm1591 = vmand %vm1334, %vm1463
    %vm1592 = vmand %vm1335, %vm1464
    %vm1593 = vmand %vm1336, %vm1465
    %vm1594 = vmand %vm1337, %vm1466
    %vm1595 = vmand %vm1338, %vm1467
    %vm1596 = vmand %vm1339, %vm1468
    %vm1597 = vmand %vm1340, %vm1469
    %vm1598 = vmand %vm1341, %vm1470
    %vm1599 = vmand %vm1342, %vm1471
    %vm1600 = vmand %vm1343, %vm1472
    %vm1601 = vmand %vm1344, %vm1473
    %vm1602 = vmand %vm1345, %vm1474
    %vm1603 = vmand %vm1346, %vm1475
    %vm1604 = vmand %vm1347, %vm1476
    %vm1605 = vmand %vm1348, %vm1477
    %vm1606 = vmand %vm1349, %vm1478
    %vm1607 = vmand %vm1350, %vm1479
    %vm1608 = vmand %vm1351, %vm1480
    %vm1609 = vmand %vm1352, %vm1481
    %vm1610 = vmand %vm1353, %vm1482
    %vm1611 = vmand %vm1354, %vm1483
    %vm1612 = vmand %vm1355, %vm1484
    %vm1613 = vmand %vm1356, %vm1485
    %vm1614 = vmand %vm1357, %vm1486
    %vm1615 = vmand %vm1358, %vm1487
    %vm1616 = vmand %vm1359, %vm1488
    %vm1617 = vmand %vm1360, %vm1489
    %vm1618 = vmand %vm1361, %vm1490
    %vm1619 = vmand %vm1362, %vm1491
    %vm1620 = vmand %vm1363, %vm1492
    %vm1621 = vmand %vm1364, %vm1493
    %vm1622 = vmand %vm1365, %vm1494
    %vm1623 = vmand %vm1366, %vm1495
    %vm1624 = vmand %vm1367, %vm1496
    %vm1625 = vmand %vm1368, %vm1497
    %vm1626 = vmand %vm1369, %vm1498
    %v1627 = vsel %vm1499, 1, 0
    %v1628 = vsel %vm1500, 1, 0
    %v1629 = vsel %vm1501, 1, 0
    %v1630 = vsel %vm1502, 1, 0
    %v1631 = vsel %vm1503, 1, 0
    %v1632 = vsel %vm1504, 1, 0
    %v1633 = vsel %vm1505, 1, 0
    %v1634 = vsel %vm1506, 1, 0
    %v1635 = vsel %vm1507, 1, 0
    %v1636 = vsel %vm1508, 1, 0
    %v1637 = vsel %vm1509, 1, 0
    %v1638 = vsel %vm1510, 1, 0
    %v1639 = vsel %vm1511, 1, 0
    %v1640 = vsel %vm1512, 1, 0
    %v1641 = vsel %vm1513, 1, 0
    %v1642 = vsel %vm1514, 1, 0
    %v1643 = vsel %vm1515, 1, 0
    %v1644 = vsel %vm1516, 1, 0
    %v1645 = vsel %vm1517, 1, 0
    %v1646 = vsel %vm1518, 1, 0
    %v1647 = vsel %vm1519, 1, 0
    %v1648 = vsel %vm1520, 1, 0
    %v1649 = vsel %vm1521, 1, 0
    %v1650 = vsel %vm1522, 1, 0
    %v1651 = vsel %vm1523, 1, 0
    %v1652 = vsel %vm1524, 1, 0
    %v1653 = vsel %vm1525, 1, 0
    %v1654 = vsel %vm1526, 1, 0
    %v1655 = vsel %vm1527, 1, 0
    %v1656 = vsel %vm1528, 1, 0
    %v1657 = vsel %vm1529, 1, 0
    %v1658 = vsel %vm1530, 1, 0
    %v1659 = vsel %vm1531, 1, 0
    %v1660 = vsel %vm1532, 1, 0
    %v1661 = vsel %vm1533, 1, 0
    %v1662 = vsel %vm1534, 1, 0
    %v1663 = vsel %vm1535, 1, 0
    %v1664 = vsel %vm1536, 1, 0
    %v1665 = vsel %vm1537, 1, 0
    %v1666 = vsel %vm1538, 1, 0
    %v1667 = vsel %vm1539, 1, 0
    %v1668 = vsel %vm1540, 1, 0
    %v1669 = vsel %vm1541, 1, 0
    %v1670 = vsel %vm1542, 1, 0
    %v1671 = vsel %vm1543, 1, 0
    %v1672 = vsel %vm1544, 1, 0
    %v1673 = vsel %vm1545, 1, 0
    %v1674 = vsel %vm1546, 1, 0
    %v1675 = vsel %vm1547, 1, 0
    %v1676 = vsel %vm1548, 1, 0
    %v1677 = vsel %vm1549, 1, 0
    %v1678 = vsel %vm1550, 1, 0
    %v1679 = vsel %vm1551, 1, 0
    %v1680 = vsel %vm1552, 1, 0
    %v1681 = vsel %vm1553, 1, 0
    %v1682 = vsel %vm1554, 1, 0
    %v1683 = vsel %vm1555, 1, 0
    %v1684 = vsel %vm1556, 1, 0
    %v1685 = vsel %vm1557, 1, 0
    %v1686 = vsel %vm1558, 1, 0
    %v1687 = vsel %vm1559, 1, 0
    %v1688 = vsel %vm1560, 1, 0
    %v1689 = vsel %vm1561, 1, 0
    %v1690 = vsel %vm1562, 1, 0
    %v1691 = vsel %vm1563, 1, 0
    %v1692 = vsel %vm1564, 1, 0
    %v1693 = vsel %vm1565, 1, 0
    %v1694 = vsel %vm1566, 1, 0
    %v1695 = vsel %vm1567, 1, 0
    %v1696 = vsel %vm1568, 1, 0
    %v1697 = vsel %vm1569, 1, 0
    %v1698 = vsel %vm1570, 1, 0
    %v1699 = vsel %vm1571, 1, 0
    %v1700 = vsel %vm1572, 1, 0
    %v1701 = vsel %vm1573, 1, 0
    %v1702 = vsel %vm1574, 1, 0
    %v1703 = vsel %vm1575, 1, 0
    %v1704 = vsel %vm1576, 1, 0
    %v1705 = vsel %vm1577, 1, 0
    %v1706 = vsel %vm1578, 1, 0
    %v1707 = vsel %vm1579, 1, 0
    %v1708 = vsel %vm1580, 1, 0
    %v1709 = vsel %vm1581, 1, 0
    %v1710 = vsel %vm1582, 1, 0
    %v1711 = vsel %vm1583, 1, 0
    %v1712 = vsel %vm1584, 1, 0
    %v1713 = vsel %vm1585, 1, 0
    %v1714 = vsel %vm1586, 1, 0
    %v1715 = vsel %vm1587, 1, 0
    %v1716 = vsel %vm1588, 1, 0
    %v1717 = vsel %vm1589, 1, 0
    %v1718 = vsel %vm1590, 1, 0
    %v1719 = vsel %vm1591, 1, 0
    %v1720 = vsel %vm1592, 1, 0
    %v1721 = vsel %vm1593, 1, 0
    %v1722 = vsel %vm1594, 1, 0
    %v1723 = vsel %vm1595, 1, 0
    %v1724 = vsel %vm1596, 1, 0
    %v1725 = vsel %vm1597, 1, 0
    %v1726 = vsel %vm1598, 1, 0
    %v1727 = vsel %vm1599, 1, 0
    %v1728 = vsel %vm1600, 1, 0
    %v1729 = vsel %vm1601, 1, 0
    %v1730 = vsel %vm1602, 1, 0
    %v1731 = vsel %vm1603, 1, 0
    %v1732 = vsel %vm1604, 1, 0
    %v1733 = vsel %vm1605, 1, 0
    %v1734 = vsel %vm1606, 1, 0
    %v1735 = vsel %vm1607, 1, 0
    %v1736 = vsel %vm1608, 1, 0
    %v1737 = vsel %vm1609, 1, 0
    %v1738 = vsel %vm1610, 1, 0
    %v1739 = vsel %vm1611, 1, 0
    %v1740 = vsel %vm1612, 1, 0
    %v1741 = vsel %vm1613, 1, 0
    %v1742 = vsel %vm1614, 1, 0
    %v1743 = vsel %vm1615, 1, 0
    %v1744 = vsel %vm1616, 1, 0
    %v1745 = vsel %vm1617, 1, 0
    %v1746 = vsel %vm1618, 1, 0
    %v1747 = vsel %vm1619, 1, 0
    %v1748 = vsel %vm1620, 1, 0
    %v1749 = vsel %vm1621, 1, 0
    %v1750 = vsel %vm1622, 1, 0
    %v1751 = vsel %vm1623, 1, 0
    %v1752 = vsel %vm1624, 1, 0
    %v1753 = vsel %vm1625, 1, 0
    %v1754 = vsel %vm1626, 1, 0
    %v1755 = vcvt.s32.f32 %v1627
    %v1756 = vcvt.s32.f32 %v1628
    %v1757 = vcvt.s32.f32 %v1629
    %v1758 = vcvt.s32.f32 %v1630
    %v1759 = vcvt.s32.f32 %v1631
    %v1760 = vcvt.s32.f32 %v1632
    %v1761 = vcvt.s32.f32 %v1633
    %v1762 = vcvt.s32.f32 %v1634
    %v1763 = vcvt.s32.f32 %v1635
    %v1764 = vcvt.s32.f32 %v1636
    %v1765 = vcvt.s32.f32 %v1637
    %v1766 = vcvt.s32.f32 %v1638
    %v1767 = vcvt.s32.f32 %v1639
    %v1768 = vcvt.s32.f32 %v1640
    %v1769 = vcvt.s32.f32 %v1641
    %v1770 = vcvt.s32.f32 %v1642
    %v1771 = vcvt.s32.f32 %v1643
    %v1772 = vcvt.s32.f32 %v1644
    %v1773 = vcvt.s32.f32 %v1645
    %v1774 = vcvt.s32.f32 %v1646
    %v1775 = vcvt.s32.f32 %v1647
    %v1776 = vcvt.s32.f32 %v1648
    %v1777 = vcvt.s32.f32 %v1649
    %v1778 = vcvt.s32.f32 %v1650
    %v1779 = vcvt.s32.f32 %v1651
    %v1780 = vcvt.s32.f32 %v1652
    %v1781 = vcvt.s32.f32 %v1653
    %v1782 = vcvt.s32.f32 %v1654
    %v1783 = vcvt.s32.f32 %v1655
    %v1784 = vcvt.s32.f32 %v1656
    %v1785 = vcvt.s32.f32 %v1657
    %v1786 = vcvt.s32.f32 %v1658
    %v1787 = vcvt.s32.f32 %v1659
    %v1788 = vcvt.s32.f32 %v1660
    %v1789 = vcvt.s32.f32 %v1661
    %v1790 = vcvt.s32.f32 %v1662
    %v1791 = vcvt.s32.f32 %v1663
    %v1792 = vcvt.s32.f32 %v1664
    %v1793 = vcvt.s32.f32 %v1665
    %v1794 = vcvt.s32.f32 %v1666
    %v1795 = vcvt.s32.f32 %v1667
    %v1796 = vcvt.s32.f32 %v1668
    %v1797 = vcvt.s32.f32 %v1669
    %v1798 = vcvt.s32.f32 %v1670
    %v1799 = vcvt.s32.f32 %v1671
    %v1800 = vcvt.s32.f32 %v1672
    %v1801 = vcvt.s32.f32 %v1673
    %v1802 = vcvt.s32.f32 %v1674
    %v1803 = vcvt.s32.f32 %v1675
    %v1804 = vcvt.s32.f32 %v1676
    %v1805 = vcvt.s32.f32 %v1677
    %v1806 = vcvt.s32.f32 %v1678
    %v1807 = vcvt.s32.f32 %v1679
    %v1808 = vcvt.s32.f32 %v1680
    %v1809 = vcvt.s32.f32 %v1681
    %v1810 = vcvt.s32.f32 %v1682
    %v1811 = vcvt.s32.f32 %v1683
    %v1812 = vcvt.s32.f32 %v1684
    %v1813 = vcvt.s32.f32 %v1685
    %v1814 = vcvt.s32.f32 %v1686
    %v1815 = vcvt.s32.f32 %v1687
    %v1816 = vcvt.s32.f32 %v1688
    %v1817 = vcvt.s32.f32 %v1689
    %v1818 = vcvt.s32.f32 %v1690
    %v1819 = vcvt.s32.f32 %v1691
    %v1820 = vcvt.s32.f32 %v1692
    %v1821 = vcvt.s32.f32 %v1693
    %v1822 = vcvt.s32.f32 %v1694
    %v1823 = vcvt.s32.f32 %v1695
    %v1824 = vcvt.s32.f32 %v1696
    %v1825 = vcvt.s32.f32 %v1697
    %v1826 = vcvt.s32.f32 %v1698
    %v1827 = vcvt.s32.f32 %v1699
    %v1828 = vcvt.s32.f32 %v1700
    %v1829 = vcvt.s32.f32 %v1701
    %v1830 = vcvt.s32.f32 %v1702
    %v1831 = vcvt.s32.f32 %v1703
    %v1832 = vcvt.s32.f32 %v1704
    %v1833 = vcvt.s32.f32 %v1705
    %v1834 = vcvt.s32.f32 %v1706
    %v1835 = vcvt.s32.f32 %v1707
    %v1836 = vcvt.s32.f32 %v1708
    %v1837 = vcvt.s32.f32 %v1709
    %v1838 = vcvt.s32.f32 %v1710
    %v1839 = vcvt.s32.f32 %v1711
    %v1840 = vcvt.s32.f32 %v1712
    %v1841 = vcvt.s32.f32 %v1713
    %v1842 = vcvt.s32.f32 %v1714
    %v1843 = vcvt.s32.f32 %v1715
    %v1844 = vcvt.s32.f32 %v1716
    %v1845 = vcvt.s32.f32 %v1717
    %v1846 = vcvt.s32.f32 %v1718
    %v1847 = vcvt.s32.f32 %v1719
    %v1848 = vcvt.s32.f32 %v1720
    %v1849 = vcvt.s32.f32 %v1721
    %v1850 = vcvt.s32.f32 %v1722
    %v1851 = vcvt.s32.f32 %v1723
    %v1852 = vcvt.s32.f32 %v1724
    %v1853 = vcvt.s32.f32 %v1725
    %v1854 = vcvt.s32.f32 %v1726
    %v1855 = vcvt.s32.f32 %v1727
    %v1856 = vcvt.s32.f32 %v1728
    %v1857 = vcvt.s32.f32 %v1729
    %v1858 = vcvt.s32.f32 %v1730
    %v1859 = vcvt.s32.f32 %v1731
    %v1860 = vcvt.s32.f32 %v1732
    %v1861 = vcvt.s32.f32 %v1733
    %v1862 = vcvt.s32.f32 %v1734
    %v1863 = vcvt.s32.f32 %v1735
    %v1864 = vcvt.s32.f32 %v1736
    %v1865 = vcvt.s32.f32 %v1737
    %v1866 = vcvt.s32.f32 %v1738
    %v1867 = vcvt.s32.f32 %v1739
    %v1868 = vcvt.s32.f32 %v1740
    %v1869 = vcvt.s32.f32 %v1741
    %v1870 = vcvt.s32.f32 %v1742
    %v1871 = vcvt.s32.f32 %v1743
    %v1872 = vcvt.s32.f32 %v1744
    %v1873 = vcvt.s32.f32 %v1745
    %v1874 = vcvt.s32.f32 %v1746
    %v1875 = vcvt.s32.f32 %v1747
    %v1876 = vcvt.s32.f32 %v1748
    %v1877 = vcvt.s32.f32 %v1749
    %v1878 = vcvt.s32.f32 %v1750
    %v1879 = vcvt.s32.f32 %v1751
    %v1880 = vcvt.s32.f32 %v1752
    %v1881 = vcvt.s32.f32 %v1753
    %v1882 = vcvt.s32.f32 %v1754
    %1883 = vmatprep.subr.mxu0 0.0
    %1884 = vmatpush1.msra.mxu0 %v1755
    %1885 = vmatprep.subr.mxu0 0.0
    %1886 = vmatpush1.msra.mxu0 %v1756
    %1887 = vmatprep.subr.mxu0 0.0
    %1888 = vmatpush1.msra.mxu0 %v1757
    %1889 = vmatprep.subr.mxu0 0.0
    %1890 = vmatpush1.msra.mxu0 %v1758
    %1891 = vmatprep.subr.mxu0 0.0
    %1892 = vmatpush1.msra.mxu0 %v1759
    %1893 = vmatprep.subr.mxu0 0.0
    %1894 = vmatpush1.msra.mxu0 %v1760
    %1895 = vmatprep.subr.mxu0 0.0
    %1896 = vmatpush1.msra.mxu0 %v1761
    %1897 = vmatprep.subr.mxu0 0.0
    %1898 = vmatpush1.msra.mxu0 %v1762
    %1899 = vmatprep.subr.mxu0 0.0
    %1900 = vmatpush1.msra.mxu0 %v1763
    %1901 = vmatprep.subr.mxu0 0.0
    %1902 = vmatpush1.msra.mxu0 %v1764
    %1903 = vmatprep.subr.mxu0 0.0
    %1904 = vmatpush1.msra.mxu0 %v1765
    %1905 = vmatprep.subr.mxu0 0.0
    %1906 = vmatpush1.msra.mxu0 %v1766
    %1907 = vmatprep.subr.mxu0 0.0
    %1908 = vmatpush1.msra.mxu0 %v1767
    %1909 = vmatprep.subr.mxu0 0.0
    %1910 = vmatpush1.msra.mxu0 %v1768
    %1911 = vmatprep.subr.mxu0 0.0
    %1912 = vmatpush1.msra.mxu0 %v1769
    %1913 = vmatprep.subr.mxu0 0.0
    %1914 = vmatpush1.msra.mxu0 %v1770
    %1915 = vmatprep.subr.mxu0 0.0
    %1916 = vmatpush1.msra.mxu0 %v1771
    %1917 = vmatprep.subr.mxu0 0.0
    %1918 = vmatpush1.msra.mxu0 %v1772
    %1919 = vmatprep.subr.mxu0 0.0
    %1920 = vmatpush1.msra.mxu0 %v1773
    %1921 = vmatprep.subr.mxu0 0.0
    %1922 = vmatpush1.msra.mxu0 %v1774
    %1923 = vmatprep.subr.mxu0 0.0
    %1924 = vmatpush1.msra.mxu0 %v1775
    %1925 = vmatprep.subr.mxu0 0.0
    %1926 = vmatpush1.msra.mxu0 %v1776
    %1927 = vmatprep.subr.mxu0 0.0
    %1928 = vmatpush1.msra.mxu0 %v1777
    %1929 = vmatprep.subr.mxu0 0.0
    %1930 = vmatpush1.msra.mxu0 %v1778
    %1931 = vmatprep.subr.mxu0 0.0
    %1932 = vmatpush1.msra.mxu0 %v1779
    %1933 = vmatprep.subr.mxu0 0.0
    %1934 = vmatpush1.msra.mxu0 %v1780
    %1935 = vmatprep.subr.mxu0 0.0
    %1936 = vmatpush1.msra.mxu0 %v1781
    %1937 = vmatprep.subr.mxu0 0.0
    %1938 = vmatpush1.msra.mxu0 %v1782
    %1939 = vmatprep.subr.mxu0 0.0
    %1940 = vmatpush1.msra.mxu0 %v1783
    %1941 = vmatprep.subr.mxu0 0.0
    %1942 = vmatpush1.msra.mxu0 %v1784
    %1943 = vmatprep.subr.mxu0 0.0
    %1944 = vmatpush1.msra.mxu0 %v1785
    %1945 = vmatprep.subr.mxu0 0.0
    %1946 = vmatpush1.msra.mxu0 %v1786
    %1947 = vmatprep.mubr.f32.mxu0 %v1105
    %1948 = vmatmul.mubr.f32.gmra.mrb[0].mxu0 %v1104
    %v1949 = vpop.f32.mrb[0].mxu0
    %v1950 = vadd.f32 0.0, %v1949
    %v1951 = vpop.f32.mrb[0].mxu0
    %1952 = vdwg.mxu0
    %1953 = vmatprep.subr.mxu0 0.0
    %1954 = vmatpush1.msra.mxu0 %v1787
    %1955 = vmatprep.subr.mxu0 0.0
    %1956 = vmatpush1.msra.mxu0 %v1788
    %1957 = vmatprep.subr.mxu0 0.0
    %1958 = vmatpush1.msra.mxu0 %v1789
    %1959 = vmatprep.subr.mxu0 0.0
    %1960 = vmatpush1.msra.mxu0 %v1790
    %1961 = vmatprep.subr.mxu0 0.0
    %1962 = vmatpush1.msra.mxu0 %v1791
    %1963 = vmatprep.subr.mxu0 0.0
    %1964 = vmatpush1.msra.mxu0 %v1792
    %1965 = vmatprep.subr.mxu0 0.0
    %1966 = vmatpush1.msra.mxu0 %v1793
    %1967 = vmatprep.subr.mxu0 0.0
    %1968 = vmatpush1.msra.mxu0 %v1794
    %1969 = vmatprep.subr.mxu0 0.0
    %1970 = vmatpush1.msra.mxu0 %v1795
    %1971 = vmatprep.subr.mxu0 0.0
    %1972 = vmatpush1.msra.mxu0 %v1796
    %1973 = vmatprep.subr.mxu0 0.0
    %1974 = vmatpush1.msra.mxu0 %v1797
    %1975 = vmatprep.subr.mxu0 0.0
    %1976 = vmatpush1.msra.mxu0 %v1798
    %1977 = vmatprep.subr.mxu0 0.0
    %1978 = vmatpush1.msra.mxu0 %v1799
    %1979 = vmatprep.subr.mxu0 0.0
    %1980 = vmatpush1.msra.mxu0 %v1800
    %1981 = vmatprep.subr.mxu0 0.0
    %1982 = vmatpush1.msra.mxu0 %v1801
    %1983 = vmatprep.subr.mxu0 0.0
    %1984 = vmatpush1.msra.mxu0 %v1802
    %1985 = vmatprep.subr.mxu0 0.0
    %1986 = vmatpush1.msra.mxu0 %v1803
    %1987 = vmatprep.subr.mxu0 0.0
    %1988 = vmatpush1.msra.mxu0 %v1804
    %1989 = vmatprep.subr.mxu0 0.0
    %1990 = vmatpush1.msra.mxu0 %v1805
    %1991 = vmatprep.subr.mxu0 0.0
    %1992 = vmatpush1.msra.mxu0 %v1806
    %1993 = vmatprep.subr.mxu0 0.0
    %1994 = vmatpush1.msra.mxu0 %v1807
    %1995 = vmatprep.subr.mxu0 0.0
    %1996 = vmatpush1.msra.mxu0 %v1808
    %1997 = vmatprep.subr.mxu0 0.0
    %1998 = vmatpush1.msra.mxu0 %v1809
    %1999 = vmatprep.subr.mxu0 0.0
    %2000 = vmatpush1.msra.mxu0 %v1810
    %2001 = vmatprep.subr.mxu0 0.0
    %2002 = vmatpush1.msra.mxu0 %v1811
    %2003 = vmatprep.subr.mxu0 0.0
    %2004 = vmatpush1.msra.mxu0 %v1812
    %2005 = vmatprep.subr.mxu0 0.0
    %2006 = vmatpush1.msra.mxu0 %v1813
    %2007 = vmatprep.subr.mxu0 0.0
    %2008 = vmatpush1.msra.mxu0 %v1814
    %2009 = vmatprep.subr.mxu0 0.0
    %2010 = vmatpush1.msra.mxu0 %v1815
    %2011 = vmatprep.subr.mxu0 0.0
    %2012 = vmatpush1.msra.mxu0 %v1816
    %2013 = vmatprep.subr.mxu0 0.0
    %2014 = vmatpush1.msra.mxu0 %v1817
    %2015 = vmatprep.subr.mxu0 0.0
    %2016 = vmatpush1.msra.mxu0 %v1818
    %2017 = vmatprep.mubr.f32.mxu0 %v1107
    %2018 = vmatmul.mubr.f32.gmra.mrb[0].mxu0 %v1106
    %v2019 = vpop.f32.mrb[0].mxu0
    %v2020 = vadd.f32 %v1950, %v2019
    %v2021 = vpop.f32.mrb[0].mxu0
    %2022 = vdwg.mxu0
    %2023 = vmatprep.subr.mxu0 0.0
    %2024 = vmatpush1.msra.mxu0 %v1819
    %2025 = vmatprep.subr.mxu0 0.0
    %2026 = vmatpush1.msra.mxu0 %v1820
    %2027 = vmatprep.subr.mxu0 0.0
    %2028 = vmatpush1.msra.mxu0 %v1821
    %2029 = vmatprep.subr.mxu0 0.0
    %2030 = vmatpush1.msra.mxu0 %v1822
    %2031 = vmatprep.subr.mxu0 0.0
    %2032 = vmatpush1.msra.mxu0 %v1823
    %2033 = vmatprep.subr.mxu0 0.0
    %2034 = vmatpush1.msra.mxu0 %v1824
    %2035 = vmatprep.subr.mxu0 0.0
    %2036 = vmatpush1.msra.mxu0 %v1825
    %2037 = vmatprep.subr.mxu0 0.0
    %2038 = vmatpush1.msra.mxu0 %v1826
    %2039 = vmatprep.subr.mxu0 0.0
    %2040 = vmatpush1.msra.mxu0 %v1827
    %2041 = vmatprep.subr.mxu0 0.0
    %2042 = vmatpush1.msra.mxu0 %v1828
    %2043 = vmatprep.subr.mxu0 0.0
    %2044 = vmatpush1.msra.mxu0 %v1829
    %2045 = vmatprep.subr.mxu0 0.0
    %2046 = vmatpush1.msra.mxu0 %v1830
    %2047 = vmatprep.subr.mxu0 0.0
    %2048 = vmatpush1.msra.mxu0 %v1831
    %2049 = vmatprep.subr.mxu0 0.0
    %2050 = vmatpush1.msra.mxu0 %v1832
    %2051 = vmatprep.subr.mxu0 0.0
    %2052 = vmatpush1.msra.mxu0 %v1833
    %2053 = vmatprep.subr.mxu0 0.0
    %2054 = vmatpush1.msra.mxu0 %v1834
    %2055 = vmatprep.subr.mxu0 0.0
    %2056 = vmatpush1.msra.mxu0 %v1835
    %2057 = vmatprep.subr.mxu0 0.0
    %2058 = vmatpush1.msra.mxu0 %v1836
    %2059 = vmatprep.subr.mxu0 0.0
    %2060 = vmatpush1.msra.mxu0 %v1837
    %2061 = vmatprep.subr.mxu0 0.0
    %2062 = vmatpush1.msra.mxu0 %v1838
    %2063 = vmatprep.subr.mxu0 0.0
    %2064 = vmatpush1.msra.mxu0 %v1839
    %2065 = vmatprep.subr.mxu0 0.0
    %2066 = vmatpush1.msra.mxu0 %v1840
    %2067 = vmatprep.subr.mxu0 0.0
    %2068 = vmatpush1.msra.mxu0 %v1841
    %2069 = vmatprep.subr.mxu0 0.0
    %2070 = vmatpush1.msra.mxu0 %v1842
    %2071 = vmatprep.subr.mxu0 0.0
    %2072 = vmatpush1.msra.mxu0 %v1843
    %2073 = vmatprep.subr.mxu0 0.0
    %2074 = vmatpush1.msra.mxu0 %v1844
    %2075 = vmatprep.subr.mxu0 0.0
    %2076 = vmatpush1.msra.mxu0 %v1845
    %2077 = vmatprep.subr.mxu0 0.0
    %2078 = vmatpush1.msra.mxu0 %v1846
    %2079 = vmatprep.subr.mxu0 0.0
    %2080 = vmatpush1.msra.mxu0 %v1847
    %2081 = vmatprep.subr.mxu0 0.0
    %2082 = vmatpush1.msra.mxu0 %v1848
    %2083 = vmatprep.subr.mxu0 0.0
    %2084 = vmatpush1.msra.mxu0 %v1849
    %2085 = vmatprep.subr.mxu0 0.0
    %2086 = vmatpush1.msra.mxu0 %v1850
    %2087 = vmatprep.mubr.f32.mxu0 %v1109
    %2088 = vmatmul.mubr.f32.gmra.mrb[0].mxu0 %v1108
    %v2089 = vpop.f32.mrb[0].mxu0
    %v2090 = vadd.f32 %v2020, %v2089
    %v2091 = vpop.f32.mrb[0].mxu0
    %2092 = vdwg.mxu0
    %2093 = vmatprep.subr.mxu0 0.0
    %2094 = vmatpush1.msra.mxu0 %v1851
    %2095 = vmatprep.subr.mxu0 0.0
    %2096 = vmatpush1.msra.mxu0 %v1852
    %2097 = vmatprep.subr.mxu0 0.0
    %2098 = vmatpush1.msra.mxu0 %v1853
    %2099 = vmatprep.subr.mxu0 0.0
    %2100 = vmatpush1.msra.mxu0 %v1854
    %2101 = vmatprep.subr.mxu0 0.0
    %2102 = vmatpush1.msra.mxu0 %v1855
    %2103 = vmatprep.subr.mxu0 0.0
    %2104 = vmatpush1.msra.mxu0 %v1856
    %2105 = vmatprep.subr.mxu0 0.0
    %2106 = vmatpush1.msra.mxu0 %v1857
    %2107 = vmatprep.subr.mxu0 0.0
    %2108 = vmatpush1.msra.mxu0 %v1858
    %2109 = vmatprep.subr.mxu0 0.0
    %2110 = vmatpush1.msra.mxu0 %v1859
    %2111 = vmatprep.subr.mxu0 0.0
    %2112 = vmatpush1.msra.mxu0 %v1860
    %2113 = vmatprep.subr.mxu0 0.0
    %2114 = vmatpush1.msra.mxu0 %v1861
    %2115 = vmatprep.subr.mxu0 0.0
    %2116 = vmatpush1.msra.mxu0 %v1862
    %2117 = vmatprep.subr.mxu0 0.0
    %2118 = vmatpush1.msra.mxu0 %v1863
    %2119 = vmatprep.subr.mxu0 0.0
    %2120 = vmatpush1.msra.mxu0 %v1864
    %2121 = vmatprep.subr.mxu0 0.0
    %2122 = vmatpush1.msra.mxu0 %v1865
    %2123 = vmatprep.subr.mxu0 0.0
    %2124 = vmatpush1.msra.mxu0 %v1866
    %2125 = vmatprep.subr.mxu0 0.0
    %2126 = vmatpush1.msra.mxu0 %v1867
    %2127 = vmatprep.subr.mxu0 0.0
    %2128 = vmatpush1.msra.mxu0 %v1868
    %2129 = vmatprep.subr.mxu0 0.0
    %2130 = vmatpush1.msra.mxu0 %v1869
    %2131 = vmatprep.subr.mxu0 0.0
    %2132 = vmatpush1.msra.mxu0 %v1870
    %2133 = vmatprep.subr.mxu0 0.0
    %2134 = vmatpush1.msra.mxu0 %v1871
    %2135 = vmatprep.subr.mxu0 0.0
    %2136 = vmatpush1.msra.mxu0 %v1872
    %2137 = vmatprep.subr.mxu0 0.0
    %2138 = vmatpush1.msra.mxu0 %v1873
    %2139 = vmatprep.subr.mxu0 0.0
    %2140 = vmatpush1.msra.mxu0 %v1874
    %2141 = vmatprep.subr.mxu0 0.0
    %2142 = vmatpush1.msra.mxu0 %v1875
    %2143 = vmatprep.subr.mxu0 0.0
    %2144 = vmatpush1.msra.mxu0 %v1876
    %2145 = vmatprep.subr.mxu0 0.0
    %2146 = vmatpush1.msra.mxu0 %v1877
    %2147 = vmatprep.subr.mxu0 0.0
    %2148 = vmatpush1.msra.mxu0 %v1878
    %2149 = vmatprep.subr.mxu0 0.0
    %2150 = vmatpush1.msra.mxu0 %v1879
    %2151 = vmatprep.subr.mxu0 0.0
    %2152 = vmatpush1.msra.mxu0 %v1880
    %2153 = vmatprep.subr.mxu0 0.0
    %2154 = vmatpush1.msra.mxu0 %v1881
    %2155 = vmatprep.subr.mxu0 0.0
    %2156 = vmatpush1.msra.mxu0 %v1882
    %2157 = vmatprep.mubr.f32.mxu0 %v1111
    %2158 = vmatmul.mubr.f32.gmra.mrb[0].mxu0 %v1110
    %v2159 = vpop.f32.mrb[0].mxu0
    %v2160 = vadd.f32 %v2090, %v2159
    %v2161 = vpop.f32.mrb[0].mxu0
    %2162 = vdwg.mxu0
    %v2163 = vmul.f32 %v2160, 0.0078125
    %v2164 = vmul.f32 %v2163, %v2163
    %v2166 = vrot.slane %v2164, 7
    %v2168 = vsub.f32 %v2163, %v2166
    %v2169 = vld [vmem:[%s4] sm:$0x1]
    %v2170 = vld [vmem:[%s4 + $0x1] sm:$0x1]
    %v2171 = vadd.f32 %v2168, 1e-05
    %v2172 = vrsqrt.pop %v2171
    %v2174 = vrot.slane %v2172, 1
    %v2176 = vmul.f32 %v2169, %v2174
    %v2177 = vmul.f32 %v2163, %v2176
    %v2178 = vsub.f32 %v2170, %v2177
    %v2179 = vlaneseq
    %v2180 = vshrl.u32 %v2179, 7
    %v2181 = vsub.s32 0, %v2180
    %v2182 = vrot.slane %v2176, %v2181
    %v2183 = vlaneseq
    %v2184 = vshrl.u32 %v2183, 7
    %v2185 = vsub.s32 0, %v2184
    %v2186 = vrot.slane %v2178, %v2185
    %v2187 = vsel %vm1103, %v2182, %v2186
    %v2188 = vadd.s32 %v1240, 128
    %v2189 = vadd.s32 %v1240, 256
    %v2190 = vadd.s32 %v1240, 384
    %v2191 = vadd.s32 %v1240, 512
    %v2192 = vadd.s32 %v1240, 640
    %v2193 = vadd.s32 %v1240, 768
    %v2194 = vadd.s32 %v1240, 896
    %v2195 = vmul.u32 %v1102, 64
    %v2196 = vmul.u32 %v1112, 64
    %vm2197 = vcmp.ge.s32.totalorder %v1240, %v2195
    %vm2198 = vcmp.ge.s32.totalorder %v2188, %v2195
    %vm2199 = vcmp.ge.s32.totalorder %v2189, %v2195
    %vm2200 = vcmp.ge.s32.totalorder %v2190, %v2195
    %vm2201 = vcmp.ge.s32.totalorder %v2191, %v2195
    %vm2202 = vcmp.ge.s32.totalorder %v2192, %v2195
    %vm2203 = vcmp.ge.s32.totalorder %v2193, %v2195
    %vm2204 = vcmp.ge.s32.totalorder %v2194, %v2195
    %vm2205 = vcmp.ge.s32.totalorder %v1240, %v2196
    %vm2206 = vcmp.ge.s32.totalorder %v2188, %v2196
    %vm2207 = vcmp.ge.s32.totalorder %v2189, %v2196
    %vm2208 = vcmp.ge.s32.totalorder %v2190, %v2196
    %vm2209 = vcmp.ge.s32.totalorder %v2191, %v2196
    %vm2210 = vcmp.ge.s32.totalorder %v2192, %v2196
    %vm2211 = vcmp.ge.s32.totalorder %v2193, %v2196
    %vm2212 = vcmp.ge.s32.totalorder %v2194, %v2196
    %v2213 = vadd.s32 %v2195, 64
    %v2214 = vadd.s32 %v2196, 64
    %vm2215 = vcmp.lt.s32.totalorder %v1240, %v2213
    %vm2216 = vcmp.lt.s32.totalorder %v2188, %v2213
    %vm2217 = vcmp.lt.s32.totalorder %v2189, %v2213
    %vm2218 = vcmp.lt.s32.totalorder %v2190, %v2213
    %vm2219 = vcmp.lt.s32.totalorder %v2191, %v2213
    %vm2220 = vcmp.lt.s32.totalorder %v2192, %v2213
    %vm2221 = vcmp.lt.s32.totalorder %v2193, %v2213
    %vm2222 = vcmp.lt.s32.totalorder %v2194, %v2213
    %vm2223 = vcmp.lt.s32.totalorder %v1240, %v2214
    %vm2224 = vcmp.lt.s32.totalorder %v2188, %v2214
    %vm2225 = vcmp.lt.s32.totalorder %v2189, %v2214
    %vm2226 = vcmp.lt.s32.totalorder %v2190, %v2214
    %vm2227 = vcmp.lt.s32.totalorder %v2191, %v2214
    %vm2228 = vcmp.lt.s32.totalorder %v2192, %v2214
    %vm2229 = vcmp.lt.s32.totalorder %v2193, %v2214
    %vm2230 = vcmp.lt.s32.totalorder %v2194, %v2214
    %vm2231 = vmand %vm2197, %vm2215
    %vm2232 = vmand %vm2198, %vm2216
    %vm2233 = vmand %vm2199, %vm2217
    %vm2234 = vmand %vm2200, %vm2218
    %vm2235 = vmand %vm2201, %vm2219
    %vm2236 = vmand %vm2202, %vm2220
    %vm2237 = vmand %vm2203, %vm2221
    %vm2238 = vmand %vm2204, %vm2222
    %vm2239 = vmand %vm2205, %vm2223
    %vm2240 = vmand %vm2206, %vm2224
    %vm2241 = vmand %vm2207, %vm2225
    %vm2242 = vmand %vm2208, %vm2226
    %vm2243 = vmand %vm2209, %vm2227
    %vm2244 = vmand %vm2210, %vm2228
    %vm2245 = vmand %vm2211, %vm2229
    %vm2246 = vmand %vm2212, %vm2230
    %v2247 = vsel %vm2231, 1, 0
    %v2248 = vsel %vm2232, 1, 0
    %v2249 = vsel %vm2233, 1, 0
    %v2250 = vsel %vm2234, 1, 0
    %v2251 = vsel %vm2235, 1, 0
    %v2252 = vsel %vm2236, 1, 0
    %v2253 = vsel %vm2237, 1, 0
    %v2254 = vsel %vm2238, 1, 0
    %v2255 = vsel %vm2239, 1, 0
    %v2256 = vsel %vm2240, 1, 0
    %v2257 = vsel %vm2241, 1, 0
    %v2258 = vsel %vm2242, 1, 0
    %v2259 = vsel %vm2243, 1, 0
    %v2260 = vsel %vm2244, 1, 0
    %v2261 = vsel %vm2245, 1, 0
    %v2262 = vsel %vm2246, 1, 0
    %v2263 = vcvt.s32.f32 %v2247
    %v2264 = vcvt.s32.f32 %v2248
    %v2265 = vcvt.s32.f32 %v2249
    %v2266 = vcvt.s32.f32 %v2250
    %v2267 = vcvt.s32.f32 %v2251
    %v2268 = vcvt.s32.f32 %v2252
    %v2269 = vcvt.s32.f32 %v2253
    %v2270 = vcvt.s32.f32 %v2254
    %v2271 = vcvt.s32.f32 %v2255
    %v2272 = vcvt.s32.f32 %v2256
    %v2273 = vcvt.s32.f32 %v2257
    %v2274 = vcvt.s32.f32 %v2258
    %v2275 = vcvt.s32.f32 %v2259
    %v2276 = vcvt.s32.f32 %v2260
    %v2277 = vcvt.s32.f32 %v2261
    %v2278 = vcvt.s32.f32 %v2262
    %vm2279 = vcmask 130048
    %v2281 = vsel %vm2279, %v2187, 0
    %2283 = vmatprep.subr.mxu0 %v2264
    %2284 = vmatpush1.msra.mxu0 %v2263
    %2285 = vmatprep.subr.mxu0 %v2272
    %2286 = vmatpush1.msra.mxu0 %v2271
    %2287 = vmatprep.subr.mxu0 0.0
    %2288 = vmatpush1.msra.mxu0 0.0
    %2289 = vmatprep.subr.mxu0 0.0
    %2290 = vmatpush1.msra.mxu0 0.0
    %2291 = vmatprep.subr.mxu0 0.0
    %2292 = vmatpush1.msra.mxu0 0.0
    %2293 = vmatprep.subr.mxu0 0.0
    %2294 = vmatpush1.msra.mxu0 0.0
    %2295 = vmatprep.subr.mxu0 0.0
    %2296 = vmatpush1.msra.mxu0 0.0
    %2297 = vmatprep.subr.mxu0 0.0
    %2298 = vmatpush1.msra.mxu0 0.0
    %2299 = vmatprep.subr.mxu0 0.0
    %2300 = vmatpush1.msra.mxu0 0.0
    %2301 = vmatprep.subr.mxu0 0.0
    %2302 = vmatpush1.msra.mxu0 0.0
    %2303 = vmatprep.subr.mxu0 0.0
    %2304 = vmatpush1.msra.mxu0 0.0
    %2305 = vmatprep.subr.mxu0 0.0
    %2306 = vmatpush1.msra.mxu0 0.0
    %2307 = vmatprep.subr.mxu0 0.0
    %2308 = vmatpush1.msra.mxu0 0.0
    %2309 = vmatprep.subr.mxu0 0.0
    %2310 = vmatpush1.msra.mxu0 0.0
    %2311 = vmatprep.subr.mxu0 0.0
    %2312 = vmatpush1.msra.mxu0 0.0
    %2313 = vmatprep.subr.mxu0 0.0
    %2314 = vmatpush1.msra.mxu0 0.0
    %2315 = vmatprep.subr.mxu0 0.0
    %2316 = vmatpush1.msra.mxu0 0.0
    %2317 = vmatprep.subr.mxu0 0.0
    %2318 = vmatpush1.msra.mxu0 0.0
    %2319 = vmatprep.subr.mxu0 0.0
    %2320 = vmatpush1.msra.mxu0 0.0
    %2321 = vmatprep.subr.mxu0 0.0
    %2322 = vmatpush1.msra.mxu0 0.0
    %2323 = vmatprep.subr.mxu0 0.0
    %2324 = vmatpush1.msra.mxu0 0.0
    %2325 = vmatprep.subr.mxu0 0.0
    %2326 = vmatpush1.msra.mxu0 0.0
    %2327 = vmatprep.subr.mxu0 0.0
    %2328 = vmatpush1.msra.mxu0 0.0
    %2329 = vmatprep.subr.mxu0 0.0
    %2330 = vmatpush1.msra.mxu0 0.0
    %2331 = vmatprep.subr.mxu0 0.0
    %2332 = vmatpush1.msra.mxu0 0.0
    %2333 = vmatprep.subr.mxu0 0.0
    %2334 = vmatpush1.msra.mxu0 0.0
    %2335 = vmatprep.subr.mxu0 0.0
    %2336 = vmatpush1.msra.mxu0 0.0
    %2337 = vmatprep.subr.mxu0 0.0
    %2338 = vmatpush1.msra.mxu0 0.0
    %2339 = vmatprep.subr.mxu0 0.0
    %2340 = vmatpush1.msra.mxu0 0.0
    %2341 = vmatprep.subr.mxu0 0.0
    %2342 = vmatpush1.msra.mxu0 0.0
    %2343 = vmatprep.subr.mxu0 0.0
    %2344 = vmatpush1.msra.mxu0 0.0
    %2345 = vmatprep.subr.mxu0 0.0
    %2346 = vmatpush1.msra.mxu0 0.0
    %2347 = vmatprep.mubr.f32.mxu0 0.0
    %2348 = vmatmul.mubr.f32.gmra.mrb[0].mxu0 %v2281
    %v2349 = vpop.f32.mrb[0].mxu0
    %v2350 = vadd.f32 0.0, %v2349
    %v2351 = vpop.f32.mrb[0].mxu0
    %v2352 = vadd.f32 0.0, %v2351
    %2353 = vdwg.mxu0
    %2354 = vmatprep.subr.mxu0 %v2266
    %2355 = vmatpush1.msra.mxu0 %v2265
    %2356 = vmatprep.subr.mxu0 %v2274
    %2357 = vmatpush1.msra.mxu0 %v2273
    %2358 = vmatprep.subr.mxu0 0.0
    %2359 = vmatpush1.msra.mxu0 0.0
    %2360 = vmatprep.subr.mxu0 0.0
    %2361 = vmatpush1.msra.mxu0 0.0
    %2362 = vmatprep.subr.mxu0 0.0
    %2363 = vmatpush1.msra.mxu0 0.0
    %2364 = vmatprep.subr.mxu0 0.0
    %2365 = vmatpush1.msra.mxu0 0.0
    %2366 = vmatprep.subr.mxu0 0.0
    %2367 = vmatpush1.msra.mxu0 0.0
    %2368 = vmatprep.subr.mxu0 0.0
    %2369 = vmatpush1.msra.mxu0 0.0
    %2370 = vmatprep.subr.mxu0 0.0
    %2371 = vmatpush1.msra.mxu0 0.0
    %2372 = vmatprep.subr.mxu0 0.0
    %2373 = vmatpush1.msra.mxu0 0.0
    %2374 = vmatprep.subr.mxu0 0.0
    %2375 = vmatpush1.msra.mxu0 0.0
    %2376 = vmatprep.subr.mxu0 0.0
    %2377 = vmatpush1.msra.mxu0 0.0
    %2378 = vmatprep.subr.mxu0 0.0
    %2379 = vmatpush1.msra.mxu0 0.0
    %2380 = vmatprep.subr.mxu0 0.0
    %2381 = vmatpush1.msra.mxu0 0.0
    %2382 = vmatprep.subr.mxu0 0.0
    %2383 = vmatpush1.msra.mxu0 0.0
    %2384 = vmatprep.subr.mxu0 0.0
    %2385 = vmatpush1.msra.mxu0 0.0
    %2386 = vmatprep.subr.mxu0 0.0
    %2387 = vmatpush1.msra.mxu0 0.0
    %2388 = vmatprep.subr.mxu0 0.0
    %2389 = vmatpush1.msra.mxu0 0.0
    %2390 = vmatprep.subr.mxu0 0.0
    %2391 = vmatpush1.msra.mxu0 0.0
    %2392 = vmatprep.subr.mxu0 0.0
    %2393 = vmatpush1.msra.mxu0 0.0
    %2394 = vmatprep.subr.mxu0 0.0
    %2395 = vmatpush1.msra.mxu0 0.0
    %2396 = vmatprep.subr.mxu0 0.0
    %2397 = vmatpush1.msra.mxu0 0.0
    %2398 = vmatprep.subr.mxu0 0.0
    %2399 = vmatpush1.msra.mxu0 0.0
    %2400 = vmatprep.subr.mxu0 0.0
    %2401 = vmatpush1.msra.mxu0 0.0
    %2402 = vmatprep.subr.mxu0 0.0
    %2403 = vmatpush1.msra.mxu0 0.0
    %2404 = vmatprep.subr.mxu0 0.0
    %2405 = vmatpush1.msra.mxu0 0.0
    %2406 = vmatprep.subr.mxu0 0.0
    %2407 = vmatpush1.msra.mxu0 0.0
    %2408 = vmatprep.subr.mxu0 0.0
    %2409 = vmatpush1.msra.mxu0 0.0
    %2410 = vmatprep.subr.mxu0 0.0
    %2411 = vmatpush1.msra.mxu0 0.0
    %2412 = vmatprep.subr.mxu0 0.0
    %2413 = vmatpush1.msra.mxu0 0.0
    %2414 = vmatprep.subr.mxu0 0.0
    %2415 = vmatpush1.msra.mxu0 0.0
    %2416 = vmatprep.subr.mxu0 0.0
    %2417 = vmatpush1.msra.mxu0 0.0
    %2418 = vmatprep.mubr.f32.mxu0 0.0
    %2419 = vmatmul.mubr.f32.gmra.mrb[0].mxu0 %v2281
    %v2420 = vpop.f32.mrb[0].mxu0
    %v2421 = vadd.f32 0.0, %v2420
    %v2422 = vpop.f32.mrb[0].mxu0
    %v2423 = vadd.f32 0.0, %v2422
    %2424 = vdwg.mxu0
    %2425 = vmatprep.subr.mxu0 %v2268
    %2426 = vmatpush1.msra.mxu0 %v2267
    %2427 = vmatprep.subr.mxu0 %v2276
    %2428 = vmatpush1.msra.mxu0 %v2275
    %2429 = vmatprep.subr.mxu0 0.0
    %2430 = vmatpush1.msra.mxu0 0.0
    %2431 = vmatprep.subr.mxu0 0.0
    %2432 = vmatpush1.msra.mxu0 0.0
    %2433 = vmatprep.subr.mxu0 0.0
    %2434 = vmatpush1.msra.mxu0 0.0
    %2435 = vmatprep.subr.mxu0 0.0
    %2436 = vmatpush1.msra.mxu0 0.0
    %2437 = vmatprep.subr.mxu0 0.0
    %2438 = vmatpush1.msra.mxu0 0.0
    %2439 = vmatprep.subr.mxu0 0.0
    %2440 = vmatpush1.msra.mxu0 0.0
    %2441 = vmatprep.subr.mxu0 0.0
    %2442 = vmatpush1.msra.mxu0 0.0
    %2443 = vmatprep.subr.mxu0 0.0
    %2444 = vmatpush1.msra.mxu0 0.0
    %2445 = vmatprep.subr.mxu0 0.0
    %2446 = vmatpush1.msra.mxu0 0.0
    %2447 = vmatprep.subr.mxu0 0.0
    %2448 = vmatpush1.msra.mxu0 0.0
    %2449 = vmatprep.subr.mxu0 0.0
    %2450 = vmatpush1.msra.mxu0 0.0
    %2451 = vmatprep.subr.mxu0 0.0
    %2452 = vmatpush1.msra.mxu0 0.0
    %2453 = vmatprep.subr.mxu0 0.0
    %2454 = vmatpush1.msra.mxu0 0.0
    %2455 = vmatprep.subr.mxu0 0.0
    %2456 = vmatpush1.msra.mxu0 0.0
    %2457 = vmatprep.subr.mxu0 0.0
    %2458 = vmatpush1.msra.mxu0 0.0
    %2459 = vmatprep.subr.mxu0 0.0
    %2460 = vmatpush1.msra.mxu0 0.0
    %2461 = vmatprep.subr.mxu0 0.0
    %2462 = vmatpush1.msra.mxu0 0.0
    %2463 = vmatprep.subr.mxu0 0.0
    %2464 = vmatpush1.msra.mxu0 0.0
    %2465 = vmatprep.subr.mxu0 0.0
    %2466 = vmatpush1.msra.mxu0 0.0
    %2467 = vmatprep.subr.mxu0 0.0
    %2468 = vmatpush1.msra.mxu0 0.0
    %2469 = vmatprep.subr.mxu0 0.0
    %2470 = vmatpush1.msra.mxu0 0.0
    %2471 = vmatprep.subr.mxu0 0.0
    %2472 = vmatpush1.msra.mxu0 0.0
    %2473 = vmatprep.subr.mxu0 0.0
    %2474 = vmatpush1.msra.mxu0 0.0
    %2475 = vmatprep.subr.mxu0 0.0
    %2476 = vmatpush1.msra.mxu0 0.0
    %2477 = vmatprep.subr.mxu0 0.0
    %2478 = vmatpush1.msra.mxu0 0.0
    %2479 = vmatprep.subr.mxu0 0.0
    %2480 = vmatpush1.msra.mxu0 0.0
    %2481 = vmatprep.subr.mxu0 0.0
    %2482 = vmatpush1.msra.mxu0 0.0
    %2483 = vmatprep.subr.mxu0 0.0
    %2484 = vmatpush1.msra.mxu0 0.0
    %2485 = vmatprep.subr.mxu0 0.0
    %2486 = vmatpush1.msra.mxu0 0.0
    %2487 = vmatprep.subr.mxu0 0.0
    %2488 = vmatpush1.msra.mxu0 0.0
    %2489 = vmatprep.mubr.f32.mxu0 0.0
    %2490 = vmatmul.mubr.f32.gmra.mrb[0].mxu0 %v2281
    %v2491 = vpop.f32.mrb[0].mxu0
    %v2492 = vadd.f32 0.0, %v2491
    %v2493 = vpop.f32.mrb[0].mxu0
    %v2494 = vadd.f32 0.0, %v2493
    %2495 = vdwg.mxu0
    %2496 = vmatprep.subr.mxu0 %v2270
    %2497 = vmatpush1.msra.mxu0 %v2269
    %2498 = vmatprep.subr.mxu0 %v2278
    %2499 = vmatpush1.msra.mxu0 %v2277
    %2500 = vmatprep.subr.mxu0 0.0
    %2501 = vmatpush1.msra.mxu0 0.0
    %2502 = vmatprep.subr.mxu0 0.0
    %2503 = vmatpush1.msra.mxu0 0.0
    %2504 = vmatprep.subr.mxu0 0.0
    %2505 = vmatpush1.msra.mxu0 0.0
    %2506 = vmatprep.subr.mxu0 0.0
    %2507 = vmatpush1.msra.mxu0 0.0
    %2508 = vmatprep.subr.mxu0 0.0
    %2509 = vmatpush1.msra.mxu0 0.0
    %2510 = vmatprep.subr.mxu0 0.0
    %2511 = vmatpush1.msra.mxu0 0.0
    %2512 = vmatprep.subr.mxu0 0.0
    %2513 = vmatpush1.msra.mxu0 0.0
    %2514 = vmatprep.subr.mxu0 0.0
    %2515 = vmatpush1.msra.mxu0 0.0
    %2516 = vmatprep.subr.mxu0 0.0
    %2517 = vmatpush1.msra.mxu0 0.0
    %2518 = vmatprep.subr.mxu0 0.0
    %2519 = vmatpush1.msra.mxu0 0.0
    %2520 = vmatprep.subr.mxu0 0.0
    %2521 = vmatpush1.msra.mxu0 0.0
    %2522 = vmatprep.subr.mxu0 0.0
    %2523 = vmatpush1.msra.mxu0 0.0
    %2524 = vmatprep.subr.mxu0 0.0
    %2525 = vmatpush1.msra.mxu0 0.0
    %2526 = vmatprep.subr.mxu0 0.0
    %2527 = vmatpush1.msra.mxu0 0.0
    %2528 = vmatprep.subr.mxu0 0.0
    %2529 = vmatpush1.msra.mxu0 0.0
    %2530 = vmatprep.subr.mxu0 0.0
    %2531 = vmatpush1.msra.mxu0 0.0
    %2532 = vmatprep.subr.mxu0 0.0
    %2533 = vmatpush1.msra.mxu0 0.0
    %2534 = vmatprep.subr.mxu0 0.0
    %2535 = vmatpush1.msra.mxu0 0.0
    %2536 = vmatprep.subr.mxu0 0.0
    %2537 = vmatpush1.msra.mxu0 0.0
    %2538 = vmatprep.subr.mxu0 0.0
    %2539 = vmatpush1.msra.mxu0 0.0
    %2540 = vmatprep.subr.mxu0 0.0
    %2541 = vmatpush1.msra.mxu0 0.0
    %2542 = vmatprep.subr.mxu0 0.0
    %2543 = vmatpush1.msra.mxu0 0.0
    %2544 = vmatprep.subr.mxu0 0.0
    %2545 = vmatpush1.msra.mxu0 0.0
    %2546 = vmatprep.subr.mxu0 0.0
    %2547 = vmatpush1.msra.mxu0 0.0
    %2548 = vmatprep.subr.mxu0 0.0
    %2549 = vmatpush1.msra.mxu0 0.0
    %2550 = vmatprep.subr.mxu0 0.0
    %2551 = vmatpush1.msra.mxu0 0.0
    %2552 = vmatprep.subr.mxu0 0.0
    %2553 = vmatpush1.msra.mxu0 0.0
    %2554 = vmatprep.subr.mxu0 0.0
    %2555 = vmatpush1.msra.mxu0 0.0
    %2556 = vmatprep.subr.mxu0 0.0
    %2557 = vmatpush1.msra.mxu0 0.0
    %2558 = vmatprep.subr.mxu0 0.0
    %2559 = vmatpush1.msra.mxu0 0.0
    %2560 = vmatprep.mubr.f32.mxu0 0.0
    %2561 = vmatmul.mubr.f32.gmra.mrb[0].mxu0 %v2281
    %v2562 = vpop.f32.mrb[0].mxu0
    %v2563 = vadd.f32 0.0, %v2562
    %v2564 = vpop.f32.mrb[0].mxu0
    %v2565 = vadd.f32 0.0, %v2564
    %2566 = vdwg.mxu0
    %v2567 = vlaneseq
    %v2568 = vshrl.u32 %v2567, 7
    %v2569 = vsub.s32 0, %v2568
    %v2570 = vrot.slane %v2350, %v2569
    %v2571 = vlaneseq
    %v2572 = vshrl.u32 %v2571, 7
    %v2573 = vsub.s32 0, %v2572
    %v2574 = vrot.slane %v2352, %v2573
    %v2575 = vlaneseq
    %v2576 = vshrl.u32 %v2575, 7
    %v2577 = vsub.s32 0, %v2576
    %v2578 = vrot.slane %v2421, %v2577
    %v2579 = vlaneseq
    %v2580 = vshrl.u32 %v2579, 7
    %v2581 = vsub.s32 0, %v2580
    %v2582 = vrot.slane %v2423, %v2581
    %v2583 = vlaneseq
    %v2584 = vshrl.u32 %v2583, 7
    %v2585 = vsub.s32 0, %v2584
    %v2586 = vrot.slane %v2492, %v2585
    %v2587 = vlaneseq
    %v2588 = vshrl.u32 %v2587, 7
    %v2589 = vsub.s32 0, %v2588
    %v2590 = vrot.slane %v2494, %v2589
    %v2591 = vlaneseq
    %v2592 = vshrl.u32 %v2591, 7
    %v2593 = vsub.s32 0, %v2592
    %v2594 = vrot.slane %v2563, %v2593
    %v2595 = vlaneseq
    %v2596 = vshrl.u32 %v2595, 7
    %v2597 = vsub.s32 0, %v2596
    %v2598 = vrot.slane %v2565, %v2597
    %v2599 = vmul.f32 %v851, %v2570
    %v2600 = vmul.f32 %v853, %v2574
    %v2601 = vmul.f32 %v892, %v2578
    %v2602 = vmul.f32 %v894, %v2582
    %v2603 = vmul.f32 %v933, %v2586
    %v2604 = vmul.f32 %v935, %v2590
    %v2605 = vmul.f32 %v974, %v2594
    %v2606 = vmul.f32 %v976, %v2598
    %v2607 = vlaneseq
    %v2608 = vshrl.u32 %v2607, 7
    %v2609 = vsub.s32 1, %v2608
    %v2610 = vrot.slane %v2350, %v2609
    %v2611 = vlaneseq
    %v2612 = vshrl.u32 %v2611, 7
    %v2613 = vsub.s32 1, %v2612
    %v2614 = vrot.slane %v2352, %v2613
    %v2615 = vlaneseq
    %v2616 = vshrl.u32 %v2615, 7
    %v2617 = vsub.s32 1, %v2616
    %v2618 = vrot.slane %v2421, %v2617
    %v2619 = vlaneseq
    %v2620 = vshrl.u32 %v2619, 7
    %v2621 = vsub.s32 1, %v2620
    %v2622 = vrot.slane %v2423, %v2621
    %v2623 = vlaneseq
    %v2624 = vshrl.u32 %v2623, 7
    %v2625 = vsub.s32 1, %v2624
    %v2626 = vrot.slane %v2492, %v2625
    %v2627 = vlaneseq
    %v2628 = vshrl.u32 %v2627, 7
    %v2629 = vsub.s32 1, %v2628
    %v2630 = vrot.slane %v2494, %v2629
    %v2631 = vlaneseq
    %v2632 = vshrl.u32 %v2631, 7
    %v2633 = vsub.s32 1, %v2632
    %v2634 = vrot.slane %v2563, %v2633
    %v2635 = vlaneseq
    %v2636 = vshrl.u32 %v2635, 7
    %v2637 = vsub.s32 1, %v2636
    %v2638 = vrot.slane %v2565, %v2637
    %v2639 = vadd.f32 %v2599, %v2610
    %v2640 = vadd.f32 %v2600, %v2614
    %v2641 = vadd.f32 %v2601, %v2618
    %v2642 = vadd.f32 %v2602, %v2622
    %v2643 = vadd.f32 %v2603, %v2626
    %v2644 = vadd.f32 %v2604, %v2630
    %v2645 = vadd.f32 %v2605, %v2634
    %v2646 = vadd.f32 %v2606, %v2638
    %v2647 = vmax.f32 %v2639, 0.0
    %v2648 = vmax.f32 %v2640, 0.0
    %v2649 = vmax.f32 %v2641, 0.0
    %v2650 = vmax.f32 %v2642, 0.0
    %v2651 = vmax.f32 %v2643, 0.0
    %v2652 = vmax.f32 %v2644, 0.0
    %v2653 = vmax.f32 %v2645, 0.0
    %v2654 = vmax.f32 %v2646, 0.0
    %v2655 = vpack.c.bf16 %v2647, %v2647
    %v2656 = vpack.c.bf16 %v2648, %v2648
    %v2657 = vpack.c.bf16 %v2649, %v2649
    %v2658 = vpack.c.bf16 %v2650, %v2650
    %v2659 = vpack.c.bf16 %v2651, %v2651
    %v2660 = vpack.c.bf16 %v2652, %v2652
    %v2661 = vpack.c.bf16 %v2653, %v2653
    %v2662 = vpack.c.bf16 %v2654, %v2654
    %v2663 = vld [vmem:[%s2] sm:$0xff]
    %v2664 = vld [vmem:[%s2 + $0x8] sm:$0xff]
    %v2665 = vld [vmem:[%s2 + $0x10] sm:$0xf]
    %v2666 = vld [vmem:[%s2 + $0x14] sm:$0xff]
    %v2667 = vld [vmem:[%s2 + $0x1c] sm:$0xff]
    %v2668 = vld [vmem:[%s2 + $0x24] sm:$0xf]
    %v2669 = vld [vmem:[%s2 + $0x28] sm:$0xff]
    %v2670 = vld [vmem:[%s2 + $0x30] sm:$0xff]
    %v2671 = vld [vmem:[%s2 + $0x38] sm:$0xf]
    %v2672 = vld [vmem:[%s2 + $0x3c] sm:$0xff]
    %v2673 = vld [vmem:[%s2 + $0x44] sm:$0xff]
    %v2674 = vld [vmem:[%s2 + $0x4c] sm:$0xf]
    %v2675 = vld [vmem:[%s2 + $0x50] sm:$0xff]
    %v2676 = vld [vmem:[%s2 + $0x58] sm:$0xff]
    %v2677 = vld [vmem:[%s2 + $0x60] sm:$0xf]
    %v2678 = vld [vmem:[%s2 + $0x64] sm:$0xff]
    %v2679 = vld [vmem:[%s2 + $0x6c] sm:$0xff]
    %v2680 = vld [vmem:[%s2 + $0x74] sm:$0xf]
    %v2681 = vld [vmem:[%s2 + $0x78] sm:$0xff]
    %v2682 = vld [vmem:[%s2 + $0x80] sm:$0xff]
    %v2683 = vld [vmem:[%s2 + $0x88] sm:$0xf]
    %v2684 = vld [vmem:[%s2 + $0x8c] sm:$0xff]
    %v2685 = vld [vmem:[%s2 + $0x94] sm:$0xff]
    %v2686 = vld [vmem:[%s2 + $0x9c] sm:$0xf]
    %v2687 = vld [vmem:[%s2 + $0xa0] sm:$0xff]
    %v2688 = vld [vmem:[%s2 + $0xa8] sm:$0xff]
    %v2689 = vld [vmem:[%s2 + $0xb0] sm:$0xf]
    %v2690 = vld [vmem:[%s2 + $0xb4] sm:$0xff]
    %v2691 = vld [vmem:[%s2 + $0xbc] sm:$0xff]
    %v2692 = vld [vmem:[%s2 + $0xc4] sm:$0xf]
    %v2693 = vld [vmem:[%s2 + $0xc8] sm:$0xff]
    %v2694 = vld [vmem:[%s2 + $0xd0] sm:$0xff]
    %v2695 = vld [vmem:[%s2 + $0xd8] sm:$0xf]
    %v2696 = vld [vmem:[%s2 + $0xdc] sm:$0xff]
    %v2697 = vld [vmem:[%s2 + $0xe4] sm:$0xff]
    %v2698 = vld [vmem:[%s2 + $0xec] sm:$0xf]
    %v2699 = vld [vmem:[%s2 + $0xf0] sm:$0xff]
    %v2700 = vld [vmem:[%s2 + $0xf8] sm:$0xff]
    %v2701 = vld [vmem:[%s2 + $0x100] sm:$0xf]
    %v2702 = vld [vmem:[%s2 + $0x104] sm:$0xff]
    %v2703 = vld [vmem:[%s2 + $0x10c] sm:$0xff]
    %v2704 = vld [vmem:[%s2 + $0x114] sm:$0xf]
    %v2705 = vld [vmem:[%s2 + $0x118] sm:$0xff]
    %v2706 = vld [vmem:[%s2 + $0x120] sm:$0xff]
    %v2707 = vld [vmem:[%s2 + $0x128] sm:$0xf]
    %v2708 = vld [vmem:[%s2 + $0x12c] sm:$0xff]
    %v2709 = vld [vmem:[%s2 + $0x134] sm:$0xff]
    %v2710 = vld [vmem:[%s2 + $0x13c] sm:$0xf]
    %v2711 = vld [vmem:[%s2 + $0x140] sm:$0xff]
    %v2712 = vld [vmem:[%s2 + $0x148] sm:$0xff]
    %v2713 = vld [vmem:[%s2 + $0x150] sm:$0xf]
    %v2714 = vld [vmem:[%s2 + $0x154] sm:$0xff]
    %v2715 = vld [vmem:[%s2 + $0x15c] sm:$0xff]
    %v2716 = vld [vmem:[%s2 + $0x164] sm:$0xf]
    %v2717 = vld [vmem:[%s2 + $0x168] sm:$0xff]
    %v2718 = vld [vmem:[%s2 + $0x170] sm:$0xff]
    %v2719 = vld [vmem:[%s2 + $0x178] sm:$0xf]
    %v2720 = vld [vmem:[%s2 + $0x17c] sm:$0xff]
    %v2721 = vld [vmem:[%s2 + $0x184] sm:$0xff]
    %v2722 = vld [vmem:[%s2 + $0x18c] sm:$0xf]
    %v2723 = vld [vmem:[%s2 + $0x190] sm:$0xff]
    %v2724 = vld [vmem:[%s2 + $0x198] sm:$0xff]
    %v2725 = vld [vmem:[%s2 + $0x1a0] sm:$0xf]
    %v2726 = vld [vmem:[%s2 + $0x1a4] sm:$0xff]
    %v2727 = vld [vmem:[%s2 + $0x1ac] sm:$0xff]
    %v2728 = vld [vmem:[%s2 + $0x1b4] sm:$0xf]
    %v2729 = vld [vmem:[%s2 + $0x1b8] sm:$0xff]
    %v2730 = vld [vmem:[%s2 + $0x1c0] sm:$0xff]
    %v2731 = vld [vmem:[%s2 + $0x1c8] sm:$0xf]
    %v2732 = vld [vmem:[%s2 + $0x1cc] sm:$0xff]
    %v2733 = vld [vmem:[%s2 + $0x1d4] sm:$0xff]
    %v2734 = vld [vmem:[%s2 + $0x1dc] sm:$0xf]
    %v2735 = vld [vmem:[%s2 + $0x1e0] sm:$0xff]
    %v2736 = vld [vmem:[%s2 + $0x1e8] sm:$0xff]
    %v2737 = vld [vmem:[%s2 + $0x1f0] sm:$0xf]
    %v2738 = vld [vmem:[%s2 + $0x1f4] sm:$0xff]
    %v2739 = vld [vmem:[%s2 + $0x1fc] sm:$0xff]
    %v2740 = vld [vmem:[%s2 + $0x204] sm:$0xf]
    %v2741 = vld [vmem:[%s2 + $0x208] sm:$0xff]
    %v2742 = vld [vmem:[%s2 + $0x210] sm:$0xff]
    %v2743 = vld [vmem:[%s2 + $0x218] sm:$0xf]
    %v2744 = vld [vmem:[%s2 + $0x21c] sm:$0xff]
    %v2745 = vld [vmem:[%s2 + $0x224] sm:$0xff]
    %v2746 = vld [vmem:[%s2 + $0x22c] sm:$0xf]
    %v2747 = vld [vmem:[%s2 + $0x230] sm:$0xff]
    %v2748 = vld [vmem:[%s2 + $0x238] sm:$0xff]
    %v2749 = vld [vmem:[%s2 + $0x240] sm:$0xf]
    %v2750 = vld [vmem:[%s2 + $0x244] sm:$0xff]
    %v2751 = vld [vmem:[%s2 + $0x24c] sm:$0xff]
    %v2752 = vld [vmem:[%s2 + $0x254] sm:$0xf]
    %v2753 = vld [vmem:[%s2 + $0x258] sm:$0xff]
    %v2754 = vld [vmem:[%s2 + $0x260] sm:$0xff]
    %v2755 = vld [vmem:[%s2 + $0x268] sm:$0xf]
    %v2756 = vld [vmem:[%s2 + $0x26c] sm:$0xff]
    %v2757 = vld [vmem:[%s2 + $0x274] sm:$0xff]
    %v2758 = vld [vmem:[%s2 + $0x27c] sm:$0xf]
    %v2759 = vld [vmem:[%s2 + $0x280] sm:$0xff]
    %v2760 = vld [vmem:[%s2 + $0x288] sm:$0xff]
    %v2761 = vld [vmem:[%s2 + $0x290] sm:$0xf]
    %v2762 = vld [vmem:[%s2 + $0x294] sm:$0xff]
    %v2763 = vld [vmem:[%s2 + $0x29c] sm:$0xff]
    %v2764 = vld [vmem:[%s2 + $0x2a4] sm:$0xf]
    %v2765 = vld [vmem:[%s2 + $0x2a8] sm:$0xff]
    %v2766 = vld [vmem:[%s2 + $0x2b0] sm:$0xff]
    %v2767 = vld [vmem:[%s2 + $0x2b8] sm:$0xf]
    %v2768 = vld [vmem:[%s2 + $0x2bc] sm:$0xff]
    %v2769 = vld [vmem:[%s2 + $0x2c4] sm:$0xff]
    %v2770 = vld [vmem:[%s2 + $0x2cc] sm:$0xf]
    %v2771 = vld [vmem:[%s2 + $0x2d0] sm:$0xff]
    %v2772 = vld [vmem:[%s2 + $0x2d8] sm:$0xff]
    %v2773 = vld [vmem:[%s2 + $0x2e0] sm:$0xf]
    %v2774 = vld [vmem:[%s2 + $0x2e4] sm:$0xff]
    %v2775 = vld [vmem:[%s2 + $0x2ec] sm:$0xff]
    %v2776 = vld [vmem:[%s2 + $0x2f4] sm:$0xf]
    %v2777 = vld [vmem:[%s2 + $0x2f8] sm:$0xff]
    %v2778 = vld [vmem:[%s2 + $0x300] sm:$0xff]
    %v2779 = vld [vmem:[%s2 + $0x308] sm:$0xf]
    %v2780 = vld [vmem:[%s2 + $0x30c] sm:$0xff]
    %v2781 = vld [vmem:[%s2 + $0x314] sm:$0xff]
    %v2782 = vld [vmem:[%s2 + $0x31c] sm:$0xf]
    %v2783 = vld [vmem:[%s2 + $0x320] sm:$0xff]
    %v2784 = vld [vmem:[%s2 + $0x328] sm:$0xff]
    %v2785 = vld [vmem:[%s2 + $0x330] sm:$0xf]
    %v2786 = vld [vmem:[%s2 + $0x334] sm:$0xff]
    %v2787 = vld [vmem:[%s2 + $0x33c] sm:$0xff]
    %v2788 = vld [vmem:[%s2 + $0x344] sm:$0xf]
    %v2789 = vld [vmem:[%s2 + $0x348] sm:$0xff]
    %v2790 = vld [vmem:[%s2 + $0x350] sm:$0xff]
    %v2791 = vld [vmem:[%s2 + $0x358] sm:$0xf]
    %v2792 = vld [vmem:[%s2 + $0x35c] sm:$0xff]
    %v2793 = vld [vmem:[%s2 + $0x364] sm:$0xff]
    %v2794 = vld [vmem:[%s2 + $0x36c] sm:$0xf]
    %v2795 = vld [vmem:[%s2 + $0x370] sm:$0xff]
    %v2796 = vld [vmem:[%s2 + $0x378] sm:$0xff]
    %v2797 = vld [vmem:[%s2 + $0x380] sm:$0xf]
    %v2798 = vld [vmem:[%s2 + $0x384] sm:$0xff]
    %v2799 = vld [vmem:[%s2 + $0x38c] sm:$0xff]
    %v2800 = vld [vmem:[%s2 + $0x394] sm:$0xf]
    %v2801 = vld [vmem:[%s2 + $0x398] sm:$0xff]
    %v2802 = vld [vmem:[%s2 + $0x3a0] sm:$0xff]
    %v2803 = vld [vmem:[%s2 + $0x3a8] sm:$0xf]
    %v2804 = vld [vmem:[%s2 + $0x3ac] sm:$0xff]
    %v2805 = vld [vmem:[%s2 + $0x3b4] sm:$0xff]
    %v2806 = vld [vmem:[%s2 + $0x3bc] sm:$0xf]
    %v2807 = vld [vmem:[%s2 + $0x3c0] sm:$0xff]
    %v2808 = vld [vmem:[%s2 + $0x3c8] sm:$0xff]
    %v2809 = vld [vmem:[%s2 + $0x3d0] sm:$0xf]
    %v2810 = vld [vmem:[%s2 + $0x3d4] sm:$0xff]
    %v2811 = vld [vmem:[%s2 + $0x3dc] sm:$0xff]
    %v2812 = vld [vmem:[%s2 + $0x3e4] sm:$0xf]
    %v2813 = vld [vmem:[%s2 + $0x3e8] sm:$0xff]
    %v2814 = vld [vmem:[%s2 + $0x3f0] sm:$0xff]
    %v2815 = vld [vmem:[%s2 + $0x3f8] sm:$0xf]
    %v2816 = vld [vmem:[%s2 + $0x3fc] sm:$0xff]
    %v2817 = vld [vmem:[%s2 + $0x404] sm:$0xff]
    %v2818 = vld [vmem:[%s2 + $0x40c] sm:$0xf]
    %v2819 = vld [vmem:[%s2 + $0x410] sm:$0xff]
    %v2820 = vld [vmem:[%s2 + $0x418] sm:$0xff]
    %v2821 = vld [vmem:[%s2 + $0x420] sm:$0xf]
    %v2822 = vld [vmem:[%s2 + $0x424] sm:$0xff]
    %v2823 = vld [vmem:[%s2 + $0x42c] sm:$0xff]
    %v2824 = vld [vmem:[%s2 + $0x434] sm:$0xf]
    %v2825 = vld [vmem:[%s2 + $0x438] sm:$0xff]
    %v2826 = vld [vmem:[%s2 + $0x440] sm:$0xff]
    %v2827 = vld [vmem:[%s2 + $0x448] sm:$0xf]
    %v2828 = vld [vmem:[%s2 + $0x44c] sm:$0xff]
    %v2829 = vld [vmem:[%s2 + $0x454] sm:$0xff]
    %v2830 = vld [vmem:[%s2 + $0x45c] sm:$0xf]
    %v2831 = vld [vmem:[%s2 + $0x460] sm:$0xff]
    %v2832 = vld [vmem:[%s2 + $0x468] sm:$0xff]
    %v2833 = vld [vmem:[%s2 + $0x470] sm:$0xf]
    %v2834 = vld [vmem:[%s2 + $0x474] sm:$0xff]
    %v2835 = vld [vmem:[%s2 + $0x47c] sm:$0xff]
    %v2836 = vld [vmem:[%s2 + $0x484] sm:$0xf]
    %v2837 = vld [vmem:[%s2 + $0x488] sm:$0xff]
    %v2838 = vld [vmem:[%s2 + $0x490] sm:$0xff]
    %v2839 = vld [vmem:[%s2 + $0x498] sm:$0xf]
    %v2840 = vld [vmem:[%s2 + $0x49c] sm:$0xff]
    %v2841 = vld [vmem:[%s2 + $0x4a4] sm:$0xff]
    %v2842 = vld [vmem:[%s2 + $0x4ac] sm:$0xf]
    %v2843 = vld [vmem:[%s2 + $0x4b0] sm:$0xff]
    %v2844 = vld [vmem:[%s2 + $0x4b8] sm:$0xff]
    %v2845 = vld [vmem:[%s2 + $0x4c0] sm:$0xf]
    %v2846 = vld [vmem:[%s2 + $0x4c4] sm:$0xff]
    %v2847 = vld [vmem:[%s2 + $0x4cc] sm:$0xff]
    %v2848 = vld [vmem:[%s2 + $0x4d4] sm:$0xf]
    %v2849 = vld [vmem:[%s2 + $0x4d8] sm:$0xff]
    %v2850 = vld [vmem:[%s2 + $0x4e0] sm:$0xff]
    %v2851 = vld [vmem:[%s2 + $0x4e8] sm:$0xf]
    %v2852 = vld [vmem:[%s2 + $0x4ec] sm:$0xff]
    %v2853 = vld [vmem:[%s2 + $0x4f4] sm:$0xff]
    %v2854 = vld [vmem:[%s2 + $0x4fc] sm:$0xf]
    %v2855 = vld [vmem:[%s2 + $0x500] sm:$0xff]
    %v2856 = vld [vmem:[%s2 + $0x508] sm:$0xff]
    %v2857 = vld [vmem:[%s2 + $0x510] sm:$0xf]
    %v2858 = vld [vmem:[%s2 + $0x514] sm:$0xff]
    %v2859 = vld [vmem:[%s2 + $0x51c] sm:$0xff]
    %v2860 = vld [vmem:[%s2 + $0x524] sm:$0xf]
    %v2861 = vld [vmem:[%s2 + $0x528] sm:$0xff]
    %v2862 = vld [vmem:[%s2 + $0x530] sm:$0xff]
    %v2863 = vld [vmem:[%s2 + $0x538] sm:$0xf]
    %v2864 = vld [vmem:[%s2 + $0x53c] sm:$0xff]
    %v2865 = vld [vmem:[%s2 + $0x544] sm:$0xff]
    %v2866 = vld [vmem:[%s2 + $0x54c] sm:$0xf]
    %v2867 = vld [vmem:[%s2 + $0x550] sm:$0xff]
    %v2868 = vld [vmem:[%s2 + $0x558] sm:$0xff]
    %v2869 = vld [vmem:[%s2 + $0x560] sm:$0xf]
    %v2870 = vld [vmem:[%s2 + $0x564] sm:$0xff]
    %v2871 = vld [vmem:[%s2 + $0x56c] sm:$0xff]
    %v2872 = vld [vmem:[%s2 + $0x574] sm:$0xf]
    %v2873 = vld [vmem:[%s2 + $0x578] sm:$0xff]
    %v2874 = vld [vmem:[%s2 + $0x580] sm:$0xff]
    %v2875 = vld [vmem:[%s2 + $0x588] sm:$0xf]
    %v2876 = vld [vmem:[%s2 + $0x58c] sm:$0xff]
    %v2877 = vld [vmem:[%s2 + $0x594] sm:$0xff]
    %v2878 = vld [vmem:[%s2 + $0x59c] sm:$0xf]
    %v2879 = vld [vmem:[%s2 + $0x5a0] sm:$0xff]
    %v2880 = vld [vmem:[%s2 + $0x5a8] sm:$0xff]
    %v2881 = vld [vmem:[%s2 + $0x5b0] sm:$0xf]
    %v2882 = vld [vmem:[%s2 + $0x5b4] sm:$0xff]
    %v2883 = vld [vmem:[%s2 + $0x5bc] sm:$0xff]
    %v2884 = vld [vmem:[%s2 + $0x5c4] sm:$0xf]
    %v2885 = vld [vmem:[%s2 + $0x5c8] sm:$0xff]
    %v2886 = vld [vmem:[%s2 + $0x5d0] sm:$0xff]
    %v2887 = vld [vmem:[%s2 + $0x5d8] sm:$0xf]
    %v2888 = vld [vmem:[%s2 + $0x5dc] sm:$0xff]
    %v2889 = vld [vmem:[%s2 + $0x5e4] sm:$0xff]
    %v2890 = vld [vmem:[%s2 + $0x5ec] sm:$0xf]
    %v2891 = vld [vmem:[%s2 + $0x5f0] sm:$0xff]
    %v2892 = vld [vmem:[%s2 + $0x5f8] sm:$0xff]
    %v2893 = vld [vmem:[%s2 + $0x600] sm:$0xf]
    %v2894 = vld [vmem:[%s2 + $0x604] sm:$0xff]
    %v2895 = vld [vmem:[%s2 + $0x60c] sm:$0xff]
    %v2896 = vld [vmem:[%s2 + $0x614] sm:$0xf]
    %v2897 = vld [vmem:[%s2 + $0x618] sm:$0xff]
    %v2898 = vld [vmem:[%s2 + $0x620] sm:$0xff]
    %v2899 = vld [vmem:[%s2 + $0x628] sm:$0xf]
    %v2900 = vld [vmem:[%s2 + $0x62c] sm:$0xff]
    %v2901 = vld [vmem:[%s2 + $0x634] sm:$0xff]
    %v2902 = vld [vmem:[%s2 + $0x63c] sm:$0xf]
    %v2903 = vld [vmem:[%s2 + $0x640] sm:$0xff]
    %v2904 = vld [vmem:[%s2 + $0x648] sm:$0xff]
    %v2905 = vld [vmem:[%s2 + $0x650] sm:$0xf]
    %v2906 = vld [vmem:[%s2 + $0x654] sm:$0xff]
    %v2907 = vld [vmem:[%s2 + $0x65c] sm:$0xff]
    %v2908 = vld [vmem:[%s2 + $0x664] sm:$0xf]
    %v2909 = vld [vmem:[%s2 + $0x668] sm:$0xff]
    %v2910 = vld [vmem:[%s2 + $0x670] sm:$0xff]
    %v2911 = vld [vmem:[%s2 + $0x678] sm:$0xf]
    %v2912 = vld [vmem:[%s2 + $0x67c] sm:$0xff]
    %v2913 = vld [vmem:[%s2 + $0x684] sm:$0xff]
    %v2914 = vld [vmem:[%s2 + $0x68c] sm:$0xf]
    %v2915 = vld [vmem:[%s2 + $0x690] sm:$0xff]
    %v2916 = vld [vmem:[%s2 + $0x698] sm:$0xff]
    %v2917 = vld [vmem:[%s2 + $0x6a0] sm:$0xf]
    %v2918 = vld [vmem:[%s2 + $0x6a4] sm:$0xff]
    %v2919 = vld [vmem:[%s2 + $0x6ac] sm:$0xff]
    %v2920 = vld [vmem:[%s2 + $0x6b4] sm:$0xf]
    %v2921 = vld [vmem:[%s2 + $0x6b8] sm:$0xff]
    %v2922 = vld [vmem:[%s2 + $0x6c0] sm:$0xff]
    %v2923 = vld [vmem:[%s2 + $0x6c8] sm:$0xf]
    %v2924 = vld [vmem:[%s2 + $0x6cc] sm:$0xff]
    %v2925 = vld [vmem:[%s2 + $0x6d4] sm:$0xff]
    %v2926 = vld [vmem:[%s2 + $0x6dc] sm:$0xf]
    %v2927 = vld [vmem:[%s2 + $0x6e0] sm:$0xff]
    %v2928 = vld [vmem:[%s2 + $0x6e8] sm:$0xff]
    %v2929 = vld [vmem:[%s2 + $0x6f0] sm:$0xf]
    %v2930 = vld [vmem:[%s2 + $0x6f4] sm:$0xff]
    %v2931 = vld [vmem:[%s2 + $0x6fc] sm:$0xff]
    %v2932 = vld [vmem:[%s2 + $0x704] sm:$0xf]
    %v2933 = vld [vmem:[%s2 + $0x708] sm:$0xff]
    %v2934 = vld [vmem:[%s2 + $0x710] sm:$0xff]
    %v2935 = vld [vmem:[%s2 + $0x718] sm:$0xf]
    %v2936 = vld [vmem:[%s2 + $0x71c] sm:$0xff]
    %v2937 = vld [vmem:[%s2 + $0x724] sm:$0xff]
    %v2938 = vld [vmem:[%s2 + $0x72c] sm:$0xf]
    %v2939 = vld [vmem:[%s2 + $0x730] sm:$0xff]
    %v2940 = vld [vmem:[%s2 + $0x738] sm:$0xff]
    %v2941 = vld [vmem:[%s2 + $0x740] sm:$0xf]
    %v2942 = vld [vmem:[%s2 + $0x744] sm:$0xff]
    %v2943 = vld [vmem:[%s2 + $0x74c] sm:$0xff]
    %v2944 = vld [vmem:[%s2 + $0x754] sm:$0xf]
    %v2945 = vld [vmem:[%s2 + $0x758] sm:$0xff]
    %v2946 = vld [vmem:[%s2 + $0x760] sm:$0xff]
    %v2947 = vld [vmem:[%s2 + $0x768] sm:$0xf]
    %v2948 = vld [vmem:[%s2 + $0x76c] sm:$0xff]
    %v2949 = vld [vmem:[%s2 + $0x774] sm:$0xff]
    %v2950 = vld [vmem:[%s2 + $0x77c] sm:$0xf]
    %v2951 = vld [vmem:[%s2 + $0x780] sm:$0xff]
    %v2952 = vld [vmem:[%s2 + $0x788] sm:$0xff]
    %v2953 = vld [vmem:[%s2 + $0x790] sm:$0xf]
    %v2954 = vld [vmem:[%s2 + $0x794] sm:$0xff]
    %v2955 = vld [vmem:[%s2 + $0x79c] sm:$0xff]
    %v2956 = vld [vmem:[%s2 + $0x7a4] sm:$0xf]
    %v2957 = vld [vmem:[%s2 + $0x7a8] sm:$0xff]
    %v2958 = vld [vmem:[%s2 + $0x7b0] sm:$0xff]
    %v2959 = vld [vmem:[%s2 + $0x7b8] sm:$0xf]
    %v2960 = vld [vmem:[%s2 + $0x7bc] sm:$0xff]
    %v2961 = vld [vmem:[%s2 + $0x7c4] sm:$0xff]
    %v2962 = vld [vmem:[%s2 + $0x7cc] sm:$0xf]
    %v2963 = vld [vmem:[%s2 + $0x7d0] sm:$0xff]
    %v2964 = vld [vmem:[%s2 + $0x7d8] sm:$0xff]
    %v2965 = vld [vmem:[%s2 + $0x7e0] sm:$0xf]
    %v2966 = vld [vmem:[%s2 + $0x7e4] sm:$0xff]
    %v2967 = vld [vmem:[%s2 + $0x7ec] sm:$0xff]
    %v2968 = vld [vmem:[%s2 + $0x7f4] sm:$0xf]
    %v2969 = vld [vmem:[%s2 + $0x7f8] sm:$0xff]
    %v2970 = vld [vmem:[%s2 + $0x800] sm:$0xff]
    %v2971 = vld [vmem:[%s2 + $0x808] sm:$0xf]
    %v2972 = vld [vmem:[%s2 + $0x80c] sm:$0xff]
    %v2973 = vld [vmem:[%s2 + $0x814] sm:$0xff]
    %v2974 = vld [vmem:[%s2 + $0x81c] sm:$0xf]
    %v2975 = vld [vmem:[%s2 + $0x820] sm:$0xff]
    %v2976 = vld [vmem:[%s2 + $0x828] sm:$0xff]
    %v2977 = vld [vmem:[%s2 + $0x830] sm:$0xf]
    %v2978 = vld [vmem:[%s2 + $0x834] sm:$0xff]
    %v2979 = vld [vmem:[%s2 + $0x83c] sm:$0xff]
    %v2980 = vld [vmem:[%s2 + $0x844] sm:$0xf]
    %v2981 = vld [vmem:[%s2 + $0x848] sm:$0xff]
    %v2982 = vld [vmem:[%s2 + $0x850] sm:$0xff]
    %v2983 = vld [vmem:[%s2 + $0x858] sm:$0xf]
    %v2984 = vld [vmem:[%s2 + $0x85c] sm:$0xff]
    %v2985 = vld [vmem:[%s2 + $0x864] sm:$0xff]
    %v2986 = vld [vmem:[%s2 + $0x86c] sm:$0xf]
    %v2987 = vld [vmem:[%s2 + $0x870] sm:$0xff]
    %v2988 = vld [vmem:[%s2 + $0x878] sm:$0xff]
    %v2989 = vld [vmem:[%s2 + $0x880] sm:$0xf]
    %v2990 = vld [vmem:[%s2 + $0x884] sm:$0xff]
    %v2991 = vld [vmem:[%s2 + $0x88c] sm:$0xff]
    %v2992 = vld [vmem:[%s2 + $0x894] sm:$0xf]
    %v2993 = vld [vmem:[%s2 + $0x898] sm:$0xff]
    %v2994 = vld [vmem:[%s2 + $0x8a0] sm:$0xff]
    %v2995 = vld [vmem:[%s2 + $0x8a8] sm:$0xf]
    %v2996 = vld [vmem:[%s2 + $0x8ac] sm:$0xff]
    %v2997 = vld [vmem:[%s2 + $0x8b4] sm:$0xff]
    %v2998 = vld [vmem:[%s2 + $0x8bc] sm:$0xf]
    %v2999 = vld [vmem:[%s2 + $0x8c0] sm:$0xff]
    %v3000 = vld [vmem:[%s2 + $0x8c8] sm:$0xff]
    %v3001 = vld [vmem:[%s2 + $0x8d0] sm:$0xf]
    %v3002 = vld [vmem:[%s2 + $0x8d4] sm:$0xff]
    %v3003 = vld [vmem:[%s2 + $0x8dc] sm:$0xff]
    %v3004 = vld [vmem:[%s2 + $0x8e4] sm:$0xf]
    %v3005 = vld [vmem:[%s2 + $0x8e8] sm:$0xff]
    %v3006 = vld [vmem:[%s2 + $0x8f0] sm:$0xff]
    %v3007 = vld [vmem:[%s2 + $0x8f8] sm:$0xf]
    %v3008 = vld [vmem:[%s2 + $0x8fc] sm:$0xff]
    %v3009 = vld [vmem:[%s2 + $0x904] sm:$0xff]
    %v3010 = vld [vmem:[%s2 + $0x90c] sm:$0xf]
    %v3011 = vld [vmem:[%s2 + $0x910] sm:$0xff]
    %v3012 = vld [vmem:[%s2 + $0x918] sm:$0xff]
    %v3013 = vld [vmem:[%s2 + $0x920] sm:$0xf]
    %v3014 = vld [vmem:[%s2 + $0x924] sm:$0xff]
    %v3015 = vld [vmem:[%s2 + $0x92c] sm:$0xff]
    %v3016 = vld [vmem:[%s2 + $0x934] sm:$0xf]
    %v3017 = vld [vmem:[%s2 + $0x938] sm:$0xff]
    %v3018 = vld [vmem:[%s2 + $0x940] sm:$0xff]
    %v3019 = vld [vmem:[%s2 + $0x948] sm:$0xf]
    %v3020 = vld [vmem:[%s2 + $0x94c] sm:$0xff]
    %v3021 = vld [vmem:[%s2 + $0x954] sm:$0xff]
    %v3022 = vld [vmem:[%s2 + $0x95c] sm:$0xf]
    %v3023 = vld [vmem:[%s2 + $0x960] sm:$0xff]
    %v3024 = vld [vmem:[%s2 + $0x968] sm:$0xff]
    %v3025 = vld [vmem:[%s2 + $0x970] sm:$0xf]
    %v3026 = vld [vmem:[%s2 + $0x974] sm:$0xff]
    %v3027 = vld [vmem:[%s2 + $0x97c] sm:$0xff]
    %v3028 = vld [vmem:[%s2 + $0x984] sm:$0xf]
    %v3029 = vld [vmem:[%s2 + $0x988] sm:$0xff]
    %v3030 = vld [vmem:[%s2 + $0x990] sm:$0xff]
    %v3031 = vld [vmem:[%s2 + $0x998] sm:$0xf]
    %v3032 = vld [vmem:[%s2 + $0x99c] sm:$0xff]
    %v3033 = vld [vmem:[%s2 + $0x9a4] sm:$0xff]
    %v3034 = vld [vmem:[%s2 + $0x9ac] sm:$0xf]
    %v3035 = vld [vmem:[%s2 + $0x9b0] sm:$0xff]
    %v3036 = vld [vmem:[%s2 + $0x9b8] sm:$0xff]
    %v3037 = vld [vmem:[%s2 + $0x9c0] sm:$0xf]
    %v3038 = vld [vmem:[%s2 + $0x9c4] sm:$0xff]
    %v3039 = vld [vmem:[%s2 + $0x9cc] sm:$0xff]
    %v3040 = vld [vmem:[%s2 + $0x9d4] sm:$0xf]
    %v3041 = vld [vmem:[%s2 + $0x9d8] sm:$0xff]
    %v3042 = vld [vmem:[%s2 + $0x9e0] sm:$0xff]
    %v3043 = vld [vmem:[%s2 + $0x9e8] sm:$0xf]
    %v3044 = vld [vmem:[%s2 + $0x9ec] sm:$0xff]
    %v3045 = vld [vmem:[%s2 + $0x9f4] sm:$0xff]
    %v3046 = vld [vmem:[%s2 + $0x9fc] sm:$0xf]
    %v3431 = vunpack.c.l.b16 %v2663
    %v3432 = vunpack.c.h.b16 %v2663
    %v3433 = vunpack.c.l.b16 %v2664
    %v3434 = vunpack.c.h.b16 %v2664
    %v3435 = vunpack.c.l.b16 %v2665
    %v3436 = vunpack.c.l.b16 %v2666
    %v3437 = vunpack.c.h.b16 %v2666
    %v3438 = vunpack.c.l.b16 %v2667
    %v3439 = vunpack.c.h.b16 %v2667
    %v3440 = vunpack.c.l.b16 %v2668
    %v3441 = vunpack.c.l.b16 %v2669
    %v3442 = vunpack.c.h.b16 %v2669
    %v3443 = vunpack.c.l.b16 %v2670
    %v3444 = vunpack.c.h.b16 %v2670
    %v3445 = vunpack.c.l.b16 %v2671
    %v3446 = vunpack.c.l.b16 %v2672
    %v3447 = vunpack.c.h.b16 %v2672
    %v3448 = vunpack.c.l.b16 %v2673
    %v3449 = vunpack.c.h.b16 %v2673
    %v3450 = vunpack.c.l.b16 %v2674
    %v3451 = vunpack.c.l.b16 %v2675
    %v3452 = vunpack.c.h.b16 %v2675
    %v3453 = vunpack.c.l.b16 %v2676
    %v3454 = vunpack.c.h.b16 %v2676
    %v3455 = vunpack.c.l.b16 %v2677
    %v3456 = vunpack.c.l.b16 %v2678
    %v3457 = vunpack.c.h.b16 %v2678
    %v3458 = vunpack.c.l.b16 %v2679
    %v3459 = vunpack.c.h.b16 %v2679
    %v3460 = vunpack.c.l.b16 %v2680
    %v3461 = vunpack.c.l.b16 %v2681
    %v3462 = vunpack.c.h.b16 %v2681
    %v3463 = vunpack.c.l.b16 %v2682
    %v3464 = vunpack.c.h.b16 %v2682
    %v3465 = vunpack.c.l.b16 %v2683
    %v3466 = vunpack.c.l.b16 %v2684
    %v3467 = vunpack.c.h.b16 %v2684
    %v3468 = vunpack.c.l.b16 %v2685
    %v3469 = vunpack.c.h.b16 %v2685
    %v3470 = vunpack.c.l.b16 %v2686
    %v3471 = vunpack.c.l.b16 %v2687
    %v3472 = vunpack.c.h.b16 %v2687
    %v3473 = vunpack.c.l.b16 %v2688
    %v3474 = vunpack.c.h.b16 %v2688
    %v3475 = vunpack.c.l.b16 %v2689
    %v3476 = vunpack.c.l.b16 %v2690
    %v3477 = vunpack.c.h.b16 %v2690
    %v3478 = vunpack.c.l.b16 %v2691
    %v3479 = vunpack.c.h.b16 %v2691
    %v3480 = vunpack.c.l.b16 %v2692
    %v3481 = vunpack.c.l.b16 %v2693
    %v3482 = vunpack.c.h.b16 %v2693
    %v3483 = vunpack.c.l.b16 %v2694
    %v3484 = vunpack.c.h.b16 %v2694
    %v3485 = vunpack.c.l.b16 %v2695
    %v3486 = vunpack.c.l.b16 %v2696
    %v3487 = vunpack.c.h.b16 %v2696
    %v3488 = vunpack.c.l.b16 %v2697
    %v3489 = vunpack.c.h.b16 %v2697
    %v3490 = vunpack.c.l.b16 %v2698
    %v3491 = vunpack.c.l.b16 %v2699
    %v3492 = vunpack.c.h.b16 %v2699
    %v3493 = vunpack.c.l.b16 %v2700
    %v3494 = vunpack.c.h.b16 %v2700
    %v3495 = vunpack.c.l.b16 %v2701
    %v3496 = vunpack.c.l.b16 %v2702
    %v3497 = vunpack.c.h.b16 %v2702
    %v3498 = vunpack.c.l.b16 %v2703
    %v3499 = vunpack.c.h.b16 %v2703
    %v3500 = vunpack.c.l.b16 %v2704
    %v3501 = vunpack.c.l.b16 %v2705
    %v3502 = vunpack.c.h.b16 %v2705
    %v3503 = vunpack.c.l.b16 %v2706
    %v3504 = vunpack.c.h.b16 %v2706
    %v3505 = vunpack.c.l.b16 %v2707
    %v3506 = vunpack.c.l.b16 %v2708
    %v3507 = vunpack.c.h.b16 %v2708
    %v3508 = vunpack.c.l.b16 %v2709
    %v3509 = vunpack.c.h.b16 %v2709
    %v3510 = vunpack.c.l.b16 %v2710
    %v3511 = vunpack.c.l.b16 %v2711
    %v3512 = vunpack.c.h.b16 %v2711
    %v3513 = vunpack.c.l.b16 %v2712
    %v3514 = vunpack.c.h.b16 %v2712
    %v3515 = vunpack.c.l.b16 %v2713
    %v3516 = vunpack.c.l.b16 %v2714
    %v3517 = vunpack.c.h.b16 %v2714
    %v3518 = vunpack.c.l.b16 %v2715
    %v3519 = vunpack.c.h.b16 %v2715
    %v3520 = vunpack.c.l.b16 %v2716
    %v3521 = vunpack.c.l.b16 %v2717
    %v3522 = vunpack.c.h.b16 %v2717
    %v3523 = vunpack.c.l.b16 %v2718
    %v3524 = vunpack.c.h.b16 %v2718
    %v3525 = vunpack.c.l.b16 %v2719
    %v3526 = vunpack.c.l.b16 %v2720
    %v3527 = vunpack.c.h.b16 %v2720
    %v3528 = vunpack.c.l.b16 %v2721
    %v3529 = vunpack.c.h.b16 %v2721
    %v3530 = vunpack.c.l.b16 %v2722
    %v3531 = vunpack.c.l.b16 %v2723
    %v3532 = vunpack.c.h.b16 %v2723
    %v3533 = vunpack.c.l.b16 %v2724
    %v3534 = vunpack.c.h.b16 %v2724
    %v3535 = vunpack.c.l.b16 %v2725
    %v3536 = vunpack.c.l.b16 %v2726
    %v3537 = vunpack.c.h.b16 %v2726
    %v3538 = vunpack.c.l.b16 %v2727
    %v3539 = vunpack.c.h.b16 %v2727
    %v3540 = vunpack.c.l.b16 %v2728
    %v3541 = vunpack.c.l.b16 %v2729
    %v3542 = vunpack.c.h.b16 %v2729
    %v3543 = vunpack.c.l.b16 %v2730
    %v3544 = vunpack.c.h.b16 %v2730
    %v3545 = vunpack.c.l.b16 %v2731
    %v3546 = vunpack.c.l.b16 %v2732
    %v3547 = vunpack.c.h.b16 %v2732
    %v3548 = vunpack.c.l.b16 %v2733
    %v3549 = vunpack.c.h.b16 %v2733
    %v3550 = vunpack.c.l.b16 %v2734
    %v3551 = vunpack.c.l.b16 %v2735
    %v3552 = vunpack.c.h.b16 %v2735
    %v3553 = vunpack.c.l.b16 %v2736
    %v3554 = vunpack.c.h.b16 %v2736
    %v3555 = vunpack.c.l.b16 %v2737
    %v3556 = vunpack.c.l.b16 %v2738
    %v3557 = vunpack.c.h.b16 %v2738
    %v3558 = vunpack.c.l.b16 %v2739
    %v3559 = vunpack.c.h.b16 %v2739
    %v3560 = vunpack.c.l.b16 %v2740
    %v3561 = vunpack.c.l.b16 %v2741
    %v3562 = vunpack.c.h.b16 %v2741
    %v3563 = vunpack.c.l.b16 %v2742
    %v3564 = vunpack.c.h.b16 %v2742
    %v3565 = vunpack.c.l.b16 %v2743
    %v3566 = vunpack.c.l.b16 %v2744
    %v3567 = vunpack.c.h.b16 %v2744
    %v3568 = vunpack.c.l.b16 %v2745
    %v3569 = vunpack.c.h.b16 %v2745
    %v3570 = vunpack.c.l.b16 %v2746
    %v3571 = vunpack.c.l.b16 %v2747
    %v3572 = vunpack.c.h.b16 %v2747
    %v3573 = vunpack.c.l.b16 %v2748
    %v3574 = vunpack.c.h.b16 %v2748
    %v3575 = vunpack.c.l.b16 %v2749
    %v3576 = vunpack.c.l.b16 %v2750
    %v3577 = vunpack.c.h.b16 %v2750
    %v3578 = vunpack.c.l.b16 %v2751
    %v3579 = vunpack.c.h.b16 %v2751
    %v3580 = vunpack.c.l.b16 %v2752
    %v3581 = vunpack.c.l.b16 %v2753
    %v3582 = vunpack.c.h.b16 %v2753
    %v3583 = vunpack.c.l.b16 %v2754
    %v3584 = vunpack.c.h.b16 %v2754
    %v3585 = vunpack.c.l.b16 %v2755
    %v3586 = vunpack.c.l.b16 %v2756
    %v3587 = vunpack.c.h.b16 %v2756
    %v3588 = vunpack.c.l.b16 %v2757
    %v3589 = vunpack.c.h.b16 %v2757
    %v3590 = vunpack.c.l.b16 %v2758
    %v3591 = vunpack.c.l.b16 %v2759
    %v3592 = vunpack.c.h.b16 %v2759
    %v3593 = vunpack.c.l.b16 %v2760
    %v3594 = vunpack.c.h.b16 %v2760
    %v3595 = vunpack.c.l.b16 %v2761
    %v3596 = vunpack.c.l.b16 %v2762
    %v3597 = vunpack.c.h.b16 %v2762
    %v3598 = vunpack.c.l.b16 %v2763
    %v3599 = vunpack.c.h.b16 %v2763
    %v3600 = vunpack.c.l.b16 %v2764
    %v3601 = vunpack.c.l.b16 %v2765
    %v3602 = vunpack.c.h.b16 %v2765
    %v3603 = vunpack.c.l.b16 %v2766
    %v3604 = vunpack.c.h.b16 %v2766
    %v3605 = vunpack.c.l.b16 %v2767
    %v3606 = vunpack.c.l.b16 %v2768
    %v3607 = vunpack.c.h.b16 %v2768
    %v3608 = vunpack.c.l.b16 %v2769
    %v3609 = vunpack.c.h.b16 %v2769
    %v3610 = vunpack.c.l.b16 %v2770
    %v3611 = vunpack.c.l.b16 %v2771
    %v3612 = vunpack.c.h.b16 %v2771
    %v3613 = vunpack.c.l.b16 %v2772
    %v3614 = vunpack.c.h.b16 %v2772
    %v3615 = vunpack.c.l.b16 %v2773
    %v3616 = vunpack.c.l.b16 %v2774
    %v3617 = vunpack.c.h.b16 %v2774
    %v3618 = vunpack.c.l.b16 %v2775
    %v3619 = vunpack.c.h.b16 %v2775
    %v3620 = vunpack.c.l.b16 %v2776
    %v3621 = vunpack.c.l.b16 %v2777
    %v3622 = vunpack.c.h.b16 %v2777
    %v3623 = vunpack.c.l.b16 %v2778
    %v3624 = vunpack.c.h.b16 %v2778
    %v3625 = vunpack.c.l.b16 %v2779
    %v3626 = vunpack.c.l.b16 %v2780
    %v3627 = vunpack.c.h.b16 %v2780
    %v3628 = vunpack.c.l.b16 %v2781
    %v3629 = vunpack.c.h.b16 %v2781
    %v3630 = vunpack.c.l.b16 %v2782
    %v3631 = vunpack.c.l.b16 %v2783
    %v3632 = vunpack.c.h.b16 %v2783
    %v3633 = vunpack.c.l.b16 %v2784
    %v3634 = vunpack.c.h.b16 %v2784
    %v3635 = vunpack.c.l.b16 %v2785
    %v3636 = vunpack.c.l.b16 %v2786
    %v3637 = vunpack.c.h.b16 %v2786
    %v3638 = vunpack.c.l.b16 %v2787
    %v3639 = vunpack.c.h.b16 %v2787
    %v3640 = vunpack.c.l.b16 %v2788
    %v3641 = vunpack.c.l.b16 %v2789
    %v3642 = vunpack.c.h.b16 %v2789
    %v3643 = vunpack.c.l.b16 %v2790
    %v3644 = vunpack.c.h.b16 %v2790
    %v3645 = vunpack.c.l.b16 %v2791
    %v3646 = vunpack.c.l.b16 %v2792
    %v3647 = vunpack.c.h.b16 %v2792
    %v3648 = vunpack.c.l.b16 %v2793
    %v3649 = vunpack.c.h.b16 %v2793
    %v3650 = vunpack.c.l.b16 %v2794
    %v3651 = vunpack.c.l.b16 %v2795
    %v3652 = vunpack.c.h.b16 %v2795
    %v3653 = vunpack.c.l.b16 %v2796
    %v3654 = vunpack.c.h.b16 %v2796
    %v3655 = vunpack.c.l.b16 %v2797
    %v3656 = vunpack.c.l.b16 %v2798
    %v3657 = vunpack.c.h.b16 %v2798
    %v3658 = vunpack.c.l.b16 %v2799
    %v3659 = vunpack.c.h.b16 %v2799
    %v3660 = vunpack.c.l.b16 %v2800
    %v3661 = vunpack.c.l.b16 %v2801
    %v3662 = vunpack.c.h.b16 %v2801
    %v3663 = vunpack.c.l.b16 %v2802
    %v3664 = vunpack.c.h.b16 %v2802
    %v3665 = vunpack.c.l.b16 %v2803
    %v3666 = vunpack.c.l.b16 %v2804
    %v3667 = vunpack.c.h.b16 %v2804
    %v3668 = vunpack.c.l.b16 %v2805
    %v3669 = vunpack.c.h.b16 %v2805
    %v3670 = vunpack.c.l.b16 %v2806
    %v3671 = vunpack.c.l.b16 %v2807
    %v3672 = vunpack.c.h.b16 %v2807
    %v3673 = vunpack.c.l.b16 %v2808
    %v3674 = vunpack.c.h.b16 %v2808
    %v3675 = vunpack.c.l.b16 %v2809
    %v3676 = vunpack.c.l.b16 %v2810
    %v3677 = vunpack.c.h.b16 %v2810
    %v3678 = vunpack.c.l.b16 %v2811
    %v3679 = vunpack.c.h.b16 %v2811
    %v3680 = vunpack.c.l.b16 %v2812
    %v3681 = vunpack.c.l.b16 %v2813
    %v3682 = vunpack.c.h.b16 %v2813
    %v3683 = vunpack.c.l.b16 %v2814
    %v3684 = vunpack.c.h.b16 %v2814
    %v3685 = vunpack.c.l.b16 %v2815
    %v3686 = vunpack.c.l.b16 %v2816
    %v3687 = vunpack.c.h.b16 %v2816
    %v3688 = vunpack.c.l.b16 %v2817
    %v3689 = vunpack.c.h.b16 %v2817
    %v3690 = vunpack.c.l.b16 %v2818
    %v3691 = vunpack.c.l.b16 %v2819
    %v3692 = vunpack.c.h.b16 %v2819
    %v3693 = vunpack.c.l.b16 %v2820
    %v3694 = vunpack.c.h.b16 %v2820
    %v3695 = vunpack.c.l.b16 %v2821
    %v3696 = vunpack.c.l.b16 %v2822
    %v3697 = vunpack.c.h.b16 %v2822
    %v3698 = vunpack.c.l.b16 %v2823
    %v3699 = vunpack.c.h.b16 %v2823
    %v3700 = vunpack.c.l.b16 %v2824
    %v3701 = vunpack.c.l.b16 %v2825
    %v3702 = vunpack.c.h.b16 %v2825
    %v3703 = vunpack.c.l.b16 %v2826
    %v3704 = vunpack.c.h.b16 %v2826
    %v3705 = vunpack.c.l.b16 %v2827
    %v3706 = vunpack.c.l.b16 %v2828
    %v3707 = vunpack.c.h.b16 %v2828
    %v3708 = vunpack.c.l.b16 %v2829
    %v3709 = vunpack.c.h.b16 %v2829
    %v3710 = vunpack.c.l.b16 %v2830
    %v3711 = vunpack.c.l.b16 %v2831
    %v3712 = vunpack.c.h.b16 %v2831
    %v3713 = vunpack.c.l.b16 %v2832
    %v3714 = vunpack.c.h.b16 %v2832
    %v3715 = vunpack.c.l.b16 %v2833
    %v3716 = vunpack.c.l.b16 %v2834
    %v3717 = vunpack.c.h.b16 %v2834
    %v3718 = vunpack.c.l.b16 %v2835
    %v3719 = vunpack.c.h.b16 %v2835
    %v3720 = vunpack.c.l.b16 %v2836
    %v3721 = vunpack.c.l.b16 %v2837
    %v3722 = vunpack.c.h.b16 %v2837
    %v3723 = vunpack.c.l.b16 %v2838
    %v3724 = vunpack.c.h.b16 %v2838
    %v3725 = vunpack.c.l.b16 %v2839
    %v3726 = vunpack.c.l.b16 %v2840
    %v3727 = vunpack.c.h.b16 %v2840
    %v3728 = vunpack.c.l.b16 %v2841
    %v3729 = vunpack.c.h.b16 %v2841
    %v3730 = vunpack.c.l.b16 %v2842
    %v3731 = vunpack.c.l.b16 %v2843
    %v3732 = vunpack.c.h.b16 %v2843
    %v3733 = vunpack.c.l.b16 %v2844
    %v3734 = vunpack.c.h.b16 %v2844
    %v3735 = vunpack.c.l.b16 %v2845
    %v3736 = vunpack.c.l.b16 %v2846
    %v3737 = vunpack.c.h.b16 %v2846
    %v3738 = vunpack.c.l.b16 %v2847
    %v3739 = vunpack.c.h.b16 %v2847
    %v3740 = vunpack.c.l.b16 %v2848
    %v3741 = vunpack.c.l.b16 %v2849
    %v3742 = vunpack.c.h.b16 %v2849
    %v3743 = vunpack.c.l.b16 %v2850
    %v3744 = vunpack.c.h.b16 %v2850
    %v3745 = vunpack.c.l.b16 %v2851
    %v3746 = vunpack.c.l.b16 %v2852
    %v3747 = vunpack.c.h.b16 %v2852
    %v3748 = vunpack.c.l.b16 %v2853
    %v3749 = vunpack.c.h.b16 %v2853
    %v3750 = vunpack.c.l.b16 %v2854
    %v3751 = vunpack.c.l.b16 %v2855
    %v3752 = vunpack.c.h.b16 %v2855
    %v3753 = vunpack.c.l.b16 %v2856
    %v3754 = vunpack.c.h.b16 %v2856
    %v3755 = vunpack.c.l.b16 %v2857
    %v3756 = vunpack.c.l.b16 %v2858
    %v3757 = vunpack.c.h.b16 %v2858
    %v3758 = vunpack.c.l.b16 %v2859
    %v3759 = vunpack.c.h.b16 %v2859
    %v3760 = vunpack.c.l.b16 %v2860
    %v3761 = vunpack.c.l.b16 %v2861
    %v3762 = vunpack.c.h.b16 %v2861
    %v3763 = vunpack.c.l.b16 %v2862
    %v3764 = vunpack.c.h.b16 %v2862
    %v3765 = vunpack.c.l.b16 %v2863
    %v3766 = vunpack.c.l.b16 %v2864
    %v3767 = vunpack.c.h.b16 %v2864
    %v3768 = vunpack.c.l.b16 %v2865
    %v3769 = vunpack.c.h.b16 %v2865
    %v3770 = vunpack.c.l.b16 %v2866
    %v3771 = vunpack.c.l.b16 %v2867
    %v3772 = vunpack.c.h.b16 %v2867
    %v3773 = vunpack.c.l.b16 %v2868
    %v3774 = vunpack.c.h.b16 %v2868
    %v3775 = vunpack.c.l.b16 %v2869
    %v3776 = vunpack.c.l.b16 %v2870
    %v3777 = vunpack.c.h.b16 %v2870
    %v3778 = vunpack.c.l.b16 %v2871
    %v3779 = vunpack.c.h.b16 %v2871
    %v3780 = vunpack.c.l.b16 %v2872
    %v3781 = vunpack.c.l.b16 %v2873
    %v3782 = vunpack.c.h.b16 %v2873
    %v3783 = vunpack.c.l.b16 %v2874
    %v3784 = vunpack.c.h.b16 %v2874
    %v3785 = vunpack.c.l.b16 %v2875
    %v3786 = vunpack.c.l.b16 %v2876
    %v3787 = vunpack.c.h.b16 %v2876
    %v3788 = vunpack.c.l.b16 %v2877
    %v3789 = vunpack.c.h.b16 %v2877
    %v3790 = vunpack.c.l.b16 %v2878
    %v3791 = vunpack.c.l.b16 %v2879
    %v3792 = vunpack.c.h.b16 %v2879
    %v3793 = vunpack.c.l.b16 %v2880
    %v3794 = vunpack.c.h.b16 %v2880
    %v3795 = vunpack.c.l.b16 %v2881
    %v3796 = vunpack.c.l.b16 %v2882
    %v3797 = vunpack.c.h.b16 %v2882
    %v3798 = vunpack.c.l.b16 %v2883
    %v3799 = vunpack.c.h.b16 %v2883
    %v3800 = vunpack.c.l.b16 %v2884
    %v3801 = vunpack.c.l.b16 %v2885
    %v3802 = vunpack.c.h.b16 %v2885
    %v3803 = vunpack.c.l.b16 %v2886
    %v3804 = vunpack.c.h.b16 %v2886
    %v3805 = vunpack.c.l.b16 %v2887
    %v3806 = vunpack.c.l.b16 %v2888
    %v3807 = vunpack.c.h.b16 %v2888
    %v3808 = vunpack.c.l.b16 %v2889
    %v3809 = vunpack.c.h.b16 %v2889
    %v3810 = vunpack.c.l.b16 %v2890
    %v3811 = vunpack.c.l.b16 %v2891
    %v3812 = vunpack.c.h.b16 %v2891
    %v3813 = vunpack.c.l.b16 %v2892
    %v3814 = vunpack.c.h.b16 %v2892
    %v3815 = vunpack.c.l.b16 %v2893
    %v3816 = vunpack.c.l.b16 %v2894
    %v3817 = vunpack.c.h.b16 %v2894
    %v3818 = vunpack.c.l.b16 %v2895
    %v3819 = vunpack.c.h.b16 %v2895
    %v3820 = vunpack.c.l.b16 %v2896
    %v3821 = vunpack.c.l.b16 %v2897
    %v3822 = vunpack.c.h.b16 %v2897
    %v3823 = vunpack.c.l.b16 %v2898
    %v3824 = vunpack.c.h.b16 %v2898
    %v3825 = vunpack.c.l.b16 %v2899
    %v3826 = vunpack.c.l.b16 %v2900
    %v3827 = vunpack.c.h.b16 %v2900
    %v3828 = vunpack.c.l.b16 %v2901
    %v3829 = vunpack.c.h.b16 %v2901
    %v3830 = vunpack.c.l.b16 %v2902
    %v3831 = vunpack.c.l.b16 %v2903
    %v3832 = vunpack.c.h.b16 %v2903
    %v3833 = vunpack.c.l.b16 %v2904
    %v3834 = vunpack.c.h.b16 %v2904
    %v3835 = vunpack.c.l.b16 %v2905
    %v3836 = vunpack.c.l.b16 %v2906
    %v3837 = vunpack.c.h.b16 %v2906
    %v3838 = vunpack.c.l.b16 %v2907
    %v3839 = vunpack.c.h.b16 %v2907
    %v3840 = vunpack.c.l.b16 %v2908
    %v3841 = vunpack.c.l.b16 %v2909
    %v3842 = vunpack.c.h.b16 %v2909
    %v3843 = vunpack.c.l.b16 %v2910
    %v3844 = vunpack.c.h.b16 %v2910
    %v3845 = vunpack.c.l.b16 %v2911
    %v3846 = vunpack.c.l.b16 %v2912
    %v3847 = vunpack.c.h.b16 %v2912
    %v3848 = vunpack.c.l.b16 %v2913
    %v3849 = vunpack.c.h.b16 %v2913
    %v3850 = vunpack.c.l.b16 %v2914
    %v3851 = vunpack.c.l.b16 %v2915
    %v3852 = vunpack.c.h.b16 %v2915
    %v3853 = vunpack.c.l.b16 %v2916
    %v3854 = vunpack.c.h.b16 %v2916
    %v3855 = vunpack.c.l.b16 %v2917
    %v3856 = vunpack.c.l.b16 %v2918
    %v3857 = vunpack.c.h.b16 %v2918
    %v3858 = vunpack.c.l.b16 %v2919
    %v3859 = vunpack.c.h.b16 %v2919
    %v3860 = vunpack.c.l.b16 %v2920
    %v3861 = vunpack.c.l.b16 %v2921
    %v3862 = vunpack.c.h.b16 %v2921
    %v3863 = vunpack.c.l.b16 %v2922
    %v3864 = vunpack.c.h.b16 %v2922
    %v3865 = vunpack.c.l.b16 %v2923
    %v3866 = vunpack.c.l.b16 %v2924
    %v3867 = vunpack.c.h.b16 %v2924
    %v3868 = vunpack.c.l.b16 %v2925
    %v3869 = vunpack.c.h.b16 %v2925
    %v3870 = vunpack.c.l.b16 %v2926
    %v3871 = vunpack.c.l.b16 %v2927
    %v3872 = vunpack.c.h.b16 %v2927
    %v3873 = vunpack.c.l.b16 %v2928
    %v3874 = vunpack.c.h.b16 %v2928
    %v3875 = vunpack.c.l.b16 %v2929
    %v3876 = vunpack.c.l.b16 %v2930
    %v3877 = vunpack.c.h.b16 %v2930
    %v3878 = vunpack.c.l.b16 %v2931
    %v3879 = vunpack.c.h.b16 %v2931
    %v3880 = vunpack.c.l.b16 %v2932
    %v3881 = vunpack.c.l.b16 %v2933
    %v3882 = vunpack.c.h.b16 %v2933
    %v3883 = vunpack.c.l.b16 %v2934
    %v3884 = vunpack.c.h.b16 %v2934
    %v3885 = vunpack.c.l.b16 %v2935
    %v3886 = vunpack.c.l.b16 %v2936
    %v3887 = vunpack.c.h.b16 %v2936
    %v3888 = vunpack.c.l.b16 %v2937
    %v3889 = vunpack.c.h.b16 %v2937
    %v3890 = vunpack.c.l.b16 %v2938
    %v3891 = vunpack.c.l.b16 %v2939
    %v3892 = vunpack.c.h.b16 %v2939
    %v3893 = vunpack.c.l.b16 %v2940
    %v3894 = vunpack.c.h.b16 %v2940
    %v3895 = vunpack.c.l.b16 %v2941
    %v3896 = vunpack.c.l.b16 %v2942
    %v3897 = vunpack.c.h.b16 %v2942
    %v3898 = vunpack.c.l.b16 %v2943
    %v3899 = vunpack.c.h.b16 %v2943
    %v3900 = vunpack.c.l.b16 %v2944
    %v3901 = vunpack.c.l.b16 %v2945
    %v3902 = vunpack.c.h.b16 %v2945
    %v3903 = vunpack.c.l.b16 %v2946
    %v3904 = vunpack.c.h.b16 %v2946
    %v3905 = vunpack.c.l.b16 %v2947
    %v3906 = vunpack.c.l.b16 %v2948
    %v3907 = vunpack.c.h.b16 %v2948
    %v3908 = vunpack.c.l.b16 %v2949
    %v3909 = vunpack.c.h.b16 %v2949
    %v3910 = vunpack.c.l.b16 %v2950
    %v3911 = vunpack.c.l.b16 %v2951
    %v3912 = vunpack.c.h.b16 %v2951
    %v3913 = vunpack.c.l.b16 %v2952
    %v3914 = vunpack.c.h.b16 %v2952
    %v3915 = vunpack.c.l.b16 %v2953
    %v3916 = vunpack.c.l.b16 %v2954
    %v3917 = vunpack.c.h.b16 %v2954
    %v3918 = vunpack.c.l.b16 %v2955
    %v3919 = vunpack.c.h.b16 %v2955
    %v3920 = vunpack.c.l.b16 %v2956
    %v3921 = vunpack.c.l.b16 %v2957
    %v3922 = vunpack.c.h.b16 %v2957
    %v3923 = vunpack.c.l.b16 %v2958
    %v3924 = vunpack.c.h.b16 %v2958
    %v3925 = vunpack.c.l.b16 %v2959
    %v3926 = vunpack.c.l.b16 %v2960
    %v3927 = vunpack.c.h.b16 %v2960
    %v3928 = vunpack.c.l.b16 %v2961
    %v3929 = vunpack.c.h.b16 %v2961
    %v3930 = vunpack.c.l.b16 %v2962
    %v3931 = vunpack.c.l.b16 %v2963
    %v3932 = vunpack.c.h.b16 %v2963
    %v3933 = vunpack.c.l.b16 %v2964
    %v3934 = vunpack.c.h.b16 %v2964
    %v3935 = vunpack.c.l.b16 %v2965
    %v3936 = vunpack.c.l.b16 %v2966
    %v3937 = vunpack.c.h.b16 %v2966
    %v3938 = vunpack.c.l.b16 %v2967
    %v3939 = vunpack.c.h.b16 %v2967
    %v3940 = vunpack.c.l.b16 %v2968
    %v3941 = vunpack.c.l.b16 %v2969
    %v3942 = vunpack.c.h.b16 %v2969
    %v3943 = vunpack.c.l.b16 %v2970
    %v3944 = vunpack.c.h.b16 %v2970
    %v3945 = vunpack.c.l.b16 %v2971
    %v3946 = vunpack.c.l.b16 %v2972
    %v3947 = vunpack.c.h.b16 %v2972
    %v3948 = vunpack.c.l.b16 %v2973
    %v3949 = vunpack.c.h.b16 %v2973
    %v3950 = vunpack.c.l.b16 %v2974
    %v3951 = vunpack.c.l.b16 %v2975
    %v3952 = vunpack.c.h.b16 %v2975
    %v3953 = vunpack.c.l.b16 %v2976
    %v3954 = vunpack.c.h.b16 %v2976
    %v3955 = vunpack.c.l.b16 %v2977
    %v3956 = vunpack.c.l.b16 %v2978
    %v3957 = vunpack.c.h.b16 %v2978
    %v3958 = vunpack.c.l.b16 %v2979
    %v3959 = vunpack.c.h.b16 %v2979
    %v3960 = vunpack.c.l.b16 %v2980
    %v3961 = vunpack.c.l.b16 %v2981
    %v3962 = vunpack.c.h.b16 %v2981
    %v3963 = vunpack.c.l.b16 %v2982
    %v3964 = vunpack.c.h.b16 %v2982
    %v3965 = vunpack.c.l.b16 %v2983
    %v3966 = vunpack.c.l.b16 %v2984
    %v3967 = vunpack.c.h.b16 %v2984
    %v3968 = vunpack.c.l.b16 %v2985
    %v3969 = vunpack.c.h.b16 %v2985
    %v3970 = vunpack.c.l.b16 %v2986
    %v3971 = vunpack.c.l.b16 %v2987
    %v3972 = vunpack.c.h.b16 %v2987
    %v3973 = vunpack.c.l.b16 %v2988
    %v3974 = vunpack.c.h.b16 %v2988
    %v3975 = vunpack.c.l.b16 %v2989
    %v3976 = vunpack.c.l.b16 %v2990
    %v3977 = vunpack.c.h.b16 %v2990
    %v3978 = vunpack.c.l.b16 %v2991
    %v3979 = vunpack.c.h.b16 %v2991
    %v3980 = vunpack.c.l.b16 %v2992
    %v3981 = vunpack.c.l.b16 %v2993
    %v3982 = vunpack.c.h.b16 %v2993
    %v3983 = vunpack.c.l.b16 %v2994
    %v3984 = vunpack.c.h.b16 %v2994
    %v3985 = vunpack.c.l.b16 %v2995
    %v3986 = vunpack.c.l.b16 %v2996
    %v3987 = vunpack.c.h.b16 %v2996
    %v3988 = vunpack.c.l.b16 %v2997
    %v3989 = vunpack.c.h.b16 %v2997
    %v3990 = vunpack.c.l.b16 %v2998
    %v3991 = vunpack.c.l.b16 %v2999
    %v3992 = vunpack.c.h.b16 %v2999
    %v3993 = vunpack.c.l.b16 %v3000
    %v3994 = vunpack.c.h.b16 %v3000
    %v3995 = vunpack.c.l.b16 %v3001
    %v3996 = vunpack.c.l.b16 %v3002
    %v3997 = vunpack.c.h.b16 %v3002
    %v3998 = vunpack.c.l.b16 %v3003
    %v3999 = vunpack.c.h.b16 %v3003
    %v4000 = vunpack.c.l.b16 %v3004
    %v4001 = vunpack.c.l.b16 %v3005
    %v4002 = vunpack.c.h.b16 %v3005
    %v4003 = vunpack.c.l.b16 %v3006
    %v4004 = vunpack.c.h.b16 %v3006
    %v4005 = vunpack.c.l.b16 %v3007
    %v4006 = vunpack.c.l.b16 %v3008
    %v4007 = vunpack.c.h.b16 %v3008
    %v4008 = vunpack.c.l.b16 %v3009
    %v4009 = vunpack.c.h.b16 %v3009
    %v4010 = vunpack.c.l.b16 %v3010
    %v4011 = vunpack.c.l.b16 %v3011
    %v4012 = vunpack.c.h.b16 %v3011
    %v4013 = vunpack.c.l.b16 %v3012
    %v4014 = vunpack.c.h.b16 %v3012
    %v4015 = vunpack.c.l.b16 %v3013
    %v4016 = vunpack.c.l.b16 %v3014
    %v4017 = vunpack.c.h.b16 %v3014
    %v4018 = vunpack.c.l.b16 %v3015
    %v4019 = vunpack.c.h.b16 %v3015
    %v4020 = vunpack.c.l.b16 %v3016
    %v4021 = vunpack.c.l.b16 %v3017
    %v4022 = vunpack.c.h.b16 %v3017
    %v4023 = vunpack.c.l.b16 %v3018
    %v4024 = vunpack.c.h.b16 %v3018
    %v4025 = vunpack.c.l.b16 %v3019
    %v4026 = vunpack.c.l.b16 %v3020
    %v4027 = vunpack.c.h.b16 %v3020
    %v4028 = vunpack.c.l.b16 %v3021
    %v4029 = vunpack.c.h.b16 %v3021
    %v4030 = vunpack.c.l.b16 %v3022
    %v4031 = vunpack.c.l.b16 %v3023
    %v4032 = vunpack.c.h.b16 %v3023
    %v4033 = vunpack.c.l.b16 %v3024
    %v4034 = vunpack.c.h.b16 %v3024
    %v4035 = vunpack.c.l.b16 %v3025
    %v4036 = vunpack.c.l.b16 %v3026
    %v4037 = vunpack.c.h.b16 %v3026
    %v4038 = vunpack.c.l.b16 %v3027
    %v4039 = vunpack.c.h.b16 %v3027
    %v4040 = vunpack.c.l.b16 %v3028
    %v4041 = vunpack.c.l.b16 %v3029
    %v4042 = vunpack.c.h.b16 %v3029
    %v4043 = vunpack.c.l.b16 %v3030
    %v4044 = vunpack.c.h.b16 %v3030
    %v4045 = vunpack.c.l.b16 %v3031
    %v4046 = vunpack.c.l.b16 %v3032
    %v4047 = vunpack.c.h.b16 %v3032
    %v4048 = vunpack.c.l.b16 %v3033
    %v4049 = vunpack.c.h.b16 %v3033
    %v4050 = vunpack.c.l.b16 %v3034
    %v4051 = vunpack.c.l.b16 %v3035
    %v4052 = vunpack.c.h.b16 %v3035
    %v4053 = vunpack.c.l.b16 %v3036
    %v4054 = vunpack.c.h.b16 %v3036
    %v4055 = vunpack.c.l.b16 %v3037
    %v4056 = vunpack.c.l.b16 %v3038
    %v4057 = vunpack.c.h.b16 %v3038
    %v4058 = vunpack.c.l.b16 %v3039
    %v4059 = vunpack.c.h.b16 %v3039
    %v4060 = vunpack.c.l.b16 %v3040
    %v4061 = vunpack.c.l.b16 %v3041
    %v4062 = vunpack.c.h.b16 %v3041
    %v4063 = vunpack.c.l.b16 %v3042
    %v4064 = vunpack.c.h.b16 %v3042
    %v4065 = vunpack.c.l.b16 %v3043
    %v4066 = vunpack.c.l.b16 %v3044
    %v4067 = vunpack.c.h.b16 %v3044
    %v4068 = vunpack.c.l.b16 %v3045
    %v4069 = vunpack.c.h.b16 %v3045
    %v4070 = vunpack.c.l.b16 %v3046
    %v4071 = vpack.c.b16 %v3436, %v3431
    %v4072 = vpack.c.b16 %v3437, %v3432
    %v4073 = vpack.c.b16 %v3438, %v3433
    %v4074 = vpack.c.b16 %v3439, %v3434
    %v4075 = vpack.c.b16 %v3440, %v3435
    %v4076 = vpack.c.b16 %v3446, %v3441
    %v4077 = vpack.c.b16 %v3447, %v3442
    %v4078 = vpack.c.b16 %v3448, %v3443
    %v4079 = vpack.c.b16 %v3449, %v3444
    %v4080 = vpack.c.b16 %v3450, %v3445
    %v4081 = vpack.c.b16 %v3456, %v3451
    %v4082 = vpack.c.b16 %v3457, %v3452
    %v4083 = vpack.c.b16 %v3458, %v3453
    %v4084 = vpack.c.b16 %v3459, %v3454
    %v4085 = vpack.c.b16 %v3460, %v3455
    %v4086 = vpack.c.b16 %v3466, %v3461
    %v4087 = vpack.c.b16 %v3467, %v3462
    %v4088 = vpack.c.b16 %v3468, %v3463
    %v4089 = vpack.c.b16 %v3469, %v3464
    %v4090 = vpack.c.b16 %v3470, %v3465
    %v4091 = vpack.c.b16 %v3476, %v3471
    %v4092 = vpack.c.b16 %v3477, %v3472
    %v4093 = vpack.c.b16 %v3478, %v3473
    %v4094 = vpack.c.b16 %v3479, %v3474
    %v4095 = vpack.c.b16 %v3480, %v3475
    %v4096 = vpack.c.b16 %v3486, %v3481
    %v4097 = vpack.c.b16 %v3487, %v3482
    %v4098 = vpack.c.b16 %v3488, %v3483
    %v4099 = vpack.c.b16 %v3489, %v3484
    %v4100 = vpack.c.b16 %v3490, %v3485
    %v4101 = vpack.c.b16 %v3496, %v3491
    %v4102 = vpack.c.b16 %v3497, %v3492
    %v4103 = vpack.c.b16 %v3498, %v3493
    %v4104 = vpack.c.b16 %v3499, %v3494
    %v4105 = vpack.c.b16 %v3500, %v3495
    %v4106 = vpack.c.b16 %v3506, %v3501
    %v4107 = vpack.c.b16 %v3507, %v3502
    %v4108 = vpack.c.b16 %v3508, %v3503
    %v4109 = vpack.c.b16 %v3509, %v3504
    %v4110 = vpack.c.b16 %v3510, %v3505
    %v4111 = vpack.c.b16 %v3516, %v3511
    %v4112 = vpack.c.b16 %v3517, %v3512
    %v4113 = vpack.c.b16 %v3518, %v3513
    %v4114 = vpack.c.b16 %v3519, %v3514
    %v4115 = vpack.c.b16 %v3520, %v3515
    %v4116 = vpack.c.b16 %v3526, %v3521
    %v4117 = vpack.c.b16 %v3527, %v3522
    %v4118 = vpack.c.b16 %v3528, %v3523
    %v4119 = vpack.c.b16 %v3529, %v3524
    %v4120 = vpack.c.b16 %v3530, %v3525
    %v4121 = vpack.c.b16 %v3536, %v3531
    %v4122 = vpack.c.b16 %v3537, %v3532
    %v4123 = vpack.c.b16 %v3538, %v3533
    %v4124 = vpack.c.b16 %v3539, %v3534
    %v4125 = vpack.c.b16 %v3540, %v3535
    %v4126 = vpack.c.b16 %v3546, %v3541
    %v4127 = vpack.c.b16 %v3547, %v3542
    %v4128 = vpack.c.b16 %v3548, %v3543
    %v4129 = vpack.c.b16 %v3549, %v3544
    %v4130 = vpack.c.b16 %v3550, %v3545
    %v4131 = vpack.c.b16 %v3556, %v3551
    %v4132 = vpack.c.b16 %v3557, %v3552
    %v4133 = vpack.c.b16 %v3558, %v3553
    %v4134 = vpack.c.b16 %v3559, %v3554
    %v4135 = vpack.c.b16 %v3560, %v3555
    %v4136 = vpack.c.b16 %v3566, %v3561
    %v4137 = vpack.c.b16 %v3567, %v3562
    %v4138 = vpack.c.b16 %v3568, %v3563
    %v4139 = vpack.c.b16 %v3569, %v3564
    %v4140 = vpack.c.b16 %v3570, %v3565
    %v4141 = vpack.c.b16 %v3576, %v3571
    %v4142 = vpack.c.b16 %v3577, %v3572
    %v4143 = vpack.c.b16 %v3578, %v3573
    %v4144 = vpack.c.b16 %v3579, %v3574
    %v4145 = vpack.c.b16 %v3580, %v3575
    %v4146 = vpack.c.b16 %v3586, %v3581
    %v4147 = vpack.c.b16 %v3587, %v3582
    %v4148 = vpack.c.b16 %v3588, %v3583
    %v4149 = vpack.c.b16 %v3589, %v3584
    %v4150 = vpack.c.b16 %v3590, %v3585
    %v4151 = vpack.c.b16 %v3596, %v3591
    %v4152 = vpack.c.b16 %v3597, %v3592
    %v4153 = vpack.c.b16 %v3598, %v3593
    %v4154 = vpack.c.b16 %v3599, %v3594
    %v4155 = vpack.c.b16 %v3600, %v3595
    %v4156 = vpack.c.b16 %v3606, %v3601
    %v4157 = vpack.c.b16 %v3607, %v3602
    %v4158 = vpack.c.b16 %v3608, %v3603
    %v4159 = vpack.c.b16 %v3609, %v3604
    %v4160 = vpack.c.b16 %v3610, %v3605
    %v4161 = vpack.c.b16 %v3616, %v3611
    %v4162 = vpack.c.b16 %v3617, %v3612
    %v4163 = vpack.c.b16 %v3618, %v3613
    %v4164 = vpack.c.b16 %v3619, %v3614
    %v4165 = vpack.c.b16 %v3620, %v3615
    %v4166 = vpack.c.b16 %v3626, %v3621
    %v4167 = vpack.c.b16 %v3627, %v3622
    %v4168 = vpack.c.b16 %v3628, %v3623
    %v4169 = vpack.c.b16 %v3629, %v3624
    %v4170 = vpack.c.b16 %v3630, %v3625
    %v4171 = vpack.c.b16 %v3636, %v3631
    %v4172 = vpack.c.b16 %v3637, %v3632
    %v4173 = vpack.c.b16 %v3638, %v3633
    %v4174 = vpack.c.b16 %v3639, %v3634
    %v4175 = vpack.c.b16 %v3640, %v3635
    %v4176 = vpack.c.b16 %v3646, %v3641
    %v4177 = vpack.c.b16 %v3647, %v3642
    %v4178 = vpack.c.b16 %v3648, %v3643
    %v4179 = vpack.c.b16 %v3649, %v3644
    %v4180 = vpack.c.b16 %v3650, %v3645
    %v4181 = vpack.c.b16 %v3656, %v3651
    %v4182 = vpack.c.b16 %v3657, %v3652
    %v4183 = vpack.c.b16 %v3658, %v3653
    %v4184 = vpack.c.b16 %v3659, %v3654
    %v4185 = vpack.c.b16 %v3660, %v3655
    %v4186 = vpack.c.b16 %v3666, %v3661
    %v4187 = vpack.c.b16 %v3667, %v3662
    %v4188 = vpack.c.b16 %v3668, %v3663
    %v4189 = vpack.c.b16 %v3669, %v3664
    %v4190 = vpack.c.b16 %v3670, %v3665
    %v4191 = vpack.c.b16 %v3676, %v3671
    %v4192 = vpack.c.b16 %v3677, %v3672
    %v4193 = vpack.c.b16 %v3678, %v3673
    %v4194 = vpack.c.b16 %v3679, %v3674
    %v4195 = vpack.c.b16 %v3680, %v3675
    %v4196 = vpack.c.b16 %v3686, %v3681
    %v4197 = vpack.c.b16 %v3687, %v3682
    %v4198 = vpack.c.b16 %v3688, %v3683
    %v4199 = vpack.c.b16 %v3689, %v3684
    %v4200 = vpack.c.b16 %v3690, %v3685
    %v4201 = vpack.c.b16 %v3696, %v3691
    %v4202 = vpack.c.b16 %v3697, %v3692
    %v4203 = vpack.c.b16 %v3698, %v3693
    %v4204 = vpack.c.b16 %v3699, %v3694
    %v4205 = vpack.c.b16 %v3700, %v3695
    %v4206 = vpack.c.b16 %v3706, %v3701
    %v4207 = vpack.c.b16 %v3707, %v3702
    %v4208 = vpack.c.b16 %v3708, %v3703
    %v4209 = vpack.c.b16 %v3709, %v3704
    %v4210 = vpack.c.b16 %v3710, %v3705
    %v4211 = vpack.c.b16 %v3716, %v3711
    %v4212 = vpack.c.b16 %v3717, %v3712
    %v4213 = vpack.c.b16 %v3718, %v3713
    %v4214 = vpack.c.b16 %v3719, %v3714
    %v4215 = vpack.c.b16 %v3720, %v3715
    %v4216 = vpack.c.b16 %v3726, %v3721
    %v4217 = vpack.c.b16 %v3727, %v3722
    %v4218 = vpack.c.b16 %v3728, %v3723
    %v4219 = vpack.c.b16 %v3729, %v3724
    %v4220 = vpack.c.b16 %v3730, %v3725
    %v4221 = vpack.c.b16 %v3736, %v3731
    %v4222 = vpack.c.b16 %v3737, %v3732
    %v4223 = vpack.c.b16 %v3738, %v3733
    %v4224 = vpack.c.b16 %v3739, %v3734
    %v4225 = vpack.c.b16 %v3740, %v3735
    %v4226 = vpack.c.b16 %v3746, %v3741
    %v4227 = vpack.c.b16 %v3747, %v3742
    %v4228 = vpack.c.b16 %v3748, %v3743
    %v4229 = vpack.c.b16 %v3749, %v3744
    %v4230 = vpack.c.b16 %v3750, %v3745
    %v4231 = vpack.c.b16 %v3756, %v3751
    %v4232 = vpack.c.b16 %v3757, %v3752
    %v4233 = vpack.c.b16 %v3758, %v3753
    %v4234 = vpack.c.b16 %v3759, %v3754
    %v4235 = vpack.c.b16 %v3760, %v3755
    %v4236 = vpack.c.b16 %v3766, %v3761
    %v4237 = vpack.c.b16 %v3767, %v3762
    %v4238 = vpack.c.b16 %v3768, %v3763
    %v4239 = vpack.c.b16 %v3769, %v3764
    %v4240 = vpack.c.b16 %v3770, %v3765
    %v4241 = vpack.c.b16 %v3776, %v3771
    %v4242 = vpack.c.b16 %v3777, %v3772
    %v4243 = vpack.c.b16 %v3778, %v3773
    %v4244 = vpack.c.b16 %v3779, %v3774
    %v4245 = vpack.c.b16 %v3780, %v3775
    %v4246 = vpack.c.b16 %v3786, %v3781
    %v4247 = vpack.c.b16 %v3787, %v3782
    %v4248 = vpack.c.b16 %v3788, %v3783
    %v4249 = vpack.c.b16 %v3789, %v3784
    %v4250 = vpack.c.b16 %v3790, %v3785
    %v4251 = vpack.c.b16 %v3796, %v3791
    %v4252 = vpack.c.b16 %v3797, %v3792
    %v4253 = vpack.c.b16 %v3798, %v3793
    %v4254 = vpack.c.b16 %v3799, %v3794
    %v4255 = vpack.c.b16 %v3800, %v3795
    %v4256 = vpack.c.b16 %v3806, %v3801
    %v4257 = vpack.c.b16 %v3807, %v3802
    %v4258 = vpack.c.b16 %v3808, %v3803
    %v4259 = vpack.c.b16 %v3809, %v3804
    %v4260 = vpack.c.b16 %v3810, %v3805
    %v4261 = vpack.c.b16 %v3816, %v3811
    %v4262 = vpack.c.b16 %v3817, %v3812
    %v4263 = vpack.c.b16 %v3818, %v3813
    %v4264 = vpack.c.b16 %v3819, %v3814
    %v4265 = vpack.c.b16 %v3820, %v3815
    %v4266 = vpack.c.b16 %v3826, %v3821
    %v4267 = vpack.c.b16 %v3827, %v3822
    %v4268 = vpack.c.b16 %v3828, %v3823
    %v4269 = vpack.c.b16 %v3829, %v3824
    %v4270 = vpack.c.b16 %v3830, %v3825
    %v4271 = vpack.c.b16 %v3836, %v3831
    %v4272 = vpack.c.b16 %v3837, %v3832
    %v4273 = vpack.c.b16 %v3838, %v3833
    %v4274 = vpack.c.b16 %v3839, %v3834
    %v4275 = vpack.c.b16 %v3840, %v3835
    %v4276 = vpack.c.b16 %v3846, %v3841
    %v4277 = vpack.c.b16 %v3847, %v3842
    %v4278 = vpack.c.b16 %v3848, %v3843
    %v4279 = vpack.c.b16 %v3849, %v3844
    %v4280 = vpack.c.b16 %v3850, %v3845
    %v4281 = vpack.c.b16 %v3856, %v3851
    %v4282 = vpack.c.b16 %v3857, %v3852
    %v4283 = vpack.c.b16 %v3858, %v3853
    %v4284 = vpack.c.b16 %v3859, %v3854
    %v4285 = vpack.c.b16 %v3860, %v3855
    %v4286 = vpack.c.b16 %v3866, %v3861
    %v4287 = vpack.c.b16 %v3867, %v3862
    %v4288 = vpack.c.b16 %v3868, %v3863
    %v4289 = vpack.c.b16 %v3869, %v3864
    %v4290 = vpack.c.b16 %v3870, %v3865
    %v4291 = vpack.c.b16 %v3876, %v3871
    %v4292 = vpack.c.b16 %v3877, %v3872
    %v4293 = vpack.c.b16 %v3878, %v3873
    %v4294 = vpack.c.b16 %v3879, %v3874
    %v4295 = vpack.c.b16 %v3880, %v3875
    %v4296 = vpack.c.b16 %v3886, %v3881
    %v4297 = vpack.c.b16 %v3887, %v3882
    %v4298 = vpack.c.b16 %v3888, %v3883
    %v4299 = vpack.c.b16 %v3889, %v3884
    %v4300 = vpack.c.b16 %v3890, %v3885
    %v4301 = vpack.c.b16 %v3896, %v3891
    %v4302 = vpack.c.b16 %v3897, %v3892
    %v4303 = vpack.c.b16 %v3898, %v3893
    %v4304 = vpack.c.b16 %v3899, %v3894
    %v4305 = vpack.c.b16 %v3900, %v3895
    %v4306 = vpack.c.b16 %v3906, %v3901
    %v4307 = vpack.c.b16 %v3907, %v3902
    %v4308 = vpack.c.b16 %v3908, %v3903
    %v4309 = vpack.c.b16 %v3909, %v3904
    %v4310 = vpack.c.b16 %v3910, %v3905
    %v4311 = vpack.c.b16 %v3916, %v3911
    %v4312 = vpack.c.b16 %v3917, %v3912
    %v4313 = vpack.c.b16 %v3918, %v3913
    %v4314 = vpack.c.b16 %v3919, %v3914
    %v4315 = vpack.c.b16 %v3920, %v3915
    %v4316 = vpack.c.b16 %v3926, %v3921
    %v4317 = vpack.c.b16 %v3927, %v3922
    %v4318 = vpack.c.b16 %v3928, %v3923
    %v4319 = vpack.c.b16 %v3929, %v3924
    %v4320 = vpack.c.b16 %v3930, %v3925
    %v4321 = vpack.c.b16 %v3936, %v3931
    %v4322 = vpack.c.b16 %v3937, %v3932
    %v4323 = vpack.c.b16 %v3938, %v3933
    %v4324 = vpack.c.b16 %v3939, %v3934
    %v4325 = vpack.c.b16 %v3940, %v3935
    %v4326 = vpack.c.b16 %v3946, %v3941
    %v4327 = vpack.c.b16 %v3947, %v3942
    %v4328 = vpack.c.b16 %v3948, %v3943
    %v4329 = vpack.c.b16 %v3949, %v3944
    %v4330 = vpack.c.b16 %v3950, %v3945
    %v4331 = vpack.c.b16 %v3956, %v3951
    %v4332 = vpack.c.b16 %v3957, %v3952
    %v4333 = vpack.c.b16 %v3958, %v3953
    %v4334 = vpack.c.b16 %v3959, %v3954
    %v4335 = vpack.c.b16 %v3960, %v3955
    %v4336 = vpack.c.b16 %v3966, %v3961
    %v4337 = vpack.c.b16 %v3967, %v3962
    %v4338 = vpack.c.b16 %v3968, %v3963
    %v4339 = vpack.c.b16 %v3969, %v3964
    %v4340 = vpack.c.b16 %v3970, %v3965
    %v4341 = vpack.c.b16 %v3976, %v3971
    %v4342 = vpack.c.b16 %v3977, %v3972
    %v4343 = vpack.c.b16 %v3978, %v3973
    %v4344 = vpack.c.b16 %v3979, %v3974
    %v4345 = vpack.c.b16 %v3980, %v3975
    %v4346 = vpack.c.b16 %v3986, %v3981
    %v4347 = vpack.c.b16 %v3987, %v3982
    %v4348 = vpack.c.b16 %v3988, %v3983
    %v4349 = vpack.c.b16 %v3989, %v3984
    %v4350 = vpack.c.b16 %v3990, %v3985
    %v4351 = vpack.c.b16 %v3996, %v3991
    %v4352 = vpack.c.b16 %v3997, %v3992
    %v4353 = vpack.c.b16 %v3998, %v3993
    %v4354 = vpack.c.b16 %v3999, %v3994
    %v4355 = vpack.c.b16 %v4000, %v3995
    %v4356 = vpack.c.b16 %v4006, %v4001
    %v4357 = vpack.c.b16 %v4007, %v4002
    %v4358 = vpack.c.b16 %v4008, %v4003
    %v4359 = vpack.c.b16 %v4009, %v4004
    %v4360 = vpack.c.b16 %v4010, %v4005
    %v4361 = vpack.c.b16 %v4016, %v4011
    %v4362 = vpack.c.b16 %v4017, %v4012
    %v4363 = vpack.c.b16 %v4018, %v4013
    %v4364 = vpack.c.b16 %v4019, %v4014
    %v4365 = vpack.c.b16 %v4020, %v4015
    %v4366 = vpack.c.b16 %v4026, %v4021
    %v4367 = vpack.c.b16 %v4027, %v4022
    %v4368 = vpack.c.b16 %v4028, %v4023
    %v4369 = vpack.c.b16 %v4029, %v4024
    %v4370 = vpack.c.b16 %v4030, %v4025
    %v4371 = vpack.c.b16 %v4036, %v4031
    %v4372 = vpack.c.b16 %v4037, %v4032
    %v4373 = vpack.c.b16 %v4038, %v4033
    %v4374 = vpack.c.b16 %v4039, %v4034
    %v4375 = vpack.c.b16 %v4040, %v4035
    %v4376 = vpack.c.b16 %v4046, %v4041
    %v4377 = vpack.c.b16 %v4047, %v4042
    %v4378 = vpack.c.b16 %v4048, %v4043
    %v4379 = vpack.c.b16 %v4049, %v4044
    %v4380 = vpack.c.b16 %v4050, %v4045
    %v4381 = vpack.c.b16 %v4056, %v4051
    %v4382 = vpack.c.b16 %v4057, %v4052
    %v4383 = vpack.c.b16 %v4058, %v4053
    %v4384 = vpack.c.b16 %v4059, %v4054
    %v4385 = vpack.c.b16 %v4060, %v4055
    %v4386 = vpack.c.b16 %v4066, %v4061
    %v4387 = vpack.c.b16 %v4067, %v4062
    %v4388 = vpack.c.b16 %v4068, %v4063
    %v4389 = vpack.c.b16 %v4069, %v4064
    %v4390 = vpack.c.b16 %v4070, %v4065
    %4711 = vmatprep.subr.bf16.mxu0 %v4072
    %4712 = vmatpush1.bf16.msra.mxu0 %v4071
    %4713 = vmatprep.subr.bf16.mxu0 %v4077
    %4714 = vmatpush1.bf16.msra.mxu0 %v4076
    %4715 = vmatprep.subr.bf16.mxu0 %v4082
    %4716 = vmatpush1.bf16.msra.mxu0 %v4081
    %4717 = vmatprep.subr.bf16.mxu0 %v4087
    %4718 = vmatpush1.bf16.msra.mxu0 %v4086
    %4719 = vmatprep.subr.bf16.mxu0 %v4092
    %4720 = vmatpush1.bf16.msra.mxu0 %v4091
    %4721 = vmatprep.subr.bf16.mxu0 %v4097
    %4722 = vmatpush1.bf16.msra.mxu0 %v4096
    %4723 = vmatprep.subr.bf16.mxu0 %v4102
    %4724 = vmatpush1.bf16.msra.mxu0 %v4101
    %4725 = vmatprep.subr.bf16.mxu0 %v4107
    %4726 = vmatpush1.bf16.msra.mxu0 %v4106
    %4727 = vmatprep.subr.bf16.mxu0 %v4112
    %4728 = vmatpush1.bf16.msra.mxu0 %v4111
    %4729 = vmatprep.subr.bf16.mxu0 %v4117
    %4730 = vmatpush1.bf16.msra.mxu0 %v4116
    %4731 = vmatprep.subr.bf16.mxu0 %v4122
    %4732 = vmatpush1.bf16.msra.mxu0 %v4121
    %4733 = vmatprep.subr.bf16.mxu0 %v4127
    %4734 = vmatpush1.bf16.msra.mxu0 %v4126
    %4735 = vmatprep.subr.bf16.mxu0 %v4132
    %4736 = vmatpush1.bf16.msra.mxu0 %v4131
    %4737 = vmatprep.subr.bf16.mxu0 %v4137
    %4738 = vmatpush1.bf16.msra.mxu0 %v4136
    %4739 = vmatprep.subr.bf16.mxu0 %v4142
    %4740 = vmatpush1.bf16.msra.mxu0 %v4141
    %4741 = vmatprep.subr.bf16.mxu0 %v4147
    %4742 = vmatpush1.bf16.msra.mxu0 %v4146
    %4743 = vmatprep.mubr.bf16.mxu0 %v2656
    %4744 = vmatmul.mubr.bf16.gmra.mrb[0].mxu0 %v2655
    %v4745 = vpop.f32.mrb[0].mxu0
    %v4746 = vadd.f32 0.0, %v4745
    %v4747 = vpop.f32.mrb[0].mxu0
    %v4748 = vadd.f32 0.0, %v4747
    %v4749 = vpop.f32.mrb[0].mxu0
    %v4750 = vpop.f32.mrb[0].mxu0
    %4751 = vdwg.mxu0
    %4752 = vmatprep.subr.bf16.mxu0 %v4152
    %4753 = vmatpush1.bf16.msra.mxu0 %v4151
    %4754 = vmatprep.subr.bf16.mxu0 %v4157
    %4755 = vmatpush1.bf16.msra.mxu0 %v4156
    %4756 = vmatprep.subr.bf16.mxu0 %v4162
    %4757 = vmatpush1.bf16.msra.mxu0 %v4161
    %4758 = vmatprep.subr.bf16.mxu0 %v4167
    %4759 = vmatpush1.bf16.msra.mxu0 %v4166
    %4760 = vmatprep.subr.bf16.mxu0 %v4172
    %4761 = vmatpush1.bf16.msra.mxu0 %v4171
    %4762 = vmatprep.subr.bf16.mxu0 %v4177
    %4763 = vmatpush1.bf16.msra.mxu0 %v4176
    %4764 = vmatprep.subr.bf16.mxu0 %v4182
    %4765 = vmatpush1.bf16.msra.mxu0 %v4181
    %4766 = vmatprep.subr.bf16.mxu0 %v4187
    %4767 = vmatpush1.bf16.msra.mxu0 %v4186
    %4768 = vmatprep.subr.bf16.mxu0 %v4192
    %4769 = vmatpush1.bf16.msra.mxu0 %v4191
    %4770 = vmatprep.subr.bf16.mxu0 %v4197
    %4771 = vmatpush1.bf16.msra.mxu0 %v4196
    %4772 = vmatprep.subr.bf16.mxu0 %v4202
    %4773 = vmatpush1.bf16.msra.mxu0 %v4201
    %4774 = vmatprep.subr.bf16.mxu0 %v4207
    %4775 = vmatpush1.bf16.msra.mxu0 %v4206
    %4776 = vmatprep.subr.bf16.mxu0 %v4212
    %4777 = vmatpush1.bf16.msra.mxu0 %v4211
    %4778 = vmatprep.subr.bf16.mxu0 %v4217
    %4779 = vmatpush1.bf16.msra.mxu0 %v4216
    %4780 = vmatprep.subr.bf16.mxu0 %v4222
    %4781 = vmatpush1.bf16.msra.mxu0 %v4221
    %4782 = vmatprep.subr.bf16.mxu0 %v4227
    %4783 = vmatpush1.bf16.msra.mxu0 %v4226
    %4784 = vmatprep.mubr.bf16.mxu0 %v2658
    %4785 = vmatmul.mubr.bf16.gmra.mrb[0].mxu0 %v2657
    %v4786 = vpop.f32.mrb[0].mxu0
    %v4787 = vadd.f32 %v4746, %v4786
    %v4788 = vpop.f32.mrb[0].mxu0
    %v4789 = vadd.f32 %v4748, %v4788
    %v4790 = vpop.f32.mrb[0].mxu0
    %v4791 = vpop.f32.mrb[0].mxu0
    %4792 = vdwg.mxu0
    %4793 = vmatprep.subr.bf16.mxu0 %v4232
    %4794 = vmatpush1.bf16.msra.mxu0 %v4231
    %4795 = vmatprep.subr.bf16.mxu0 %v4237
    %4796 = vmatpush1.bf16.msra.mxu0 %v4236
    %4797 = vmatprep.subr.bf16.mxu0 %v4242
    %4798 = vmatpush1.bf16.msra.mxu0 %v4241
    %4799 = vmatprep.subr.bf16.mxu0 %v4247
    %4800 = vmatpush1.bf16.msra.mxu0 %v4246
    %4801 = vmatprep.subr.bf16.mxu0 %v4252
    %4802 = vmatpush1.bf16.msra.mxu0 %v4251
    %4803 = vmatprep.subr.bf16.mxu0 %v4257
    %4804 = vmatpush1.bf16.msra.mxu0 %v4256
    %4805 = vmatprep.subr.bf16.mxu0 %v4262
    %4806 = vmatpush1.bf16.msra.mxu0 %v4261
    %4807 = vmatprep.subr.bf16.mxu0 %v4267
    %4808 = vmatpush1.bf16.msra.mxu0 %v4266
    %4809 = vmatprep.subr.bf16.mxu0 %v4272
    %4810 = vmatpush1.bf16.msra.mxu0 %v4271
    %4811 = vmatprep.subr.bf16.mxu0 %v4277
    %4812 = vmatpush1.bf16.msra.mxu0 %v4276
    %4813 = vmatprep.subr.bf16.mxu0 %v4282
    %4814 = vmatpush1.bf16.msra.mxu0 %v4281
    %4815 = vmatprep.subr.bf16.mxu0 %v4287
    %4816 = vmatpush1.bf16.msra.mxu0 %v4286
    %4817 = vmatprep.subr.bf16.mxu0 %v4292
    %4818 = vmatpush1.bf16.msra.mxu0 %v4291
    %4819 = vmatprep.subr.bf16.mxu0 %v4297
    %4820 = vmatpush1.bf16.msra.mxu0 %v4296
    %4821 = vmatprep.subr.bf16.mxu0 %v4302
    %4822 = vmatpush1.bf16.msra.mxu0 %v4301
    %4823 = vmatprep.subr.bf16.mxu0 %v4307
    %4824 = vmatpush1.bf16.msra.mxu0 %v4306
    %4825 = vmatprep.mubr.bf16.mxu0 %v2660
    %4826 = vmatmul.mubr.bf16.gmra.mrb[0].mxu0 %v2659
    %v4827 = vpop.f32.mrb[0].mxu0
    %v4828 = vadd.f32 %v4787, %v4827
    %v4829 = vpop.f32.mrb[0].mxu0
    %v4830 = vadd.f32 %v4789, %v4829
    %v4831 = vpop.f32.mrb[0].mxu0
    %v4832 = vpop.f32.mrb[0].mxu0
    %4833 = vdwg.mxu0
    %4834 = vmatprep.subr.bf16.mxu0 %v4312
    %4835 = vmatpush1.bf16.msra.mxu0 %v4311
    %4836 = vmatprep.subr.bf16.mxu0 %v4317
    %4837 = vmatpush1.bf16.msra.mxu0 %v4316
    %4838 = vmatprep.subr.bf16.mxu0 %v4322
    %4839 = vmatpush1.bf16.msra.mxu0 %v4321
    %4840 = vmatprep.subr.bf16.mxu0 %v4327
    %4841 = vmatpush1.bf16.msra.mxu0 %v4326
    %4842 = vmatprep.subr.bf16.mxu0 %v4332
    %4843 = vmatpush1.bf16.msra.mxu0 %v4331
    %4844 = vmatprep.subr.bf16.mxu0 %v4337
    %4845 = vmatpush1.bf16.msra.mxu0 %v4336
    %4846 = vmatprep.subr.bf16.mxu0 %v4342
    %4847 = vmatpush1.bf16.msra.mxu0 %v4341
    %4848 = vmatprep.subr.bf16.mxu0 %v4347
    %4849 = vmatpush1.bf16.msra.mxu0 %v4346
    %4850 = vmatprep.subr.bf16.mxu0 %v4352
    %4851 = vmatpush1.bf16.msra.mxu0 %v4351
    %4852 = vmatprep.subr.bf16.mxu0 %v4357
    %4853 = vmatpush1.bf16.msra.mxu0 %v4356
    %4854 = vmatprep.subr.bf16.mxu0 %v4362
    %4855 = vmatpush1.bf16.msra.mxu0 %v4361
    %4856 = vmatprep.subr.bf16.mxu0 %v4367
    %4857 = vmatpush1.bf16.msra.mxu0 %v4366
    %4858 = vmatprep.subr.bf16.mxu0 %v4372
    %4859 = vmatpush1.bf16.msra.mxu0 %v4371
    %4860 = vmatprep.subr.bf16.mxu0 %v4377
    %4861 = vmatpush1.bf16.msra.mxu0 %v4376
    %4862 = vmatprep.subr.bf16.mxu0 %v4382
    %4863 = vmatpush1.bf16.msra.mxu0 %v4381
    %4864 = vmatprep.subr.bf16.mxu0 %v4387
    %4865 = vmatpush1.bf16.msra.mxu0 %v4386
    %4866 = vmatprep.mubr.bf16.mxu0 %v2662
    %4867 = vmatmul.mubr.bf16.gmra.mrb[0].mxu0 %v2661
    %v4868 = vpop.f32.mrb[0].mxu0
    %v4869 = vadd.f32 %v4828, %v4868
    %v4870 = vpop.f32.mrb[0].mxu0
    %v4871 = vadd.f32 %v4830, %v4870
    %v4872 = vpop.f32.mrb[0].mxu0
    %v4873 = vpop.f32.mrb[0].mxu0
    %4874 = vdwg.mxu0
    %4875 = vmatprep.subr.bf16.mxu0 %v4074
    %4876 = vmatpush1.bf16.msra.mxu0 %v4073
    %4877 = vmatprep.subr.bf16.mxu0 %v4079
    %4878 = vmatpush1.bf16.msra.mxu0 %v4078
    %4879 = vmatprep.subr.bf16.mxu0 %v4084
    %4880 = vmatpush1.bf16.msra.mxu0 %v4083
    %4881 = vmatprep.subr.bf16.mxu0 %v4089
    %4882 = vmatpush1.bf16.msra.mxu0 %v4088
    %4883 = vmatprep.subr.bf16.mxu0 %v4094
    %4884 = vmatpush1.bf16.msra.mxu0 %v4093
    %4885 = vmatprep.subr.bf16.mxu0 %v4099
    %4886 = vmatpush1.bf16.msra.mxu0 %v4098
    %4887 = vmatprep.subr.bf16.mxu0 %v4104
    %4888 = vmatpush1.bf16.msra.mxu0 %v4103
    %4889 = vmatprep.subr.bf16.mxu0 %v4109
    %4890 = vmatpush1.bf16.msra.mxu0 %v4108
    %4891 = vmatprep.subr.bf16.mxu0 %v4114
    %4892 = vmatpush1.bf16.msra.mxu0 %v4113
    %4893 = vmatprep.subr.bf16.mxu0 %v4119
    %4894 = vmatpush1.bf16.msra.mxu0 %v4118
    %4895 = vmatprep.subr.bf16.mxu0 %v4124
    %4896 = vmatpush1.bf16.msra.mxu0 %v4123
    %4897 = vmatprep.subr.bf16.mxu0 %v4129
    %4898 = vmatpush1.bf16.msra.mxu0 %v4128
    %4899 = vmatprep.subr.bf16.mxu0 %v4134
    %4900 = vmatpush1.bf16.msra.mxu0 %v4133
    %4901 = vmatprep.subr.bf16.mxu0 %v4139
    %4902 = vmatpush1.bf16.msra.mxu0 %v4138
    %4903 = vmatprep.subr.bf16.mxu0 %v4144
    %4904 = vmatpush1.bf16.msra.mxu0 %v4143
    %4905 = vmatprep.subr.bf16.mxu0 %v4149
    %4906 = vmatpush1.bf16.msra.mxu0 %v4148
    %4907 = vmatprep.mubr.bf16.mxu0 %v2656
    %4908 = vmatmul.mubr.bf16.gmra.mrb[0].mxu0 %v2655
    %v4909 = vpop.f32.mrb[0].mxu0
    %v4910 = vadd.f32 0.0, %v4909
    %v4911 = vpop.f32.mrb[0].mxu0
    %v4912 = vadd.f32 0.0, %v4911
    %v4913 = vpop.f32.mrb[0].mxu0
    %v4914 = vpop.f32.mrb[0].mxu0
    %4915 = vdwg.mxu0
    %4916 = vmatprep.subr.bf16.mxu0 %v4154
    %4917 = vmatpush1.bf16.msra.mxu0 %v4153
    %4918 = vmatprep.subr.bf16.mxu0 %v4159
    %4919 = vmatpush1.bf16.msra.mxu0 %v4158
    %4920 = vmatprep.subr.bf16.mxu0 %v4164
    %4921 = vmatpush1.bf16.msra.mxu0 %v4163
    %4922 = vmatprep.subr.bf16.mxu0 %v4169
    %4923 = vmatpush1.bf16.msra.mxu0 %v4168
    %4924 = vmatprep.subr.bf16.mxu0 %v4174
    %4925 = vmatpush1.bf16.msra.mxu0 %v4173
    %4926 = vmatprep.subr.bf16.mxu0 %v4179
    %4927 = vmatpush1.bf16.msra.mxu0 %v4178
    %4928 = vmatprep.subr.bf16.mxu0 %v4184
    %4929 = vmatpush1.bf16.msra.mxu0 %v4183
    %4930 = vmatprep.subr.bf16.mxu0 %v4189
    %4931 = vmatpush1.bf16.msra.mxu0 %v4188
    %4932 = vmatprep.subr.bf16.mxu0 %v4194
    %4933 = vmatpush1.bf16.msra.mxu0 %v4193
    %4934 = vmatprep.subr.bf16.mxu0 %v4199
    %4935 = vmatpush1.bf16.msra.mxu0 %v4198
    %4936 = vmatprep.subr.bf16.mxu0 %v4204
    %4937 = vmatpush1.bf16.msra.mxu0 %v4203
    %4938 = vmatprep.subr.bf16.mxu0 %v4209
    %4939 = vmatpush1.bf16.msra.mxu0 %v4208
    %4940 = vmatprep.subr.bf16.mxu0 %v4214
    %4941 = vmatpush1.bf16.msra.mxu0 %v4213
    %4942 = vmatprep.subr.bf16.mxu0 %v4219
    %4943 = vmatpush1.bf16.msra.mxu0 %v4218
    %4944 = vmatprep.subr.bf16.mxu0 %v4224
    %4945 = vmatpush1.bf16.msra.mxu0 %v4223
    %4946 = vmatprep.subr.bf16.mxu0 %v4229
    %4947 = vmatpush1.bf16.msra.mxu0 %v4228
    %4948 = vmatprep.mubr.bf16.mxu0 %v2658
    %4949 = vmatmul.mubr.bf16.gmra.mrb[0].mxu0 %v2657
    %v4950 = vpop.f32.mrb[0].mxu0
    %v4951 = vadd.f32 %v4910, %v4950
    %v4952 = vpop.f32.mrb[0].mxu0
    %v4953 = vadd.f32 %v4912, %v4952
    %v4954 = vpop.f32.mrb[0].mxu0
    %v4955 = vpop.f32.mrb[0].mxu0
    %4956 = vdwg.mxu0
    %4957 = vmatprep.subr.bf16.mxu0 %v4234
    %4958 = vmatpush1.bf16.msra.mxu0 %v4233
    %4959 = vmatprep.subr.bf16.mxu0 %v4239
    %4960 = vmatpush1.bf16.msra.mxu0 %v4238
    %4961 = vmatprep.subr.bf16.mxu0 %v4244
    %4962 = vmatpush1.bf16.msra.mxu0 %v4243
    %4963 = vmatprep.subr.bf16.mxu0 %v4249
    %4964 = vmatpush1.bf16.msra.mxu0 %v4248
    %4965 = vmatprep.subr.bf16.mxu0 %v4254
    %4966 = vmatpush1.bf16.msra.mxu0 %v4253
    %4967 = vmatprep.subr.bf16.mxu0 %v4259
    %4968 = vmatpush1.bf16.msra.mxu0 %v4258
    %4969 = vmatprep.subr.bf16.mxu0 %v4264
    %4970 = vmatpush1.bf16.msra.mxu0 %v4263
    %4971 = vmatprep.subr.bf16.mxu0 %v4269
    %4972 = vmatpush1.bf16.msra.mxu0 %v4268
    %4973 = vmatprep.subr.bf16.mxu0 %v4274
    %4974 = vmatpush1.bf16.msra.mxu0 %v4273
    %4975 = vmatprep.subr.bf16.mxu0 %v4279
    %4976 = vmatpush1.bf16.msra.mxu0 %v4278
    %4977 = vmatprep.subr.bf16.mxu0 %v4284
    %4978 = vmatpush1.bf16.msra.mxu0 %v4283
    %4979 = vmatprep.subr.bf16.mxu0 %v4289
    %4980 = vmatpush1.bf16.msra.mxu0 %v4288
    %4981 = vmatprep.subr.bf16.mxu0 %v4294
    %4982 = vmatpush1.bf16.msra.mxu0 %v4293
    %4983 = vmatprep.subr.bf16.mxu0 %v4299
    %4984 = vmatpush1.bf16.msra.mxu0 %v4298
    %4985 = vmatprep.subr.bf16.mxu0 %v4304
    %4986 = vmatpush1.bf16.msra.mxu0 %v4303
    %4987 = vmatprep.subr.bf16.mxu0 %v4309
    %4988 = vmatpush1.bf16.msra.mxu0 %v4308
    %4989 = vmatprep.mubr.bf16.mxu0 %v2660
    %4990 = vmatmul.mubr.bf16.gmra.mrb[0].mxu0 %v2659
    %v4991 = vpop.f32.mrb[0].mxu0
    %v4992 = vadd.f32 %v4951, %v4991
    %v4993 = vpop.f32.mrb[0].mxu0
    %v4994 = vadd.f32 %v4953, %v4993
    %v4995 = vpop.f32.mrb[0].mxu0
    %v4996 = vpop.f32.mrb[0].mxu0
    %4997 = vdwg.mxu0
    %4998 = vmatprep.subr.bf16.mxu0 %v4314
    %4999 = vmatpush1.bf16.msra.mxu0 %v4313
    %5000 = vmatprep.subr.bf16.mxu0 %v4319
    %5001 = vmatpush1.bf16.msra.mxu0 %v4318
    %5002 = vmatprep.subr.bf16.mxu0 %v4324
    %5003 = vmatpush1.bf16.msra.mxu0 %v4323
    %5004 = vmatprep.subr.bf16.mxu0 %v4329
    %5005 = vmatpush1.bf16.msra.mxu0 %v4328
    %5006 = vmatprep.subr.bf16.mxu0 %v4334
    %5007 = vmatpush1.bf16.msra.mxu0 %v4333
    %5008 = vmatprep.subr.bf16.mxu0 %v4339
    %5009 = vmatpush1.bf16.msra.mxu0 %v4338
    %5010 = vmatprep.subr.bf16.mxu0 %v4344
    %5011 = vmatpush1.bf16.msra.mxu0 %v4343
    %5012 = vmatprep.subr.bf16.mxu0 %v4349
    %5013 = vmatpush1.bf16.msra.mxu0 %v4348
    %5014 = vmatprep.subr.bf16.mxu0 %v4354
    %5015 = vmatpush1.bf16.msra.mxu0 %v4353
    %5016 = vmatprep.subr.bf16.mxu0 %v4359
    %5017 = vmatpush1.bf16.msra.mxu0 %v4358
    %5018 = vmatprep.subr.bf16.mxu0 %v4364
    %5019 = vmatpush1.bf16.msra.mxu0 %v4363
    %5020 = vmatprep.subr.bf16.mxu0 %v4369
    %5021 = vmatpush1.bf16.msra.mxu0 %v4368
    %5022 = vmatprep.subr.bf16.mxu0 %v4374
    %5023 = vmatpush1.bf16.msra.mxu0 %v4373
    %5024 = vmatprep.subr.bf16.mxu0 %v4379
    %5025 = vmatpush1.bf16.msra.mxu0 %v4378
    %5026 = vmatprep.subr.bf16.mxu0 %v4384
    %5027 = vmatpush1.bf16.msra.mxu0 %v4383
    %5028 = vmatprep.subr.bf16.mxu0 %v4389
    %5029 = vmatpush1.bf16.msra.mxu0 %v4388
    %5030 = vmatprep.mubr.bf16.mxu0 %v2662
    %5031 = vmatmul.mubr.bf16.gmra.mrb[0].mxu0 %v2661
    %v5032 = vpop.f32.mrb[0].mxu0
    %v5033 = vadd.f32 %v4992, %v5032
    %v5034 = vpop.f32.mrb[0].mxu0
    %v5035 = vadd.f32 %v4994, %v5034
    %v5036 = vpop.f32.mrb[0].mxu0
    %v5037 = vpop.f32.mrb[0].mxu0
    %5038 = vdwg.mxu0
    %5039 = vmatprep.subr.bf16.mxu0 0
    %5040 = vmatpush1.bf16.msra.mxu0 %v4075
    %5041 = vmatprep.subr.bf16.mxu0 0
    %5042 = vmatpush1.bf16.msra.mxu0 %v4080
    %5043 = vmatprep.subr.bf16.mxu0 0
    %5044 = vmatpush1.bf16.msra.mxu0 %v4085
    %5045 = vmatprep.subr.bf16.mxu0 0
    %5046 = vmatpush1.bf16.msra.mxu0 %v4090
    %5047 = vmatprep.subr.bf16.mxu0 0
    %5048 = vmatpush1.bf16.msra.mxu0 %v4095
    %5049 = vmatprep.subr.bf16.mxu0 0
    %5050 = vmatpush1.bf16.msra.mxu0 %v4100
    %5051 = vmatprep.subr.bf16.mxu0 0
    %5052 = vmatpush1.bf16.msra.mxu0 %v4105
    %5053 = vmatprep.subr.bf16.mxu0 0
    %5054 = vmatpush1.bf16.msra.mxu0 %v4110
    %5055 = vmatprep.subr.bf16.mxu0 0
    %5056 = vmatpush1.bf16.msra.mxu0 %v4115
    %5057 = vmatprep.subr.bf16.mxu0 0
    %5058 = vmatpush1.bf16.msra.mxu0 %v4120
    %5059 = vmatprep.subr.bf16.mxu0 0
    %5060 = vmatpush1.bf16.msra.mxu0 %v4125
    %5061 = vmatprep.subr.bf16.mxu0 0
    %5062 = vmatpush1.bf16.msra.mxu0 %v4130
    %5063 = vmatprep.subr.bf16.mxu0 0
    %5064 = vmatpush1.bf16.msra.mxu0 %v4135
    %5065 = vmatprep.subr.bf16.mxu0 0
    %5066 = vmatpush1.bf16.msra.mxu0 %v4140
    %5067 = vmatprep.subr.bf16.mxu0 0
    %5068 = vmatpush1.bf16.msra.mxu0 %v4145
    %5069 = vmatprep.subr.bf16.mxu0 0
    %5070 = vmatpush1.bf16.msra.mxu0 %v4150
    %5071 = vmatprep.mubr.bf16.mxu0 %v2656
    %5072 = vmatmul.mubr.bf16.gmra.mrb[0].mxu0 %v2655
    %v5073 = vpop.f32.mrb[0].mxu0
    %v5074 = vadd.f32 0.0, %v5073
    %v5075 = vpop.f32.mrb[0].mxu0
    %v5076 = vpop.f32.mrb[0].mxu0
    %v5077 = vpop.f32.mrb[0].mxu0
    %5078 = vdwg.mxu0
    %5079 = vmatprep.subr.bf16.mxu0 0
    %5080 = vmatpush1.bf16.msra.mxu0 %v4155
    %5081 = vmatprep.subr.bf16.mxu0 0
    %5082 = vmatpush1.bf16.msra.mxu0 %v4160
    %5083 = vmatprep.subr.bf16.mxu0 0
    %5084 = vmatpush1.bf16.msra.mxu0 %v4165
    %5085 = vmatprep.subr.bf16.mxu0 0
    %5086 = vmatpush1.bf16.msra.mxu0 %v4170
    %5087 = vmatprep.subr.bf16.mxu0 0
    %5088 = vmatpush1.bf16.msra.mxu0 %v4175
    %5089 = vmatprep.subr.bf16.mxu0 0
    %5090 = vmatpush1.bf16.msra.mxu0 %v4180
    %5091 = vmatprep.subr.bf16.mxu0 0
    %5092 = vmatpush1.bf16.msra.mxu0 %v4185
    %5093 = vmatprep.subr.bf16.mxu0 0
    %5094 = vmatpush1.bf16.msra.mxu0 %v4190
    %5095 = vmatprep.subr.bf16.mxu0 0
    %5096 = vmatpush1.bf16.msra.mxu0 %v4195
    %5097 = vmatprep.subr.bf16.mxu0 0
    %5098 = vmatpush1.bf16.msra.mxu0 %v4200
    %5099 = vmatprep.subr.bf16.mxu0 0
    %5100 = vmatpush1.bf16.msra.mxu0 %v4205
    %5101 = vmatprep.subr.bf16.mxu0 0
    %5102 = vmatpush1.bf16.msra.mxu0 %v4210
    %5103 = vmatprep.subr.bf16.mxu0 0
    %5104 = vmatpush1.bf16.msra.mxu0 %v4215
    %5105 = vmatprep.subr.bf16.mxu0 0
    %5106 = vmatpush1.bf16.msra.mxu0 %v4220
    %5107 = vmatprep.subr.bf16.mxu0 0
    %5108 = vmatpush1.bf16.msra.mxu0 %v4225
    %5109 = vmatprep.subr.bf16.mxu0 0
    %5110 = vmatpush1.bf16.msra.mxu0 %v4230
    %5111 = vmatprep.mubr.bf16.mxu0 %v2658
    %5112 = vmatmul.mubr.bf16.gmra.mrb[0].mxu0 %v2657
    %v5113 = vpop.f32.mrb[0].mxu0
    %v5114 = vadd.f32 %v5074, %v5113
    %v5115 = vpop.f32.mrb[0].mxu0
    %v5116 = vpop.f32.mrb[0].mxu0
    %v5117 = vpop.f32.mrb[0].mxu0
    %5118 = vdwg.mxu0
    %5119 = vmatprep.subr.bf16.mxu0 0
    %5120 = vmatpush1.bf16.msra.mxu0 %v4235
    %5121 = vmatprep.subr.bf16.mxu0 0
    %5122 = vmatpush1.bf16.msra.mxu0 %v4240
    %5123 = vmatprep.subr.bf16.mxu0 0
    %5124 = vmatpush1.bf16.msra.mxu0 %v4245
    %5125 = vmatprep.subr.bf16.mxu0 0
    %5126 = vmatpush1.bf16.msra.mxu0 %v4250
    %5127 = vmatprep.subr.bf16.mxu0 0
    %5128 = vmatpush1.bf16.msra.mxu0 %v4255
    %5129 = vmatprep.subr.bf16.mxu0 0
    %5130 = vmatpush1.bf16.msra.mxu0 %v4260
    %5131 = vmatprep.subr.bf16.mxu0 0
    %5132 = vmatpush1.bf16.msra.mxu0 %v4265
    %5133 = vmatprep.subr.bf16.mxu0 0
    %5134 = vmatpush1.bf16.msra.mxu0 %v4270
    %5135 = vmatprep.subr.bf16.mxu0 0
    %5136 = vmatpush1.bf16.msra.mxu0 %v4275
    %5137 = vmatprep.subr.bf16.mxu0 0
    %5138 = vmatpush1.bf16.msra.mxu0 %v4280
    %5139 = vmatprep.subr.bf16.mxu0 0
    %5140 = vmatpush1.bf16.msra.mxu0 %v4285
    %5141 = vmatprep.subr.bf16.mxu0 0
    %5142 = vmatpush1.bf16.msra.mxu0 %v4290
    %5143 = vmatprep.subr.bf16.mxu0 0
    %5144 = vmatpush1.bf16.msra.mxu0 %v4295
    %5145 = vmatprep.subr.bf16.mxu0 0
    %5146 = vmatpush1.bf16.msra.mxu0 %v4300
    %5147 = vmatprep.subr.bf16.mxu0 0
    %5148 = vmatpush1.bf16.msra.mxu0 %v4305
    %5149 = vmatprep.subr.bf16.mxu0 0
    %5150 = vmatpush1.bf16.msra.mxu0 %v4310
    %5151 = vmatprep.mubr.bf16.mxu0 %v2660
    %5152 = vmatmul.mubr.bf16.gmra.mrb[0].mxu0 %v2659
    %v5153 = vpop.f32.mrb[0].mxu0
    %v5154 = vadd.f32 %v5114, %v5153
    %v5155 = vpop.f32.mrb[0].mxu0
    %v5156 = vpop.f32.mrb[0].mxu0
    %v5157 = vpop.f32.mrb[0].mxu0
    %5158 = vdwg.mxu0
    %5159 = vmatprep.subr.bf16.mxu0 0
    %5160 = vmatpush1.bf16.msra.mxu0 %v4315
    %5161 = vmatprep.subr.bf16.mxu0 0
    %5162 = vmatpush1.bf16.msra.mxu0 %v4320
    %5163 = vmatprep.subr.bf16.mxu0 0
    %5164 = vmatpush1.bf16.msra.mxu0 %v4325
    %5165 = vmatprep.subr.bf16.mxu0 0
    %5166 = vmatpush1.bf16.msra.mxu0 %v4330
    %5167 = vmatprep.subr.bf16.mxu0 0
    %5168 = vmatpush1.bf16.msra.mxu0 %v4335
    %5169 = vmatprep.subr.bf16.mxu0 0
    %5170 = vmatpush1.bf16.msra.mxu0 %v4340
    %5171 = vmatprep.subr.bf16.mxu0 0
    %5172 = vmatpush1.bf16.msra.mxu0 %v4345
    %5173 = vmatprep.subr.bf16.mxu0 0
    %5174 = vmatpush1.bf16.msra.mxu0 %v4350
    %5175 = vmatprep.subr.bf16.mxu0 0
    %5176 = vmatpush1.bf16.msra.mxu0 %v4355
    %5177 = vmatprep.subr.bf16.mxu0 0
    %5178 = vmatpush1.bf16.msra.mxu0 %v4360
    %5179 = vmatprep.subr.bf16.mxu0 0
    %5180 = vmatpush1.bf16.msra.mxu0 %v4365
    %5181 = vmatprep.subr.bf16.mxu0 0
    %5182 = vmatpush1.bf16.msra.mxu0 %v4370
    %5183 = vmatprep.subr.bf16.mxu0 0
    %5184 = vmatpush1.bf16.msra.mxu0 %v4375
    %5185 = vmatprep.subr.bf16.mxu0 0
    %5186 = vmatpush1.bf16.msra.mxu0 %v4380
    %5187 = vmatprep.subr.bf16.mxu0 0
    %5188 = vmatpush1.bf16.msra.mxu0 %v4385
    %5189 = vmatprep.subr.bf16.mxu0 0
    %5190 = vmatpush1.bf16.msra.mxu0 %v4390
    %5191 = vmatprep.mubr.bf16.mxu0 %v2662
    %5192 = vmatmul.mubr.bf16.gmra.mrb[0].mxu0 %v2661
    %v5193 = vpop.f32.mrb[0].mxu0
    %v5194 = vadd.f32 %v5154, %v5193
    %v5195 = vpop.f32.mrb[0].mxu0
    %v5196 = vpop.f32.mrb[0].mxu0
    %v5197 = vpop.f32.mrb[0].mxu0
    %5198 = vdwg.mxu0
    %v5199 = vsel %vm980, %v4869, 0.0
    %v5200 = vrot.slane %v5199, 4
    %v5201 = vadd.f32 %v5199, %v5200
    %v5202 = vrot.slane %v5201, 2
    %v5203 = vadd.f32 %v5201, %v5202
    %v5204 = vrot.slane %v5203, 1
    %v5205 = vadd.f32 %v5203, %v5204
    %v5206 = vsel %vm980, %v4871, 0.0
    %v5207 = vrot.slane %v5206, 4
    %v5208 = vadd.f32 %v5206, %v5207
    %v5209 = vrot.slane %v5208, 2
    %v5210 = vadd.f32 %v5208, %v5209
    %v5211 = vrot.slane %v5210, 1
    %v5212 = vadd.f32 %v5210, %v5211
    %v5213 = vsel %vm980, %v5033, 0.0
    %v5214 = vrot.slane %v5213, 4
    %v5215 = vadd.f32 %v5213, %v5214
    %v5216 = vrot.slane %v5215, 2
    %v5217 = vadd.f32 %v5215, %v5216
    %v5218 = vrot.slane %v5217, 1
    %v5219 = vadd.f32 %v5217, %v5218
    %v5220 = vsel %vm980, %v5035, 0.0
    %v5221 = vrot.slane %v5220, 4
    %v5222 = vadd.f32 %v5220, %v5221
    %v5223 = vrot.slane %v5222, 2
    %v5224 = vadd.f32 %v5222, %v5223
    %v5225 = vrot.slane %v5224, 1
    %v5226 = vadd.f32 %v5224, %v5225
    %vm5227 = vcmask 517120
    %v5228 = vsel %vm5227, %v5194, 0.0
    %v5229 = vrot.slane %v5228, 4
    %v5230 = vadd.f32 %v5228, %v5229
    %v5231 = vrot.slane %v5230, 2
    %v5232 = vadd.f32 %v5230, %v5231
    %v5233 = vrot.slane %v5232, 1
    %v5234 = vadd.f32 %v5232, %v5233
    %v5235 = vmul.f32 %v4869, %v4869
    %v5236 = vmul.f32 %v4871, %v4871
    %v5237 = vmul.f32 %v5033, %v5033
    %v5238 = vmul.f32 %v5035, %v5035
    %v5239 = vmul.f32 %v5194, %v5194
    %v5240 = vsel %vm980, %v5235, 0.0
    %v5241 = vrot.slane %v5240, 4
    %v5242 = vadd.f32 %v5240, %v5241
    %v5243 = vrot.slane %v5242, 2
    %v5244 = vadd.f32 %v5242, %v5243
    %v5245 = vrot.slane %v5244, 1
    %v5246 = vadd.f32 %v5244, %v5245
    %v5247 = vsel %vm980, %v5236, 0.0
    %v5248 = vrot.slane %v5247, 4
    %v5249 = vadd.f32 %v5247, %v5248
    %v5250 = vrot.slane %v5249, 2
    %v5251 = vadd.f32 %v5249, %v5250
    %v5252 = vrot.slane %v5251, 1
    %v5253 = vadd.f32 %v5251, %v5252
    %v5254 = vsel %vm980, %v5237, 0.0
    %v5255 = vrot.slane %v5254, 4
    %v5256 = vadd.f32 %v5254, %v5255
    %v5257 = vrot.slane %v5256, 2
    %v5258 = vadd.f32 %v5256, %v5257
    %v5259 = vrot.slane %v5258, 1
    %v5260 = vadd.f32 %v5258, %v5259
    %v5261 = vsel %vm980, %v5238, 0.0
    %v5262 = vrot.slane %v5261, 4
    %v5263 = vadd.f32 %v5261, %v5262
    %v5264 = vrot.slane %v5263, 2
    %v5265 = vadd.f32 %v5263, %v5264
    %v5266 = vrot.slane %v5265, 1
    %v5267 = vadd.f32 %v5265, %v5266
    %v5268 = vsel %vm5227, %v5239, 0.0
    %v5269 = vrot.slane %v5268, 4
    %v5270 = vadd.f32 %v5268, %v5269
    %v5271 = vrot.slane %v5270, 2
    %v5272 = vadd.f32 %v5270, %v5271
    %v5273 = vrot.slane %v5272, 1
    %v5274 = vadd.f32 %v5272, %v5273
    %v5275 = vsel %vm1103, %v5205, %v5246
    %v5276 = vsel %vm1103, %v5212, %v5253
    %v5277 = vsel %vm1103, %v5219, %v5260
    %v5278 = vsel %vm1103, %v5226, %v5267
    %v5279 = vsel %vm1103, %v5234, %v5274
    %v5280 = vmul.u32 %v1240, 36
    %vm5281 = vcmp.ge.s32.totalorder %v1102, %v5280
    %vm5282 = vcmp.ge.s32.totalorder %v1112, %v5280
    %vm5283 = vcmp.ge.s32.totalorder %v1113, %v5280
    %vm5284 = vcmp.ge.s32.totalorder %v1114, %v5280
    %vm5285 = vcmp.ge.s32.totalorder %v1115, %v5280
    %vm5286 = vcmp.ge.s32.totalorder %v1116, %v5280
    %vm5287 = vcmp.ge.s32.totalorder %v1117, %v5280
    %vm5288 = vcmp.ge.s32.totalorder %v1118, %v5280
    %vm5289 = vcmp.ge.s32.totalorder %v1119, %v5280
    %vm5290 = vcmp.ge.s32.totalorder %v1120, %v5280
    %vm5291 = vcmp.ge.s32.totalorder %v1121, %v5280
    %vm5292 = vcmp.ge.s32.totalorder %v1122, %v5280
    %vm5293 = vcmp.ge.s32.totalorder %v1123, %v5280
    %vm5294 = vcmp.ge.s32.totalorder %v1124, %v5280
    %vm5295 = vcmp.ge.s32.totalorder %v1125, %v5280
    %vm5296 = vcmp.ge.s32.totalorder %v1126, %v5280
    %vm5297 = vcmp.ge.s32.totalorder %v1127, %v5280
    %vm5298 = vcmp.ge.s32.totalorder %v1128, %v5280
    %vm5299 = vcmp.ge.s32.totalorder %v1129, %v5280
    %vm5300 = vcmp.ge.s32.totalorder %v1130, %v5280
    %vm5301 = vcmp.ge.s32.totalorder %v1131, %v5280
    %vm5302 = vcmp.ge.s32.totalorder %v1132, %v5280
    %vm5303 = vcmp.ge.s32.totalorder %v1133, %v5280
    %vm5304 = vcmp.ge.s32.totalorder %v1134, %v5280
    %vm5305 = vcmp.ge.s32.totalorder %v1135, %v5280
    %vm5306 = vcmp.ge.s32.totalorder %v1136, %v5280
    %vm5307 = vcmp.ge.s32.totalorder %v1137, %v5280
    %vm5308 = vcmp.ge.s32.totalorder %v1138, %v5280
    %vm5309 = vcmp.ge.s32.totalorder %v1139, %v5280
    %vm5310 = vcmp.ge.s32.totalorder %v1140, %v5280
    %vm5311 = vcmp.ge.s32.totalorder %v1141, %v5280
    %vm5312 = vcmp.ge.s32.totalorder %v1142, %v5280
    %vm5313 = vcmp.ge.s32.totalorder %v1143, %v5280
    %vm5314 = vcmp.ge.s32.totalorder %v1144, %v5280
    %vm5315 = vcmp.ge.s32.totalorder %v1145, %v5280
    %vm5316 = vcmp.ge.s32.totalorder %v1146, %v5280
    %vm5317 = vcmp.ge.s32.totalorder %v1147, %v5280
    %vm5318 = vcmp.ge.s32.totalorder %v1148, %v5280
    %vm5319 = vcmp.ge.s32.totalorder %v1149, %v5280
    %vm5320 = vcmp.ge.s32.totalorder %v1150, %v5280
    %vm5321 = vcmp.ge.s32.totalorder %v1151, %v5280
    %vm5322 = vcmp.ge.s32.totalorder %v1152, %v5280
    %vm5323 = vcmp.ge.s32.totalorder %v1153, %v5280
    %vm5324 = vcmp.ge.s32.totalorder %v1154, %v5280
    %vm5325 = vcmp.ge.s32.totalorder %v1155, %v5280
    %vm5326 = vcmp.ge.s32.totalorder %v1156, %v5280
    %vm5327 = vcmp.ge.s32.totalorder %v1157, %v5280
    %vm5328 = vcmp.ge.s32.totalorder %v1158, %v5280
    %vm5329 = vcmp.ge.s32.totalorder %v1159, %v5280
    %vm5330 = vcmp.ge.s32.totalorder %v1160, %v5280
    %vm5331 = vcmp.ge.s32.totalorder %v1161, %v5280
    %vm5332 = vcmp.ge.s32.totalorder %v1162, %v5280
    %vm5333 = vcmp.ge.s32.totalorder %v1163, %v5280
    %vm5334 = vcmp.ge.s32.totalorder %v1164, %v5280
    %vm5335 = vcmp.ge.s32.totalorder %v1165, %v5280
    %vm5336 = vcmp.ge.s32.totalorder %v1166, %v5280
    %vm5337 = vcmp.ge.s32.totalorder %v1167, %v5280
    %vm5338 = vcmp.ge.s32.totalorder %v1168, %v5280
    %vm5339 = vcmp.ge.s32.totalorder %v1169, %v5280
    %vm5340 = vcmp.ge.s32.totalorder %v1170, %v5280
    %vm5341 = vcmp.ge.s32.totalorder %v1171, %v5280
    %vm5342 = vcmp.ge.s32.totalorder %v1172, %v5280
    %vm5343 = vcmp.ge.s32.totalorder %v1173, %v5280
    %vm5344 = vcmp.ge.s32.totalorder %v1174, %v5280
    %vm5345 = vcmp.ge.s32.totalorder %v1175, %v5280
    %vm5346 = vcmp.ge.s32.totalorder %v1176, %v5280
    %vm5347 = vcmp.ge.s32.totalorder %v1177, %v5280
    %vm5348 = vcmp.ge.s32.totalorder %v1178, %v5280
    %vm5349 = vcmp.ge.s32.totalorder %v1179, %v5280
    %vm5350 = vcmp.ge.s32.totalorder %v1180, %v5280
    %vm5351 = vcmp.ge.s32.totalorder %v1181, %v5280
    %vm5352 = vcmp.ge.s32.totalorder %v1182, %v5280
    %v5353 = vadd.s32 %v5280, 36
    %vm5354 = vcmp.lt.s32.totalorder %v1102, %v5353
    %vm5355 = vcmp.lt.s32.totalorder %v1112, %v5353
    %vm5356 = vcmp.lt.s32.totalorder %v1113, %v5353
    %vm5357 = vcmp.lt.s32.totalorder %v1114, %v5353
    %vm5358 = vcmp.lt.s32.totalorder %v1115, %v5353
    %vm5359 = vcmp.lt.s32.totalorder %v1116, %v5353
    %vm5360 = vcmp.lt.s32.totalorder %v1117, %v5353
    %vm5361 = vcmp.lt.s32.totalorder %v1118, %v5353
    %vm5362 = vcmp.lt.s32.totalorder %v1119, %v5353
    %vm5363 = vcmp.lt.s32.totalorder %v1120, %v5353
    %vm5364 = vcmp.lt.s32.totalorder %v1121, %v5353
    %vm5365 = vcmp.lt.s32.totalorder %v1122, %v5353
    %vm5366 = vcmp.lt.s32.totalorder %v1123, %v5353
    %vm5367 = vcmp.lt.s32.totalorder %v1124, %v5353
    %vm5368 = vcmp.lt.s32.totalorder %v1125, %v5353
    %vm5369 = vcmp.lt.s32.totalorder %v1126, %v5353
    %vm5370 = vcmp.lt.s32.totalorder %v1127, %v5353
    %vm5371 = vcmp.lt.s32.totalorder %v1128, %v5353
    %vm5372 = vcmp.lt.s32.totalorder %v1129, %v5353
    %vm5373 = vcmp.lt.s32.totalorder %v1130, %v5353
    %vm5374 = vcmp.lt.s32.totalorder %v1131, %v5353
    %vm5375 = vcmp.lt.s32.totalorder %v1132, %v5353
    %vm5376 = vcmp.lt.s32.totalorder %v1133, %v5353
    %vm5377 = vcmp.lt.s32.totalorder %v1134, %v5353
    %vm5378 = vcmp.lt.s32.totalorder %v1135, %v5353
    %vm5379 = vcmp.lt.s32.totalorder %v1136, %v5353
    %vm5380 = vcmp.lt.s32.totalorder %v1137, %v5353
    %vm5381 = vcmp.lt.s32.totalorder %v1138, %v5353
    %vm5382 = vcmp.lt.s32.totalorder %v1139, %v5353
    %vm5383 = vcmp.lt.s32.totalorder %v1140, %v5353
    %vm5384 = vcmp.lt.s32.totalorder %v1141, %v5353
    %vm5385 = vcmp.lt.s32.totalorder %v1142, %v5353
    %vm5386 = vcmp.lt.s32.totalorder %v1143, %v5353
    %vm5387 = vcmp.lt.s32.totalorder %v1144, %v5353
    %vm5388 = vcmp.lt.s32.totalorder %v1145, %v5353
    %vm5389 = vcmp.lt.s32.totalorder %v1146, %v5353
    %vm5390 = vcmp.lt.s32.totalorder %v1147, %v5353
    %vm5391 = vcmp.lt.s32.totalorder %v1148, %v5353
    %vm5392 = vcmp.lt.s32.totalorder %v1149, %v5353
    %vm5393 = vcmp.lt.s32.totalorder %v1150, %v5353
    %vm5394 = vcmp.lt.s32.totalorder %v1151, %v5353
    %vm5395 = vcmp.lt.s32.totalorder %v1152, %v5353
    %vm5396 = vcmp.lt.s32.totalorder %v1153, %v5353
    %vm5397 = vcmp.lt.s32.totalorder %v1154, %v5353
    %vm5398 = vcmp.lt.s32.totalorder %v1155, %v5353
    %vm5399 = vcmp.lt.s32.totalorder %v1156, %v5353
    %vm5400 = vcmp.lt.s32.totalorder %v1157, %v5353
    %vm5401 = vcmp.lt.s32.totalorder %v1158, %v5353
    %vm5402 = vcmp.lt.s32.totalorder %v1159, %v5353
    %vm5403 = vcmp.lt.s32.totalorder %v1160, %v5353
    %vm5404 = vcmp.lt.s32.totalorder %v1161, %v5353
    %vm5405 = vcmp.lt.s32.totalorder %v1162, %v5353
    %vm5406 = vcmp.lt.s32.totalorder %v1163, %v5353
    %vm5407 = vcmp.lt.s32.totalorder %v1164, %v5353
    %vm5408 = vcmp.lt.s32.totalorder %v1165, %v5353
    %vm5409 = vcmp.lt.s32.totalorder %v1166, %v5353
    %vm5410 = vcmp.lt.s32.totalorder %v1167, %v5353
    %vm5411 = vcmp.lt.s32.totalorder %v1168, %v5353
    %vm5412 = vcmp.lt.s32.totalorder %v1169, %v5353
    %vm5413 = vcmp.lt.s32.totalorder %v1170, %v5353
    %vm5414 = vcmp.lt.s32.totalorder %v1171, %v5353
    %vm5415 = vcmp.lt.s32.totalorder %v1172, %v5353
    %vm5416 = vcmp.lt.s32.totalorder %v1173, %v5353
    %vm5417 = vcmp.lt.s32.totalorder %v1174, %v5353
    %vm5418 = vcmp.lt.s32.totalorder %v1175, %v5353
    %vm5419 = vcmp.lt.s32.totalorder %v1176, %v5353
    %vm5420 = vcmp.lt.s32.totalorder %v1177, %v5353
    %vm5421 = vcmp.lt.s32.totalorder %v1178, %v5353
    %vm5422 = vcmp.lt.s32.totalorder %v1179, %v5353
    %vm5423 = vcmp.lt.s32.totalorder %v1180, %v5353
    %vm5424 = vcmp.lt.s32.totalorder %v1181, %v5353
    %vm5425 = vcmp.lt.s32.totalorder %v1182, %v5353
    %vm5426 = vmand %vm5281, %vm5354
    %vm5427 = vmand %vm5282, %vm5355
    %vm5428 = vmand %vm5283, %vm5356
    %vm5429 = vmand %vm5284, %vm5357
    %vm5430 = vmand %vm5285, %vm5358
    %vm5431 = vmand %vm5286, %vm5359
    %vm5432 = vmand %vm5287, %vm5360
    %vm5433 = vmand %vm5288, %vm5361
    %vm5434 = vmand %vm5289, %vm5362
    %vm5435 = vmand %vm5290, %vm5363
    %vm5436 = vmand %vm5291, %vm5364
    %vm5437 = vmand %vm5292, %vm5365
    %vm5438 = vmand %vm5293, %vm5366
    %vm5439 = vmand %vm5294, %vm5367
    %vm5440 = vmand %vm5295, %vm5368
    %vm5441 = vmand %vm5296, %vm5369
    %vm5442 = vmand %vm5297, %vm5370
    %vm5443 = vmand %vm5298, %vm5371
    %vm5444 = vmand %vm5299, %vm5372
    %vm5445 = vmand %vm5300, %vm5373
    %vm5446 = vmand %vm5301, %vm5374
    %vm5447 = vmand %vm5302, %vm5375
    %vm5448 = vmand %vm5303, %vm5376
    %vm5449 = vmand %vm5304, %vm5377
    %vm5450 = vmand %vm5305, %vm5378
    %vm5451 = vmand %vm5306, %vm5379
    %vm5452 = vmand %vm5307, %vm5380
    %vm5453 = vmand %vm5308, %vm5381
    %vm5454 = vmand %vm5309, %vm5382
    %vm5455 = vmand %vm5310, %vm5383
    %vm5456 = vmand %vm5311, %vm5384
    %vm5457 = vmand %vm5312, %vm5385
    %vm5458 = vmand %vm5313, %vm5386
    %vm5459 = vmand %vm5314, %vm5387
    %vm5460 = vmand %vm5315, %vm5388
    %vm5461 = vmand %vm5316, %vm5389
    %vm5462 = vmand %vm5317, %vm5390
    %vm5463 = vmand %vm5318, %vm5391
    %vm5464 = vmand %vm5319, %vm5392
    %vm5465 = vmand %vm5320, %vm5393
    %vm5466 = vmand %vm5321, %vm5394
    %vm5467 = vmand %vm5322, %vm5395
    %vm5468 = vmand %vm5323, %vm5396
    %vm5469 = vmand %vm5324, %vm5397
    %vm5470 = vmand %vm5325, %vm5398
    %vm5471 = vmand %vm5326, %vm5399
    %vm5472 = vmand %vm5327, %vm5400
    %vm5473 = vmand %vm5328, %vm5401
    %vm5474 = vmand %vm5329, %vm5402
    %vm5475 = vmand %vm5330, %vm5403
    %vm5476 = vmand %vm5331, %vm5404
    %vm5477 = vmand %vm5332, %vm5405
    %vm5478 = vmand %vm5333, %vm5406
    %vm5479 = vmand %vm5334, %vm5407
    %vm5480 = vmand %vm5335, %vm5408
    %vm5481 = vmand %vm5336, %vm5409
    %vm5482 = vmand %vm5337, %vm5410
    %vm5483 = vmand %vm5338, %vm5411
    %vm5484 = vmand %vm5339, %vm5412
    %vm5485 = vmand %vm5340, %vm5413
    %vm5486 = vmand %vm5341, %vm5414
    %vm5487 = vmand %vm5342, %vm5415
    %vm5488 = vmand %vm5343, %vm5416
    %vm5489 = vmand %vm5344, %vm5417
    %vm5490 = vmand %vm5345, %vm5418
    %vm5491 = vmand %vm5346, %vm5419
    %vm5492 = vmand %vm5347, %vm5420
    %vm5493 = vmand %vm5348, %vm5421
    %vm5494 = vmand %vm5349, %vm5422
    %vm5495 = vmand %vm5350, %vm5423
    %vm5496 = vmand %vm5351, %vm5424
    %vm5497 = vmand %vm5352, %vm5425
    %v5498 = vsel %vm5426, 1, 0
    %v5499 = vsel %vm5427, 1, 0
    %v5500 = vsel %vm5428, 1, 0
    %v5501 = vsel %vm5429, 1, 0
    %v5502 = vsel %vm5430, 1, 0
    %v5503 = vsel %vm5431, 1, 0
    %v5504 = vsel %vm5432, 1, 0
    %v5505 = vsel %vm5433, 1, 0
    %v5506 = vsel %vm5434, 1, 0
    %v5507 = vsel %vm5435, 1, 0
    %v5508 = vsel %vm5436, 1, 0
    %v5509 = vsel %vm5437, 1, 0
    %v5510 = vsel %vm5438, 1, 0
    %v5511 = vsel %vm5439, 1, 0
    %v5512 = vsel %vm5440, 1, 0
    %v5513 = vsel %vm5441, 1, 0
    %v5514 = vsel %vm5442, 1, 0
    %v5515 = vsel %vm5443, 1, 0
    %v5516 = vsel %vm5444, 1, 0
    %v5517 = vsel %vm5445, 1, 0
    %v5518 = vsel %vm5446, 1, 0
    %v5519 = vsel %vm5447, 1, 0
    %v5520 = vsel %vm5448, 1, 0
    %v5521 = vsel %vm5449, 1, 0
    %v5522 = vsel %vm5450, 1, 0
    %v5523 = vsel %vm5451, 1, 0
    %v5524 = vsel %vm5452, 1, 0
    %v5525 = vsel %vm5453, 1, 0
    %v5526 = vsel %vm5454, 1, 0
    %v5527 = vsel %vm5455, 1, 0
    %v5528 = vsel %vm5456, 1, 0
    %v5529 = vsel %vm5457, 1, 0
    %v5530 = vsel %vm5458, 1, 0
    %v5531 = vsel %vm5459, 1, 0
    %v5532 = vsel %vm5460, 1, 0
    %v5533 = vsel %vm5461, 1, 0
    %v5534 = vsel %vm5462, 1, 0
    %v5535 = vsel %vm5463, 1, 0
    %v5536 = vsel %vm5464, 1, 0
    %v5537 = vsel %vm5465, 1, 0
    %v5538 = vsel %vm5466, 1, 0
    %v5539 = vsel %vm5467, 1, 0
    %v5540 = vsel %vm5468, 1, 0
    %v5541 = vsel %vm5469, 1, 0
    %v5542 = vsel %vm5470, 1, 0
    %v5543 = vsel %vm5471, 1, 0
    %v5544 = vsel %vm5472, 1, 0
    %v5545 = vsel %vm5473, 1, 0
    %v5546 = vsel %vm5474, 1, 0
    %v5547 = vsel %vm5475, 1, 0
    %v5548 = vsel %vm5476, 1, 0
    %v5549 = vsel %vm5477, 1, 0
    %v5550 = vsel %vm5478, 1, 0
    %v5551 = vsel %vm5479, 1, 0
    %v5552 = vsel %vm5480, 1, 0
    %v5553 = vsel %vm5481, 1, 0
    %v5554 = vsel %vm5482, 1, 0
    %v5555 = vsel %vm5483, 1, 0
    %v5556 = vsel %vm5484, 1, 0
    %v5557 = vsel %vm5485, 1, 0
    %v5558 = vsel %vm5486, 1, 0
    %v5559 = vsel %vm5487, 1, 0
    %v5560 = vsel %vm5488, 1, 0
    %v5561 = vsel %vm5489, 1, 0
    %v5562 = vsel %vm5490, 1, 0
    %v5563 = vsel %vm5491, 1, 0
    %v5564 = vsel %vm5492, 1, 0
    %v5565 = vsel %vm5493, 1, 0
    %v5566 = vsel %vm5494, 1, 0
    %v5567 = vsel %vm5495, 1, 0
    %v5568 = vsel %vm5496, 1, 0
    %v5569 = vsel %vm5497, 1, 0
    %v5570 = vcvt.s32.f32 %v5498
    %v5571 = vcvt.s32.f32 %v5499
    %v5572 = vcvt.s32.f32 %v5500
    %v5573 = vcvt.s32.f32 %v5501
    %v5574 = vcvt.s32.f32 %v5502
    %v5575 = vcvt.s32.f32 %v5503
    %v5576 = vcvt.s32.f32 %v5504
    %v5577 = vcvt.s32.f32 %v5505
    %v5578 = vcvt.s32.f32 %v5506
    %v5579 = vcvt.s32.f32 %v5507
    %v5580 = vcvt.s32.f32 %v5508
    %v5581 = vcvt.s32.f32 %v5509
    %v5582 = vcvt.s32.f32 %v5510
    %v5583 = vcvt.s32.f32 %v5511
    %v5584 = vcvt.s32.f32 %v5512
    %v5585 = vcvt.s32.f32 %v5513
    %v5586 = vcvt.s32.f32 %v5514
    %v5587 = vcvt.s32.f32 %v5515
    %v5588 = vcvt.s32.f32 %v5516
    %v5589 = vcvt.s32.f32 %v5517
    %v5590 = vcvt.s32.f32 %v5518
    %v5591 = vcvt.s32.f32 %v5519
    %v5592 = vcvt.s32.f32 %v5520
    %v5593 = vcvt.s32.f32 %v5521
    %v5594 = vcvt.s32.f32 %v5522
    %v5595 = vcvt.s32.f32 %v5523
    %v5596 = vcvt.s32.f32 %v5524
    %v5597 = vcvt.s32.f32 %v5525
    %v5598 = vcvt.s32.f32 %v5526
    %v5599 = vcvt.s32.f32 %v5527
    %v5600 = vcvt.s32.f32 %v5528
    %v5601 = vcvt.s32.f32 %v5529
    %v5602 = vcvt.s32.f32 %v5530
    %v5603 = vcvt.s32.f32 %v5531
    %v5604 = vcvt.s32.f32 %v5532
    %v5605 = vcvt.s32.f32 %v5533
    %v5606 = vcvt.s32.f32 %v5534
    %v5607 = vcvt.s32.f32 %v5535
    %v5608 = vcvt.s32.f32 %v5536
    %v5609 = vcvt.s32.f32 %v5537
    %v5610 = vcvt.s32.f32 %v5538
    %v5611 = vcvt.s32.f32 %v5539
    %v5612 = vcvt.s32.f32 %v5540
    %v5613 = vcvt.s32.f32 %v5541
    %v5614 = vcvt.s32.f32 %v5542
    %v5615 = vcvt.s32.f32 %v5543
    %v5616 = vcvt.s32.f32 %v5544
    %v5617 = vcvt.s32.f32 %v5545
    %v5618 = vcvt.s32.f32 %v5546
    %v5619 = vcvt.s32.f32 %v5547
    %v5620 = vcvt.s32.f32 %v5548
    %v5621 = vcvt.s32.f32 %v5549
    %v5622 = vcvt.s32.f32 %v5550
    %v5623 = vcvt.s32.f32 %v5551
    %v5624 = vcvt.s32.f32 %v5552
    %v5625 = vcvt.s32.f32 %v5553
    %v5626 = vcvt.s32.f32 %v5554
    %v5627 = vcvt.s32.f32 %v5555
    %v5628 = vcvt.s32.f32 %v5556
    %v5629 = vcvt.s32.f32 %v5557
    %v5630 = vcvt.s32.f32 %v5558
    %v5631 = vcvt.s32.f32 %v5559
    %v5632 = vcvt.s32.f32 %v5560
    %v5633 = vcvt.s32.f32 %v5561
    %v5634 = vcvt.s32.f32 %v5562
    %v5635 = vcvt.s32.f32 %v5563
    %v5636 = vcvt.s32.f32 %v5564
    %v5637 = vcvt.s32.f32 %v5565
    %v5638 = vcvt.s32.f32 %v5566
    %v5639 = vcvt.s32.f32 %v5567
    %v5640 = vcvt.s32.f32 %v5568
    %v5641 = vcvt.s32.f32 %v5569
    %vm5642 = vcmask 523264
    %v5644 = vsel %vm5642, %v5279, 0
    %5646 = vmatprep.subr.mxu0 0.0
    %5647 = vmatpush1.msra.mxu0 %v5570
    %5648 = vmatprep.subr.mxu0 0.0
    %5649 = vmatpush1.msra.mxu0 %v5571
    %5650 = vmatprep.subr.mxu0 0.0
    %5651 = vmatpush1.msra.mxu0 %v5572
    %5652 = vmatprep.subr.mxu0 0.0
    %5653 = vmatpush1.msra.mxu0 %v5573
    %5654 = vmatprep.subr.mxu0 0.0
    %5655 = vmatpush1.msra.mxu0 %v5574
    %5656 = vmatprep.subr.mxu0 0.0
    %5657 = vmatpush1.msra.mxu0 %v5575
    %5658 = vmatprep.subr.mxu0 0.0
    %5659 = vmatpush1.msra.mxu0 %v5576
    %5660 = vmatprep.subr.mxu0 0.0
    %5661 = vmatpush1.msra.mxu0 %v5577
    %5662 = vmatprep.subr.mxu0 0.0
    %5663 = vmatpush1.msra.mxu0 %v5578
    %5664 = vmatprep.subr.mxu0 0.0
    %5665 = vmatpush1.msra.mxu0 %v5579
    %5666 = vmatprep.subr.mxu0 0.0
    %5667 = vmatpush1.msra.mxu0 %v5580
    %5668 = vmatprep.subr.mxu0 0.0
    %5669 = vmatpush1.msra.mxu0 %v5581
    %5670 = vmatprep.subr.mxu0 0.0
    %5671 = vmatpush1.msra.mxu0 %v5582
    %5672 = vmatprep.subr.mxu0 0.0
    %5673 = vmatpush1.msra.mxu0 %v5583
    %5674 = vmatprep.subr.mxu0 0.0
    %5675 = vmatpush1.msra.mxu0 %v5584
    %5676 = vmatprep.subr.mxu0 0.0
    %5677 = vmatpush1.msra.mxu0 %v5585
    %5678 = vmatprep.subr.mxu0 0.0
    %5679 = vmatpush1.msra.mxu0 %v5586
    %5680 = vmatprep.subr.mxu0 0.0
    %5681 = vmatpush1.msra.mxu0 %v5587
    %5682 = vmatprep.subr.mxu0 0.0
    %5683 = vmatpush1.msra.mxu0 %v5588
    %5684 = vmatprep.subr.mxu0 0.0
    %5685 = vmatpush1.msra.mxu0 %v5589
    %5686 = vmatprep.subr.mxu0 0.0
    %5687 = vmatpush1.msra.mxu0 %v5590
    %5688 = vmatprep.subr.mxu0 0.0
    %5689 = vmatpush1.msra.mxu0 %v5591
    %5690 = vmatprep.subr.mxu0 0.0
    %5691 = vmatpush1.msra.mxu0 %v5592
    %5692 = vmatprep.subr.mxu0 0.0
    %5693 = vmatpush1.msra.mxu0 %v5593
    %5694 = vmatprep.subr.mxu0 0.0
    %5695 = vmatpush1.msra.mxu0 %v5594
    %5696 = vmatprep.subr.mxu0 0.0
    %5697 = vmatpush1.msra.mxu0 %v5595
    %5698 = vmatprep.subr.mxu0 0.0
    %5699 = vmatpush1.msra.mxu0 %v5596
    %5700 = vmatprep.subr.mxu0 0.0
    %5701 = vmatpush1.msra.mxu0 %v5597
    %5702 = vmatprep.subr.mxu0 0.0
    %5703 = vmatpush1.msra.mxu0 %v5598
    %5704 = vmatprep.subr.mxu0 0.0
    %5705 = vmatpush1.msra.mxu0 %v5599
    %5706 = vmatprep.subr.mxu0 0.0
    %5707 = vmatpush1.msra.mxu0 %v5600
    %5708 = vmatprep.subr.mxu0 0.0
    %5709 = vmatpush1.msra.mxu0 %v5601
    %5710 = vmatprep.mubr.f32.mxu0 %v5276
    %5711 = vmatmul.mubr.f32.gmra.mrb[0].mxu0 %v5275
    %v5712 = vpop.f32.mrb[0].mxu0
    %v5713 = vadd.f32 0.0, %v5712
    %v5714 = vpop.f32.mrb[0].mxu0
    %5715 = vdwg.mxu0
    %5716 = vmatprep.subr.mxu0 0.0
    %5717 = vmatpush1.msra.mxu0 %v5602
    %5718 = vmatprep.subr.mxu0 0.0
    %5719 = vmatpush1.msra.mxu0 %v5603
    %5720 = vmatprep.subr.mxu0 0.0
    %5721 = vmatpush1.msra.mxu0 %v5604
    %5722 = vmatprep.subr.mxu0 0.0
    %5723 = vmatpush1.msra.mxu0 %v5605
    %5724 = vmatprep.subr.mxu0 0.0
    %5725 = vmatpush1.msra.mxu0 %v5606
    %5726 = vmatprep.subr.mxu0 0.0
    %5727 = vmatpush1.msra.mxu0 %v5607
    %5728 = vmatprep.subr.mxu0 0.0
    %5729 = vmatpush1.msra.mxu0 %v5608
    %5730 = vmatprep.subr.mxu0 0.0
    %5731 = vmatpush1.msra.mxu0 %v5609
    %5732 = vmatprep.subr.mxu0 0.0
    %5733 = vmatpush1.msra.mxu0 %v5610
    %5734 = vmatprep.subr.mxu0 0.0
    %5735 = vmatpush1.msra.mxu0 %v5611
    %5736 = vmatprep.subr.mxu0 0.0
    %5737 = vmatpush1.msra.mxu0 %v5612
    %5738 = vmatprep.subr.mxu0 0.0
    %5739 = vmatpush1.msra.mxu0 %v5613
    %5740 = vmatprep.subr.mxu0 0.0
    %5741 = vmatpush1.msra.mxu0 %v5614
    %5742 = vmatprep.subr.mxu0 0.0
    %5743 = vmatpush1.msra.mxu0 %v5615
    %5744 = vmatprep.subr.mxu0 0.0
    %5745 = vmatpush1.msra.mxu0 %v5616
    %5746 = vmatprep.subr.mxu0 0.0
    %5747 = vmatpush1.msra.mxu0 %v5617
    %5748 = vmatprep.subr.mxu0 0.0
    %5749 = vmatpush1.msra.mxu0 %v5618
    %5750 = vmatprep.subr.mxu0 0.0
    %5751 = vmatpush1.msra.mxu0 %v5619
    %5752 = vmatprep.subr.mxu0 0.0
    %5753 = vmatpush1.msra.mxu0 %v5620
    %5754 = vmatprep.subr.mxu0 0.0
    %5755 = vmatpush1.msra.mxu0 %v5621
    %5756 = vmatprep.subr.mxu0 0.0
    %5757 = vmatpush1.msra.mxu0 %v5622
    %5758 = vmatprep.subr.mxu0 0.0
    %5759 = vmatpush1.msra.mxu0 %v5623
    %5760 = vmatprep.subr.mxu0 0.0
    %5761 = vmatpush1.msra.mxu0 %v5624
    %5762 = vmatprep.subr.mxu0 0.0
    %5763 = vmatpush1.msra.mxu0 %v5625
    %5764 = vmatprep.subr.mxu0 0.0
    %5765 = vmatpush1.msra.mxu0 %v5626
    %5766 = vmatprep.subr.mxu0 0.0
    %5767 = vmatpush1.msra.mxu0 %v5627
    %5768 = vmatprep.subr.mxu0 0.0
    %5769 = vmatpush1.msra.mxu0 %v5628
    %5770 = vmatprep.subr.mxu0 0.0
    %5771 = vmatpush1.msra.mxu0 %v5629
    %5772 = vmatprep.subr.mxu0 0.0
    %5773 = vmatpush1.msra.mxu0 %v5630
    %5774 = vmatprep.subr.mxu0 0.0
    %5775 = vmatpush1.msra.mxu0 %v5631
    %5776 = vmatprep.subr.mxu0 0.0
    %5777 = vmatpush1.msra.mxu0 %v5632
    %5778 = vmatprep.subr.mxu0 0.0
    %5779 = vmatpush1.msra.mxu0 %v5633
    %5780 = vmatprep.mubr.f32.mxu0 %v5278
    %5781 = vmatmul.mubr.f32.gmra.mrb[0].mxu0 %v5277
    %v5782 = vpop.f32.mrb[0].mxu0
    %v5783 = vadd.f32 %v5713, %v5782
    %v5784 = vpop.f32.mrb[0].mxu0
    %5785 = vdwg.mxu0
    %5786 = vmatprep.subr.mxu0 0.0
    %5787 = vmatpush1.msra.mxu0 %v5634
    %5788 = vmatprep.subr.mxu0 0.0
    %5789 = vmatpush1.msra.mxu0 %v5635
    %5790 = vmatprep.subr.mxu0 0.0
    %5791 = vmatpush1.msra.mxu0 %v5636
    %5792 = vmatprep.subr.mxu0 0.0
    %5793 = vmatpush1.msra.mxu0 %v5637
    %5794 = vmatprep.subr.mxu0 0.0
    %5795 = vmatpush1.msra.mxu0 %v5638
    %5796 = vmatprep.subr.mxu0 0.0
    %5797 = vmatpush1.msra.mxu0 %v5639
    %5798 = vmatprep.subr.mxu0 0.0
    %5799 = vmatpush1.msra.mxu0 %v5640
    %5800 = vmatprep.subr.mxu0 0.0
    %5801 = vmatpush1.msra.mxu0 %v5641
    %5802 = vmatprep.subr.mxu0 0.0
    %5803 = vmatpush1.msra.mxu0 0.0
    %5804 = vmatprep.subr.mxu0 0.0
    %5805 = vmatpush1.msra.mxu0 0.0
    %5806 = vmatprep.subr.mxu0 0.0
    %5807 = vmatpush1.msra.mxu0 0.0
    %5808 = vmatprep.subr.mxu0 0.0
    %5809 = vmatpush1.msra.mxu0 0.0
    %5810 = vmatprep.subr.mxu0 0.0
    %5811 = vmatpush1.msra.mxu0 0.0
    %5812 = vmatprep.subr.mxu0 0.0
    %5813 = vmatpush1.msra.mxu0 0.0
    %5814 = vmatprep.subr.mxu0 0.0
    %5815 = vmatpush1.msra.mxu0 0.0
    %5816 = vmatprep.subr.mxu0 0.0
    %5817 = vmatpush1.msra.mxu0 0.0
    %5818 = vmatprep.subr.mxu0 0.0
    %5819 = vmatpush1.msra.mxu0 0.0
    %5820 = vmatprep.subr.mxu0 0.0
    %5821 = vmatpush1.msra.mxu0 0.0
    %5822 = vmatprep.subr.mxu0 0.0
    %5823 = vmatpush1.msra.mxu0 0.0
    %5824 = vmatprep.subr.mxu0 0.0
    %5825 = vmatpush1.msra.mxu0 0.0
    %5826 = vmatprep.subr.mxu0 0.0
    %5827 = vmatpush1.msra.mxu0 0.0
    %5828 = vmatprep.subr.mxu0 0.0
    %5829 = vmatpush1.msra.mxu0 0.0
    %5830 = vmatprep.subr.mxu0 0.0
    %5831 = vmatpush1.msra.mxu0 0.0
    %5832 = vmatprep.subr.mxu0 0.0
    %5833 = vmatpush1.msra.mxu0 0.0
    %5834 = vmatprep.subr.mxu0 0.0
    %5835 = vmatpush1.msra.mxu0 0.0
    %5836 = vmatprep.subr.mxu0 0.0
    %5837 = vmatpush1.msra.mxu0 0.0
    %5838 = vmatprep.subr.mxu0 0.0
    %5839 = vmatpush1.msra.mxu0 0.0
    %5840 = vmatprep.subr.mxu0 0.0
    %5841 = vmatpush1.msra.mxu0 0.0
    %5842 = vmatprep.subr.mxu0 0.0
    %5843 = vmatpush1.msra.mxu0 0.0
    %5844 = vmatprep.subr.mxu0 0.0
    %5845 = vmatpush1.msra.mxu0 0.0
    %5846 = vmatprep.subr.mxu0 0.0
    %5847 = vmatpush1.msra.mxu0 0.0
    %5848 = vmatprep.subr.mxu0 0.0
    %5849 = vmatpush1.msra.mxu0 0.0
    %5850 = vmatprep.mubr.f32.mxu0 0.0
    %5851 = vmatmul.mubr.f32.gmra.mrb[0].mxu0 %v5644
    %v5852 = vpop.f32.mrb[0].mxu0
    %v5853 = vadd.f32 %v5783, %v5852
    %v5854 = vpop.f32.mrb[0].mxu0
    %5855 = vdwg.mxu0
    %v5856 = vmul.f32 %v5853, 0.013888889
    %v5857 = vmul.f32 %v5856, %v5856
    %v5859 = vrot.slane %v5857, 7
    %v5861 = vsub.f32 %v5856, %v5859
    %v5862 = vld [vmem:[%s4 + $0x2] sm:$0x1]
    %v5863 = vld [vmem:[%s4 + $0x3] sm:$0x1]
    %v5864 = vadd.f32 %v5861, 1e-05
    %v5865 = vrsqrt.pop %v5864
    %v5867 = vrot.slane %v5865, 1
    %v5869 = vmul.f32 %v5862, %v5867
    %v5870 = vmul.f32 %v5856, %v5869
    %v5871 = vsub.f32 %v5863, %v5870
    %v5872 = vlaneseq
    %v5873 = vshrl.u32 %v5872, 7
    %v5874 = vsub.s32 0, %v5873
    %v5875 = vrot.slane %v5869, %v5874
    %v5876 = vlaneseq
    %v5877 = vshrl.u32 %v5876, 7
    %v5878 = vsub.s32 0, %v5877
    %v5879 = vrot.slane %v5871, %v5878
    %v5880 = vsel %vm1103, %v5875, %v5879
    %v5881 = vmul.u32 %v1102, 36
    %v5882 = vmul.u32 %v1112, 36
    %vm5883 = vcmp.ge.s32.totalorder %v1240, %v5881
    %vm5884 = vcmp.ge.s32.totalorder %v2188, %v5881
    %vm5885 = vcmp.ge.s32.totalorder %v2189, %v5881
    %vm5886 = vcmp.ge.s32.totalorder %v2190, %v5881
    %vm5887 = vcmp.ge.s32.totalorder %v2191, %v5881
    %vm5888 = vcmp.ge.s32.totalorder %v1240, %v5882
    %vm5889 = vcmp.ge.s32.totalorder %v2188, %v5882
    %vm5890 = vcmp.ge.s32.totalorder %v2189, %v5882
    %vm5891 = vcmp.ge.s32.totalorder %v2190, %v5882
    %vm5892 = vcmp.ge.s32.totalorder %v2191, %v5882
    %v5893 = vadd.s32 %v5881, 36
    %v5894 = vadd.s32 %v5882, 36
    %vm5895 = vcmp.lt.s32.totalorder %v1240, %v5893
    %vm5896 = vcmp.lt.s32.totalorder %v2188, %v5893
    %vm5897 = vcmp.lt.s32.totalorder %v2189, %v5893
    %vm5898 = vcmp.lt.s32.totalorder %v2190, %v5893
    %vm5899 = vcmp.lt.s32.totalorder %v2191, %v5893
    %vm5900 = vcmp.lt.s32.totalorder %v1240, %v5894
    %vm5901 = vcmp.lt.s32.totalorder %v2188, %v5894
    %vm5902 = vcmp.lt.s32.totalorder %v2189, %v5894
    %vm5903 = vcmp.lt.s32.totalorder %v2190, %v5894
    %vm5904 = vcmp.lt.s32.totalorder %v2191, %v5894
    %vm5905 = vmand %vm5883, %vm5895
    %vm5906 = vmand %vm5884, %vm5896
    %vm5907 = vmand %vm5885, %vm5897
    %vm5908 = vmand %vm5886, %vm5898
    %vm5909 = vmand %vm5887, %vm5899
    %vm5910 = vmand %vm5888, %vm5900
    %vm5911 = vmand %vm5889, %vm5901
    %vm5912 = vmand %vm5890, %vm5902
    %vm5913 = vmand %vm5891, %vm5903
    %vm5914 = vmand %vm5892, %vm5904
    %v5915 = vsel %vm5905, 1, 0
    %v5916 = vsel %vm5906, 1, 0
    %v5917 = vsel %vm5907, 1, 0
    %v5918 = vsel %vm5908, 1, 0
    %v5919 = vsel %vm5909, 1, 0
    %v5920 = vsel %vm5910, 1, 0
    %v5921 = vsel %vm5911, 1, 0
    %v5922 = vsel %vm5912, 1, 0
    %v5923 = vsel %vm5913, 1, 0
    %v5924 = vsel %vm5914, 1, 0
    %v5925 = vcvt.s32.f32 %v5915
    %v5926 = vcvt.s32.f32 %v5916
    %v5927 = vcvt.s32.f32 %v5917
    %v5928 = vcvt.s32.f32 %v5918
    %v5929 = vcvt.s32.f32 %v5919
    %v5930 = vcvt.s32.f32 %v5920
    %v5931 = vcvt.s32.f32 %v5921
    %v5932 = vcvt.s32.f32 %v5922
    %v5933 = vcvt.s32.f32 %v5923
    %v5934 = vcvt.s32.f32 %v5924
    %v5936 = vsel %vm2279, %v5880, 0
    %5938 = vmatprep.subr.mxu0 %v5926
    %5939 = vmatpush1.msra.mxu0 %v5925
    %5940 = vmatprep.subr.mxu0 %v5931
    %5941 = vmatpush1.msra.mxu0 %v5930
    %5942 = vmatprep.subr.mxu0 0.0
    %5943 = vmatpush1.msra.mxu0 0.0
    %5944 = vmatprep.subr.mxu0 0.0
    %5945 = vmatpush1.msra.mxu0 0.0
    %5946 = vmatprep.subr.mxu0 0.0
    %5947 = vmatpush1.msra.mxu0 0.0
    %5948 = vmatprep.subr.mxu0 0.0
    %5949 = vmatpush1.msra.mxu0 0.0
    %5950 = vmatprep.subr.mxu0 0.0
    %5951 = vmatpush1.msra.mxu0 0.0
    %5952 = vmatprep.subr.mxu0 0.0
    %5953 = vmatpush1.msra.mxu0 0.0
    %5954 = vmatprep.subr.mxu0 0.0
    %5955 = vmatpush1.msra.mxu0 0.0
    %5956 = vmatprep.subr.mxu0 0.0
    %5957 = vmatpush1.msra.mxu0 0.0
    %5958 = vmatprep.subr.mxu0 0.0
    %5959 = vmatpush1.msra.mxu0 0.0
    %5960 = vmatprep.subr.mxu0 0.0
    %5961 = vmatpush1.msra.mxu0 0.0
    %5962 = vmatprep.subr.mxu0 0.0
    %5963 = vmatpush1.msra.mxu0 0.0
    %5964 = vmatprep.subr.mxu0 0.0
    %5965 = vmatpush1.msra.mxu0 0.0
    %5966 = vmatprep.subr.mxu0 0.0
    %5967 = vmatpush1.msra.mxu0 0.0
    %5968 = vmatprep.subr.mxu0 0.0
    %5969 = vmatpush1.msra.mxu0 0.0
    %5970 = vmatprep.subr.mxu0 0.0
    %5971 = vmatpush1.msra.mxu0 0.0
    %5972 = vmatprep.subr.mxu0 0.0
    %5973 = vmatpush1.msra.mxu0 0.0
    %5974 = vmatprep.subr.mxu0 0.0
    %5975 = vmatpush1.msra.mxu0 0.0
    %5976 = vmatprep.subr.mxu0 0.0
    %5977 = vmatpush1.msra.mxu0 0.0
    %5978 = vmatprep.subr.mxu0 0.0
    %5979 = vmatpush1.msra.mxu0 0.0
    %5980 = vmatprep.subr.mxu0 0.0
    %5981 = vmatpush1.msra.mxu0 0.0
    %5982 = vmatprep.subr.mxu0 0.0
    %5983 = vmatpush1.msra.mxu0 0.0
    %5984 = vmatprep.subr.mxu0 0.0
    %5985 = vmatpush1.msra.mxu0 0.0
    %5986 = vmatprep.subr.mxu0 0.0
    %5987 = vmatpush1.msra.mxu0 0.0
    %5988 = vmatprep.subr.mxu0 0.0
    %5989 = vmatpush1.msra.mxu0 0.0
    %5990 = vmatprep.subr.mxu0 0.0
    %5991 = vmatpush1.msra.mxu0 0.0
    %5992 = vmatprep.subr.mxu0 0.0
    %5993 = vmatpush1.msra.mxu0 0.0
    %5994 = vmatprep.subr.mxu0 0.0
    %5995 = vmatpush1.msra.mxu0 0.0
    %5996 = vmatprep.subr.mxu0 0.0
    %5997 = vmatpush1.msra.mxu0 0.0
    %5998 = vmatprep.subr.mxu0 0.0
    %5999 = vmatpush1.msra.mxu0 0.0
    %6000 = vmatprep.subr.mxu0 0.0
    %6001 = vmatpush1.msra.mxu0 0.0
    %6002 = vmatprep.mubr.f32.mxu0 0.0
    %6003 = vmatmul.mubr.f32.gmra.mrb[0].mxu0 %v5936
    %v6004 = vpop.f32.mrb[0].mxu0
    %v6005 = vadd.f32 0.0, %v6004
    %v6006 = vpop.f32.mrb[0].mxu0
    %v6007 = vadd.f32 0.0, %v6006
    %6008 = vdwg.mxu0
    %6009 = vmatprep.subr.mxu0 %v5928
    %6010 = vmatpush1.msra.mxu0 %v5927
    %6011 = vmatprep.subr.mxu0 %v5933
    %6012 = vmatpush1.msra.mxu0 %v5932
    %6013 = vmatprep.subr.mxu0 0.0
    %6014 = vmatpush1.msra.mxu0 0.0
    %6015 = vmatprep.subr.mxu0 0.0
    %6016 = vmatpush1.msra.mxu0 0.0
    %6017 = vmatprep.subr.mxu0 0.0
    %6018 = vmatpush1.msra.mxu0 0.0
    %6019 = vmatprep.subr.mxu0 0.0
    %6020 = vmatpush1.msra.mxu0 0.0
    %6021 = vmatprep.subr.mxu0 0.0
    %6022 = vmatpush1.msra.mxu0 0.0
    %6023 = vmatprep.subr.mxu0 0.0
    %6024 = vmatpush1.msra.mxu0 0.0
    %6025 = vmatprep.subr.mxu0 0.0
    %6026 = vmatpush1.msra.mxu0 0.0
    %6027 = vmatprep.subr.mxu0 0.0
    %6028 = vmatpush1.msra.mxu0 0.0
    %6029 = vmatprep.subr.mxu0 0.0
    %6030 = vmatpush1.msra.mxu0 0.0
    %6031 = vmatprep.subr.mxu0 0.0
    %6032 = vmatpush1.msra.mxu0 0.0
    %6033 = vmatprep.subr.mxu0 0.0
    %6034 = vmatpush1.msra.mxu0 0.0
    %6035 = vmatprep.subr.mxu0 0.0
    %6036 = vmatpush1.msra.mxu0 0.0
    %6037 = vmatprep.subr.mxu0 0.0
    %6038 = vmatpush1.msra.mxu0 0.0
    %6039 = vmatprep.subr.mxu0 0.0
    %6040 = vmatpush1.msra.mxu0 0.0
    %6041 = vmatprep.subr.mxu0 0.0
    %6042 = vmatpush1.msra.mxu0 0.0
    %6043 = vmatprep.subr.mxu0 0.0
    %6044 = vmatpush1.msra.mxu0 0.0
    %6045 = vmatprep.subr.mxu0 0.0
    %6046 = vmatpush1.msra.mxu0 0.0
    %6047 = vmatprep.subr.mxu0 0.0
    %6048 = vmatpush1.msra.mxu0 0.0
    %6049 = vmatprep.subr.mxu0 0.0
    %6050 = vmatpush1.msra.mxu0 0.0
    %6051 = vmatprep.subr.mxu0 0.0
    %6052 = vmatpush1.msra.mxu0 0.0
    %6053 = vmatprep.subr.mxu0 0.0
    %6054 = vmatpush1.msra.mxu0 0.0
    %6055 = vmatprep.subr.mxu0 0.0
    %6056 = vmatpush1.msra.mxu0 0.0
    %6057 = vmatprep.subr.mxu0 0.0
    %6058 = vmatpush1.msra.mxu0 0.0
    %6059 = vmatprep.subr.mxu0 0.0
    %6060 = vmatpush1.msra.mxu0 0.0
    %6061 = vmatprep.subr.mxu0 0.0
    %6062 = vmatpush1.msra.mxu0 0.0
    %6063 = vmatprep.subr.mxu0 0.0
    %6064 = vmatpush1.msra.mxu0 0.0
    %6065 = vmatprep.subr.mxu0 0.0
    %6066 = vmatpush1.msra.mxu0 0.0
    %6067 = vmatprep.subr.mxu0 0.0
    %6068 = vmatpush1.msra.mxu0 0.0
    %6069 = vmatprep.subr.mxu0 0.0
    %6070 = vmatpush1.msra.mxu0 0.0
    %6071 = vmatprep.subr.mxu0 0.0
    %6072 = vmatpush1.msra.mxu0 0.0
    %6073 = vmatprep.mubr.f32.mxu0 0.0
    %6074 = vmatmul.mubr.f32.gmra.mrb[0].mxu0 %v5936
    %v6075 = vpop.f32.mrb[0].mxu0
    %v6076 = vadd.f32 0.0, %v6075
    %v6077 = vpop.f32.mrb[0].mxu0
    %v6078 = vadd.f32 0.0, %v6077
    %6079 = vdwg.mxu0
    %6080 = vmatprep.subr.mxu0 0.0
    %6081 = vmatpush1.msra.mxu0 %v5929
    %6082 = vmatprep.subr.mxu0 0.0
    %6083 = vmatpush1.msra.mxu0 %v5934
    %6084 = vmatprep.subr.mxu0 0.0
    %6085 = vmatpush1.msra.mxu0 0.0
    %6086 = vmatprep.subr.mxu0 0.0
    %6087 = vmatpush1.msra.mxu0 0.0
    %6088 = vmatprep.subr.mxu0 0.0
    %6089 = vmatpush1.msra.mxu0 0.0
    %6090 = vmatprep.subr.mxu0 0.0
    %6091 = vmatpush1.msra.mxu0 0.0
    %6092 = vmatprep.subr.mxu0 0.0
    %6093 = vmatpush1.msra.mxu0 0.0
    %6094 = vmatprep.subr.mxu0 0.0
    %6095 = vmatpush1.msra.mxu0 0.0
    %6096 = vmatprep.subr.mxu0 0.0
    %6097 = vmatpush1.msra.mxu0 0.0
    %6098 = vmatprep.subr.mxu0 0.0
    %6099 = vmatpush1.msra.mxu0 0.0
    %6100 = vmatprep.subr.mxu0 0.0
    %6101 = vmatpush1.msra.mxu0 0.0
    %6102 = vmatprep.subr.mxu0 0.0
    %6103 = vmatpush1.msra.mxu0 0.0
    %6104 = vmatprep.subr.mxu0 0.0
    %6105 = vmatpush1.msra.mxu0 0.0
    %6106 = vmatprep.subr.mxu0 0.0
    %6107 = vmatpush1.msra.mxu0 0.0
    %6108 = vmatprep.subr.mxu0 0.0
    %6109 = vmatpush1.msra.mxu0 0.0
    %6110 = vmatprep.subr.mxu0 0.0
    %6111 = vmatpush1.msra.mxu0 0.0
    %6112 = vmatprep.subr.mxu0 0.0
    %6113 = vmatpush1.msra.mxu0 0.0
    %6114 = vmatprep.subr.mxu0 0.0
    %6115 = vmatpush1.msra.mxu0 0.0
    %6116 = vmatprep.subr.mxu0 0.0
    %6117 = vmatpush1.msra.mxu0 0.0
    %6118 = vmatprep.subr.mxu0 0.0
    %6119 = vmatpush1.msra.mxu0 0.0
    %6120 = vmatprep.subr.mxu0 0.0
    %6121 = vmatpush1.msra.mxu0 0.0
    %6122 = vmatprep.subr.mxu0 0.0
    %6123 = vmatpush1.msra.mxu0 0.0
    %6124 = vmatprep.subr.mxu0 0.0
    %6125 = vmatpush1.msra.mxu0 0.0
    %6126 = vmatprep.subr.mxu0 0.0
    %6127 = vmatpush1.msra.mxu0 0.0
    %6128 = vmatprep.subr.mxu0 0.0
    %6129 = vmatpush1.msra.mxu0 0.0
    %6130 = vmatprep.subr.mxu0 0.0
    %6131 = vmatpush1.msra.mxu0 0.0
    %6132 = vmatprep.subr.mxu0 0.0
    %6133 = vmatpush1.msra.mxu0 0.0
    %6134 = vmatprep.subr.mxu0 0.0
    %6135 = vmatpush1.msra.mxu0 0.0
    %6136 = vmatprep.subr.mxu0 0.0
    %6137 = vmatpush1.msra.mxu0 0.0
    %6138 = vmatprep.subr.mxu0 0.0
    %6139 = vmatpush1.msra.mxu0 0.0
    %6140 = vmatprep.subr.mxu0 0.0
    %6141 = vmatpush1.msra.mxu0 0.0
    %6142 = vmatprep.subr.mxu0 0.0
    %6143 = vmatpush1.msra.mxu0 0.0
    %6144 = vmatprep.mubr.f32.mxu0 0.0
    %6145 = vmatmul.mubr.f32.gmra.mrb[0].mxu0 %v5936
    %v6146 = vpop.f32.mrb[0].mxu0
    %v6147 = vadd.f32 0.0, %v6146
    %v6148 = vpop.f32.mrb[0].mxu0
    %6149 = vdwg.mxu0
    %v6150 = vlaneseq
    %v6151 = vshrl.u32 %v6150, 7
    %v6152 = vsub.s32 0, %v6151
    %v6153 = vrot.slane %v6005, %v6152
    %v6154 = vlaneseq
    %v6155 = vshrl.u32 %v6154, 7
    %v6156 = vsub.s32 0, %v6155
    %v6157 = vrot.slane %v6007, %v6156
    %v6158 = vlaneseq
    %v6159 = vshrl.u32 %v6158, 7
    %v6160 = vsub.s32 0, %v6159
    %v6161 = vrot.slane %v6076, %v6160
    %v6162 = vlaneseq
    %v6163 = vshrl.u32 %v6162, 7
    %v6164 = vsub.s32 0, %v6163
    %v6165 = vrot.slane %v6078, %v6164
    %v6166 = vlaneseq
    %v6167 = vshrl.u32 %v6166, 7
    %v6168 = vsub.s32 0, %v6167
    %v6169 = vrot.slane %v6147, %v6168
    %v6170 = vmul.f32 %v4869, %v6153
    %v6171 = vmul.f32 %v4871, %v6157
    %v6172 = vmul.f32 %v5033, %v6161
    %v6173 = vmul.f32 %v5035, %v6165
    %v6174 = vmul.f32 %v5194, %v6169
    %v6175 = vlaneseq
    %v6176 = vshrl.u32 %v6175, 7
    %v6177 = vsub.s32 1, %v6176
    %v6178 = vrot.slane %v6005, %v6177
    %v6179 = vlaneseq
    %v6180 = vshrl.u32 %v6179, 7
    %v6181 = vsub.s32 1, %v6180
    %v6182 = vrot.slane %v6007, %v6181
    %v6183 = vlaneseq
    %v6184 = vshrl.u32 %v6183, 7
    %v6185 = vsub.s32 1, %v6184
    %v6186 = vrot.slane %v6076, %v6185
    %v6187 = vlaneseq
    %v6188 = vshrl.u32 %v6187, 7
    %v6189 = vsub.s32 1, %v6188
    %v6190 = vrot.slane %v6078, %v6189
    %v6191 = vlaneseq
    %v6192 = vshrl.u32 %v6191, 7
    %v6193 = vsub.s32 1, %v6192
    %v6194 = vrot.slane %v6147, %v6193
    %v6195 = vadd.f32 %v6170, %v6178
    %v6196 = vadd.f32 %v6171, %v6182
    %v6197 = vadd.f32 %v6172, %v6186
    %v6198 = vadd.f32 %v6173, %v6190
    %v6199 = vadd.f32 %v6174, %v6194
    %v6200 = vmax.f32 %v6195, 0.0
    %v6201 = vmax.f32 %v6196, 0.0
    %v6202 = vmax.f32 %v6197, 0.0
    %v6203 = vmax.f32 %v6198, 0.0
    %v6204 = vmax.f32 %v6199, 0.0
    %v6205 = vpack.c.bf16 %v6200, %v6200
    %v6206 = vpack.c.bf16 %v6201, %v6201
    %v6207 = vpack.c.bf16 %v6202, %v6202
    %v6208 = vpack.c.bf16 %v6203, %v6203
    %v6209 = vpack.c.bf16 %v6204, %v6204
    %v6210 = vld [vmem:[%s3] sm:$0xff]
    %v6211 = vld [vmem:[%s3 + $0x8] sm:$0xff]
    %v6212 = vld [vmem:[%s3 + $0x10] sm:$0xff]
    %v6213 = vld [vmem:[%s3 + $0x18] sm:$0xff]
    %v6214 = vld [vmem:[%s3 + $0x20] sm:$0xff]
    %v6215 = vld [vmem:[%s3 + $0x28] sm:$0xff]
    %v6216 = vld [vmem:[%s3 + $0x30] sm:$0xff]
    %v6217 = vld [vmem:[%s3 + $0x38] sm:$0xff]
    %v6218 = vld [vmem:[%s3 + $0x40] sm:$0xff]
    %v6219 = vld [vmem:[%s3 + $0x48] sm:$0xff]
    %v6220 = vld [vmem:[%s3 + $0x50] sm:$0xff]
    %v6221 = vld [vmem:[%s3 + $0x58] sm:$0xff]
    %v6222 = vld [vmem:[%s3 + $0x60] sm:$0xff]
    %v6223 = vld [vmem:[%s3 + $0x68] sm:$0xff]
    %v6224 = vld [vmem:[%s3 + $0x70] sm:$0xff]
    %v6225 = vld [vmem:[%s3 + $0x78] sm:$0xff]
    %v6226 = vld [vmem:[%s3 + $0x80] sm:$0xff]
    %v6227 = vld [vmem:[%s3 + $0x88] sm:$0xff]
    %v6228 = vld [vmem:[%s3 + $0x90] sm:$0xff]
    %v6229 = vld [vmem:[%s3 + $0x98] sm:$0xff]
    %v6230 = vld [vmem:[%s3 + $0xa0] sm:$0xff]
    %v6231 = vld [vmem:[%s3 + $0xa8] sm:$0xff]
    %v6232 = vld [vmem:[%s3 + $0xb0] sm:$0xff]
    %v6233 = vld [vmem:[%s3 + $0xb8] sm:$0xff]
    %v6234 = vld [vmem:[%s3 + $0xc0] sm:$0xff]
    %v6235 = vld [vmem:[%s3 + $0xc8] sm:$0xff]
    %v6236 = vld [vmem:[%s3 + $0xd0] sm:$0xff]
    %v6237 = vld [vmem:[%s3 + $0xd8] sm:$0xff]
    %v6238 = vld [vmem:[%s3 + $0xe0] sm:$0xff]
    %v6239 = vld [vmem:[%s3 + $0xe8] sm:$0xff]
    %v6240 = vld [vmem:[%s3 + $0xf0] sm:$0xff]
    %v6241 = vld [vmem:[%s3 + $0xf8] sm:$0xff]
    %v6242 = vld [vmem:[%s3 + $0x100] sm:$0xff]
    %v6243 = vld [vmem:[%s3 + $0x108] sm:$0xff]
    %v6244 = vld [vmem:[%s3 + $0x110] sm:$0xff]
    %v6245 = vld [vmem:[%s3 + $0x118] sm:$0xff]
    %v6246 = vld [vmem:[%s3 + $0x120] sm:$0xff]
    %v6247 = vld [vmem:[%s3 + $0x128] sm:$0xff]
    %v6248 = vld [vmem:[%s3 + $0x130] sm:$0xff]
    %v6249 = vld [vmem:[%s3 + $0x138] sm:$0xff]
    %v6250 = vld [vmem:[%s3 + $0x140] sm:$0xff]
    %v6251 = vld [vmem:[%s3 + $0x148] sm:$0xff]
    %v6252 = vld [vmem:[%s3 + $0x150] sm:$0xff]
    %v6253 = vld [vmem:[%s3 + $0x158] sm:$0xff]
    %v6254 = vld [vmem:[%s3 + $0x160] sm:$0xff]
    %v6255 = vld [vmem:[%s3 + $0x168] sm:$0xff]
    %v6256 = vld [vmem:[%s3 + $0x170] sm:$0xff]
    %v6257 = vld [vmem:[%s3 + $0x178] sm:$0xff]
    %v6258 = vld [vmem:[%s3 + $0x180] sm:$0xff]
    %v6259 = vld [vmem:[%s3 + $0x188] sm:$0xff]
    %v6260 = vld [vmem:[%s3 + $0x190] sm:$0xff]
    %v6261 = vld [vmem:[%s3 + $0x198] sm:$0xff]
    %v6262 = vld [vmem:[%s3 + $0x1a0] sm:$0xff]
    %v6263 = vld [vmem:[%s3 + $0x1a8] sm:$0xff]
    %v6264 = vld [vmem:[%s3 + $0x1b0] sm:$0xff]
    %v6265 = vld [vmem:[%s3 + $0x1b8] sm:$0xff]
    %v6266 = vld [vmem:[%s3 + $0x1c0] sm:$0xff]
    %v6267 = vld [vmem:[%s3 + $0x1c8] sm:$0xff]
    %v6268 = vld [vmem:[%s3 + $0x1d0] sm:$0xff]
    %v6269 = vld [vmem:[%s3 + $0x1d8] sm:$0xff]
    %v6270 = vld [vmem:[%s3 + $0x1e0] sm:$0xff]
    %v6271 = vld [vmem:[%s3 + $0x1e8] sm:$0xff]
    %v6272 = vld [vmem:[%s3 + $0x1f0] sm:$0xff]
    %v6273 = vld [vmem:[%s3 + $0x1f8] sm:$0xff]
    %v6274 = vld [vmem:[%s3 + $0x200] sm:$0xff]
    %v6275 = vld [vmem:[%s3 + $0x208] sm:$0xff]
    %v6276 = vld [vmem:[%s3 + $0x210] sm:$0xff]
    %v6277 = vld [vmem:[%s3 + $0x218] sm:$0xff]
    %v6278 = vld [vmem:[%s3 + $0x220] sm:$0xff]
    %v6279 = vld [vmem:[%s3 + $0x228] sm:$0xff]
    %v6280 = vld [vmem:[%s3 + $0x230] sm:$0xff]
    %v6281 = vld [vmem:[%s3 + $0x238] sm:$0xff]
    %v6282 = vld [vmem:[%s3 + $0x240] sm:$0xff]
    %v6283 = vld [vmem:[%s3 + $0x248] sm:$0xff]
    %v6284 = vld [vmem:[%s3 + $0x250] sm:$0xff]
    %v6285 = vld [vmem:[%s3 + $0x258] sm:$0xff]
    %v6286 = vld [vmem:[%s3 + $0x260] sm:$0xff]
    %v6287 = vld [vmem:[%s3 + $0x268] sm:$0xff]
    %v6288 = vld [vmem:[%s3 + $0x270] sm:$0xff]
    %v6289 = vld [vmem:[%s3 + $0x278] sm:$0xff]
    %v6290 = vld [vmem:[%s3 + $0x280] sm:$0xff]
    %v6291 = vld [vmem:[%s3 + $0x288] sm:$0xff]
    %v6292 = vld [vmem:[%s3 + $0x290] sm:$0xff]
    %v6293 = vld [vmem:[%s3 + $0x298] sm:$0xff]
    %v6294 = vld [vmem:[%s3 + $0x2a0] sm:$0xff]
    %v6295 = vld [vmem:[%s3 + $0x2a8] sm:$0xff]
    %v6296 = vld [vmem:[%s3 + $0x2b0] sm:$0xff]
    %v6297 = vld [vmem:[%s3 + $0x2b8] sm:$0xff]
    %v6298 = vld [vmem:[%s3 + $0x2c0] sm:$0xff]
    %v6299 = vld [vmem:[%s3 + $0x2c8] sm:$0xff]
    %v6300 = vld [vmem:[%s3 + $0x2d0] sm:$0xff]
    %v6301 = vld [vmem:[%s3 + $0x2d8] sm:$0xff]
    %v6302 = vld [vmem:[%s3 + $0x2e0] sm:$0xff]
    %v6303 = vld [vmem:[%s3 + $0x2e8] sm:$0xff]
    %v6304 = vld [vmem:[%s3 + $0x2f0] sm:$0xff]
    %v6305 = vld [vmem:[%s3 + $0x2f8] sm:$0xff]
    %v6306 = vld [vmem:[%s3 + $0x300] sm:$0xff]
    %v6307 = vld [vmem:[%s3 + $0x308] sm:$0xff]
    %v6308 = vld [vmem:[%s3 + $0x310] sm:$0xff]
    %v6309 = vld [vmem:[%s3 + $0x318] sm:$0xff]
    %v6310 = vld [vmem:[%s3 + $0x320] sm:$0xff]
    %v6311 = vld [vmem:[%s3 + $0x328] sm:$0xff]
    %v6312 = vld [vmem:[%s3 + $0x330] sm:$0xff]
    %v6313 = vld [vmem:[%s3 + $0x338] sm:$0xff]
    %v6314 = vld [vmem:[%s3 + $0x340] sm:$0xff]
    %v6315 = vld [vmem:[%s3 + $0x348] sm:$0xff]
    %v6316 = vld [vmem:[%s3 + $0x350] sm:$0xff]
    %v6317 = vld [vmem:[%s3 + $0x358] sm:$0xff]
    %v6318 = vld [vmem:[%s3 + $0x360] sm:$0xff]
    %v6319 = vld [vmem:[%s3 + $0x368] sm:$0xff]
    %v6320 = vld [vmem:[%s3 + $0x370] sm:$0xff]
    %v6321 = vld [vmem:[%s3 + $0x378] sm:$0xff]
    %v6322 = vld [vmem:[%s3 + $0x380] sm:$0xff]
    %v6323 = vld [vmem:[%s3 + $0x388] sm:$0xff]
    %v6324 = vld [vmem:[%s3 + $0x390] sm:$0xff]
    %v6325 = vld [vmem:[%s3 + $0x398] sm:$0xff]
    %v6326 = vld [vmem:[%s3 + $0x3a0] sm:$0xff]
    %v6327 = vld [vmem:[%s3 + $0x3a8] sm:$0xff]
    %v6328 = vld [vmem:[%s3 + $0x3b0] sm:$0xff]
    %v6329 = vld [vmem:[%s3 + $0x3b8] sm:$0xff]
    %v6330 = vld [vmem:[%s3 + $0x3c0] sm:$0xff]
    %v6331 = vld [vmem:[%s3 + $0x3c8] sm:$0xff]
    %v6332 = vld [vmem:[%s3 + $0x3d0] sm:$0xff]
    %v6333 = vld [vmem:[%s3 + $0x3d8] sm:$0xff]
    %v6334 = vld [vmem:[%s3 + $0x3e0] sm:$0xff]
    %v6335 = vld [vmem:[%s3 + $0x3e8] sm:$0xff]
    %v6336 = vld [vmem:[%s3 + $0x3f0] sm:$0xff]
    %v6337 = vld [vmem:[%s3 + $0x3f8] sm:$0xff]
    %v6338 = vld [vmem:[%s3 + $0x400] sm:$0xff]
    %v6339 = vld [vmem:[%s3 + $0x408] sm:$0xff]
    %v6340 = vld [vmem:[%s3 + $0x410] sm:$0xff]
    %v6341 = vld [vmem:[%s3 + $0x418] sm:$0xff]
    %v6342 = vld [vmem:[%s3 + $0x420] sm:$0xff]
    %v6343 = vld [vmem:[%s3 + $0x428] sm:$0xff]
    %v6344 = vld [vmem:[%s3 + $0x430] sm:$0xff]
    %v6345 = vld [vmem:[%s3 + $0x438] sm:$0xff]
    %v6346 = vld [vmem:[%s3 + $0x440] sm:$0xff]
    %v6347 = vld [vmem:[%s3 + $0x448] sm:$0xff]
    %v6348 = vld [vmem:[%s3 + $0x450] sm:$0xff]
    %v6349 = vld [vmem:[%s3 + $0x458] sm:$0xff]
    %v6350 = vld [vmem:[%s3 + $0x460] sm:$0xff]
    %v6351 = vld [vmem:[%s3 + $0x468] sm:$0xff]
    %v6352 = vld [vmem:[%s3 + $0x470] sm:$0xff]
    %v6353 = vld [vmem:[%s3 + $0x478] sm:$0xff]
    %v6498 = vunpack.c.l.b16 %v6210
    %v6499 = vunpack.c.h.b16 %v6210
    %v6500 = vunpack.c.l.b16 %v6211
    %v6501 = vunpack.c.h.b16 %v6211
    %v6502 = vunpack.c.l.b16 %v6212
    %v6503 = vunpack.c.h.b16 %v6212
    %v6504 = vunpack.c.l.b16 %v6213
    %v6505 = vunpack.c.h.b16 %v6213
    %v6506 = vunpack.c.l.b16 %v6214
    %v6507 = vunpack.c.h.b16 %v6214
    %v6508 = vunpack.c.l.b16 %v6215
    %v6509 = vunpack.c.h.b16 %v6215
    %v6510 = vunpack.c.l.b16 %v6216
    %v6511 = vunpack.c.h.b16 %v6216
    %v6512 = vunpack.c.l.b16 %v6217
    %v6513 = vunpack.c.h.b16 %v6217
    %v6514 = vunpack.c.l.b16 %v6218
    %v6515 = vunpack.c.h.b16 %v6218
    %v6516 = vunpack.c.l.b16 %v6219
    %v6517 = vunpack.c.h.b16 %v6219
    %v6518 = vunpack.c.l.b16 %v6220
    %v6519 = vunpack.c.h.b16 %v6220
    %v6520 = vunpack.c.l.b16 %v6221
    %v6521 = vunpack.c.h.b16 %v6221
    %v6522 = vunpack.c.l.b16 %v6222
    %v6523 = vunpack.c.h.b16 %v6222
    %v6524 = vunpack.c.l.b16 %v6223
    %v6525 = vunpack.c.h.b16 %v6223
    %v6526 = vunpack.c.l.b16 %v6224
    %v6527 = vunpack.c.h.b16 %v6224
    %v6528 = vunpack.c.l.b16 %v6225
    %v6529 = vunpack.c.h.b16 %v6225
    %v6530 = vunpack.c.l.b16 %v6226
    %v6531 = vunpack.c.h.b16 %v6226
    %v6532 = vunpack.c.l.b16 %v6227
    %v6533 = vunpack.c.h.b16 %v6227
    %v6534 = vunpack.c.l.b16 %v6228
    %v6535 = vunpack.c.h.b16 %v6228
    %v6536 = vunpack.c.l.b16 %v6229
    %v6537 = vunpack.c.h.b16 %v6229
    %v6538 = vunpack.c.l.b16 %v6230
    %v6539 = vunpack.c.h.b16 %v6230
    %v6540 = vunpack.c.l.b16 %v6231
    %v6541 = vunpack.c.h.b16 %v6231
    %v6542 = vunpack.c.l.b16 %v6232
    %v6543 = vunpack.c.h.b16 %v6232
    %v6544 = vunpack.c.l.b16 %v6233
    %v6545 = vunpack.c.h.b16 %v6233
    %v6546 = vunpack.c.l.b16 %v6234
    %v6547 = vunpack.c.h.b16 %v6234
    %v6548 = vunpack.c.l.b16 %v6235
    %v6549 = vunpack.c.h.b16 %v6235
    %v6550 = vunpack.c.l.b16 %v6236
    %v6551 = vunpack.c.h.b16 %v6236
    %v6552 = vunpack.c.l.b16 %v6237
    %v6553 = vunpack.c.h.b16 %v6237
    %v6554 = vunpack.c.l.b16 %v6238
    %v6555 = vunpack.c.h.b16 %v6238
    %v6556 = vunpack.c.l.b16 %v6239
    %v6557 = vunpack.c.h.b16 %v6239
    %v6558 = vunpack.c.l.b16 %v6240
    %v6559 = vunpack.c.h.b16 %v6240
    %v6560 = vunpack.c.l.b16 %v6241
    %v6561 = vunpack.c.h.b16 %v6241
    %v6562 = vunpack.c.l.b16 %v6242
    %v6563 = vunpack.c.h.b16 %v6242
    %v6564 = vunpack.c.l.b16 %v6243
    %v6565 = vunpack.c.h.b16 %v6243
    %v6566 = vunpack.c.l.b16 %v6244
    %v6567 = vunpack.c.h.b16 %v6244
    %v6568 = vunpack.c.l.b16 %v6245
    %v6569 = vunpack.c.h.b16 %v6245
    %v6570 = vunpack.c.l.b16 %v6246
    %v6571 = vunpack.c.h.b16 %v6246
    %v6572 = vunpack.c.l.b16 %v6247
    %v6573 = vunpack.c.h.b16 %v6247
    %v6574 = vunpack.c.l.b16 %v6248
    %v6575 = vunpack.c.h.b16 %v6248
    %v6576 = vunpack.c.l.b16 %v6249
    %v6577 = vunpack.c.h.b16 %v6249
    %v6578 = vunpack.c.l.b16 %v6250
    %v6579 = vunpack.c.h.b16 %v6250
    %v6580 = vunpack.c.l.b16 %v6251
    %v6581 = vunpack.c.h.b16 %v6251
    %v6582 = vunpack.c.l.b16 %v6252
    %v6583 = vunpack.c.h.b16 %v6252
    %v6584 = vunpack.c.l.b16 %v6253
    %v6585 = vunpack.c.h.b16 %v6253
    %v6586 = vunpack.c.l.b16 %v6254
    %v6587 = vunpack.c.h.b16 %v6254
    %v6588 = vunpack.c.l.b16 %v6255
    %v6589 = vunpack.c.h.b16 %v6255
    %v6590 = vunpack.c.l.b16 %v6256
    %v6591 = vunpack.c.h.b16 %v6256
    %v6592 = vunpack.c.l.b16 %v6257
    %v6593 = vunpack.c.h.b16 %v6257
    %v6594 = vunpack.c.l.b16 %v6258
    %v6595 = vunpack.c.h.b16 %v6258
    %v6596 = vunpack.c.l.b16 %v6259
    %v6597 = vunpack.c.h.b16 %v6259
    %v6598 = vunpack.c.l.b16 %v6260
    %v6599 = vunpack.c.h.b16 %v6260
    %v6600 = vunpack.c.l.b16 %v6261
    %v6601 = vunpack.c.h.b16 %v6261
    %v6602 = vunpack.c.l.b16 %v6262
    %v6603 = vunpack.c.h.b16 %v6262
    %v6604 = vunpack.c.l.b16 %v6263
    %v6605 = vunpack.c.h.b16 %v6263
    %v6606 = vunpack.c.l.b16 %v6264
    %v6607 = vunpack.c.h.b16 %v6264
    %v6608 = vunpack.c.l.b16 %v6265
    %v6609 = vunpack.c.h.b16 %v6265
    %v6610 = vunpack.c.l.b16 %v6266
    %v6611 = vunpack.c.h.b16 %v6266
    %v6612 = vunpack.c.l.b16 %v6267
    %v6613 = vunpack.c.h.b16 %v6267
    %v6614 = vunpack.c.l.b16 %v6268
    %v6615 = vunpack.c.h.b16 %v6268
    %v6616 = vunpack.c.l.b16 %v6269
    %v6617 = vunpack.c.h.b16 %v6269
    %v6618 = vunpack.c.l.b16 %v6270
    %v6619 = vunpack.c.h.b16 %v6270
    %v6620 = vunpack.c.l.b16 %v6271
    %v6621 = vunpack.c.h.b16 %v6271
    %v6622 = vunpack.c.l.b16 %v6272
    %v6623 = vunpack.c.h.b16 %v6272
    %v6624 = vunpack.c.l.b16 %v6273
    %v6625 = vunpack.c.h.b16 %v6273
    %v6626 = vunpack.c.l.b16 %v6274
    %v6627 = vunpack.c.h.b16 %v6274
    %v6628 = vunpack.c.l.b16 %v6275
    %v6629 = vunpack.c.h.b16 %v6275
    %v6630 = vunpack.c.l.b16 %v6276
    %v6631 = vunpack.c.h.b16 %v6276
    %v6632 = vunpack.c.l.b16 %v6277
    %v6633 = vunpack.c.h.b16 %v6277
    %v6634 = vunpack.c.l.b16 %v6278
    %v6635 = vunpack.c.h.b16 %v6278
    %v6636 = vunpack.c.l.b16 %v6279
    %v6637 = vunpack.c.h.b16 %v6279
    %v6638 = vunpack.c.l.b16 %v6280
    %v6639 = vunpack.c.h.b16 %v6280
    %v6640 = vunpack.c.l.b16 %v6281
    %v6641 = vunpack.c.h.b16 %v6281
    %v6642 = vunpack.c.l.b16 %v6282
    %v6643 = vunpack.c.h.b16 %v6282
    %v6644 = vunpack.c.l.b16 %v6283
    %v6645 = vunpack.c.h.b16 %v6283
    %v6646 = vunpack.c.l.b16 %v6284
    %v6647 = vunpack.c.h.b16 %v6284
    %v6648 = vunpack.c.l.b16 %v6285
    %v6649 = vunpack.c.h.b16 %v6285
    %v6650 = vunpack.c.l.b16 %v6286
    %v6651 = vunpack.c.h.b16 %v6286
    %v6652 = vunpack.c.l.b16 %v6287
    %v6653 = vunpack.c.h.b16 %v6287
    %v6654 = vunpack.c.l.b16 %v6288
    %v6655 = vunpack.c.h.b16 %v6288
    %v6656 = vunpack.c.l.b16 %v6289
    %v6657 = vunpack.c.h.b16 %v6289
    %v6658 = vunpack.c.l.b16 %v6290
    %v6659 = vunpack.c.h.b16 %v6290
    %v6660 = vunpack.c.l.b16 %v6291
    %v6661 = vunpack.c.h.b16 %v6291
    %v6662 = vunpack.c.l.b16 %v6292
    %v6663 = vunpack.c.h.b16 %v6292
    %v6664 = vunpack.c.l.b16 %v6293
    %v6665 = vunpack.c.h.b16 %v6293
    %v6666 = vunpack.c.l.b16 %v6294
    %v6667 = vunpack.c.h.b16 %v6294
    %v6668 = vunpack.c.l.b16 %v6295
    %v6669 = vunpack.c.h.b16 %v6295
    %v6670 = vunpack.c.l.b16 %v6296
    %v6671 = vunpack.c.h.b16 %v6296
    %v6672 = vunpack.c.l.b16 %v6297
    %v6673 = vunpack.c.h.b16 %v6297
    %v6674 = vunpack.c.l.b16 %v6298
    %v6675 = vunpack.c.h.b16 %v6298
    %v6676 = vunpack.c.l.b16 %v6299
    %v6677 = vunpack.c.h.b16 %v6299
    %v6678 = vunpack.c.l.b16 %v6300
    %v6679 = vunpack.c.h.b16 %v6300
    %v6680 = vunpack.c.l.b16 %v6301
    %v6681 = vunpack.c.h.b16 %v6301
    %v6682 = vunpack.c.l.b16 %v6302
    %v6683 = vunpack.c.h.b16 %v6302
    %v6684 = vunpack.c.l.b16 %v6303
    %v6685 = vunpack.c.h.b16 %v6303
    %v6686 = vunpack.c.l.b16 %v6304
    %v6687 = vunpack.c.h.b16 %v6304
    %v6688 = vunpack.c.l.b16 %v6305
    %v6689 = vunpack.c.h.b16 %v6305
    %v6690 = vunpack.c.l.b16 %v6306
    %v6691 = vunpack.c.h.b16 %v6306
    %v6692 = vunpack.c.l.b16 %v6307
    %v6693 = vunpack.c.h.b16 %v6307
    %v6694 = vunpack.c.l.b16 %v6308
    %v6695 = vunpack.c.h.b16 %v6308
    %v6696 = vunpack.c.l.b16 %v6309
    %v6697 = vunpack.c.h.b16 %v6309
    %v6698 = vunpack.c.l.b16 %v6310
    %v6699 = vunpack.c.h.b16 %v6310
    %v6700 = vunpack.c.l.b16 %v6311
    %v6701 = vunpack.c.h.b16 %v6311
    %v6702 = vunpack.c.l.b16 %v6312
    %v6703 = vunpack.c.h.b16 %v6312
    %v6704 = vunpack.c.l.b16 %v6313
    %v6705 = vunpack.c.h.b16 %v6313
    %v6706 = vunpack.c.l.b16 %v6314
    %v6707 = vunpack.c.h.b16 %v6314
    %v6708 = vunpack.c.l.b16 %v6315
    %v6709 = vunpack.c.h.b16 %v6315
    %v6710 = vunpack.c.l.b16 %v6316
    %v6711 = vunpack.c.h.b16 %v6316
    %v6712 = vunpack.c.l.b16 %v6317
    %v6713 = vunpack.c.h.b16 %v6317
    %v6714 = vunpack.c.l.b16 %v6318
    %v6715 = vunpack.c.h.b16 %v6318
    %v6716 = vunpack.c.l.b16 %v6319
    %v6717 = vunpack.c.h.b16 %v6319
    %v6718 = vunpack.c.l.b16 %v6320
    %v6719 = vunpack.c.h.b16 %v6320
    %v6720 = vunpack.c.l.b16 %v6321
    %v6721 = vunpack.c.h.b16 %v6321
    %v6722 = vunpack.c.l.b16 %v6322
    %v6723 = vunpack.c.h.b16 %v6322
    %v6724 = vunpack.c.l.b16 %v6323
    %v6725 = vunpack.c.h.b16 %v6323
    %v6726 = vunpack.c.l.b16 %v6324
    %v6727 = vunpack.c.h.b16 %v6324
    %v6728 = vunpack.c.l.b16 %v6325
    %v6729 = vunpack.c.h.b16 %v6325
    %v6730 = vunpack.c.l.b16 %v6326
    %v6731 = vunpack.c.h.b16 %v6326
    %v6732 = vunpack.c.l.b16 %v6327
    %v6733 = vunpack.c.h.b16 %v6327
    %v6734 = vunpack.c.l.b16 %v6328
    %v6735 = vunpack.c.h.b16 %v6328
    %v6736 = vunpack.c.l.b16 %v6329
    %v6737 = vunpack.c.h.b16 %v6329
    %v6738 = vunpack.c.l.b16 %v6330
    %v6739 = vunpack.c.h.b16 %v6330
    %v6740 = vunpack.c.l.b16 %v6331
    %v6741 = vunpack.c.h.b16 %v6331
    %v6742 = vunpack.c.l.b16 %v6332
    %v6743 = vunpack.c.h.b16 %v6332
    %v6744 = vunpack.c.l.b16 %v6333
    %v6745 = vunpack.c.h.b16 %v6333
    %v6746 = vunpack.c.l.b16 %v6334
    %v6747 = vunpack.c.h.b16 %v6334
    %v6748 = vunpack.c.l.b16 %v6335
    %v6749 = vunpack.c.h.b16 %v6335
    %v6750 = vunpack.c.l.b16 %v6336
    %v6751 = vunpack.c.h.b16 %v6336
    %v6752 = vunpack.c.l.b16 %v6337
    %v6753 = vunpack.c.h.b16 %v6337
    %v6754 = vunpack.c.l.b16 %v6338
    %v6755 = vunpack.c.h.b16 %v6338
    %v6756 = vunpack.c.l.b16 %v6339
    %v6757 = vunpack.c.h.b16 %v6339
    %v6758 = vunpack.c.l.b16 %v6340
    %v6759 = vunpack.c.h.b16 %v6340
    %v6760 = vunpack.c.l.b16 %v6341
    %v6761 = vunpack.c.h.b16 %v6341
    %v6762 = vunpack.c.l.b16 %v6342
    %v6763 = vunpack.c.h.b16 %v6342
    %v6764 = vunpack.c.l.b16 %v6343
    %v6765 = vunpack.c.h.b16 %v6343
    %v6766 = vunpack.c.l.b16 %v6344
    %v6767 = vunpack.c.h.b16 %v6344
    %v6768 = vunpack.c.l.b16 %v6345
    %v6769 = vunpack.c.h.b16 %v6345
    %v6770 = vunpack.c.l.b16 %v6346
    %v6771 = vunpack.c.h.b16 %v6346
    %v6772 = vunpack.c.l.b16 %v6347
    %v6773 = vunpack.c.h.b16 %v6347
    %v6774 = vunpack.c.l.b16 %v6348
    %v6775 = vunpack.c.h.b16 %v6348
    %v6776 = vunpack.c.l.b16 %v6349
    %v6777 = vunpack.c.h.b16 %v6349
    %v6778 = vunpack.c.l.b16 %v6350
    %v6779 = vunpack.c.h.b16 %v6350
    %v6780 = vunpack.c.l.b16 %v6351
    %v6781 = vunpack.c.h.b16 %v6351
    %v6782 = vunpack.c.l.b16 %v6352
    %v6783 = vunpack.c.h.b16 %v6352
    %v6784 = vunpack.c.l.b16 %v6353
    %v6785 = vunpack.c.h.b16 %v6353
    %v6786 = vpack.c.b16 %v6502, %v6498
    %v6787 = vpack.c.b16 %v6503, %v6499
    %v6788 = vpack.c.b16 %v6504, %v6500
    %v6789 = vpack.c.b16 %v6505, %v6501
    %v6790 = vpack.c.b16 %v6510, %v6506
    %v6791 = vpack.c.b16 %v6511, %v6507
    %v6792 = vpack.c.b16 %v6512, %v6508
    %v6793 = vpack.c.b16 %v6513, %v6509
    %v6794 = vpack.c.b16 %v6518, %v6514
    %v6795 = vpack.c.b16 %v6519, %v6515
    %v6796 = vpack.c.b16 %v6520, %v6516
    %v6797 = vpack.c.b16 %v6521, %v6517
    %v6798 = vpack.c.b16 %v6526, %v6522
    %v6799 = vpack.c.b16 %v6527, %v6523
    %v6800 = vpack.c.b16 %v6528, %v6524
    %v6801 = vpack.c.b16 %v6529, %v6525
    %v6802 = vpack.c.b16 %v6534, %v6530
    %v6803 = vpack.c.b16 %v6535, %v6531
    %v6804 = vpack.c.b16 %v6536, %v6532
    %v6805 = vpack.c.b16 %v6537, %v6533
    %v6806 = vpack.c.b16 %v6542, %v6538
    %v6807 = vpack.c.b16 %v6543, %v6539
    %v6808 = vpack.c.b16 %v6544, %v6540
    %v6809 = vpack.c.b16 %v6545, %v6541
    %v6810 = vpack.c.b16 %v6550, %v6546
    %v6811 = vpack.c.b16 %v6551, %v6547
    %v6812 = vpack.c.b16 %v6552, %v6548
    %v6813 = vpack.c.b16 %v6553, %v6549
    %v6814 = vpack.c.b16 %v6558, %v6554
    %v6815 = vpack.c.b16 %v6559, %v6555
    %v6816 = vpack.c.b16 %v6560, %v6556
    %v6817 = vpack.c.b16 %v6561, %v6557
    %v6818 = vpack.c.b16 %v6566, %v6562
    %v6819 = vpack.c.b16 %v6567, %v6563
    %v6820 = vpack.c.b16 %v6568, %v6564
    %v6821 = vpack.c.b16 %v6569, %v6565
    %v6822 = vpack.c.b16 %v6574, %v6570
    %v6823 = vpack.c.b16 %v6575, %v6571
    %v6824 = vpack.c.b16 %v6576, %v6572
    %v6825 = vpack.c.b16 %v6577, %v6573
    %v6826 = vpack.c.b16 %v6582, %v6578
    %v6827 = vpack.c.b16 %v6583, %v6579
    %v6828 = vpack.c.b16 %v6584, %v6580
    %v6829 = vpack.c.b16 %v6585, %v6581
    %v6830 = vpack.c.b16 %v6590, %v6586
    %v6831 = vpack.c.b16 %v6591, %v6587
    %v6832 = vpack.c.b16 %v6592, %v6588
    %v6833 = vpack.c.b16 %v6593, %v6589
    %v6834 = vpack.c.b16 %v6598, %v6594
    %v6835 = vpack.c.b16 %v6599, %v6595
    %v6836 = vpack.c.b16 %v6600, %v6596
    %v6837 = vpack.c.b16 %v6601, %v6597
    %v6838 = vpack.c.b16 %v6606, %v6602
    %v6839 = vpack.c.b16 %v6607, %v6603
    %v6840 = vpack.c.b16 %v6608, %v6604
    %v6841 = vpack.c.b16 %v6609, %v6605
    %v6842 = vpack.c.b16 %v6614, %v6610
    %v6843 = vpack.c.b16 %v6615, %v6611
    %v6844 = vpack.c.b16 %v6616, %v6612
    %v6845 = vpack.c.b16 %v6617, %v6613
    %v6846 = vpack.c.b16 %v6622, %v6618
    %v6847 = vpack.c.b16 %v6623, %v6619
    %v6848 = vpack.c.b16 %v6624, %v6620
    %v6849 = vpack.c.b16 %v6625, %v6621
    %v6850 = vpack.c.b16 %v6630, %v6626
    %v6851 = vpack.c.b16 %v6631, %v6627
    %v6852 = vpack.c.b16 %v6632, %v6628
    %v6853 = vpack.c.b16 %v6633, %v6629
    %v6854 = vpack.c.b16 %v6638, %v6634
    %v6855 = vpack.c.b16 %v6639, %v6635
    %v6856 = vpack.c.b16 %v6640, %v6636
    %v6857 = vpack.c.b16 %v6641, %v6637
    %v6858 = vpack.c.b16 %v6646, %v6642
    %v6859 = vpack.c.b16 %v6647, %v6643
    %v6860 = vpack.c.b16 %v6648, %v6644
    %v6861 = vpack.c.b16 %v6649, %v6645
    %v6862 = vpack.c.b16 %v6654, %v6650
    %v6863 = vpack.c.b16 %v6655, %v6651
    %v6864 = vpack.c.b16 %v6656, %v6652
    %v6865 = vpack.c.b16 %v6657, %v6653
    %v6866 = vpack.c.b16 %v6662, %v6658
    %v6867 = vpack.c.b16 %v6663, %v6659
    %v6868 = vpack.c.b16 %v6664, %v6660
    %v6869 = vpack.c.b16 %v6665, %v6661
    %v6870 = vpack.c.b16 %v6670, %v6666
    %v6871 = vpack.c.b16 %v6671, %v6667
    %v6872 = vpack.c.b16 %v6672, %v6668
    %v6873 = vpack.c.b16 %v6673, %v6669
    %v6874 = vpack.c.b16 %v6678, %v6674
    %v6875 = vpack.c.b16 %v6679, %v6675
    %v6876 = vpack.c.b16 %v6680, %v6676
    %v6877 = vpack.c.b16 %v6681, %v6677
    %v6878 = vpack.c.b16 %v6686, %v6682
    %v6879 = vpack.c.b16 %v6687, %v6683
    %v6880 = vpack.c.b16 %v6688, %v6684
    %v6881 = vpack.c.b16 %v6689, %v6685
    %v6882 = vpack.c.b16 %v6694, %v6690
    %v6883 = vpack.c.b16 %v6695, %v6691
    %v6884 = vpack.c.b16 %v6696, %v6692
    %v6885 = vpack.c.b16 %v6697, %v6693
    %v6886 = vpack.c.b16 %v6702, %v6698
    %v6887 = vpack.c.b16 %v6703, %v6699
    %v6888 = vpack.c.b16 %v6704, %v6700
    %v6889 = vpack.c.b16 %v6705, %v6701
    %v6890 = vpack.c.b16 %v6710, %v6706
    %v6891 = vpack.c.b16 %v6711, %v6707
    %v6892 = vpack.c.b16 %v6712, %v6708
    %v6893 = vpack.c.b16 %v6713, %v6709
    %v6894 = vpack.c.b16 %v6718, %v6714
    %v6895 = vpack.c.b16 %v6719, %v6715
    %v6896 = vpack.c.b16 %v6720, %v6716
    %v6897 = vpack.c.b16 %v6721, %v6717
    %v6898 = vpack.c.b16 %v6726, %v6722
    %v6899 = vpack.c.b16 %v6727, %v6723
    %v6900 = vpack.c.b16 %v6728, %v6724
    %v6901 = vpack.c.b16 %v6729, %v6725
    %v6902 = vpack.c.b16 %v6734, %v6730
    %v6903 = vpack.c.b16 %v6735, %v6731
    %v6904 = vpack.c.b16 %v6736, %v6732
    %v6905 = vpack.c.b16 %v6737, %v6733
    %v6906 = vpack.c.b16 %v6742, %v6738
    %v6907 = vpack.c.b16 %v6743, %v6739
    %v6908 = vpack.c.b16 %v6744, %v6740
    %v6909 = vpack.c.b16 %v6745, %v6741
    %v6910 = vpack.c.b16 %v6750, %v6746
    %v6911 = vpack.c.b16 %v6751, %v6747
    %v6912 = vpack.c.b16 %v6752, %v6748
    %v6913 = vpack.c.b16 %v6753, %v6749
    %v6914 = vpack.c.b16 %v6758, %v6754
    %v6915 = vpack.c.b16 %v6759, %v6755
    %v6916 = vpack.c.b16 %v6760, %v6756
    %v6917 = vpack.c.b16 %v6761, %v6757
    %v6918 = vpack.c.b16 %v6766, %v6762
    %v6919 = vpack.c.b16 %v6767, %v6763
    %v6920 = vpack.c.b16 %v6768, %v6764
    %v6921 = vpack.c.b16 %v6769, %v6765
    %v6922 = vpack.c.b16 %v6774, %v6770
    %v6923 = vpack.c.b16 %v6775, %v6771
    %v6924 = vpack.c.b16 %v6776, %v6772
    %v6925 = vpack.c.b16 %v6777, %v6773
    %v6926 = vpack.c.b16 %v6782, %v6778
    %v6927 = vpack.c.b16 %v6783, %v6779
    %v6928 = vpack.c.b16 %v6784, %v6780
    %v6929 = vpack.c.b16 %v6785, %v6781
    %v7075 = vsel %vm5642, %v6209, 0
    %7077 = vmatprep.subr.bf16.mxu0 %v6787
    %7078 = vmatpush1.bf16.msra.mxu0 %v6786
    %7079 = vmatprep.subr.bf16.mxu0 %v6791
    %7080 = vmatpush1.bf16.msra.mxu0 %v6790
    %7081 = vmatprep.subr.bf16.mxu0 %v6795
    %7082 = vmatpush1.bf16.msra.mxu0 %v6794
    %7083 = vmatprep.subr.bf16.mxu0 %v6799
    %7084 = vmatpush1.bf16.msra.mxu0 %v6798
    %7085 = vmatprep.subr.bf16.mxu0 %v6803
    %7086 = vmatpush1.bf16.msra.mxu0 %v6802
    %7087 = vmatprep.subr.bf16.mxu0 %v6807
    %7088 = vmatpush1.bf16.msra.mxu0 %v6806
    %7089 = vmatprep.subr.bf16.mxu0 %v6811
    %7090 = vmatpush1.bf16.msra.mxu0 %v6810
    %7091 = vmatprep.subr.bf16.mxu0 %v6815
    %7092 = vmatpush1.bf16.msra.mxu0 %v6814
    %7093 = vmatprep.subr.bf16.mxu0 %v6819
    %7094 = vmatpush1.bf16.msra.mxu0 %v6818
    %7095 = vmatprep.subr.bf16.mxu0 %v6823
    %7096 = vmatpush1.bf16.msra.mxu0 %v6822
    %7097 = vmatprep.subr.bf16.mxu0 %v6827
    %7098 = vmatpush1.bf16.msra.mxu0 %v6826
    %7099 = vmatprep.subr.bf16.mxu0 %v6831
    %7100 = vmatpush1.bf16.msra.mxu0 %v6830
    %7101 = vmatprep.subr.bf16.mxu0 %v6835
    %7102 = vmatpush1.bf16.msra.mxu0 %v6834
    %7103 = vmatprep.subr.bf16.mxu0 %v6839
    %7104 = vmatpush1.bf16.msra.mxu0 %v6838
    %7105 = vmatprep.subr.bf16.mxu0 %v6843
    %7106 = vmatpush1.bf16.msra.mxu0 %v6842
    %7107 = vmatprep.subr.bf16.mxu0 %v6847
    %7108 = vmatpush1.bf16.msra.mxu0 %v6846
    %7109 = vmatprep.mubr.bf16.mxu0 %v6206
    %7110 = vmatmul.mubr.bf16.gmra.mrb[0].mxu0 %v6205
    %v7111 = vpop.f32.mrb[0].mxu0
    %v7112 = vadd.f32 0.0, %v7111
    %v7113 = vpop.f32.mrb[0].mxu0
    %v7114 = vadd.f32 0.0, %v7113
    %v7115 = vpop.f32.mrb[0].mxu0
    %v7116 = vpop.f32.mrb[0].mxu0
    %7117 = vdwg.mxu0
    %7118 = vmatprep.subr.bf16.mxu0 %v6851
    %7119 = vmatpush1.bf16.msra.mxu0 %v6850
    %7120 = vmatprep.subr.bf16.mxu0 %v6855
    %7121 = vmatpush1.bf16.msra.mxu0 %v6854
    %7122 = vmatprep.subr.bf16.mxu0 %v6859
    %7123 = vmatpush1.bf16.msra.mxu0 %v6858
    %7124 = vmatprep.subr.bf16.mxu0 %v6863
    %7125 = vmatpush1.bf16.msra.mxu0 %v6862
    %7126 = vmatprep.subr.bf16.mxu0 %v6867
    %7127 = vmatpush1.bf16.msra.mxu0 %v6866
    %7128 = vmatprep.subr.bf16.mxu0 %v6871
    %7129 = vmatpush1.bf16.msra.mxu0 %v6870
    %7130 = vmatprep.subr.bf16.mxu0 %v6875
    %7131 = vmatpush1.bf16.msra.mxu0 %v6874
    %7132 = vmatprep.subr.bf16.mxu0 %v6879
    %7133 = vmatpush1.bf16.msra.mxu0 %v6878
    %7134 = vmatprep.subr.bf16.mxu0 %v6883
    %7135 = vmatpush1.bf16.msra.mxu0 %v6882
    %7136 = vmatprep.subr.bf16.mxu0 %v6887
    %7137 = vmatpush1.bf16.msra.mxu0 %v6886
    %7138 = vmatprep.subr.bf16.mxu0 %v6891
    %7139 = vmatpush1.bf16.msra.mxu0 %v6890
    %7140 = vmatprep.subr.bf16.mxu0 %v6895
    %7141 = vmatpush1.bf16.msra.mxu0 %v6894
    %7142 = vmatprep.subr.bf16.mxu0 %v6899
    %7143 = vmatpush1.bf16.msra.mxu0 %v6898
    %7144 = vmatprep.subr.bf16.mxu0 %v6903
    %7145 = vmatpush1.bf16.msra.mxu0 %v6902
    %7146 = vmatprep.subr.bf16.mxu0 %v6907
    %7147 = vmatpush1.bf16.msra.mxu0 %v6906
    %7148 = vmatprep.subr.bf16.mxu0 %v6911
    %7149 = vmatpush1.bf16.msra.mxu0 %v6910
    %7150 = vmatprep.mubr.bf16.mxu0 %v6208
    %7151 = vmatmul.mubr.bf16.gmra.mrb[0].mxu0 %v6207
    %v7152 = vpop.f32.mrb[0].mxu0
    %v7153 = vadd.f32 %v7112, %v7152
    %v7154 = vpop.f32.mrb[0].mxu0
    %v7155 = vadd.f32 %v7114, %v7154
    %v7156 = vpop.f32.mrb[0].mxu0
    %v7157 = vpop.f32.mrb[0].mxu0
    %7158 = vdwg.mxu0
    %7159 = vmatprep.subr.bf16.mxu0 %v6915
    %7160 = vmatpush1.bf16.msra.mxu0 %v6914
    %7161 = vmatprep.subr.bf16.mxu0 %v6919
    %7162 = vmatpush1.bf16.msra.mxu0 %v6918
    %7163 = vmatprep.subr.bf16.mxu0 %v6923
    %7164 = vmatpush1.bf16.msra.mxu0 %v6922
    %7165 = vmatprep.subr.bf16.mxu0 %v6927
    %7166 = vmatpush1.bf16.msra.mxu0 %v6926
    %7167 = vmatprep.subr.bf16.mxu0 0
    %7168 = vmatpush1.bf16.msra.mxu0 0
    %7169 = vmatprep.subr.bf16.mxu0 0
    %7170 = vmatpush1.bf16.msra.mxu0 0
    %7171 = vmatprep.subr.bf16.mxu0 0
    %7172 = vmatpush1.bf16.msra.mxu0 0
    %7173 = vmatprep.subr.bf16.mxu0 0
    %7174 = vmatpush1.bf16.msra.mxu0 0
    %7175 = vmatprep.subr.bf16.mxu0 0
    %7176 = vmatpush1.bf16.msra.mxu0 0
    %7177 = vmatprep.subr.bf16.mxu0 0
    %7178 = vmatpush1.bf16.msra.mxu0 0
    %7179 = vmatprep.subr.bf16.mxu0 0
    %7180 = vmatpush1.bf16.msra.mxu0 0
    %7181 = vmatprep.subr.bf16.mxu0 0
    %7182 = vmatpush1.bf16.msra.mxu0 0
    %7183 = vmatprep.subr.bf16.mxu0 0
    %7184 = vmatpush1.bf16.msra.mxu0 0
    %7185 = vmatprep.subr.bf16.mxu0 0
    %7186 = vmatpush1.bf16.msra.mxu0 0
    %7187 = vmatprep.subr.bf16.mxu0 0
    %7188 = vmatpush1.bf16.msra.mxu0 0
    %7189 = vmatprep.subr.bf16.mxu0 0
    %7190 = vmatpush1.bf16.msra.mxu0 0
    %7191 = vmatprep.mubr.bf16.mxu0 0
    %7192 = vmatmul.mubr.bf16.gmra.mrb[0].mxu0 %v7075
    %v7193 = vpop.f32.mrb[0].mxu0
    %v7194 = vadd.f32 %v7153, %v7193
    %v7195 = vpop.f32.mrb[0].mxu0
    %v7196 = vadd.f32 %v7155, %v7195
    %v7197 = vpop.f32.mrb[0].mxu0
    %v7198 = vpop.f32.mrb[0].mxu0
    %7199 = vdwg.mxu0
    %7200 = vmatprep.subr.bf16.mxu0 %v6789
    %7201 = vmatpush1.bf16.msra.mxu0 %v6788
    %7202 = vmatprep.subr.bf16.mxu0 %v6793
    %7203 = vmatpush1.bf16.msra.mxu0 %v6792
    %7204 = vmatprep.subr.bf16.mxu0 %v6797
    %7205 = vmatpush1.bf16.msra.mxu0 %v6796
    %7206 = vmatprep.subr.bf16.mxu0 %v6801
    %7207 = vmatpush1.bf16.msra.mxu0 %v6800
    %7208 = vmatprep.subr.bf16.mxu0 %v6805
    %7209 = vmatpush1.bf16.msra.mxu0 %v6804
    %7210 = vmatprep.subr.bf16.mxu0 %v6809
    %7211 = vmatpush1.bf16.msra.mxu0 %v6808
    %7212 = vmatprep.subr.bf16.mxu0 %v6813
    %7213 = vmatpush1.bf16.msra.mxu0 %v6812
    %7214 = vmatprep.subr.bf16.mxu0 %v6817
    %7215 = vmatpush1.bf16.msra.mxu0 %v6816
    %7216 = vmatprep.subr.bf16.mxu0 %v6821
    %7217 = vmatpush1.bf16.msra.mxu0 %v6820
    %7218 = vmatprep.subr.bf16.mxu0 %v6825
    %7219 = vmatpush1.bf16.msra.mxu0 %v6824
    %7220 = vmatprep.subr.bf16.mxu0 %v6829
    %7221 = vmatpush1.bf16.msra.mxu0 %v6828
    %7222 = vmatprep.subr.bf16.mxu0 %v6833
    %7223 = vmatpush1.bf16.msra.mxu0 %v6832
    %7224 = vmatprep.subr.bf16.mxu0 %v6837
    %7225 = vmatpush1.bf16.msra.mxu0 %v6836
    %7226 = vmatprep.subr.bf16.mxu0 %v6841
    %7227 = vmatpush1.bf16.msra.mxu0 %v6840
    %7228 = vmatprep.subr.bf16.mxu0 %v6845
    %7229 = vmatpush1.bf16.msra.mxu0 %v6844
    %7230 = vmatprep.subr.bf16.mxu0 %v6849
    %7231 = vmatpush1.bf16.msra.mxu0 %v6848
    %7232 = vmatprep.mubr.bf16.mxu0 %v6206
    %7233 = vmatmul.mubr.bf16.gmra.mrb[0].mxu0 %v6205
    %v7234 = vpop.f32.mrb[0].mxu0
    %v7235 = vadd.f32 0.0, %v7234
    %v7236 = vpop.f32.mrb[0].mxu0
    %v7237 = vadd.f32 0.0, %v7236
    %v7238 = vpop.f32.mrb[0].mxu0
    %v7239 = vpop.f32.mrb[0].mxu0
    %7240 = vdwg.mxu0
    %7241 = vmatprep.subr.bf16.mxu0 %v6853
    %7242 = vmatpush1.bf16.msra.mxu0 %v6852
    %7243 = vmatprep.subr.bf16.mxu0 %v6857
    %7244 = vmatpush1.bf16.msra.mxu0 %v6856
    %7245 = vmatprep.subr.bf16.mxu0 %v6861
    %7246 = vmatpush1.bf16.msra.mxu0 %v6860
    %7247 = vmatprep.subr.bf16.mxu0 %v6865
    %7248 = vmatpush1.bf16.msra.mxu0 %v6864
    %7249 = vmatprep.subr.bf16.mxu0 %v6869
    %7250 = vmatpush1.bf16.msra.mxu0 %v6868
    %7251 = vmatprep.subr.bf16.mxu0 %v6873
    %7252 = vmatpush1.bf16.msra.mxu0 %v6872
    %7253 = vmatprep.subr.bf16.mxu0 %v6877
    %7254 = vmatpush1.bf16.msra.mxu0 %v6876
    %7255 = vmatprep.subr.bf16.mxu0 %v6881
    %7256 = vmatpush1.bf16.msra.mxu0 %v6880
    %7257 = vmatprep.subr.bf16.mxu0 %v6885
    %7258 = vmatpush1.bf16.msra.mxu0 %v6884
    %7259 = vmatprep.subr.bf16.mxu0 %v6889
    %7260 = vmatpush1.bf16.msra.mxu0 %v6888
    %7261 = vmatprep.subr.bf16.mxu0 %v6893
    %7262 = vmatpush1.bf16.msra.mxu0 %v6892
    %7263 = vmatprep.subr.bf16.mxu0 %v6897
    %7264 = vmatpush1.bf16.msra.mxu0 %v6896
    %7265 = vmatprep.subr.bf16.mxu0 %v6901
    %7266 = vmatpush1.bf16.msra.mxu0 %v6900
    %7267 = vmatprep.subr.bf16.mxu0 %v6905
    %7268 = vmatpush1.bf16.msra.mxu0 %v6904
    %7269 = vmatprep.subr.bf16.mxu0 %v6909
    %7270 = vmatpush1.bf16.msra.mxu0 %v6908
    %7271 = vmatprep.subr.bf16.mxu0 %v6913
    %7272 = vmatpush1.bf16.msra.mxu0 %v6912
    %7273 = vmatprep.mubr.bf16.mxu0 %v6208
    %7274 = vmatmul.mubr.bf16.gmra.mrb[0].mxu0 %v6207
    %v7275 = vpop.f32.mrb[0].mxu0
    %v7276 = vadd.f32 %v7235, %v7275
    %v7277 = vpop.f32.mrb[0].mxu0
    %v7278 = vadd.f32 %v7237, %v7277
    %v7279 = vpop.f32.mrb[0].mxu0
    %v7280 = vpop.f32.mrb[0].mxu0
    %7281 = vdwg.mxu0
    %7282 = vmatprep.subr.bf16.mxu0 %v6917
    %7283 = vmatpush1.bf16.msra.mxu0 %v6916
    %7284 = vmatprep.subr.bf16.mxu0 %v6921
    %7285 = vmatpush1.bf16.msra.mxu0 %v6920
    %7286 = vmatprep.subr.bf16.mxu0 %v6925
    %7287 = vmatpush1.bf16.msra.mxu0 %v6924
    %7288 = vmatprep.subr.bf16.mxu0 %v6929
    %7289 = vmatpush1.bf16.msra.mxu0 %v6928
    %7290 = vmatprep.subr.bf16.mxu0 0
    %7291 = vmatpush1.bf16.msra.mxu0 0
    %7292 = vmatprep.subr.bf16.mxu0 0
    %7293 = vmatpush1.bf16.msra.mxu0 0
    %7294 = vmatprep.subr.bf16.mxu0 0
    %7295 = vmatpush1.bf16.msra.mxu0 0
    %7296 = vmatprep.subr.bf16.mxu0 0
    %7297 = vmatpush1.bf16.msra.mxu0 0
    %7298 = vmatprep.subr.bf16.mxu0 0
    %7299 = vmatpush1.bf16.msra.mxu0 0
    %7300 = vmatprep.subr.bf16.mxu0 0
    %7301 = vmatpush1.bf16.msra.mxu0 0
    %7302 = vmatprep.subr.bf16.mxu0 0
    %7303 = vmatpush1.bf16.msra.mxu0 0
    %7304 = vmatprep.subr.bf16.mxu0 0
    %7305 = vmatpush1.bf16.msra.mxu0 0
    %7306 = vmatprep.subr.bf16.mxu0 0
    %7307 = vmatpush1.bf16.msra.mxu0 0
    %7308 = vmatprep.subr.bf16.mxu0 0
    %7309 = vmatpush1.bf16.msra.mxu0 0
    %7310 = vmatprep.subr.bf16.mxu0 0
    %7311 = vmatpush1.bf16.msra.mxu0 0
    %7312 = vmatprep.subr.bf16.mxu0 0
    %7313 = vmatpush1.bf16.msra.mxu0 0
    %7314 = vmatprep.mubr.bf16.mxu0 0
    %7315 = vmatmul.mubr.bf16.gmra.mrb[0].mxu0 %v7075
    %v7316 = vpop.f32.mrb[0].mxu0
    %v7317 = vadd.f32 %v7276, %v7316
    %v7318 = vpop.f32.mrb[0].mxu0
    %v7319 = vadd.f32 %v7278, %v7318
    %v7320 = vpop.f32.mrb[0].mxu0
    %v7321 = vpop.f32.mrb[0].mxu0
    %7322 = vdwg.mxu0
    %v7323 = vsel %vm980, %v7194, 0.0
    %v7324 = vrot.slane %v7323, 4
    %v7325 = vadd.f32 %v7323, %v7324
    %v7326 = vrot.slane %v7325, 2
    %v7327 = vadd.f32 %v7325, %v7326
    %v7328 = vrot.slane %v7327, 1
    %v7329 = vadd.f32 %v7327, %v7328
    %v7330 = vsel %vm980, %v7196, 0.0
    %v7331 = vrot.slane %v7330, 4
    %v7332 = vadd.f32 %v7330, %v7331
    %v7333 = vrot.slane %v7332, 2
    %v7334 = vadd.f32 %v7332, %v7333
    %v7335 = vrot.slane %v7334, 1
    %v7336 = vadd.f32 %v7334, %v7335
    %v7337 = vsel %vm980, %v7317, 0.0
    %v7338 = vrot.slane %v7337, 4
    %v7339 = vadd.f32 %v7337, %v7338
    %v7340 = vrot.slane %v7339, 2
    %v7341 = vadd.f32 %v7339, %v7340
    %v7342 = vrot.slane %v7341, 1
    %v7343 = vadd.f32 %v7341, %v7342
    %v7344 = vsel %vm980, %v7319, 0.0
    %v7345 = vrot.slane %v7344, 4
    %v7346 = vadd.f32 %v7344, %v7345
    %v7347 = vrot.slane %v7346, 2
    %v7348 = vadd.f32 %v7346, %v7347
    %v7349 = vrot.slane %v7348, 1
    %v7350 = vadd.f32 %v7348, %v7349
    %v7351 = vmul.f32 %v7194, %v7194
    %v7352 = vmul.f32 %v7196, %v7196
    %v7353 = vmul.f32 %v7317, %v7317
    %v7354 = vmul.f32 %v7319, %v7319
    %v7355 = vsel %vm980, %v7351, 0.0
    %v7356 = vrot.slane %v7355, 4
    %v7357 = vadd.f32 %v7355, %v7356
    %v7358 = vrot.slane %v7357, 2
    %v7359 = vadd.f32 %v7357, %v7358
    %v7360 = vrot.slane %v7359, 1
    %v7361 = vadd.f32 %v7359, %v7360
    %v7362 = vsel %vm980, %v7352, 0.0
    %v7363 = vrot.slane %v7362, 4
    %v7364 = vadd.f32 %v7362, %v7363
    %v7365 = vrot.slane %v7364, 2
    %v7366 = vadd.f32 %v7364, %v7365
    %v7367 = vrot.slane %v7366, 1
    %v7368 = vadd.f32 %v7366, %v7367
    %v7369 = vsel %vm980, %v7353, 0.0
    %v7370 = vrot.slane %v7369, 4
    %v7371 = vadd.f32 %v7369, %v7370
    %v7372 = vrot.slane %v7371, 2
    %v7373 = vadd.f32 %v7371, %v7372
    %v7374 = vrot.slane %v7373, 1
    %v7375 = vadd.f32 %v7373, %v7374
    %v7376 = vsel %vm980, %v7354, 0.0
    %v7377 = vrot.slane %v7376, 4
    %v7378 = vadd.f32 %v7376, %v7377
    %v7379 = vrot.slane %v7378, 2
    %v7380 = vadd.f32 %v7378, %v7379
    %v7381 = vrot.slane %v7380, 1
    %v7382 = vadd.f32 %v7380, %v7381
    %v7383 = vsel %vm1103, %v7329, %v7361
    %v7384 = vsel %vm1103, %v7336, %v7368
    %v7385 = vsel %vm1103, %v7343, %v7375
    %v7386 = vsel %vm1103, %v7350, %v7382
    %v7387 = vmul.u32 %v1240, 16
    %vm7388 = vcmp.ge.s32.totalorder %v1102, %v7387
    %vm7389 = vcmp.ge.s32.totalorder %v1112, %v7387
    %vm7390 = vcmp.ge.s32.totalorder %v1113, %v7387
    %vm7391 = vcmp.ge.s32.totalorder %v1114, %v7387
    %vm7392 = vcmp.ge.s32.totalorder %v1115, %v7387
    %vm7393 = vcmp.ge.s32.totalorder %v1116, %v7387
    %vm7394 = vcmp.ge.s32.totalorder %v1117, %v7387
    %vm7395 = vcmp.ge.s32.totalorder %v1118, %v7387
    %vm7396 = vcmp.ge.s32.totalorder %v1119, %v7387
    %vm7397 = vcmp.ge.s32.totalorder %v1120, %v7387
    %vm7398 = vcmp.ge.s32.totalorder %v1121, %v7387
    %vm7399 = vcmp.ge.s32.totalorder %v1122, %v7387
    %vm7400 = vcmp.ge.s32.totalorder %v1123, %v7387
    %vm7401 = vcmp.ge.s32.totalorder %v1124, %v7387
    %vm7402 = vcmp.ge.s32.totalorder %v1125, %v7387
    %vm7403 = vcmp.ge.s32.totalorder %v1126, %v7387
    %vm7404 = vcmp.ge.s32.totalorder %v1127, %v7387
    %vm7405 = vcmp.ge.s32.totalorder %v1128, %v7387
    %vm7406 = vcmp.ge.s32.totalorder %v1129, %v7387
    %vm7407 = vcmp.ge.s32.totalorder %v1130, %v7387
    %vm7408 = vcmp.ge.s32.totalorder %v1131, %v7387
    %vm7409 = vcmp.ge.s32.totalorder %v1132, %v7387
    %vm7410 = vcmp.ge.s32.totalorder %v1133, %v7387
    %vm7411 = vcmp.ge.s32.totalorder %v1134, %v7387
    %vm7412 = vcmp.ge.s32.totalorder %v1135, %v7387
    %vm7413 = vcmp.ge.s32.totalorder %v1136, %v7387
    %vm7414 = vcmp.ge.s32.totalorder %v1137, %v7387
    %vm7415 = vcmp.ge.s32.totalorder %v1138, %v7387
    %vm7416 = vcmp.ge.s32.totalorder %v1139, %v7387
    %vm7417 = vcmp.ge.s32.totalorder %v1140, %v7387
    %vm7418 = vcmp.ge.s32.totalorder %v1141, %v7387
    %vm7419 = vcmp.ge.s32.totalorder %v1142, %v7387
    %vm7420 = vcmp.ge.s32.totalorder %v1143, %v7387
    %vm7421 = vcmp.ge.s32.totalorder %v1144, %v7387
    %vm7422 = vcmp.ge.s32.totalorder %v1145, %v7387
    %vm7423 = vcmp.ge.s32.totalorder %v1146, %v7387
    %vm7424 = vcmp.ge.s32.totalorder %v1147, %v7387
    %vm7425 = vcmp.ge.s32.totalorder %v1148, %v7387
    %vm7426 = vcmp.ge.s32.totalorder %v1149, %v7387
    %vm7427 = vcmp.ge.s32.totalorder %v1150, %v7387
    %vm7428 = vcmp.ge.s32.totalorder %v1151, %v7387
    %vm7429 = vcmp.ge.s32.totalorder %v1152, %v7387
    %vm7430 = vcmp.ge.s32.totalorder %v1153, %v7387
    %vm7431 = vcmp.ge.s32.totalorder %v1154, %v7387
    %vm7432 = vcmp.ge.s32.totalorder %v1155, %v7387
    %vm7433 = vcmp.ge.s32.totalorder %v1156, %v7387
    %vm7434 = vcmp.ge.s32.totalorder %v1157, %v7387
    %vm7435 = vcmp.ge.s32.totalorder %v1158, %v7387
    %vm7436 = vcmp.ge.s32.totalorder %v1159, %v7387
    %vm7437 = vcmp.ge.s32.totalorder %v1160, %v7387
    %vm7438 = vcmp.ge.s32.totalorder %v1161, %v7387
    %vm7439 = vcmp.ge.s32.totalorder %v1162, %v7387
    %vm7440 = vcmp.ge.s32.totalorder %v1163, %v7387
    %vm7441 = vcmp.ge.s32.totalorder %v1164, %v7387
    %vm7442 = vcmp.ge.s32.totalorder %v1165, %v7387
    %vm7443 = vcmp.ge.s32.totalorder %v1166, %v7387
    %vm7444 = vcmp.ge.s32.totalorder %v1167, %v7387
    %vm7445 = vcmp.ge.s32.totalorder %v1168, %v7387
    %vm7446 = vcmp.ge.s32.totalorder %v1169, %v7387
    %vm7447 = vcmp.ge.s32.totalorder %v1170, %v7387
    %vm7448 = vcmp.ge.s32.totalorder %v1171, %v7387
    %vm7449 = vcmp.ge.s32.totalorder %v1172, %v7387
    %vm7450 = vcmp.ge.s32.totalorder %v1173, %v7387
    %vm7451 = vcmp.ge.s32.totalorder %v1174, %v7387
    %v7452 = vadd.s32 %v7387, 16
    %vm7453 = vcmp.lt.s32.totalorder %v1102, %v7452
    %vm7454 = vcmp.lt.s32.totalorder %v1112, %v7452
    %vm7455 = vcmp.lt.s32.totalorder %v1113, %v7452
    %vm7456 = vcmp.lt.s32.totalorder %v1114, %v7452
    %vm7457 = vcmp.lt.s32.totalorder %v1115, %v7452
    %vm7458 = vcmp.lt.s32.totalorder %v1116, %v7452
    %vm7459 = vcmp.lt.s32.totalorder %v1117, %v7452
    %vm7460 = vcmp.lt.s32.totalorder %v1118, %v7452
    %vm7461 = vcmp.lt.s32.totalorder %v1119, %v7452
    %vm7462 = vcmp.lt.s32.totalorder %v1120, %v7452
    %vm7463 = vcmp.lt.s32.totalorder %v1121, %v7452
    %vm7464 = vcmp.lt.s32.totalorder %v1122, %v7452
    %vm7465 = vcmp.lt.s32.totalorder %v1123, %v7452
    %vm7466 = vcmp.lt.s32.totalorder %v1124, %v7452
    %vm7467 = vcmp.lt.s32.totalorder %v1125, %v7452
    %vm7468 = vcmp.lt.s32.totalorder %v1126, %v7452
    %vm7469 = vcmp.lt.s32.totalorder %v1127, %v7452
    %vm7470 = vcmp.lt.s32.totalorder %v1128, %v7452
    %vm7471 = vcmp.lt.s32.totalorder %v1129, %v7452
    %vm7472 = vcmp.lt.s32.totalorder %v1130, %v7452
    %vm7473 = vcmp.lt.s32.totalorder %v1131, %v7452
    %vm7474 = vcmp.lt.s32.totalorder %v1132, %v7452
    %vm7475 = vcmp.lt.s32.totalorder %v1133, %v7452
    %vm7476 = vcmp.lt.s32.totalorder %v1134, %v7452
    %vm7477 = vcmp.lt.s32.totalorder %v1135, %v7452
    %vm7478 = vcmp.lt.s32.totalorder %v1136, %v7452
    %vm7479 = vcmp.lt.s32.totalorder %v1137, %v7452
    %vm7480 = vcmp.lt.s32.totalorder %v1138, %v7452
    %vm7481 = vcmp.lt.s32.totalorder %v1139, %v7452
    %vm7482 = vcmp.lt.s32.totalorder %v1140, %v7452
    %vm7483 = vcmp.lt.s32.totalorder %v1141, %v7452
    %vm7484 = vcmp.lt.s32.totalorder %v1142, %v7452
    %vm7485 = vcmp.lt.s32.totalorder %v1143, %v7452
    %vm7486 = vcmp.lt.s32.totalorder %v1144, %v7452
    %vm7487 = vcmp.lt.s32.totalorder %v1145, %v7452
    %vm7488 = vcmp.lt.s32.totalorder %v1146, %v7452
    %vm7489 = vcmp.lt.s32.totalorder %v1147, %v7452
    %vm7490 = vcmp.lt.s32.totalorder %v1148, %v7452
    %vm7491 = vcmp.lt.s32.totalorder %v1149, %v7452
    %vm7492 = vcmp.lt.s32.totalorder %v1150, %v7452
    %vm7493 = vcmp.lt.s32.totalorder %v1151, %v7452
    %vm7494 = vcmp.lt.s32.totalorder %v1152, %v7452
    %vm7495 = vcmp.lt.s32.totalorder %v1153, %v7452
    %vm7496 = vcmp.lt.s32.totalorder %v1154, %v7452
    %vm7497 = vcmp.lt.s32.totalorder %v1155, %v7452
    %vm7498 = vcmp.lt.s32.totalorder %v1156, %v7452
    %vm7499 = vcmp.lt.s32.totalorder %v1157, %v7452
    %vm7500 = vcmp.lt.s32.totalorder %v1158, %v7452
    %vm7501 = vcmp.lt.s32.totalorder %v1159, %v7452
    %vm7502 = vcmp.lt.s32.totalorder %v1160, %v7452
    %vm7503 = vcmp.lt.s32.totalorder %v1161, %v7452
    %vm7504 = vcmp.lt.s32.totalorder %v1162, %v7452
    %vm7505 = vcmp.lt.s32.totalorder %v1163, %v7452
    %vm7506 = vcmp.lt.s32.totalorder %v1164, %v7452
    %vm7507 = vcmp.lt.s32.totalorder %v1165, %v7452
    %vm7508 = vcmp.lt.s32.totalorder %v1166, %v7452
    %vm7509 = vcmp.lt.s32.totalorder %v1167, %v7452
    %vm7510 = vcmp.lt.s32.totalorder %v1168, %v7452
    %vm7511 = vcmp.lt.s32.totalorder %v1169, %v7452
    %vm7512 = vcmp.lt.s32.totalorder %v1170, %v7452
    %vm7513 = vcmp.lt.s32.totalorder %v1171, %v7452
    %vm7514 = vcmp.lt.s32.totalorder %v1172, %v7452
    %vm7515 = vcmp.lt.s32.totalorder %v1173, %v7452
    %vm7516 = vcmp.lt.s32.totalorder %v1174, %v7452
    %vm7517 = vmand %vm7388, %vm7453
    %vm7518 = vmand %vm7389, %vm7454
    %vm7519 = vmand %vm7390, %vm7455
    %vm7520 = vmand %vm7391, %vm7456
    %vm7521 = vmand %vm7392, %vm7457
    %vm7522 = vmand %vm7393, %vm7458
    %vm7523 = vmand %vm7394, %vm7459
    %vm7524 = vmand %vm7395, %vm7460
    %vm7525 = vmand %vm7396, %vm7461
    %vm7526 = vmand %vm7397, %vm7462
    %vm7527 = vmand %vm7398, %vm7463
    %vm7528 = vmand %vm7399, %vm7464
    %vm7529 = vmand %vm7400, %vm7465
    %vm7530 = vmand %vm7401, %vm7466
    %vm7531 = vmand %vm7402, %vm7467
    %vm7532 = vmand %vm7403, %vm7468
    %vm7533 = vmand %vm7404, %vm7469
    %vm7534 = vmand %vm7405, %vm7470
    %vm7535 = vmand %vm7406, %vm7471
    %vm7536 = vmand %vm7407, %vm7472
    %vm7537 = vmand %vm7408, %vm7473
    %vm7538 = vmand %vm7409, %vm7474
    %vm7539 = vmand %vm7410, %vm7475
    %vm7540 = vmand %vm7411, %vm7476
    %vm7541 = vmand %vm7412, %vm7477
    %vm7542 = vmand %vm7413, %vm7478
    %vm7543 = vmand %vm7414, %vm7479
    %vm7544 = vmand %vm7415, %vm7480
    %vm7545 = vmand %vm7416, %vm7481
    %vm7546 = vmand %vm7417, %vm7482
    %vm7547 = vmand %vm7418, %vm7483
    %vm7548 = vmand %vm7419, %vm7484
    %vm7549 = vmand %vm7420, %vm7485
    %vm7550 = vmand %vm7421, %vm7486
    %vm7551 = vmand %vm7422, %vm7487
    %vm7552 = vmand %vm7423, %vm7488
    %vm7553 = vmand %vm7424, %vm7489
    %vm7554 = vmand %vm7425, %vm7490
    %vm7555 = vmand %vm7426, %vm7491
    %vm7556 = vmand %vm7427, %vm7492
    %vm7557 = vmand %vm7428, %vm7493
    %vm7558 = vmand %vm7429, %vm7494
    %vm7559 = vmand %vm7430, %vm7495
    %vm7560 = vmand %vm7431, %vm7496
    %vm7561 = vmand %vm7432, %vm7497
    %vm7562 = vmand %vm7433, %vm7498
    %vm7563 = vmand %vm7434, %vm7499
    %vm7564 = vmand %vm7435, %vm7500
    %vm7565 = vmand %vm7436, %vm7501
    %vm7566 = vmand %vm7437, %vm7502
    %vm7567 = vmand %vm7438, %vm7503
    %vm7568 = vmand %vm7439, %vm7504
    %vm7569 = vmand %vm7440, %vm7505
    %vm7570 = vmand %vm7441, %vm7506
    %vm7571 = vmand %vm7442, %vm7507
    %vm7572 = vmand %vm7443, %vm7508
    %vm7573 = vmand %vm7444, %vm7509
    %vm7574 = vmand %vm7445, %vm7510
    %vm7575 = vmand %vm7446, %vm7511
    %vm7576 = vmand %vm7447, %vm7512
    %vm7577 = vmand %vm7448, %vm7513
    %vm7578 = vmand %vm7449, %vm7514
    %vm7579 = vmand %vm7450, %vm7515
    %vm7580 = vmand %vm7451, %vm7516
    %v7581 = vsel %vm7517, 1, 0
    %v7582 = vsel %vm7518, 1, 0
    %v7583 = vsel %vm7519, 1, 0
    %v7584 = vsel %vm7520, 1, 0
    %v7585 = vsel %vm7521, 1, 0
    %v7586 = vsel %vm7522, 1, 0
    %v7587 = vsel %vm7523, 1, 0
    %v7588 = vsel %vm7524, 1, 0
    %v7589 = vsel %vm7525, 1, 0
    %v7590 = vsel %vm7526, 1, 0
    %v7591 = vsel %vm7527, 1, 0
    %v7592 = vsel %vm7528, 1, 0
    %v7593 = vsel %vm7529, 1, 0
    %v7594 = vsel %vm7530, 1, 0
    %v7595 = vsel %vm7531, 1, 0
    %v7596 = vsel %vm7532, 1, 0
    %v7597 = vsel %vm7533, 1, 0
    %v7598 = vsel %vm7534, 1, 0
    %v7599 = vsel %vm7535, 1, 0
    %v7600 = vsel %vm7536, 1, 0
    %v7601 = vsel %vm7537, 1, 0
    %v7602 = vsel %vm7538, 1, 0
    %v7603 = vsel %vm7539, 1, 0
    %v7604 = vsel %vm7540, 1, 0
    %v7605 = vsel %vm7541, 1, 0
    %v7606 = vsel %vm7542, 1, 0
    %v7607 = vsel %vm7543, 1, 0
    %v7608 = vsel %vm7544, 1, 0
    %v7609 = vsel %vm7545, 1, 0
    %v7610 = vsel %vm7546, 1, 0
    %v7611 = vsel %vm7547, 1, 0
    %v7612 = vsel %vm7548, 1, 0
    %v7613 = vsel %vm7549, 1, 0
    %v7614 = vsel %vm7550, 1, 0
    %v7615 = vsel %vm7551, 1, 0
    %v7616 = vsel %vm7552, 1, 0
    %v7617 = vsel %vm7553, 1, 0
    %v7618 = vsel %vm7554, 1, 0
    %v7619 = vsel %vm7555, 1, 0
    %v7620 = vsel %vm7556, 1, 0
    %v7621 = vsel %vm7557, 1, 0
    %v7622 = vsel %vm7558, 1, 0
    %v7623 = vsel %vm7559, 1, 0
    %v7624 = vsel %vm7560, 1, 0
    %v7625 = vsel %vm7561, 1, 0
    %v7626 = vsel %vm7562, 1, 0
    %v7627 = vsel %vm7563, 1, 0
    %v7628 = vsel %vm7564, 1, 0
    %v7629 = vsel %vm7565, 1, 0
    %v7630 = vsel %vm7566, 1, 0
    %v7631 = vsel %vm7567, 1, 0
    %v7632 = vsel %vm7568, 1, 0
    %v7633 = vsel %vm7569, 1, 0
    %v7634 = vsel %vm7570, 1, 0
    %v7635 = vsel %vm7571, 1, 0
    %v7636 = vsel %vm7572, 1, 0
    %v7637 = vsel %vm7573, 1, 0
    %v7638 = vsel %vm7574, 1, 0
    %v7639 = vsel %vm7575, 1, 0
    %v7640 = vsel %vm7576, 1, 0
    %v7641 = vsel %vm7577, 1, 0
    %v7642 = vsel %vm7578, 1, 0
    %v7643 = vsel %vm7579, 1, 0
    %v7644 = vsel %vm7580, 1, 0
    %v7645 = vcvt.s32.f32 %v7581
    %v7646 = vcvt.s32.f32 %v7582
    %v7647 = vcvt.s32.f32 %v7583
    %v7648 = vcvt.s32.f32 %v7584
    %v7649 = vcvt.s32.f32 %v7585
    %v7650 = vcvt.s32.f32 %v7586
    %v7651 = vcvt.s32.f32 %v7587
    %v7652 = vcvt.s32.f32 %v7588
    %v7653 = vcvt.s32.f32 %v7589
    %v7654 = vcvt.s32.f32 %v7590
    %v7655 = vcvt.s32.f32 %v7591
    %v7656 = vcvt.s32.f32 %v7592
    %v7657 = vcvt.s32.f32 %v7593
    %v7658 = vcvt.s32.f32 %v7594
    %v7659 = vcvt.s32.f32 %v7595
    %v7660 = vcvt.s32.f32 %v7596
    %v7661 = vcvt.s32.f32 %v7597
    %v7662 = vcvt.s32.f32 %v7598
    %v7663 = vcvt.s32.f32 %v7599
    %v7664 = vcvt.s32.f32 %v7600
    %v7665 = vcvt.s32.f32 %v7601
    %v7666 = vcvt.s32.f32 %v7602
    %v7667 = vcvt.s32.f32 %v7603
    %v7668 = vcvt.s32.f32 %v7604
    %v7669 = vcvt.s32.f32 %v7605
    %v7670 = vcvt.s32.f32 %v7606
    %v7671 = vcvt.s32.f32 %v7607
    %v7672 = vcvt.s32.f32 %v7608
    %v7673 = vcvt.s32.f32 %v7609
    %v7674 = vcvt.s32.f32 %v7610
    %v7675 = vcvt.s32.f32 %v7611
    %v7676 = vcvt.s32.f32 %v7612
    %v7677 = vcvt.s32.f32 %v7613
    %v7678 = vcvt.s32.f32 %v7614
    %v7679 = vcvt.s32.f32 %v7615
    %v7680 = vcvt.s32.f32 %v7616
    %v7681 = vcvt.s32.f32 %v7617
    %v7682 = vcvt.s32.f32 %v7618
    %v7683 = vcvt.s32.f32 %v7619
    %v7684 = vcvt.s32.f32 %v7620
    %v7685 = vcvt.s32.f32 %v7621
    %v7686 = vcvt.s32.f32 %v7622
    %v7687 = vcvt.s32.f32 %v7623
    %v7688 = vcvt.s32.f32 %v7624
    %v7689 = vcvt.s32.f32 %v7625
    %v7690 = vcvt.s32.f32 %v7626
    %v7691 = vcvt.s32.f32 %v7627
    %v7692 = vcvt.s32.f32 %v7628
    %v7693 = vcvt.s32.f32 %v7629
    %v7694 = vcvt.s32.f32 %v7630
    %v7695 = vcvt.s32.f32 %v7631
    %v7696 = vcvt.s32.f32 %v7632
    %v7697 = vcvt.s32.f32 %v7633
    %v7698 = vcvt.s32.f32 %v7634
    %v7699 = vcvt.s32.f32 %v7635
    %v7700 = vcvt.s32.f32 %v7636
    %v7701 = vcvt.s32.f32 %v7637
    %v7702 = vcvt.s32.f32 %v7638
    %v7703 = vcvt.s32.f32 %v7639
    %v7704 = vcvt.s32.f32 %v7640
    %v7705 = vcvt.s32.f32 %v7641
    %v7706 = vcvt.s32.f32 %v7642
    %v7707 = vcvt.s32.f32 %v7643
    %v7708 = vcvt.s32.f32 %v7644
    %7709 = vmatprep.subr.mxu0 0.0
    %7710 = vmatpush1.msra.mxu0 %v7645
    %7711 = vmatprep.subr.mxu0 0.0
    %7712 = vmatpush1.msra.mxu0 %v7646
    %7713 = vmatprep.subr.mxu0 0.0
    %7714 = vmatpush1.msra.mxu0 %v7647
    %7715 = vmatprep.subr.mxu0 0.0
    %7716 = vmatpush1.msra.mxu0 %v7648
    %7717 = vmatprep.subr.mxu0 0.0
    %7718 = vmatpush1.msra.mxu0 %v7649
    %7719 = vmatprep.subr.mxu0 0.0
    %7720 = vmatpush1.msra.mxu0 %v7650
    %7721 = vmatprep.subr.mxu0 0.0
    %7722 = vmatpush1.msra.mxu0 %v7651
    %7723 = vmatprep.subr.mxu0 0.0
    %7724 = vmatpush1.msra.mxu0 %v7652
    %7725 = vmatprep.subr.mxu0 0.0
    %7726 = vmatpush1.msra.mxu0 %v7653
    %7727 = vmatprep.subr.mxu0 0.0
    %7728 = vmatpush1.msra.mxu0 %v7654
    %7729 = vmatprep.subr.mxu0 0.0
    %7730 = vmatpush1.msra.mxu0 %v7655
    %7731 = vmatprep.subr.mxu0 0.0
    %7732 = vmatpush1.msra.mxu0 %v7656
    %7733 = vmatprep.subr.mxu0 0.0
    %7734 = vmatpush1.msra.mxu0 %v7657
    %7735 = vmatprep.subr.mxu0 0.0
    %7736 = vmatpush1.msra.mxu0 %v7658
    %7737 = vmatprep.subr.mxu0 0.0
    %7738 = vmatpush1.msra.mxu0 %v7659
    %7739 = vmatprep.subr.mxu0 0.0
    %7740 = vmatpush1.msra.mxu0 %v7660
    %7741 = vmatprep.subr.mxu0 0.0
    %7742 = vmatpush1.msra.mxu0 %v7661
    %7743 = vmatprep.subr.mxu0 0.0
    %7744 = vmatpush1.msra.mxu0 %v7662
    %7745 = vmatprep.subr.mxu0 0.0
    %7746 = vmatpush1.msra.mxu0 %v7663
    %7747 = vmatprep.subr.mxu0 0.0
    %7748 = vmatpush1.msra.mxu0 %v7664
    %7749 = vmatprep.subr.mxu0 0.0
    %7750 = vmatpush1.msra.mxu0 %v7665
    %7751 = vmatprep.subr.mxu0 0.0
    %7752 = vmatpush1.msra.mxu0 %v7666
    %7753 = vmatprep.subr.mxu0 0.0
    %7754 = vmatpush1.msra.mxu0 %v7667
    %7755 = vmatprep.subr.mxu0 0.0
    %7756 = vmatpush1.msra.mxu0 %v7668
    %7757 = vmatprep.subr.mxu0 0.0
    %7758 = vmatpush1.msra.mxu0 %v7669
    %7759 = vmatprep.subr.mxu0 0.0
    %7760 = vmatpush1.msra.mxu0 %v7670
    %7761 = vmatprep.subr.mxu0 0.0
    %7762 = vmatpush1.msra.mxu0 %v7671
    %7763 = vmatprep.subr.mxu0 0.0
    %7764 = vmatpush1.msra.mxu0 %v7672
    %7765 = vmatprep.subr.mxu0 0.0
    %7766 = vmatpush1.msra.mxu0 %v7673
    %7767 = vmatprep.subr.mxu0 0.0
    %7768 = vmatpush1.msra.mxu0 %v7674
    %7769 = vmatprep.subr.mxu0 0.0
    %7770 = vmatpush1.msra.mxu0 %v7675
    %7771 = vmatprep.subr.mxu0 0.0
    %7772 = vmatpush1.msra.mxu0 %v7676
    %7773 = vmatprep.mubr.f32.mxu0 %v7384
    %7774 = vmatmul.mubr.f32.gmra.mrb[0].mxu0 %v7383
    %v7775 = vpop.f32.mrb[0].mxu0
    %v7776 = vadd.f32 0.0, %v7775
    %v7777 = vpop.f32.mrb[0].mxu0
    %7778 = vdwg.mxu0
    %7779 = vmatprep.subr.mxu0 0.0
    %7780 = vmatpush1.msra.mxu0 %v7677
    %7781 = vmatprep.subr.mxu0 0.0
    %7782 = vmatpush1.msra.mxu0 %v7678
    %7783 = vmatprep.subr.mxu0 0.0
    %7784 = vmatpush1.msra.mxu0 %v7679
    %7785 = vmatprep.subr.mxu0 0.0
    %7786 = vmatpush1.msra.mxu0 %v7680
    %7787 = vmatprep.subr.mxu0 0.0
    %7788 = vmatpush1.msra.mxu0 %v7681
    %7789 = vmatprep.subr.mxu0 0.0
    %7790 = vmatpush1.msra.mxu0 %v7682
    %7791 = vmatprep.subr.mxu0 0.0
    %7792 = vmatpush1.msra.mxu0 %v7683
    %7793 = vmatprep.subr.mxu0 0.0
    %7794 = vmatpush1.msra.mxu0 %v7684
    %7795 = vmatprep.subr.mxu0 0.0
    %7796 = vmatpush1.msra.mxu0 %v7685
    %7797 = vmatprep.subr.mxu0 0.0
    %7798 = vmatpush1.msra.mxu0 %v7686
    %7799 = vmatprep.subr.mxu0 0.0
    %7800 = vmatpush1.msra.mxu0 %v7687
    %7801 = vmatprep.subr.mxu0 0.0
    %7802 = vmatpush1.msra.mxu0 %v7688
    %7803 = vmatprep.subr.mxu0 0.0
    %7804 = vmatpush1.msra.mxu0 %v7689
    %7805 = vmatprep.subr.mxu0 0.0
    %7806 = vmatpush1.msra.mxu0 %v7690
    %7807 = vmatprep.subr.mxu0 0.0
    %7808 = vmatpush1.msra.mxu0 %v7691
    %7809 = vmatprep.subr.mxu0 0.0
    %7810 = vmatpush1.msra.mxu0 %v7692
    %7811 = vmatprep.subr.mxu0 0.0
    %7812 = vmatpush1.msra.mxu0 %v7693
    %7813 = vmatprep.subr.mxu0 0.0
    %7814 = vmatpush1.msra.mxu0 %v7694
    %7815 = vmatprep.subr.mxu0 0.0
    %7816 = vmatpush1.msra.mxu0 %v7695
    %7817 = vmatprep.subr.mxu0 0.0
    %7818 = vmatpush1.msra.mxu0 %v7696
    %7819 = vmatprep.subr.mxu0 0.0
    %7820 = vmatpush1.msra.mxu0 %v7697
    %7821 = vmatprep.subr.mxu0 0.0
    %7822 = vmatpush1.msra.mxu0 %v7698
    %7823 = vmatprep.subr.mxu0 0.0
    %7824 = vmatpush1.msra.mxu0 %v7699
    %7825 = vmatprep.subr.mxu0 0.0
    %7826 = vmatpush1.msra.mxu0 %v7700
    %7827 = vmatprep.subr.mxu0 0.0
    %7828 = vmatpush1.msra.mxu0 %v7701
    %7829 = vmatprep.subr.mxu0 0.0
    %7830 = vmatpush1.msra.mxu0 %v7702
    %7831 = vmatprep.subr.mxu0 0.0
    %7832 = vmatpush1.msra.mxu0 %v7703
    %7833 = vmatprep.subr.mxu0 0.0
    %7834 = vmatpush1.msra.mxu0 %v7704
    %7835 = vmatprep.subr.mxu0 0.0
    %7836 = vmatpush1.msra.mxu0 %v7705
    %7837 = vmatprep.subr.mxu0 0.0
    %7838 = vmatpush1.msra.mxu0 %v7706
    %7839 = vmatprep.subr.mxu0 0.0
    %7840 = vmatpush1.msra.mxu0 %v7707
    %7841 = vmatprep.subr.mxu0 0.0
    %7842 = vmatpush1.msra.mxu0 %v7708
    %7843 = vmatprep.mubr.f32.mxu0 %v7386
    %7844 = vmatmul.mubr.f32.gmra.mrb[0].mxu0 %v7385
    %v7845 = vpop.f32.mrb[0].mxu0
    %v7846 = vadd.f32 %v7776, %v7845
    %v7847 = vpop.f32.mrb[0].mxu0
    %7848 = vdwg.mxu0
    %v7849 = vmul.f32 %v7846, 0.03125
    %v7850 = vmul.f32 %v7849, %v7849
    %v7852 = vrot.slane %v7850, 7
    %v7854 = vsub.f32 %v7849, %v7852
    %v7855 = vld [vmem:[%s4 + $0x4] sm:$0x1]
    %v7856 = vld [vmem:[%s4 + $0x5] sm:$0x1]
    %v7857 = vadd.f32 %v7854, 1e-05
    %v7858 = vrsqrt.pop %v7857
    %v7860 = vrot.slane %v7858, 1
    %v7862 = vmul.f32 %v7855, %v7860
    %v7863 = vmul.f32 %v7849, %v7862
    %v7864 = vsub.f32 %v7856, %v7863
    %v7865 = vlaneseq
    %v7866 = vshrl.u32 %v7865, 7
    %v7867 = vsub.s32 0, %v7866
    %v7868 = vrot.slane %v7862, %v7867
    %v7869 = vlaneseq
    %v7870 = vshrl.u32 %v7869, 7
    %v7871 = vsub.s32 0, %v7870
    %v7872 = vrot.slane %v7864, %v7871
    %v7873 = vsel %vm1103, %v7868, %v7872
    %v7874 = vmul.u32 %v1102, 16
    %v7875 = vmul.u32 %v1112, 16
    %v7876 = vmul.u32 %v1113, 16
    %v7877 = vmul.u32 %v1114, 16
    %vm7878 = vcmp.ge.s32.totalorder %v1240, %v7874
    %vm7879 = vcmp.ge.s32.totalorder %v2188, %v7874
    %vm7880 = vcmp.ge.s32.totalorder %v2189, %v7874
    %vm7881 = vcmp.ge.s32.totalorder %v2190, %v7874
    %vm7882 = vcmp.ge.s32.totalorder %v1240, %v7875
    %vm7883 = vcmp.ge.s32.totalorder %v2188, %v7875
    %vm7884 = vcmp.ge.s32.totalorder %v2189, %v7875
    %vm7885 = vcmp.ge.s32.totalorder %v2190, %v7875
    %vm7886 = vcmp.ge.s32.totalorder %v1240, %v7876
    %vm7887 = vcmp.ge.s32.totalorder %v2188, %v7876
    %vm7888 = vcmp.ge.s32.totalorder %v2189, %v7876
    %vm7889 = vcmp.ge.s32.totalorder %v2190, %v7876
    %vm7890 = vcmp.ge.s32.totalorder %v1240, %v7877
    %vm7891 = vcmp.ge.s32.totalorder %v2188, %v7877
    %vm7892 = vcmp.ge.s32.totalorder %v2189, %v7877
    %vm7893 = vcmp.ge.s32.totalorder %v2190, %v7877
    %v7894 = vadd.s32 %v7874, 16
    %v7895 = vadd.s32 %v7875, 16
    %v7896 = vadd.s32 %v7876, 16
    %v7897 = vadd.s32 %v7877, 16
    %vm7898 = vcmp.lt.s32.totalorder %v1240, %v7894
    %vm7899 = vcmp.lt.s32.totalorder %v2188, %v7894
    %vm7900 = vcmp.lt.s32.totalorder %v2189, %v7894
    %vm7901 = vcmp.lt.s32.totalorder %v2190, %v7894
    %vm7902 = vcmp.lt.s32.totalorder %v1240, %v7895
    %vm7903 = vcmp.lt.s32.totalorder %v2188, %v7895
    %vm7904 = vcmp.lt.s32.totalorder %v2189, %v7895
    %vm7905 = vcmp.lt.s32.totalorder %v2190, %v7895
    %vm7906 = vcmp.lt.s32.totalorder %v1240, %v7896
    %vm7907 = vcmp.lt.s32.totalorder %v2188, %v7896
    %vm7908 = vcmp.lt.s32.totalorder %v2189, %v7896
    %vm7909 = vcmp.lt.s32.totalorder %v2190, %v7896
    %vm7910 = vcmp.lt.s32.totalorder %v1240, %v7897
    %vm7911 = vcmp.lt.s32.totalorder %v2188, %v7897
    %vm7912 = vcmp.lt.s32.totalorder %v2189, %v7897
    %vm7913 = vcmp.lt.s32.totalorder %v2190, %v7897
    %vm7914 = vmand %vm7878, %vm7898
    %vm7915 = vmand %vm7879, %vm7899
    %vm7916 = vmand %vm7880, %vm7900
    %vm7917 = vmand %vm7881, %vm7901
    %vm7918 = vmand %vm7882, %vm7902
    %vm7919 = vmand %vm7883, %vm7903
    %vm7920 = vmand %vm7884, %vm7904
    %vm7921 = vmand %vm7885, %vm7905
    %vm7922 = vmand %vm7886, %vm7906
    %vm7923 = vmand %vm7887, %vm7907
    %vm7924 = vmand %vm7888, %vm7908
    %vm7925 = vmand %vm7889, %vm7909
    %vm7926 = vmand %vm7890, %vm7910
    %vm7927 = vmand %vm7891, %vm7911
    %vm7928 = vmand %vm7892, %vm7912
    %vm7929 = vmand %vm7893, %vm7913
    %v7930 = vsel %vm7914, 1, 0
    %v7931 = vsel %vm7915, 1, 0
    %v7932 = vsel %vm7916, 1, 0
    %v7933 = vsel %vm7917, 1, 0
    %v7934 = vsel %vm7918, 1, 0
    %v7935 = vsel %vm7919, 1, 0
    %v7936 = vsel %vm7920, 1, 0
    %v7937 = vsel %vm7921, 1, 0
    %v7938 = vsel %vm7922, 1, 0
    %v7939 = vsel %vm7923, 1, 0
    %v7940 = vsel %vm7924, 1, 0
    %v7941 = vsel %vm7925, 1, 0
    %v7942 = vsel %vm7926, 1, 0
    %v7943 = vsel %vm7927, 1, 0
    %v7944 = vsel %vm7928, 1, 0
    %v7945 = vsel %vm7929, 1, 0
    %v7946 = vcvt.s32.f32 %v7930
    %v7947 = vcvt.s32.f32 %v7931
    %v7948 = vcvt.s32.f32 %v7932
    %v7949 = vcvt.s32.f32 %v7933
    %v7950 = vcvt.s32.f32 %v7934
    %v7951 = vcvt.s32.f32 %v7935
    %v7952 = vcvt.s32.f32 %v7936
    %v7953 = vcvt.s32.f32 %v7937
    %v7954 = vcvt.s32.f32 %v7938
    %v7955 = vcvt.s32.f32 %v7939
    %v7956 = vcvt.s32.f32 %v7940
    %v7957 = vcvt.s32.f32 %v7941
    %v7958 = vcvt.s32.f32 %v7942
    %v7959 = vcvt.s32.f32 %v7943
    %v7960 = vcvt.s32.f32 %v7944
    %v7961 = vcvt.s32.f32 %v7945
    %vm7962 = vcmask 261120
    %v7964 = vsel %vm7962, %v7873, 0
    %7966 = vmatprep.subr.mxu0 %v7947
    %7967 = vmatpush1.msra.mxu0 %v7946
    %7968 = vmatprep.subr.mxu0 %v7951
    %7969 = vmatpush1.msra.mxu0 %v7950
    %7970 = vmatprep.subr.mxu0 %v7955
    %7971 = vmatpush1.msra.mxu0 %v7954
    %7972 = vmatprep.subr.mxu0 %v7959
    %7973 = vmatpush1.msra.mxu0 %v7958
    %7974 = vmatprep.subr.mxu0 0.0
    %7975 = vmatpush1.msra.mxu0 0.0
    %7976 = vmatprep.subr.mxu0 0.0
    %7977 = vmatpush1.msra.mxu0 0.0
    %7978 = vmatprep.subr.mxu0 0.0
    %7979 = vmatpush1.msra.mxu0 0.0
    %7980 = vmatprep.subr.mxu0 0.0
    %7981 = vmatpush1.msra.mxu0 0.0
    %7982 = vmatprep.subr.mxu0 0.0
    %7983 = vmatpush1.msra.mxu0 0.0
    %7984 = vmatprep.subr.mxu0 0.0
    %7985 = vmatpush1.msra.mxu0 0.0
    %7986 = vmatprep.subr.mxu0 0.0
    %7987 = vmatpush1.msra.mxu0 0.0
    %7988 = vmatprep.subr.mxu0 0.0
    %7989 = vmatpush1.msra.mxu0 0.0
    %7990 = vmatprep.subr.mxu0 0.0
    %7991 = vmatpush1.msra.mxu0 0.0
    %7992 = vmatprep.subr.mxu0 0.0
    %7993 = vmatpush1.msra.mxu0 0.0
    %7994 = vmatprep.subr.mxu0 0.0
    %7995 = vmatpush1.msra.mxu0 0.0
    %7996 = vmatprep.subr.mxu0 0.0
    %7997 = vmatpush1.msra.mxu0 0.0
    %7998 = vmatprep.subr.mxu0 0.0
    %7999 = vmatpush1.msra.mxu0 0.0
    %8000 = vmatprep.subr.mxu0 0.0
    %8001 = vmatpush1.msra.mxu0 0.0
    %8002 = vmatprep.subr.mxu0 0.0
    %8003 = vmatpush1.msra.mxu0 0.0
    %8004 = vmatprep.subr.mxu0 0.0
    %8005 = vmatpush1.msra.mxu0 0.0
    %8006 = vmatprep.subr.mxu0 0.0
    %8007 = vmatpush1.msra.mxu0 0.0
    %8008 = vmatprep.subr.mxu0 0.0
    %8009 = vmatpush1.msra.mxu0 0.0
    %8010 = vmatprep.subr.mxu0 0.0
    %8011 = vmatpush1.msra.mxu0 0.0
    %8012 = vmatprep.subr.mxu0 0.0
    %8013 = vmatpush1.msra.mxu0 0.0
    %8014 = vmatprep.subr.mxu0 0.0
    %8015 = vmatpush1.msra.mxu0 0.0
    %8016 = vmatprep.subr.mxu0 0.0
    %8017 = vmatpush1.msra.mxu0 0.0
    %8018 = vmatprep.subr.mxu0 0.0
    %8019 = vmatpush1.msra.mxu0 0.0
    %8020 = vmatprep.subr.mxu0 0.0
    %8021 = vmatpush1.msra.mxu0 0.0
    %8022 = vmatprep.subr.mxu0 0.0
    %8023 = vmatpush1.msra.mxu0 0.0
    %8024 = vmatprep.subr.mxu0 0.0
    %8025 = vmatpush1.msra.mxu0 0.0
    %8026 = vmatprep.subr.mxu0 0.0
    %8027 = vmatpush1.msra.mxu0 0.0
    %8028 = vmatprep.subr.mxu0 0.0
    %8029 = vmatpush1.msra.mxu0 0.0
    %8030 = vmatprep.mubr.f32.mxu0 0.0
    %8031 = vmatmul.mubr.f32.gmra.mrb[0].mxu0 %v7964
    %v8032 = vpop.f32.mrb[0].mxu0
    %v8033 = vadd.f32 0.0, %v8032
    %v8034 = vpop.f32.mrb[0].mxu0
    %v8035 = vadd.f32 0.0, %v8034
    %8036 = vdwg.mxu0
    %8037 = vmatprep.subr.mxu0 %v7949
    %8038 = vmatpush1.msra.mxu0 %v7948
    %8039 = vmatprep.subr.mxu0 %v7953
    %8040 = vmatpush1.msra.mxu0 %v7952
    %8041 = vmatprep.subr.mxu0 %v7957
    %8042 = vmatpush1.msra.mxu0 %v7956
    %8043 = vmatprep.subr.mxu0 %v7961
    %8044 = vmatpush1.msra.mxu0 %v7960
    %8045 = vmatprep.subr.mxu0 0.0
    %8046 = vmatpush1.msra.mxu0 0.0
    %8047 = vmatprep.subr.mxu0 0.0
    %8048 = vmatpush1.msra.mxu0 0.0
    %8049 = vmatprep.subr.mxu0 0.0
    %8050 = vmatpush1.msra.mxu0 0.0
    %8051 = vmatprep.subr.mxu0 0.0
    %8052 = vmatpush1.msra.mxu0 0.0
    %8053 = vmatprep.subr.mxu0 0.0
    %8054 = vmatpush1.msra.mxu0 0.0
    %8055 = vmatprep.subr.mxu0 0.0
    %8056 = vmatpush1.msra.mxu0 0.0
    %8057 = vmatprep.subr.mxu0 0.0
    %8058 = vmatpush1.msra.mxu0 0.0
    %8059 = vmatprep.subr.mxu0 0.0
    %8060 = vmatpush1.msra.mxu0 0.0
    %8061 = vmatprep.subr.mxu0 0.0
    %8062 = vmatpush1.msra.mxu0 0.0
    %8063 = vmatprep.subr.mxu0 0.0
    %8064 = vmatpush1.msra.mxu0 0.0
    %8065 = vmatprep.subr.mxu0 0.0
    %8066 = vmatpush1.msra.mxu0 0.0
    %8067 = vmatprep.subr.mxu0 0.0
    %8068 = vmatpush1.msra.mxu0 0.0
    %8069 = vmatprep.subr.mxu0 0.0
    %8070 = vmatpush1.msra.mxu0 0.0
    %8071 = vmatprep.subr.mxu0 0.0
    %8072 = vmatpush1.msra.mxu0 0.0
    %8073 = vmatprep.subr.mxu0 0.0
    %8074 = vmatpush1.msra.mxu0 0.0
    %8075 = vmatprep.subr.mxu0 0.0
    %8076 = vmatpush1.msra.mxu0 0.0
    %8077 = vmatprep.subr.mxu0 0.0
    %8078 = vmatpush1.msra.mxu0 0.0
    %8079 = vmatprep.subr.mxu0 0.0
    %8080 = vmatpush1.msra.mxu0 0.0
    %8081 = vmatprep.subr.mxu0 0.0
    %8082 = vmatpush1.msra.mxu0 0.0
    %8083 = vmatprep.subr.mxu0 0.0
    %8084 = vmatpush1.msra.mxu0 0.0
    %8085 = vmatprep.subr.mxu0 0.0
    %8086 = vmatpush1.msra.mxu0 0.0
    %8087 = vmatprep.subr.mxu0 0.0
    %8088 = vmatpush1.msra.mxu0 0.0
    %8089 = vmatprep.subr.mxu0 0.0
    %8090 = vmatpush1.msra.mxu0 0.0
    %8091 = vmatprep.subr.mxu0 0.0
    %8092 = vmatpush1.msra.mxu0 0.0
    %8093 = vmatprep.subr.mxu0 0.0
    %8094 = vmatpush1.msra.mxu0 0.0
    %8095 = vmatprep.subr.mxu0 0.0
    %8096 = vmatpush1.msra.mxu0 0.0
    %8097 = vmatprep.subr.mxu0 0.0
    %8098 = vmatpush1.msra.mxu0 0.0
    %8099 = vmatprep.subr.mxu0 0.0
    %8100 = vmatpush1.msra.mxu0 0.0
    %8101 = vmatprep.mubr.f32.mxu0 0.0
    %8102 = vmatmul.mubr.f32.gmra.mrb[0].mxu0 %v7964
    %v8103 = vpop.f32.mrb[0].mxu0
    %v8104 = vadd.f32 0.0, %v8103
    %v8105 = vpop.f32.mrb[0].mxu0
    %v8106 = vadd.f32 0.0, %v8105
    %8107 = vdwg.mxu0
    %v8108 = vlaneseq
    %v8109 = vshrl.u32 %v8108, 7
    %v8110 = vsub.s32 0, %v8109
    %v8111 = vrot.slane %v8033, %v8110
    %v8112 = vlaneseq
    %v8113 = vshrl.u32 %v8112, 7
    %v8114 = vsub.s32 0, %v8113
    %v8115 = vrot.slane %v8035, %v8114
    %v8116 = vlaneseq
    %v8117 = vshrl.u32 %v8116, 7
    %v8118 = vsub.s32 0, %v8117
    %v8119 = vrot.slane %v8104, %v8118
    %v8120 = vlaneseq
    %v8121 = vshrl.u32 %v8120, 7
    %v8122 = vsub.s32 0, %v8121
    %v8123 = vrot.slane %v8106, %v8122
    %v8124 = vmul.f32 %v7194, %v8111
    %v8125 = vmul.f32 %v7196, %v8115
    %v8126 = vmul.f32 %v7317, %v8119
    %v8127 = vmul.f32 %v7319, %v8123
    %v8128 = vlaneseq
    %v8129 = vshrl.u32 %v8128, 7
    %v8130 = vsub.s32 1, %v8129
    %v8131 = vrot.slane %v8033, %v8130
    %v8132 = vlaneseq
    %v8133 = vshrl.u32 %v8132, 7
    %v8134 = vsub.s32 1, %v8133
    %v8135 = vrot.slane %v8035, %v8134
    %v8136 = vlaneseq
    %v8137 = vshrl.u32 %v8136, 7
    %v8138 = vsub.s32 1, %v8137
    %v8139 = vrot.slane %v8104, %v8138
    %v8140 = vlaneseq
    %v8141 = vshrl.u32 %v8140, 7
    %v8142 = vsub.s32 1, %v8141
    %v8143 = vrot.slane %v8106, %v8142
    %v8144 = vadd.f32 %v8124, %v8131
    %v8145 = vadd.f32 %v8125, %v8135
    %v8146 = vadd.f32 %v8126, %v8139
    %v8147 = vadd.f32 %v8127, %v8143
    %v8148 = vmax.f32 %v8144, 0.0
    %v8149 = vmax.f32 %v8145, 0.0
    %v8150 = vmax.f32 %v8146, 0.0
    %v8151 = vmax.f32 %v8147, 0.0
    %v8156 = vcombine.low %v8148, %v8149
    %v8157 = vcombine.low %v8150, %v8151
    %v8159 = vunpack.c.l.s4 1983009808
    %v8160 = vunpack.c.0.s8 %v8159
    %v8161 = vlaneseq
    %v8162 = vshrl.u32 %v8161, 7
    %v8163 = vsub.s32 %v8160, %v8162
    %v8164 = vrot.slane %v8156, %v8163
    %v8166 = vunpack.c.l.s4 1983009808
    %v8167 = vunpack.c.0.s8 %v8166
    %v8168 = vlaneseq
    %v8169 = vshrl.u32 %v8168, 7
    %v8170 = vsub.s32 %v8167, %v8169
    %v8171 = vrot.slane %v8157, %v8170
    %v8172 = vcombine.low %v8164, %v8171
    %8174 = vst [vmem:[#allocation2] sm:$0xff] %v8172
    // Predicated region
    $region22: #{context_net_forward.1} parent=1 // pred_check
      _
    $region23: #{context_net_forward.1} parent=1 // pred_check_branch
      %8176 = sbr.rel (0) target = $region25
    $region24: #{context_net_forward.1} parent=1 // pred_region
      %s8178 = ssub.s32 128, 128
      %8179 = vsyncadd [#allocation3], %s8178
      %s8181 = sshll.u32 [#allocation2], 4
      %s8182 = int_to_ptr.vmem [resolvable:$true] %s8181
      %8184 = dma.vmem_to_hbm [thread:$0]  %s8182, 128, %s5, [#allocation3]
    $region25: #{context_net_forward.1} parent=1 // pred_fallthru
      _
    // Predicated region
    $region26: #{context_net_forward.1} parent=1 // pred_check
      _
    $region27: #{context_net_forward.1} parent=1 // pred_check_branch
      %8186 = sbr.rel (0) target = $region29
    $region28: #{context_net_forward.1} parent=1 // pred_region
      %8187 = dma.done [#allocation3], 128
    $region29: #{context_net_forward.1} parent=1 // pred_fallthru
      _
    %8188 = vsyncpa [#allocation3], 1

</llo_original>
